<compile_context>
chip_gen: v5e
topology: v5e:2x2
jax: 0.10.0
libtpu: 0.0.40
codegen_flags: <defaults>
</compile_context>

<pallas_src>
import functools

import jax
import jax.numpy as jnp
import numpy as np
from jax import lax
from jax.experimental import pallas as pl
from jax.experimental.pallas import tpu as pltpu

_VMEM_LIMIT_CONV = 16 * 1024 * 1024   # fused conv kernel uses < 2 MiB
_VMEM_LIMIT_L3 = 32 * 1024 * 1024     # layer3 worst case ~13 MiB (v7x tk=K path)

_H_IN = 28   # MNIST spatial size (required by the 128*7*7 Linear)
_H1 = 14     # after conv1 (3x3, stride 2, pad 1)
_H2 = 7      # after conv2


def _round_up(x, m):
    return ((x + m - 1) // m) * m


def _tpu_generation():
    try:
        kind = jax.devices()[0].device_kind
    except Exception:
        return 0
    digits = ""
    for ch in kind:
        if ch.isdigit():
            digits += ch
        elif digits:
            break
    return int(digits) if digits else 0


def select_layer3_config():
    """Per-generation layer3 configuration (static, chosen off the hot path)."""
    gen = _tpu_generation()
    if gen >= 7:
        # v7x: 2 TensorCores, no int MXU.  Split the 1024 output columns
        # across the cores ("parallel" leading grid axis) and use a single K
        # step so each core's 6.4 MB half-weight streams as one large DMA.
        return {"nsplit": 2, "tk": 128 * 7 * 7, "w3_int8": False}
    if gen in (5, 6):
        # v5e/v6e: single TC; int8 w3 halves the dominant HBM stream.  Keep K
        # tiled so the int8->bf16 widen overlaps the next block's DMA.
        return {"nsplit": 1, "tk": 896, "w3_int8": True}
    # Unknown generation: previously validated conservative configuration.
    return {"nsplit": 1, "tk": 896, "w3_int8": False}


# ----------------------------------------------------------------------------
# Constant index / mask tables for the fused layer1+layer2 im2col
# ----------------------------------------------------------------------------
def _conv_gather_constants():
    """Row order of the duplicated cols matrix: layer2-tap-major (t = ky*3+kx),
    then (n, ho, wo).  Column order: (ty, tx, cin).  Returns
      idx  : (9, 49, 9) int32 flat indices into the padded 30x30 input plane
      mask : (9, 49) float32, 0 where layer2's tap reads layer2's zero padding
    """
    ho, wo = np.meshgrid(np.arange(_H2), np.arange(_H2), indexing="ij")
    idx_taps, mask_taps = [], []
    for ky in range(3):
        for kx in range(3):
            h1 = 2 * ho - 1 + ky                    # layer1 output coords read by this tap
            w1 = 2 * wo - 1 + kx
            valid = ((h1 >= 0) & (w1 >= 0)).astype(np.float32)  # upper bound never exceeded
            h1c = np.clip(h1, 0, _H1 - 1)
            w1c = np.clip(w1, 0, _H1 - 1)
            sub = []
            for ty in range(3):
                for tx in range(3):
                    hp = 2 * h1c + ty               # row in the padded 30x30 input
                    wp = 2 * w1c + tx
                    sub.append(hp * (_H_IN + 2) + wp)
            idx_taps.append(np.stack(sub, axis=-1).reshape(_H2 * _H2, 9))
            mask_taps.append(valid.reshape(_H2 * _H2))
    return (np.stack(idx_taps, 0).astype(np.int32),
            np.stack(mask_taps, 0).astype(np.float32))


_COLS_IDX, _COLS_MASK = _conv_gather_constants()


def build_conv_inputs(x_nchw):
    """x: (N, C, 28, 28) -> (cols (9*tpb, K1P) bf16, mask (9*tpb, 1) f32, tpb)."""
    N, C, H, W = x_nchw.shape
    assert (H, W) == (_H_IN, _H_IN), "28x28 input required by the 128*7*7 Linear"
    tpb = _round_up(N * _H2 * _H2, 8)        # per-tap row block, 8-aligned
    k1p = _round_up(9 * C, 8)                # padded layer1 im2col width

    x = jnp.transpose(x_nchw, (0, 2, 3, 1)).astype(jnp.float32)   # NHWC
    xp = jnp.pad(x, ((0, 0), (1, 1), (1, 1), (0, 0)))             # (N, 30, 30, C)
    xpf = xp.reshape(N, (_H_IN + 2) * (_H_IN + 2), C)

    g = xpf[:, jnp.asarray(_COLS_IDX), :]                         # (N, 9, 49, 9, C)
    g = jnp.transpose(g, (1, 0, 2, 3, 4)).reshape(9, N * 49, 9 * C)
    g = jnp.pad(g, ((0, 0), (0, tpb - N * 49), (0, k1p - 9 * C)))
    cols = g.reshape(9 * tpb, k1p).astype(jnp.bfloat16)

    m = np.broadcast_to(_COLS_MASK[:, None, :], (9, N, 49)).reshape(9, N * 49)
    m = np.pad(m, ((0, 0), (0, tpb - N * 49))).reshape(9 * tpb, 1)
    mask = jnp.asarray(m, jnp.float32)
    return cols, mask, tpb


# ----------------------------------------------------------------------------
# Kernel A: fused layer1 + layer2 (conv-as-matmul, BN folded, LeakyReLU)
# ----------------------------------------------------------------------------
def _fused_conv_kernel(cols_ref, mask_ref, w1_ref, sh1_ref, w2_ref, sh2_ref,
                       o_ref, *, slope, n_valid, tpb):
    acc = None
    for t in range(9):                                   # layer2's 3x3 taps, unrolled
        c_t = cols_ref[t * tpb:(t + 1) * tpb, :]         # (tpb, K1P) bf16, aligned slice
        y1 = jnp.dot(c_t, w1_ref[...], preferred_element_type=jnp.float32)
        y1 = y1 + sh1_ref[...]                           # BN1 shift (scale folded in w1)
        y1 = jnp.where(y1 >= 0.0, y1, slope * y1)        # LeakyReLU(0.1)
        y1 = y1 * mask_ref[t * tpb:(t + 1) * tpb, :]     # zero layer2's padding taps
        part = jnp.dot(y1.astype(jnp.bfloat16),
                       w2_ref[t * 64:(t + 1) * 64, :],
                       preferred_element_type=jnp.float32)
        acc = part if acc is None else acc + part
    z = acc[:n_valid, :] + sh2_ref[...]                  # BN2 shift (scale folded in w2)
    z = jnp.where(z >= 0.0, z, slope * z)
    o_ref[...] = z.astype(o_ref.dtype)


def fused_conv_bn_lrelu(cols, mask, w1, sh1, w2, sh2, *, n_valid, tpb, slope=0.1):
    rows, k1p = cols.shape
    assert rows == 9 * tpb and w1.shape[0] == k1p
    kernel = functools.partial(_fused_conv_kernel, slope=slope,
                               n_valid=n_valid, tpb=tpb)
    return pl.pallas_call(
        kernel,
        out_shape=jax.ShapeDtypeStruct((n_valid, 128), jnp.bfloat16),
        grid_spec=pltpu.PrefetchScalarGridSpec(
            num_scalar_prefetch=0,
            grid=(1,),
            in_specs=[
                pl.BlockSpec((rows, k1p), lambda i: (0, 0)),
                pl.BlockSpec((rows, 1), lambda i: (0, 0)),
                pl.BlockSpec((k1p, 64), lambda i: (0, 0)),
                pl.BlockSpec((1, 64), lambda i: (0, 0)),
                pl.BlockSpec((576, 128), lambda i: (0, 0)),
                pl.BlockSpec((1, 128), lambda i: (0, 0)),
            ],
            out_specs=pl.BlockSpec((n_valid, 128), lambda i: (0, 0)),
        ),
        compiler_params=pltpu.CompilerParams(
            dimension_semantics=("arbitrary",),
            vmem_limit_bytes=_VMEM_LIMIT_CONV,
        ),
    )(cols, mask, w1, sh1, w2, sh2)


# ----------------------------------------------------------------------------
# Kernel B: layer3 Linear + BN1d + LeakyReLU, fc(1024->1) head fused
#   grid = (nsplit, nk):  j splits the output columns (parallel; 2 TCs on v7x),
#   k tiles K; the f32 y_ output block is the accumulator across k.
# ----------------------------------------------------------------------------
def _linear_bn_lrelu_fc_kernel(x_ref, w_ref, scale_ref, shift_ref,
                               wfc_ref, bfc_ref, y_ref, d_ref, *, slope, nsplit):
    j = pl.program_id(0)
    k = pl.program_id(1)

    @pl.when(k == 0)
    def _():
        y_ref[...] = jnp.zeros_like(y_ref)

    # w may be int8 (v5e/v6e) -> widen to bf16 on the VPU; no-op when already bf16.
    y_ref[...] += jnp.dot(x_ref[...], w_ref[...].astype(jnp.bfloat16),
                          preferred_element_type=jnp.float32)

    @pl.when(k == pl.num_programs(1) - 1)
    def _():
        z = y_ref[...] * scale_ref[...] + shift_ref[...]   # BN (+ int8 dequant), f32
        z = jnp.where(z >= 0.0, z, slope * z)              # LeakyReLU(0.1)
        y_ref[...] = z
        # fused fc head: lane-reduce against this split's w_fc slice
        logit = jnp.sum(z * wfc_ref[...], axis=-1, keepdims=True)
        if nsplit == 1:
            logit = logit + bfc_ref[...]
            d_ref[0] = pl.reciprocal(1.0 + jnp.exp(-logit), approx=True)
        else:
            # partial logit; fc bias added once; sigmoid applied in the wrapper
            logit = logit + jnp.where(j == 0, bfc_ref[...],
                                      jnp.zeros_like(bfc_ref[...]))
            d_ref[0] = logit


def linear_bn_lrelu_fc(x, w, scale, shift, w_fc, b_fc, *, nsplit, tk, slope=0.1):
    M, K = x.shape
    Kw, N = w.shape
    assert K == Kw and N % nsplit == 0
    if tk is None or K % tk != 0:
        tk = K
    nk = K // tk
    nc = N // nsplit
    kernel = functools.partial(_linear_bn_lrelu_fc_kernel, slope=slope, nsplit=nsplit)
    y_, d = pl.pallas_call(
        kernel,
        out_shape=(jax.ShapeDtypeStruct((M, N), jnp.float32),
                   jax.ShapeDtypeStruct((nsplit, M, 1), jnp.float32)),
        grid_spec=pltpu.PrefetchScalarGridSpec(
            num_scalar_prefetch=0,
            grid=(nsplit, nk),
            in_specs=[
                pl.BlockSpec((M, tk), lambda j, k: (0, k)),
                pl.BlockSpec((tk, nc), lambda j, k: (k, j)),
                pl.BlockSpec((1, nc), lambda j, k: (0, j)),
                pl.BlockSpec((1, nc), lambda j, k: (0, j)),
                pl.BlockSpec((1, nc), lambda j, k: (0, j)),
                pl.BlockSpec((1, 1), lambda j, k: (0, 0)),
            ],
            out_specs=(pl.BlockSpec((M, nc), lambda j, k: (0, j)),
                       pl.BlockSpec((1, M, 1), lambda j, k: (j, 0, 0))),
        ),
        compiler_params=pltpu.CompilerParams(
            dimension_semantics=("parallel", "arbitrary"),
            vmem_limit_bytes=_VMEM_LIMIT_L3,
        ),
    )(x, w, scale, shift, w_fc, b_fc)
    return y_, d


# ----------------------------------------------------------------------------
# BN folding + one-time parameter prep (off the hot path)
# ----------------------------------------------------------------------------
def bn_fold(gamma, beta, mean, var, eps=1e-5, lin_bias=None):
    scale = gamma / jnp.sqrt(var + eps)
    if lin_bias is None:
        shift = beta - mean * scale
    else:
        shift = (lin_bias - mean) * scale + beta
    return (scale.reshape(1, -1).astype(jnp.float32),
            shift.reshape(1, -1).astype(jnp.float32))


def prepare_pallas_params(p, cfg, eps=1e-5):
    q = {}
    # conv layers: fold the BN scale into the bf16 weight columns; keep shift.
    s1, sh1 = bn_fold(p["bn1_g"], p["bn1_b"], p["bn1_m"], p["bn1_v"], eps)
    k1 = p["w1"].shape[0]
    k1p = _round_up(k1, 8)
    q["w1"] = jnp.pad(p["w1"] * s1, ((0, k1p - k1), (0, 0))).astype(jnp.bfloat16)
    q["sh1"] = sh1
    s2, sh2 = bn_fold(p["bn2_g"], p["bn2_b"], p["bn2_m"], p["bn2_v"], eps)
    q["w2"] = (p["w2"] * s2).astype(jnp.bfloat16)
    q["sh2"] = sh2
    # layer3: permute w3 rows from PyTorch's NCHW-flatten order (c*49 + h*7 + w)
    # to the NHWC-flatten order ((h*7+w)*128 + c) so layer2's output feeds it
    # directly (no transpose in the hot path).
    w3p = p["w3"].reshape(128, 7, 7, 1024).transpose(1, 2, 0, 3).reshape(49 * 128, 1024)
    s3, sh3 = bn_fold(p["bn3_g"], p["bn3_b"], p["bn3_m"], p["bn3_v"], eps,
                      lin_bias=p["b3"])
    if cfg["w3_int8"]:
        # per-output-column symmetric int8; dequant scale folded into the BN scale
        qs = jnp.maximum(jnp.max(jnp.abs(w3p), axis=0, keepdims=True), 1e-12) / 127.0
        q["w3"] = jnp.clip(jnp.round(w3p / qs), -127, 127).astype(jnp.int8)
        q["s3"] = (s3 * qs).astype(jnp.float32)
    else:
        q["w3"] = w3p.astype(jnp.bfloat16)
        q["s3"] = s3
    q["sh3"] = sh3
    q["w_fc"] = p["w_fc"].reshape(1, -1).astype(jnp.float32)
    q["b_fc"] = p["b_fc"].reshape(1, 1).astype(jnp.float32)
    return q


# ----------------------------------------------------------------------------
# Discriminator forward (Pallas-backed)
# ----------------------------------------------------------------------------
def discriminator_forward(q, x_nchw, *, cfg):
    N = x_nchw.shape[0]

    # fused layer1 + layer2 (single pallas_call)
    cols, mask, tpb = build_conv_inputs(x_nchw)
    y2 = fused_conv_bn_lrelu(cols, mask, q["w1"], q["sh1"], q["w2"], q["sh2"],
                             n_valid=N * _H2 * _H2, tpb=tpb)    # (N*49, 128) bf16

    # NHWC flatten (w3 rows were pre-permuted to match); this reshape is free.
    yf = y2.reshape(N, _H2 * _H2 * 128)

    # layer3 Linear + BN1d + LeakyReLU with the fc head fused
    y_, d_part = linear_bn_lrelu_fc(yf, q["w3"], q["s3"], q["sh3"],
                                    q["w_fc"], q["b_fc"],
                                    nsplit=cfg["nsplit"], tk=cfg["tk"])
    if cfg["nsplit"] == 1:
        d = d_part[0]                                           # sigmoid already applied
    else:
        d = 1.0 / (1.0 + jnp.exp(-(d_part[0] + d_part[1])))     # combine per-core partials
    return d, y_


# ----------------------------------------------------------------------------
# Pure-JAX reference (mirrors the PyTorch module, eval-mode BatchNorm)
# ----------------------------------------------------------------------------
def reference_forward(params, x_nchw):
    eps = 1e-5
    x = jnp.transpose(x_nchw, (0, 2, 3, 1)).astype(jnp.float32)
    N = x.shape[0]
    in_c = x.shape[-1]

    def conv_bn_lrelu_ref(x, w_hwio, g, b, m, v):
        y = lax.conv_general_dilated(
            x, w_hwio, window_strides=(2, 2), padding=((1, 1), (1, 1)),
            dimension_numbers=("NHWC", "HWIO", "NHWC"))
        y = (y - m) / jnp.sqrt(v + eps) * g + b
        return jnp.where(y >= 0, y, 0.1 * y)

    y = conv_bn_lrelu_ref(x, params["w1"].reshape(3, 3, in_c, 64),
                          params["bn1_g"], params["bn1_b"],
                          params["bn1_m"], params["bn1_v"])
    y = conv_bn_lrelu_ref(y, params["w2"].reshape(3, 3, 64, 128),
                          params["bn2_g"], params["bn2_b"],
                          params["bn2_m"], params["bn2_v"])
    y = jnp.transpose(y, (0, 3, 1, 2)).reshape(N, -1)            # PyTorch .view(N, -1)
    z = y @ params["w3"] + params["b3"]
    z = (z - params["bn3_m"]) / jnp.sqrt(params["bn3_v"] + eps) \
        * params["bn3_g"] + params["bn3_b"]
    y_ = jnp.where(z >= 0, z, 0.1 * z)
    d = 1.0 / (1.0 + jnp.exp(-(y_ @ params["w_fc"] + params["b_fc"])))
    return d, y_


# ----------------------------------------------------------------------------
# Deterministic parameter init (synthetic; shapes from the PyTorch __init__)
# ----------------------------------------------------------------------------
def init_params(key, in_channel=1):
    ks = jax.random.split(key, 20)
    f32 = jnp.float32
    p = {}
    # conv1: PyTorch weight (64, in_c, 3, 3) -> HWIO flattened (9*in_c, 64)
    p["w1"] = jax.random.normal(ks[0], (9 * in_channel, 64), f32) * 0.10
    p["bn1_g"] = jax.random.uniform(ks[1], (64,), f32, 0.5, 1.5)
    p["bn1_b"] = jax.random.normal(ks[2], (64,), f32) * 0.1
    p["bn1_m"] = jax.random.normal(ks[3], (64,), f32) * 0.1
    p["bn1_v"] = jax.random.uniform(ks[4], (64,), f32, 0.5, 1.5)
    # conv2: (128, 64, 3, 3) -> (9*64, 128)
    p["w2"] = jax.random.normal(ks[5], (9 * 64, 128), f32) * 0.05
    p["bn2_g"] = jax.random.uniform(ks[6], (128,), f32, 0.5, 1.5)
    p["bn2_b"] = jax.random.normal(ks[7], (128,), f32) * 0.1
    p["bn2_m"] = jax.random.normal(ks[8], (128,), f32) * 0.1
    p["bn2_v"] = jax.random.uniform(ks[9], (128,), f32, 0.5, 1.5)
    # layer3 linear: (1024, 6272) in torch -> stored transposed (6272, 1024)
    p["w3"] = jax.random.normal(ks[10], (128 * 7 * 7, 1024), f32) * 0.02
    p["b3"] = jax.random.normal(ks[11], (1024,), f32) * 0.1
    p["bn3_g"] = jax.random.uniform(ks[12], (1024,), f32, 0.5, 1.5)
    p["bn3_b"] = jax.random.normal(ks[13], (1024,), f32) * 0.1
    p["bn3_m"] = jax.random.normal(ks[14], (1024,), f32) * 0.1
    p["bn3_v"] = jax.random.uniform(ks[15], (1024,), f32, 0.5, 1.5)
    # fc: (1, 1024) in torch -> stored transposed (1024, 1)
    p["w_fc"] = jax.random.normal(ks[16], (1024, 1), f32) * 0.05
    p["b_fc"] = jax.random.normal(ks[17], (1,), f32) * 0.1
    return p


if __name__ == "__main__":
    key = jax.random.PRNGKey(0)
    k_param, k_x = jax.random.split(key)
    params = init_params(k_param, in_channel=1)

    cfg = select_layer3_config()               # static, per-TPU-generation choices
    qparams = prepare_pallas_params(params, cfg)   # one-time prep, off the hot path

    # MNIST-shaped input (28x28 is required by the 128*7*7 Linear), batch=2.
    x = jax.random.normal(k_x, (2, 1, 28, 28), jnp.float32)

    fwd = jax.jit(functools.partial(discriminator_forward, cfg=cfg))
    d, y_ = fwd(qparams, x)
    d, y_ = jax.block_until_ready((d, y_))

    d_ref, y_ref = reference_forward(params, x)
    np.testing.assert_allclose(np.asarray(y_), np.asarray(y_ref),
                               rtol=5e-2, atol=5e-2)
    np.testing.assert_allclose(np.asarray(d), np.asarray(d_ref),
                               rtol=5e-2, atol=5e-2)
    assert d.shape == (2, 1) and y_.shape == (2, 1024)

    print("KERNEL_OK")
</pallas_src>

<mosaic_0001>
module attributes {stable_mosaic.version = 11 : i64} {
  func.func @_fused_conv_kernel(%arg0: i32, %arg1: memref<936x16xbf16, #tpu.memory_space<vmem>>, %arg2: memref<936x1xf32, #tpu.memory_space<vmem>>, %arg3: memref<16x64xbf16, #tpu.memory_space<vmem>>, %arg4: memref<1x64xf32, #tpu.memory_space<vmem>>, %arg5: memref<576x128xbf16, #tpu.memory_space<vmem>>, %arg6: memref<1x128xf32, #tpu.memory_space<vmem>>, %arg7: memref<98x128xbf16, #tpu.memory_space<vmem>>) attributes {dimension_semantics = [#tpu.dimension_semantics<arbitrary>], iteration_bounds = array<i64: 1>, scalar_prefetch = 0 : i64, scratch_operands = 0 : i64, tpu.core_type = #tpu.core_type<tc>, window_params = [{pipeline_mode = #tpu.pipeline_mode<synchronous>, transform_indices = @transform_0, window_bounds = array<i64: 936, 16>}, {pipeline_mode = #tpu.pipeline_mode<synchronous>, transform_indices = @transform_1, window_bounds = array<i64: 936, 1>}, {pipeline_mode = #tpu.pipeline_mode<synchronous>, transform_indices = @transform_2, window_bounds = array<i64: 16, 64>}, {pipeline_mode = #tpu.pipeline_mode<synchronous>, transform_indices = @transform_3, window_bounds = array<i64: 1, 64>}, {pipeline_mode = #tpu.pipeline_mode<synchronous>, transform_indices = @transform_4, window_bounds = array<i64: 576, 128>}, {pipeline_mode = #tpu.pipeline_mode<synchronous>, transform_indices = @transform_5, window_bounds = array<i64: 1, 128>}, {pipeline_mode = #tpu.pipeline_mode<synchronous>, transform_indices = @transform_6, window_bounds = array<i64: 98, 128>}]} {
    %c0 = arith.constant 0 : index
    %c0_0 = arith.constant 0 : index
    %0 = vector.load %arg1[%c0, %c0_0] : memref<936x16xbf16, #tpu.memory_space<vmem>>, vector<104x16xbf16>
    %c0_1 = arith.constant 0 : index
    %c0_2 = arith.constant 0 : index
    %1 = vector.load %arg3[%c0_1, %c0_2] : memref<16x64xbf16, #tpu.memory_space<vmem>>, vector<16x64xbf16>
    %cst = arith.constant dense<0.000000e+00> : vector<104x64xf32>
    %2 = tpu.matmul %0, %1, %cst {dimension_numbers = #tpu.dot_dimension_numbers<[1], [0], [0], [1], [0, 0, 1, 1], [], []>} : vector<104x16xbf16>, vector<16x64xbf16>, vector<104x64xf32> -> vector<104x64xf32>
    %c0_3 = arith.constant 0 : index
    %c0_4 = arith.constant 0 : index
    %3 = vector.load %arg4[%c0_3, %c0_4] : memref<1x64xf32, #tpu.memory_space<vmem>>, vector<1x64xf32>
    %4 = vector.broadcast %3 : vector<1x64xf32> to vector<104x64xf32>
    %5 = arith.addf %2, %4 : vector<104x64xf32>
    %cst_5 = arith.constant 0.000000e+00 : f32
    %6 = vector.broadcast %cst_5 : f32 to vector<104x64xf32>
    %7 = arith.cmpf oge, %5, %6 : vector<104x64xf32>
    %cst_6 = arith.constant 1.000000e-01 : f32
    %8 = vector.broadcast %cst_6 : f32 to vector<104x64xf32>
    %9 = arith.mulf %8, %5 : vector<104x64xf32>
    %10 = arith.select %7, %5, %9 : vector<104x64xi1>, vector<104x64xf32>
    %c0_7 = arith.constant 0 : index
    %c0_8 = arith.constant 0 : index
    %11 = vector.load %arg2[%c0_7, %c0_8] : memref<936x1xf32, #tpu.memory_space<vmem>>, vector<104x1xf32>
    %12 = vector.broadcast %11 : vector<104x1xf32> to vector<104x64xf32>
    %13 = arith.mulf %10, %12 : vector<104x64xf32>
    %14 = arith.truncf %13 : vector<104x64xf32> to vector<104x64xbf16>
    %c0_9 = arith.constant 0 : index
    %c0_10 = arith.constant 0 : index
    %15 = vector.load %arg5[%c0_9, %c0_10] : memref<576x128xbf16, #tpu.memory_space<vmem>>, vector<64x128xbf16>
    %cst_11 = arith.constant dense<0.000000e+00> : vector<104x128xf32>
    %16 = tpu.matmul %14, %15, %cst_11 {dimension_numbers = #tpu.dot_dimension_numbers<[1], [0], [0], [1], [0, 0, 1, 1], [], []>} : vector<104x64xbf16>, vector<64x128xbf16>, vector<104x128xf32> -> vector<104x128xf32>
    %c104 = arith.constant 104 : index
    %c0_12 = arith.constant 0 : index
    %17 = vector.load %arg1[%c104, %c0_12] : memref<936x16xbf16, #tpu.memory_space<vmem>>, vector<104x16xbf16>
    %c0_13 = arith.constant 0 : index
    %c0_14 = arith.constant 0 : index
    %18 = vector.load %arg3[%c0_13, %c0_14] : memref<16x64xbf16, #tpu.memory_space<vmem>>, vector<16x64xbf16>
    %cst_15 = arith.constant dense<0.000000e+00> : vector<104x64xf32>
    %19 = tpu.matmul %17, %18, %cst_15 {dimension_numbers = #tpu.dot_dimension_numbers<[1], [0], [0], [1], [0, 0, 1, 1], [], []>} : vector<104x16xbf16>, vector<16x64xbf16>, vector<104x64xf32> -> vector<104x64xf32>
    %c0_16 = arith.constant 0 : index
    %c0_17 = arith.constant 0 : index
    %20 = vector.load %arg4[%c0_16, %c0_17] : memref<1x64xf32, #tpu.memory_space<vmem>>, vector<1x64xf32>
    %21 = vector.broadcast %20 : vector<1x64xf32> to vector<104x64xf32>
    %22 = arith.addf %19, %21 : vector<104x64xf32>
    %cst_18 = arith.constant 0.000000e+00 : f32
    %23 = vector.broadcast %cst_18 : f32 to vector<104x64xf32>
    %24 = arith.cmpf oge, %22, %23 : vector<104x64xf32>
    %cst_19 = arith.constant 1.000000e-01 : f32
    %25 = vector.broadcast %cst_19 : f32 to vector<104x64xf32>
    %26 = arith.mulf %25, %22 : vector<104x64xf32>
    %27 = arith.select %24, %22, %26 : vector<104x64xi1>, vector<104x64xf32>
    %c104_20 = arith.constant 104 : index
    %c0_21 = arith.constant 0 : index
    %28 = vector.load %arg2[%c104_20, %c0_21] : memref<936x1xf32, #tpu.memory_space<vmem>>, vector<104x1xf32>
    %29 = vector.broadcast %28 : vector<104x1xf32> to vector<104x64xf32>
    %30 = arith.mulf %27, %29 : vector<104x64xf32>
    %31 = arith.truncf %30 : vector<104x64xf32> to vector<104x64xbf16>
    %c64 = arith.constant 64 : index
    %c0_22 = arith.constant 0 : index
    %32 = vector.load %arg5[%c64, %c0_22] : memref<576x128xbf16, #tpu.memory_space<vmem>>, vector<64x128xbf16>
    %cst_23 = arith.constant dense<0.000000e+00> : vector<104x128xf32>
    %33 = tpu.matmul %31, %32, %cst_23 {dimension_numbers = #tpu.dot_dimension_numbers<[1], [0], [0], [1], [0, 0, 1, 1], [], []>} : vector<104x64xbf16>, vector<64x128xbf16>, vector<104x128xf32> -> vector<104x128xf32>
    %34 = arith.addf %16, %33 : vector<104x128xf32>
    %c208 = arith.constant 208 : index
    %c0_24 = arith.constant 0 : index
    %35 = vector.load %arg1[%c208, %c0_24] : memref<936x16xbf16, #tpu.memory_space<vmem>>, vector<104x16xbf16>
    %c0_25 = arith.constant 0 : index
    %c0_26 = arith.constant 0 : index
    %36 = vector.load %arg3[%c0_25, %c0_26] : memref<16x64xbf16, #tpu.memory_space<vmem>>, vector<16x64xbf16>
    %cst_27 = arith.constant dense<0.000000e+00> : vector<104x64xf32>
    %37 = tpu.matmul %35, %36, %cst_27 {dimension_numbers = #tpu.dot_dimension_numbers<[1], [0], [0], [1], [0, 0, 1, 1], [], []>} : vector<104x16xbf16>, vector<16x64xbf16>, vector<104x64xf32> -> vector<104x64xf32>
    %c0_28 = arith.constant 0 : index
    %c0_29 = arith.constant 0 : index
    %38 = vector.load %arg4[%c0_28, %c0_29] : memref<1x64xf32, #tpu.memory_space<vmem>>, vector<1x64xf32>
    %39 = vector.broadcast %38 : vector<1x64xf32> to vector<104x64xf32>
    %40 = arith.addf %37, %39 : vector<104x64xf32>
    %cst_30 = arith.constant 0.000000e+00 : f32
    %41 = vector.broadcast %cst_30 : f32 to vector<104x64xf32>
    %42 = arith.cmpf oge, %40, %41 : vector<104x64xf32>
    %cst_31 = arith.constant 1.000000e-01 : f32
    %43 = vector.broadcast %cst_31 : f32 to vector<104x64xf32>
    %44 = arith.mulf %43, %40 : vector<104x64xf32>
    %45 = arith.select %42, %40, %44 : vector<104x64xi1>, vector<104x64xf32>
    %c208_32 = arith.constant 208 : index
    %c0_33 = arith.constant 0 : index
    %46 = vector.load %arg2[%c208_32, %c0_33] : memref<936x1xf32, #tpu.memory_space<vmem>>, vector<104x1xf32>
    %47 = vector.broadcast %46 : vector<104x1xf32> to vector<104x64xf32>
    %48 = arith.mulf %45, %47 : vector<104x64xf32>
    %49 = arith.truncf %48 : vector<104x64xf32> to vector<104x64xbf16>
    %c128 = arith.constant 128 : index
    %c0_34 = arith.constant 0 : index
    %50 = vector.load %arg5[%c128, %c0_34] : memref<576x128xbf16, #tpu.memory_space<vmem>>, vector<64x128xbf16>
    %cst_35 = arith.constant dense<0.000000e+00> : vector<104x128xf32>
    %51 = tpu.matmul %49, %50, %cst_35 {dimension_numbers = #tpu.dot_dimension_numbers<[1], [0], [0], [1], [0, 0, 1, 1], [], []>} : vector<104x64xbf16>, vector<64x128xbf16>, vector<104x128xf32> -> vector<104x128xf32>
    %52 = arith.addf %34, %51 : vector<104x128xf32>
    %c312 = arith.constant 312 : index
    %c0_36 = arith.constant 0 : index
    %53 = vector.load %arg1[%c312, %c0_36] : memref<936x16xbf16, #tpu.memory_space<vmem>>, vector<104x16xbf16>
    %c0_37 = arith.constant 0 : index
    %c0_38 = arith.constant 0 : index
    %54 = vector.load %arg3[%c0_37, %c0_38] : memref<16x64xbf16, #tpu.memory_space<vmem>>, vector<16x64xbf16>
    %cst_39 = arith.constant dense<0.000000e+00> : vector<104x64xf32>
    %55 = tpu.matmul %53, %54, %cst_39 {dimension_numbers = #tpu.dot_dimension_numbers<[1], [0], [0], [1], [0, 0, 1, 1], [], []>} : vector<104x16xbf16>, vector<16x64xbf16>, vector<104x64xf32> -> vector<104x64xf32>
    %c0_40 = arith.constant 0 : index
    %c0_41 = arith.constant 0 : index
    %56 = vector.load %arg4[%c0_40, %c0_41] : memref<1x64xf32, #tpu.memory_space<vmem>>, vector<1x64xf32>
    %57 = vector.broadcast %56 : vector<1x64xf32> to vector<104x64xf32>
    %58 = arith.addf %55, %57 : vector<104x64xf32>
    %cst_42 = arith.constant 0.000000e+00 : f32
    %59 = vector.broadcast %cst_42 : f32 to vector<104x64xf32>
    %60 = arith.cmpf oge, %58, %59 : vector<104x64xf32>
    %cst_43 = arith.constant 1.000000e-01 : f32
    %61 = vector.broadcast %cst_43 : f32 to vector<104x64xf32>
    %62 = arith.mulf %61, %58 : vector<104x64xf32>
    %63 = arith.select %60, %58, %62 : vector<104x64xi1>, vector<104x64xf32>
    %c312_44 = arith.constant 312 : index
    %c0_45 = arith.constant 0 : index
    %64 = vector.load %arg2[%c312_44, %c0_45] : memref<936x1xf32, #tpu.memory_space<vmem>>, vector<104x1xf32>
    %65 = vector.broadcast %64 : vector<104x1xf32> to vector<104x64xf32>
    %66 = arith.mulf %63, %65 : vector<104x64xf32>
    %67 = arith.truncf %66 : vector<104x64xf32> to vector<104x64xbf16>
    %c192 = arith.constant 192 : index
    %c0_46 = arith.constant 0 : index
    %68 = vector.load %arg5[%c192, %c0_46] : memref<576x128xbf16, #tpu.memory_space<vmem>>, vector<64x128xbf16>
    %cst_47 = arith.constant dense<0.000000e+00> : vector<104x128xf32>
    %69 = tpu.matmul %67, %68, %cst_47 {dimension_numbers = #tpu.dot_dimension_numbers<[1], [0], [0], [1], [0, 0, 1, 1], [], []>} : vector<104x64xbf16>, vector<64x128xbf16>, vector<104x128xf32> -> vector<104x128xf32>
    %70 = arith.addf %52, %69 : vector<104x128xf32>
    %c416 = arith.constant 416 : index
    %c0_48 = arith.constant 0 : index
    %71 = vector.load %arg1[%c416, %c0_48] : memref<936x16xbf16, #tpu.memory_space<vmem>>, vector<104x16xbf16>
    %c0_49 = arith.constant 0 : index
    %c0_50 = arith.constant 0 : index
    %72 = vector.load %arg3[%c0_49, %c0_50] : memref<16x64xbf16, #tpu.memory_space<vmem>>, vector<16x64xbf16>
    %cst_51 = arith.constant dense<0.000000e+00> : vector<104x64xf32>
    %73 = tpu.matmul %71, %72, %cst_51 {dimension_numbers = #tpu.dot_dimension_numbers<[1], [0], [0], [1], [0, 0, 1, 1], [], []>} : vector<104x16xbf16>, vector<16x64xbf16>, vector<104x64xf32> -> vector<104x64xf32>
    %c0_52 = arith.constant 0 : index
    %c0_53 = arith.constant 0 : index
    %74 = vector.load %arg4[%c0_52, %c0_53] : memref<1x64xf32, #tpu.memory_space<vmem>>, vector<1x64xf32>
    %75 = vector.broadcast %74 : vector<1x64xf32> to vector<104x64xf32>
    %76 = arith.addf %73, %75 : vector<104x64xf32>
    %cst_54 = arith.constant 0.000000e+00 : f32
    %77 = vector.broadcast %cst_54 : f32 to vector<104x64xf32>
    %78 = arith.cmpf oge, %76, %77 : vector<104x64xf32>
    %cst_55 = arith.constant 1.000000e-01 : f32
    %79 = vector.broadcast %cst_55 : f32 to vector<104x64xf32>
    %80 = arith.mulf %79, %76 : vector<104x64xf32>
    %81 = arith.select %78, %76, %80 : vector<104x64xi1>, vector<104x64xf32>
    %c416_56 = arith.constant 416 : index
    %c0_57 = arith.constant 0 : index
    %82 = vector.load %arg2[%c416_56, %c0_57] : memref<936x1xf32, #tpu.memory_space<vmem>>, vector<104x1xf32>
    %83 = vector.broadcast %82 : vector<104x1xf32> to vector<104x64xf32>
    %84 = arith.mulf %81, %83 : vector<104x64xf32>
    %85 = arith.truncf %84 : vector<104x64xf32> to vector<104x64xbf16>
    %c256 = arith.constant 256 : index
    %c0_58 = arith.constant 0 : index
    %86 = vector.load %arg5[%c256, %c0_58] : memref<576x128xbf16, #tpu.memory_space<vmem>>, vector<64x128xbf16>
    %cst_59 = arith.constant dense<0.000000e+00> : vector<104x128xf32>
    %87 = tpu.matmul %85, %86, %cst_59 {dimension_numbers = #tpu.dot_dimension_numbers<[1], [0], [0], [1], [0, 0, 1, 1], [], []>} : vector<104x64xbf16>, vector<64x128xbf16>, vector<104x128xf32> -> vector<104x128xf32>
    %88 = arith.addf %70, %87 : vector<104x128xf32>
    %c520 = arith.constant 520 : index
    %c0_60 = arith.constant 0 : index
    %89 = vector.load %arg1[%c520, %c0_60] : memref<936x16xbf16, #tpu.memory_space<vmem>>, vector<104x16xbf16>
    %c0_61 = arith.constant 0 : index
    %c0_62 = arith.constant 0 : index
    %90 = vector.load %arg3[%c0_61, %c0_62] : memref<16x64xbf16, #tpu.memory_space<vmem>>, vector<16x64xbf16>
    %cst_63 = arith.constant dense<0.000000e+00> : vector<104x64xf32>
    %91 = tpu.matmul %89, %90, %cst_63 {dimension_numbers = #tpu.dot_dimension_numbers<[1], [0], [0], [1], [0, 0, 1, 1], [], []>} : vector<104x16xbf16>, vector<16x64xbf16>, vector<104x64xf32> -> vector<104x64xf32>
    %c0_64 = arith.constant 0 : index
    %c0_65 = arith.constant 0 : index
    %92 = vector.load %arg4[%c0_64, %c0_65] : memref<1x64xf32, #tpu.memory_space<vmem>>, vector<1x64xf32>
    %93 = vector.broadcast %92 : vector<1x64xf32> to vector<104x64xf32>
    %94 = arith.addf %91, %93 : vector<104x64xf32>
    %cst_66 = arith.constant 0.000000e+00 : f32
    %95 = vector.broadcast %cst_66 : f32 to vector<104x64xf32>
    %96 = arith.cmpf oge, %94, %95 : vector<104x64xf32>
    %cst_67 = arith.constant 1.000000e-01 : f32
    %97 = vector.broadcast %cst_67 : f32 to vector<104x64xf32>
    %98 = arith.mulf %97, %94 : vector<104x64xf32>
    %99 = arith.select %96, %94, %98 : vector<104x64xi1>, vector<104x64xf32>
    %c520_68 = arith.constant 520 : index
    %c0_69 = arith.constant 0 : index
    %100 = vector.load %arg2[%c520_68, %c0_69] : memref<936x1xf32, #tpu.memory_space<vmem>>, vector<104x1xf32>
    %101 = vector.broadcast %100 : vector<104x1xf32> to vector<104x64xf32>
    %102 = arith.mulf %99, %101 : vector<104x64xf32>
    %103 = arith.truncf %102 : vector<104x64xf32> to vector<104x64xbf16>
    %c320 = arith.constant 320 : index
    %c0_70 = arith.constant 0 : index
    %104 = vector.load %arg5[%c320, %c0_70] : memref<576x128xbf16, #tpu.memory_space<vmem>>, vector<64x128xbf16>
    %cst_71 = arith.constant dense<0.000000e+00> : vector<104x128xf32>
    %105 = tpu.matmul %103, %104, %cst_71 {dimension_numbers = #tpu.dot_dimension_numbers<[1], [0], [0], [1], [0, 0, 1, 1], [], []>} : vector<104x64xbf16>, vector<64x128xbf16>, vector<104x128xf32> -> vector<104x128xf32>
    %106 = arith.addf %88, %105 : vector<104x128xf32>
    %c624 = arith.constant 624 : index
    %c0_72 = arith.constant 0 : index
    %107 = vector.load %arg1[%c624, %c0_72] : memref<936x16xbf16, #tpu.memory_space<vmem>>, vector<104x16xbf16>
    %c0_73 = arith.constant 0 : index
    %c0_74 = arith.constant 0 : index
    %108 = vector.load %arg3[%c0_73, %c0_74] : memref<16x64xbf16, #tpu.memory_space<vmem>>, vector<16x64xbf16>
    %cst_75 = arith.constant dense<0.000000e+00> : vector<104x64xf32>
    %109 = tpu.matmul %107, %108, %cst_75 {dimension_numbers = #tpu.dot_dimension_numbers<[1], [0], [0], [1], [0, 0, 1, 1], [], []>} : vector<104x16xbf16>, vector<16x64xbf16>, vector<104x64xf32> -> vector<104x64xf32>
    %c0_76 = arith.constant 0 : index
    %c0_77 = arith.constant 0 : index
    %110 = vector.load %arg4[%c0_76, %c0_77] : memref<1x64xf32, #tpu.memory_space<vmem>>, vector<1x64xf32>
    %111 = vector.broadcast %110 : vector<1x64xf32> to vector<104x64xf32>
    %112 = arith.addf %109, %111 : vector<104x64xf32>
    %cst_78 = arith.constant 0.000000e+00 : f32
    %113 = vector.broadcast %cst_78 : f32 to vector<104x64xf32>
    %114 = arith.cmpf oge, %112, %113 : vector<104x64xf32>
    %cst_79 = arith.constant 1.000000e-01 : f32
    %115 = vector.broadcast %cst_79 : f32 to vector<104x64xf32>
    %116 = arith.mulf %115, %112 : vector<104x64xf32>
    %117 = arith.select %114, %112, %116 : vector<104x64xi1>, vector<104x64xf32>
    %c624_80 = arith.constant 624 : index
    %c0_81 = arith.constant 0 : index
    %118 = vector.load %arg2[%c624_80, %c0_81] : memref<936x1xf32, #tpu.memory_space<vmem>>, vector<104x1xf32>
    %119 = vector.broadcast %118 : vector<104x1xf32> to vector<104x64xf32>
    %120 = arith.mulf %117, %119 : vector<104x64xf32>
    %121 = arith.truncf %120 : vector<104x64xf32> to vector<104x64xbf16>
    %c384 = arith.constant 384 : index
    %c0_82 = arith.constant 0 : index
    %122 = vector.load %arg5[%c384, %c0_82] : memref<576x128xbf16, #tpu.memory_space<vmem>>, vector<64x128xbf16>
    %cst_83 = arith.constant dense<0.000000e+00> : vector<104x128xf32>
    %123 = tpu.matmul %121, %122, %cst_83 {dimension_numbers = #tpu.dot_dimension_numbers<[1], [0], [0], [1], [0, 0, 1, 1], [], []>} : vector<104x64xbf16>, vector<64x128xbf16>, vector<104x128xf32> -> vector<104x128xf32>
    %124 = arith.addf %106, %123 : vector<104x128xf32>
    %c728 = arith.constant 728 : index
    %c0_84 = arith.constant 0 : index
    %125 = vector.load %arg1[%c728, %c0_84] : memref<936x16xbf16, #tpu.memory_space<vmem>>, vector<104x16xbf16>
    %c0_85 = arith.constant 0 : index
    %c0_86 = arith.constant 0 : index
    %126 = vector.load %arg3[%c0_85, %c0_86] : memref<16x64xbf16, #tpu.memory_space<vmem>>, vector<16x64xbf16>
    %cst_87 = arith.constant dense<0.000000e+00> : vector<104x64xf32>
    %127 = tpu.matmul %125, %126, %cst_87 {dimension_numbers = #tpu.dot_dimension_numbers<[1], [0], [0], [1], [0, 0, 1, 1], [], []>} : vector<104x16xbf16>, vector<16x64xbf16>, vector<104x64xf32> -> vector<104x64xf32>
    %c0_88 = arith.constant 0 : index
    %c0_89 = arith.constant 0 : index
    %128 = vector.load %arg4[%c0_88, %c0_89] : memref<1x64xf32, #tpu.memory_space<vmem>>, vector<1x64xf32>
    %129 = vector.broadcast %128 : vector<1x64xf32> to vector<104x64xf32>
    %130 = arith.addf %127, %129 : vector<104x64xf32>
    %cst_90 = arith.constant 0.000000e+00 : f32
    %131 = vector.broadcast %cst_90 : f32 to vector<104x64xf32>
    %132 = arith.cmpf oge, %130, %131 : vector<104x64xf32>
    %cst_91 = arith.constant 1.000000e-01 : f32
    %133 = vector.broadcast %cst_91 : f32 to vector<104x64xf32>
    %134 = arith.mulf %133, %130 : vector<104x64xf32>
    %135 = arith.select %132, %130, %134 : vector<104x64xi1>, vector<104x64xf32>
    %c728_92 = arith.constant 728 : index
    %c0_93 = arith.constant 0 : index
    %136 = vector.load %arg2[%c728_92, %c0_93] : memref<936x1xf32, #tpu.memory_space<vmem>>, vector<104x1xf32>
    %137 = vector.broadcast %136 : vector<104x1xf32> to vector<104x64xf32>
    %138 = arith.mulf %135, %137 : vector<104x64xf32>
    %139 = arith.truncf %138 : vector<104x64xf32> to vector<104x64xbf16>
    %c448 = arith.constant 448 : index
    %c0_94 = arith.constant 0 : index
    %140 = vector.load %arg5[%c448, %c0_94] : memref<576x128xbf16, #tpu.memory_space<vmem>>, vector<64x128xbf16>
    %cst_95 = arith.constant dense<0.000000e+00> : vector<104x128xf32>
    %141 = tpu.matmul %139, %140, %cst_95 {dimension_numbers = #tpu.dot_dimension_numbers<[1], [0], [0], [1], [0, 0, 1, 1], [], []>} : vector<104x64xbf16>, vector<64x128xbf16>, vector<104x128xf32> -> vector<104x128xf32>
    %142 = arith.addf %124, %141 : vector<104x128xf32>
    %c832 = arith.constant 832 : index
    %c0_96 = arith.constant 0 : index
    %143 = vector.load %arg1[%c832, %c0_96] : memref<936x16xbf16, #tpu.memory_space<vmem>>, vector<104x16xbf16>
    %c0_97 = arith.constant 0 : index
    %c0_98 = arith.constant 0 : index
    %144 = vector.load %arg3[%c0_97, %c0_98] : memref<16x64xbf16, #tpu.memory_space<vmem>>, vector<16x64xbf16>
    %cst_99 = arith.constant dense<0.000000e+00> : vector<104x64xf32>
    %145 = tpu.matmul %143, %144, %cst_99 {dimension_numbers = #tpu.dot_dimension_numbers<[1], [0], [0], [1], [0, 0, 1, 1], [], []>} : vector<104x16xbf16>, vector<16x64xbf16>, vector<104x64xf32> -> vector<104x64xf32>
    %c0_100 = arith.constant 0 : index
    %c0_101 = arith.constant 0 : index
    %146 = vector.load %arg4[%c0_100, %c0_101] : memref<1x64xf32, #tpu.memory_space<vmem>>, vector<1x64xf32>
    %147 = vector.broadcast %146 : vector<1x64xf32> to vector<104x64xf32>
    %148 = arith.addf %145, %147 : vector<104x64xf32>
    %cst_102 = arith.constant 0.000000e+00 : f32
    %149 = vector.broadcast %cst_102 : f32 to vector<104x64xf32>
    %150 = arith.cmpf oge, %148, %149 : vector<104x64xf32>
    %cst_103 = arith.constant 1.000000e-01 : f32
    %151 = vector.broadcast %cst_103 : f32 to vector<104x64xf32>
    %152 = arith.mulf %151, %148 : vector<104x64xf32>
    %153 = arith.select %150, %148, %152 : vector<104x64xi1>, vector<104x64xf32>
    %c832_104 = arith.constant 832 : index
    %c0_105 = arith.constant 0 : index
    %154 = vector.load %arg2[%c832_104, %c0_105] : memref<936x1xf32, #tpu.memory_space<vmem>>, vector<104x1xf32>
    %155 = vector.broadcast %154 : vector<104x1xf32> to vector<104x64xf32>
    %156 = arith.mulf %153, %155 : vector<104x64xf32>
    %157 = arith.truncf %156 : vector<104x64xf32> to vector<104x64xbf16>
    %c512 = arith.constant 512 : index
    %c0_106 = arith.constant 0 : index
    %158 = vector.load %arg5[%c512, %c0_106] : memref<576x128xbf16, #tpu.memory_space<vmem>>, vector<64x128xbf16>
    %cst_107 = arith.constant dense<0.000000e+00> : vector<104x128xf32>
    %159 = tpu.matmul %157, %158, %cst_107 {dimension_numbers = #tpu.dot_dimension_numbers<[1], [0], [0], [1], [0, 0, 1, 1], [], []>} : vector<104x64xbf16>, vector<64x128xbf16>, vector<104x128xf32> -> vector<104x128xf32>
    %160 = arith.addf %142, %159 : vector<104x128xf32>
    %161 = vector.extract_strided_slice %160 {offsets = [0, 0], sizes = [98, 128], strides = [1, 1]} : vector<104x128xf32> to vector<98x128xf32>
    %c0_108 = arith.constant 0 : index
    %c0_109 = arith.constant 0 : index
    %162 = vector.load %arg6[%c0_108, %c0_109] : memref<1x128xf32, #tpu.memory_space<vmem>>, vector<1x128xf32>
    %163 = vector.broadcast %162 : vector<1x128xf32> to vector<98x128xf32>
    %164 = arith.addf %161, %163 : vector<98x128xf32>
    %cst_110 = arith.constant 0.000000e+00 : f32
    %165 = vector.broadcast %cst_110 : f32 to vector<98x128xf32>
    %166 = arith.cmpf oge, %164, %165 : vector<98x128xf32>
    %cst_111 = arith.constant 1.000000e-01 : f32
    %167 = vector.broadcast %cst_111 : f32 to vector<98x128xf32>
    %168 = arith.mulf %167, %164 : vector<98x128xf32>
    %169 = arith.select %166, %164, %168 : vector<98x128xi1>, vector<98x128xf32>
    %170 = arith.truncf %169 : vector<98x128xf32> to vector<98x128xbf16>
    %c0_112 = arith.constant 0 : index
    %c0_113 = arith.constant 0 : index
    %171 = vector.load %arg7[%c0_112, %c0_113] : memref<98x128xbf16, #tpu.memory_space<vmem>>, vector<98x128xbf16>
    tpu.vector_store %arg7[%c0_112, %c0_113], %170 {strides = array<i32>} : memref<98x128xbf16, #tpu.memory_space<vmem>>, vector<98x128xbf16>,
    return
  }
  func.func @transform_0(%arg0: i32) -> (i32, i32) {
    %c0_i32 = arith.constant 0 : i32
    %c0_i32_0 = arith.constant 0 : i32
    %c0_i32_1 = arith.constant 0 : i32
    return %c0_i32, %c0_i32_0 : i32, i32
  }
  func.func @transform_1(%arg0: i32) -> (i32, i32) {
    %c0_i32 = arith.constant 0 : i32
    %c0_i32_0 = arith.constant 0 : i32
    %c0_i32_1 = arith.constant 0 : i32
    return %c0_i32, %c0_i32_0 : i32, i32
  }
  func.func @transform_2(%arg0: i32) -> (i32, i32) {
    %c0_i32 = arith.constant 0 : i32
    %c0_i32_0 = arith.constant 0 : i32
    %c0_i32_1 = arith.constant 0 : i32
    return %c0_i32, %c0_i32_0 : i32, i32
  }
  func.func @transform_3(%arg0: i32) -> (i32, i32) {
    %c0_i32 = arith.constant 0 : i32
    %c0_i32_0 = arith.constant 0 : i32
    %c0_i32_1 = arith.constant 0 : i32
    return %c0_i32, %c0_i32_0 : i32, i32
  }
  func.func @transform_4(%arg0: i32) -> (i32, i32) {
    %c0_i32 = arith.constant 0 : i32
    %c0_i32_0 = arith.constant 0 : i32
    %c0_i32_1 = arith.constant 0 : i32
    return %c0_i32, %c0_i32_0 : i32, i32
  }
  func.func @transform_5(%arg0: i32) -> (i32, i32) {
    %c0_i32 = arith.constant 0 : i32
    %c0_i32_0 = arith.constant 0 : i32
    %c0_i32_1 = arith.constant 0 : i32
    return %c0_i32, %c0_i32_0 : i32, i32
  }
  func.func @transform_6(%arg0: i32) -> (i32, i32) {
    %c0_i32 = arith.constant 0 : i32
    %c0_i32_0 = arith.constant 0 : i32
    %c0_i32_1 = arith.constant 0 : i32
    return %c0_i32, %c0_i32_0 : i32, i32
  }
}

module attributes {stable_mosaic.version = 11 : i64} {
  func.func @_linear_bn_lrelu_fc_kernel(%arg0: i32, %arg1: i32, %arg2: memref<2x896xbf16, #tpu.memory_space<vmem>>, %arg3: memref<896x1024xbf16, #tpu.memory_space<vmem>>, %arg4: memref<1x1024xf32, #tpu.memory_space<vmem>>, %arg5: memref<1x1024xf32, #tpu.memory_space<vmem>>, %arg6: memref<1x1024xf32, #tpu.memory_space<vmem>>, %arg7: memref<1x1xf32, #tpu.memory_space<vmem>>, %arg8: memref<2x1024xf32, #tpu.memory_space<vmem>>, %arg9: memref<1x2x1xf32, #tpu.memory_space<vmem>>) attributes {dimension_semantics = [#tpu.dimension_semantics<parallel>, #tpu.dimension_semantics<arbitrary>], iteration_bounds = array<i64: 1, 7>, scalar_prefetch = 0 : i64, scratch_operands = 0 : i64, tpu.core_type = #tpu.core_type<tc>, window_params = [{transform_indices = @transform_0, window_bounds = array<i64: 2, 896>}, {transform_indices = @transform_1, window_bounds = array<i64: 896, 1024>}, {transform_indices = @transform_2, window_bounds = array<i64: 1, 1024>}, {transform_indices = @transform_3, window_bounds = array<i64: 1, 1024>}, {transform_indices = @transform_4, window_bounds = array<i64: 1, 1024>}, {pipeline_mode = #tpu.pipeline_mode<synchronous>, transform_indices = @transform_5, window_bounds = array<i64: 1, 1>}, {transform_indices = @transform_6, window_bounds = array<i64: 2, 1024>}, {transform_indices = @transform_7, window_bounds = array<i64: 1, 2, 1>}]} {
    %c0_i32 = arith.constant 0 : i32
    %0 = arith.cmpi eq, %arg1, %c0_i32 : i32
    %1 = arith.extui %0 : i1 to i32
    %c0_i32_0 = arith.constant 0 : i32
    %2 = arith.cmpi ne, %1, %c0_i32_0 : i32
    scf.if %2 {
      %cst_9 = arith.constant 0.000000e+00 : f32
      %12 = vector.broadcast %cst_9 : f32 to vector<2x1024xf32>
      %c0_10 = arith.constant 0 : index
      %c0_11 = arith.constant 0 : index
      %13 = vector.load %arg8[%c0_10, %c0_11] : memref<2x1024xf32, #tpu.memory_space<vmem>>, vector<2x1024xf32>
      tpu.vector_store %arg8[%c0_10, %c0_11], %12 {strides = array<i32>} : memref<2x1024xf32, #tpu.memory_space<vmem>>, vector<2x1024xf32>,
    } else {
    }
    %c0 = arith.constant 0 : index
    %c0_1 = arith.constant 0 : index
    %3 = vector.load %arg8[%c0, %c0_1] : memref<2x1024xf32, #tpu.memory_space<vmem>>, vector<2x1024xf32>
    %c0_2 = arith.constant 0 : index
    %c0_3 = arith.constant 0 : index
    %4 = vector.load %arg2[%c0_2, %c0_3] : memref<2x896xbf16, #tpu.memory_space<vmem>>, vector<2x896xbf16>
    %c0_4 = arith.constant 0 : index
    %c0_5 = arith.constant 0 : index
    %5 = vector.load %arg3[%c0_4, %c0_5] : memref<896x1024xbf16, #tpu.memory_space<vmem>>, vector<896x1024xbf16>
    %cst = arith.constant dense<0.000000e+00> : vector<2x1024xf32>
    %6 = tpu.matmul %4, %5, %cst {dimension_numbers = #tpu.dot_dimension_numbers<[1], [0], [0], [1], [0, 0, 1, 1], [], []>} : vector<2x896xbf16>, vector<896x1024xbf16>, vector<2x1024xf32> -> vector<2x1024xf32>
    %7 = arith.addf %3, %6 : vector<2x1024xf32>
    %c0_6 = arith.constant 0 : index
    %c0_7 = arith.constant 0 : index
    %8 = vector.load %arg8[%c0_6, %c0_7] : memref<2x1024xf32, #tpu.memory_space<vmem>>, vector<2x1024xf32>
    tpu.vector_store %arg8[%c0_6, %c0_7], %7 {strides = array<i32>} : memref<2x1024xf32, #tpu.memory_space<vmem>>, vector<2x1024xf32>,
    %c6_i32 = arith.constant 6 : i32
    %9 = arith.cmpi eq, %arg1, %c6_i32 : i32
    %10 = arith.extui %9 : i1 to i32
    %c0_i32_8 = arith.constant 0 : i32
    %11 = arith.cmpi ne, %10, %c0_i32_8 : i32
    scf.if %11 {
      %c0_9 = arith.constant 0 : index
      %c0_10 = arith.constant 0 : index
      %12 = vector.load %arg8[%c0_9, %c0_10] : memref<2x1024xf32, #tpu.memory_space<vmem>>, vector<2x1024xf32>
      %c0_11 = arith.constant 0 : index
      %c0_12 = arith.constant 0 : index
      %13 = vector.load %arg4[%c0_11, %c0_12] : memref<1x1024xf32, #tpu.memory_space<vmem>>, vector<1x1024xf32>
      %14 = vector.broadcast %13 : vector<1x1024xf32> to vector<2x1024xf32>
      %15 = arith.mulf %12, %14 : vector<2x1024xf32>
      %c0_13 = arith.constant 0 : index
      %c0_14 = arith.constant 0 : index
      %16 = vector.load %arg5[%c0_13, %c0_14] : memref<1x1024xf32, #tpu.memory_space<vmem>>, vector<1x1024xf32>
      %17 = vector.broadcast %16 : vector<1x1024xf32> to vector<2x1024xf32>
      %18 = arith.addf %15, %17 : vector<2x1024xf32>
      %cst_15 = arith.constant 0.000000e+00 : f32
      %19 = vector.broadcast %cst_15 : f32 to vector<2x1024xf32>
      %20 = arith.cmpf oge, %18, %19 : vector<2x1024xf32>
      %cst_16 = arith.constant 1.000000e-01 : f32
      %21 = vector.broadcast %cst_16 : f32 to vector<2x1024xf32>
      %22 = arith.mulf %21, %18 : vector<2x1024xf32>
      %23 = arith.select %20, %18, %22 : vector<2x1024xi1>, vector<2x1024xf32>
      %c0_17 = arith.constant 0 : index
      %c0_18 = arith.constant 0 : index
      %24 = vector.load %arg8[%c0_17, %c0_18] : memref<2x1024xf32, #tpu.memory_space<vmem>>, vector<2x1024xf32>
      tpu.vector_store %arg8[%c0_17, %c0_18], %23 {strides = array<i32>} : memref<2x1024xf32, #tpu.memory_space<vmem>>, vector<2x1024xf32>,
      %c0_19 = arith.constant 0 : index
      %c0_20 = arith.constant 0 : index
      %25 = vector.load %arg6[%c0_19, %c0_20] : memref<1x1024xf32, #tpu.memory_space<vmem>>, vector<1x1024xf32>
      %26 = vector.broadcast %25 : vector<1x1024xf32> to vector<2x1024xf32>
      %27 = arith.mulf %23, %26 : vector<2x1024xf32>
      %cst_21 = arith.constant dense<0.000000e+00> : vector<2xf32>
      %28 = vector.multi_reduction <add>, %27, %cst_21 [1] : vector<2x1024xf32> to vector<2xf32>
      %29 = vector.shape_cast %28 : vector<2xf32> to vector<2x1xf32>
      %c0_22 = arith.constant 0 : index
      %c0_23 = arith.constant 0 : index
      %30 = vector.load %arg7[%c0_22, %c0_23] : memref<1x1xf32, #tpu.memory_space<vmem>>, vector<1x1xf32>
      %31 = vector.broadcast %30 : vector<1x1xf32> to vector<2x1xf32>
      %32 = arith.addf %29, %31 : vector<2x1xf32>
      %cst_24 = arith.constant 0.000000e+00 : f32
      %33 = vector.broadcast %cst_24 : f32 to vector<2x1xf32>
      %34 = arith.subf %33, %32 : vector<2x1xf32>
      %35 = math.exp %34 : vector<2x1xf32>
      %cst_25 = arith.constant 1.000000e+00 : f32
      %36 = vector.broadcast %cst_25 : f32 to vector<2x1xf32>
      %37 = arith.addf %36, %35 : vector<2x1xf32>
      %38 = tpu.reciprocal %37 {approx = true} : vector<2x1xf32> -> vector<2x1xf32>
      %c0_26 = arith.constant 0 : index
      %c0_27 = arith.constant 0 : index
      %c0_28 = arith.constant 0 : index
      %39 = vector.load %arg9[%c0_26, %c0_27, %c0_28] : memref<1x2x1xf32, #tpu.memory_space<vmem>>, vector<1x2x1xf32>
      %40 = vector.shape_cast %39 : vector<1x2x1xf32> to vector<2x1xf32>
      %41 = vector.shape_cast %38 : vector<2x1xf32> to vector<1x2x1xf32>
      tpu.vector_store %arg9[%c0_26, %c0_27, %c0_28], %41 {strides = array<i32>} : memref<1x2x1xf32, #tpu.memory_space<vmem>>, vector<1x2x1xf32>,
    } else {
    }
    return
  }
  func.func @transform_0(%arg0: i32, %arg1: i32) -> (i32, i32) {
    %c0_i32 = arith.constant 0 : i32
    %c0_i32_0 = arith.constant 0 : i32
    return %c0_i32, %arg1 : i32, i32
  }
  func.func @transform_1(%arg0: i32, %arg1: i32) -> (i32, i32) {
    %c0_i32 = arith.constant 0 : i32
    return %arg1, %arg0 : i32, i32
  }
  func.func @transform_2(%arg0: i32, %arg1: i32) -> (i32, i32) {
    %c0_i32 = arith.constant 0 : i32
    %c0_i32_0 = arith.constant 0 : i32
    return %c0_i32, %arg0 : i32, i32
  }
  func.func @transform_3(%arg0: i32, %arg1: i32) -> (i32, i32) {
    %c0_i32 = arith.constant 0 : i32
    %c0_i32_0 = arith.constant 0 : i32
    return %c0_i32, %arg0 : i32, i32
  }
  func.func @transform_4(%arg0: i32, %arg1: i32) -> (i32, i32) {
    %c0_i32 = arith.constant 0 : i32
    %c0_i32_0 = arith.constant 0 : i32
    return %c0_i32, %arg0 : i32, i32
  }
  func.func @transform_5(%arg0: i32, %arg1: i32) -> (i32, i32) {
    %c0_i32 = arith.constant 0 : i32
    %c0_i32_0 = arith.constant 0 : i32
    %c0_i32_1 = arith.constant 0 : i32
    return %c0_i32, %c0_i32_0 : i32, i32
  }
  func.func @transform_6(%arg0: i32, %arg1: i32) -> (i32, i32) {
    %c0_i32 = arith.constant 0 : i32
    %c0_i32_0 = arith.constant 0 : i32
    return %c0_i32, %arg0 : i32, i32
  }
  func.func @transform_7(%arg0: i32, %arg1: i32) -> (i32, i32, i32) {
    %c0_i32 = arith.constant 0 : i32
    %c0_i32_0 = arith.constant 0 : i32
    %c0_i32_1 = arith.constant 0 : i32
    return %arg0, %c0_i32, %c0_i32_0 : i32, i32, i32
  }
}

</mosaic_0001>

<llo_original>
// kernel: discriminator_forward.2
$region0: #{discriminator_forward.2}
  #allocation0 [shape = 'u32[]', space=smem, size = 0x4, offset = 0x4, fixed_abs, tag = 'smem constant byte address 0x4 - core index']
  #allocation1 [shape = 'u32[72,128]{1,0:T(1,128)}', space=vmem, size = 0x9000, scoped, tag = 'internal scratch']
  %s0 = inlined_call_operand.vmem [shape: bf16[936,16], index: 0, kind: input, shape index: {}]
  %s1 = inlined_call_operand.hbm [shape: f32[936,1], index: 1, kind: input, shape index: {}]
  %s2 = inlined_call_operand.hbm [shape: bf16[16,64], index: 2, kind: input, shape index: {}]
  %s3 = inlined_call_operand.hbm [shape: f32[1,64], index: 3, kind: input, shape index: {}]
  %s4 = inlined_call_operand.hbm [shape: bf16[576,128], index: 4, kind: input, shape index: {}]
  %s5 = inlined_call_operand.hbm [shape: f32[1,128], index: 5, kind: input, shape index: {}]
  %s6 = inlined_call_operand.vmem [shape: bf16[98,128], index: 6, kind: output, shape index: {}]
  %s7 = sld [smem:[#allocation0]]
  $region54: #{discriminator_forward.2} parent=0
    _
  %s9 = ssub.s32 1, %s7
  %s10 = scalar_select 0, %s9, %s7
  $region1: #{discriminator_forward.2} parent=0
    #allocation2 [shape = 'u8[479232]{0}', space=vmem, size = 0x75000, scoped, tag = 'input window, operand 1, single buffered']
    #allocation3 [shape = 's32[1]{0}', space=sflag, size = 0x4, scoped, tag = 'scoped memory for discriminator_forward.2']
    #allocation4 [shape = 'u8[4096]{0}', space=vmem, size = 0x1000, scoped, tag = 'input window, operand 2, single buffered']
    #allocation5 [shape = 's32[1]{0}', space=sflag, size = 0x4, scoped, tag = 'scoped memory for discriminator_forward.2']
    #allocation6 [shape = 'u8[512]{0}', space=vmem, size = 0x400, scoped, tag = 'input window, operand 3, single buffered']
    #allocation7 [shape = 'u8[147456]{0}', space=vmem, size = 0x24000, scoped, tag = 'input window, operand 4, single buffered']
    #allocation8 [shape = 's32[1]{0}', space=sflag, size = 0x4, scoped, tag = 'scoped memory for discriminator_forward.2']
    #allocation9 [shape = 'u8[512]{0}', space=vmem, size = 0x400, scoped, tag = 'input window, operand 5, single buffered']
    %11 = vsyncpa [#allocation3], 0
    %12 = vsyncpa [#allocation5], 0
    %13 = vsyncpa [#allocation8], 0
    // Predicated region
    $region2: #{discriminator_forward.2} parent=1 // pred_check
      _
    $region3: #{discriminator_forward.2} parent=1 // pred_check_branch
      %15 = sbr.rel (0) target = $region5
    $region4: #{discriminator_forward.2} parent=1 // pred_region
      _
    $region5: #{discriminator_forward.2} parent=1 // pred_fallthru
      _
    // Predicated region
    $region6: #{discriminator_forward.2} parent=1 // pred_check
      _
    $region7: #{discriminator_forward.2} parent=1 // pred_check_branch
      %17 = sbr.rel (0) target = $region9
    $region8: #{discriminator_forward.2} parent=1 // pred_region
      %19 = vsyncadd [#allocation3], 0
      %s20 = sshll.u32 %s1, 4
      %s21 = int_to_ptr.hbm [resolvable:$true] %s20
      %s22 = sshll.u32 [#allocation2], 4
      %s23 = int_to_ptr.vmem [resolvable:$true] %s22
      %28 = dma.hbm_to_vmem [thread:$0]  %s21, 14976, %s23, [#allocation3], 128, 128, 8
    $region9: #{discriminator_forward.2} parent=1 // pred_fallthru
      _
    // Predicated region
    $region10: #{discriminator_forward.2} parent=1 // pred_check
      _
    $region11: #{discriminator_forward.2} parent=1 // pred_check_branch
      %30 = sbr.rel (0) target = $region13
    $region12: #{discriminator_forward.2} parent=1 // pred_region
      %32 = vsyncadd [#allocation5], 0
      %s33 = sshll.u32 %s2, 4
      %s34 = int_to_ptr.hbm [resolvable:$true] %s33
      %s35 = sshll.u32 [#allocation4], 4
      %s36 = int_to_ptr.vmem [resolvable:$true] %s35
      %41 = dma.hbm_to_vmem [thread:$0]  %s34, 128, %s36, [#allocation5], 64, 64, 4
    $region13: #{discriminator_forward.2} parent=1 // pred_fallthru
      _
    // Predicated region
    $region14: #{discriminator_forward.2} parent=1 // pred_check
      _
    $region15: #{discriminator_forward.2} parent=1 // pred_check_branch
      %43 = sbr.rel (0) target = $region17
    $region16: #{discriminator_forward.2} parent=1 // pred_region
      %45 = vsyncadd [#allocation5], 0
      %s47 = sshll.u32 %s3, 4
      %s48 = int_to_ptr.hbm [resolvable:$true] %s47
      %s49 = sshll.u32 [#allocation6], 4
      %s50 = int_to_ptr.vmem [resolvable:$true] %s49
      %52 = dma.hbm_to_vmem [thread:$0]  %s48, 16, %s50, [#allocation5]
    $region17: #{discriminator_forward.2} parent=1 // pred_fallthru
      _
    // Predicated region
    $region18: #{discriminator_forward.2} parent=1 // pred_check
      _
    $region19: #{discriminator_forward.2} parent=1 // pred_check_branch
      %54 = sbr.rel (0) target = $region21
    $region20: #{discriminator_forward.2} parent=1 // pred_region
      %56 = vsyncadd [#allocation8], 0
      %s57 = sshll.u32 %s4, 4
      %s58 = int_to_ptr.hbm [resolvable:$true] %s57
      %s59 = sshll.u32 [#allocation7], 4
      %s60 = int_to_ptr.vmem [resolvable:$true] %s59
      %65 = dma.hbm_to_vmem [thread:$0]  %s58, 4608, %s60, [#allocation8], 64, 64, 4
    $region21: #{discriminator_forward.2} parent=1 // pred_fallthru
      _
    // Predicated region
    $region22: #{discriminator_forward.2} parent=1 // pred_check
      _
    $region23: #{discriminator_forward.2} parent=1 // pred_check_branch
      %67 = sbr.rel (0) target = $region25
    $region24: #{discriminator_forward.2} parent=1 // pred_region
      %69 = vsyncadd [#allocation8], 0
      %s71 = sshll.u32 %s5, 4
      %s72 = int_to_ptr.hbm [resolvable:$true] %s71
      %s73 = sshll.u32 [#allocation9], 4
      %s74 = int_to_ptr.vmem [resolvable:$true] %s73
      %76 = dma.hbm_to_vmem [thread:$0]  %s72, 16, %s74, [#allocation8]
    $region25: #{discriminator_forward.2} parent=1 // pred_fallthru
      _
    // Predicated region
    $region26: #{discriminator_forward.2} parent=1 // pred_check
      _
    $region27: #{discriminator_forward.2} parent=1 // pred_check_branch
      %78 = sbr.rel (0) target = $region29
    $region28: #{discriminator_forward.2} parent=1 // pred_region
      %80 = dma.done [#allocation3], 14976
    $region29: #{discriminator_forward.2} parent=1 // pred_fallthru
      _
    // Predicated region
    $region30: #{discriminator_forward.2} parent=1 // pred_check
      _
    $region31: #{discriminator_forward.2} parent=1 // pred_check_branch
      %82 = sbr.rel (0) target = $region33
    $region32: #{discriminator_forward.2} parent=1 // pred_region
      %84 = dma.done [#allocation5], 128
    $region33: #{discriminator_forward.2} parent=1 // pred_fallthru
      _
    // Predicated region
    $region34: #{discriminator_forward.2} parent=1 // pred_check
      _
    $region35: #{discriminator_forward.2} parent=1 // pred_check_branch
      %86 = sbr.rel (0) target = $region37
    $region36: #{discriminator_forward.2} parent=1 // pred_region
      %88 = dma.done [#allocation5], 16
    $region37: #{discriminator_forward.2} parent=1 // pred_fallthru
      _
    // Predicated region
    $region38: #{discriminator_forward.2} parent=1 // pred_check
      _
    $region39: #{discriminator_forward.2} parent=1 // pred_check_branch
      %90 = sbr.rel (0) target = $region41
    $region40: #{discriminator_forward.2} parent=1 // pred_region
      %92 = dma.done [#allocation8], 4608
    $region41: #{discriminator_forward.2} parent=1 // pred_fallthru
      _
    // Predicated region
    $region42: #{discriminator_forward.2} parent=1 // pred_check
      _
    $region43: #{discriminator_forward.2} parent=1 // pred_check_branch
      %94 = sbr.rel (0) target = $region45
    $region44: #{discriminator_forward.2} parent=1 // pred_region
      %96 = dma.done [#allocation8], 16
    $region45: #{discriminator_forward.2} parent=1 // pred_fallthru
      _
    %v98 = vld [vmem:[%s0] sm:$0xf]
    %v99 = vld [vmem:[%s0 + $0x4] sm:$0xf]
    %v100 = vld [vmem:[%s0 + $0x8] sm:$0xf]
    %v101 = vld [vmem:[%s0 + $0xc] sm:$0xf]
    %v102 = vld [vmem:[%s0 + $0x10] sm:$0xf]
    %v103 = vld [vmem:[%s0 + $0x14] sm:$0xf]
    %v104 = vld [vmem:[%s0 + $0x18] sm:$0xf]
    %v105 = vld [vmem:[%s0 + $0x1c] sm:$0xf]
    %v106 = vld [vmem:[%s0 + $0x20] sm:$0xf]
    %v107 = vld [vmem:[%s0 + $0x24] sm:$0xf]
    %v108 = vld [vmem:[%s0 + $0x28] sm:$0xf]
    %v109 = vld [vmem:[%s0 + $0x2c] sm:$0xf]
    %v110 = vld [vmem:[%s0 + $0x30] sm:$0xf]
    %v111 = vld [vmem:[#allocation4] sm:$0xf]
    %v112 = vld [vmem:[#allocation4 + $0x4] sm:$0xf]
    %v113 = vld [vmem:[#allocation6] sm:$0x1]
    %v115 = vperm.slane %v113, 0
    %v130 = vunpack.c.l.b16 %v98
    %v131 = vunpack.c.l.b16 %v99
    %v132 = vunpack.c.l.b16 %v100
    %v133 = vunpack.c.l.b16 %v101
    %v134 = vunpack.c.l.b16 %v102
    %v135 = vunpack.c.l.b16 %v103
    %v136 = vunpack.c.l.b16 %v104
    %v137 = vunpack.c.l.b16 %v105
    %v138 = vunpack.c.l.b16 %v106
    %v139 = vunpack.c.l.b16 %v107
    %v140 = vunpack.c.l.b16 %v108
    %v141 = vunpack.c.l.b16 %v109
    %v142 = vunpack.c.l.b16 %v110
    %v143 = vpack.c.b16 %v131, %v130
    %v144 = vpack.c.b16 %v133, %v132
    %v145 = vpack.c.b16 %v135, %v134
    %v146 = vpack.c.b16 %v137, %v136
    %v147 = vpack.c.b16 %v139, %v138
    %v148 = vpack.c.b16 %v141, %v140
    %v149 = vpack.c.b16 %v142, %v142
    %v152 = vunpack.c.l.b16 %v111
    %v153 = vunpack.c.l.b16 %v112
    %v154 = vpack.c.b16 %v153, %v152
    %vm156 = vcmask 130048
    %v158 = vsel %vm156, %v143, 0
    %v161 = vsel %vm156, %v144, 0
    %v164 = vsel %vm156, %v145, 0
    %v167 = vsel %vm156, %v146, 0
    %v170 = vsel %vm156, %v147, 0
    %v173 = vsel %vm156, %v148, 0
    %v176 = vsel %vm156, %v149, 0
    %178 = vmatpush.bf16.msra.mxu0 0
    %179 = vmatpush.bf16.msra.mxu0 0
    %180 = vmatpush.bf16.msra.mxu0 0
    %181 = vmatpush.bf16.msra.mxu0 0
    %182 = vmatpush.bf16.msra.mxu0 0
    %183 = vmatpush.bf16.msra.mxu0 0
    %184 = vmatpush.bf16.msra.mxu0 0
    %185 = vmatpush.bf16.msra.mxu0 %v154
    %186 = vmatmul.bf16.gmra.mxu0 %v158
    %v187 = vpop.f32.mrf.mxu0
    %v188 = vadd.f32 %v115, %v187
    %v189 = vpop.f32.mrf.mxu0
    %v190 = vadd.f32 %v115, %v189
    %191 = vmatmul.bf16.gmra.mxu0 %v161
    %v192 = vpop.f32.mrf.mxu0
    %v193 = vadd.f32 %v115, %v192
    %v194 = vpop.f32.mrf.mxu0
    %v195 = vadd.f32 %v115, %v194
    %196 = vmatmul.bf16.gmra.mxu0 %v164
    %v197 = vpop.f32.mrf.mxu0
    %v198 = vadd.f32 %v115, %v197
    %v199 = vpop.f32.mrf.mxu0
    %v200 = vadd.f32 %v115, %v199
    %201 = vmatmul.bf16.gmra.mxu0 %v167
    %v202 = vpop.f32.mrf.mxu0
    %v203 = vadd.f32 %v115, %v202
    %v204 = vpop.f32.mrf.mxu0
    %v205 = vadd.f32 %v115, %v204
    %206 = vmatmul.bf16.gmra.mxu0 %v170
    %v207 = vpop.f32.mrf.mxu0
    %v208 = vadd.f32 %v115, %v207
    %v209 = vpop.f32.mrf.mxu0
    %v210 = vadd.f32 %v115, %v209
    %211 = vmatmul.bf16.gmra.mxu0 %v173
    %v212 = vpop.f32.mrf.mxu0
    %v213 = vadd.f32 %v115, %v212
    %v214 = vpop.f32.mrf.mxu0
    %v215 = vadd.f32 %v115, %v214
    %216 = vmatmul.bf16.gmra.mxu0 %v176
    %v217 = vpop.f32.mrf.mxu0
    %v218 = vadd.f32 %v115, %v217
    %v219 = vpop.f32.mrf.mxu0
    %220 = vdwg.mxu0
    %vm221 = vcmp.ge.f32.partialorder %v188, 0.0
    %vm222 = vcmp.ge.f32.partialorder %v190, 0.0
    %vm223 = vcmp.ge.f32.partialorder %v193, 0.0
    %vm224 = vcmp.ge.f32.partialorder %v195, 0.0
    %vm225 = vcmp.ge.f32.partialorder %v198, 0.0
    %vm226 = vcmp.ge.f32.partialorder %v200, 0.0
    %vm227 = vcmp.ge.f32.partialorder %v203, 0.0
    %vm228 = vcmp.ge.f32.partialorder %v205, 0.0
    %vm229 = vcmp.ge.f32.partialorder %v208, 0.0
    %vm230 = vcmp.ge.f32.partialorder %v210, 0.0
    %vm231 = vcmp.ge.f32.partialorder %v213, 0.0
    %vm232 = vcmp.ge.f32.partialorder %v215, 0.0
    %vm233 = vcmp.ge.f32.partialorder %v218, 0.0
    %v234 = vmul.f32 %v188, 0.1
    %v235 = vmul.f32 %v190, 0.1
    %v236 = vmul.f32 %v193, 0.1
    %v237 = vmul.f32 %v195, 0.1
    %v238 = vmul.f32 %v198, 0.1
    %v239 = vmul.f32 %v200, 0.1
    %v240 = vmul.f32 %v203, 0.1
    %v241 = vmul.f32 %v205, 0.1
    %v242 = vmul.f32 %v208, 0.1
    %v243 = vmul.f32 %v210, 0.1
    %v244 = vmul.f32 %v213, 0.1
    %v245 = vmul.f32 %v215, 0.1
    %v246 = vmul.f32 %v218, 0.1
    %v247 = vsel %vm221, %v188, %v234
    %v248 = vsel %vm222, %v190, %v235
    %v249 = vsel %vm223, %v193, %v236
    %v250 = vsel %vm224, %v195, %v237
    %v251 = vsel %vm225, %v198, %v238
    %v252 = vsel %vm226, %v200, %v239
    %v253 = vsel %vm227, %v203, %v240
    %v254 = vsel %vm228, %v205, %v241
    %v255 = vsel %vm229, %v208, %v242
    %v256 = vsel %vm230, %v210, %v243
    %v257 = vsel %vm231, %v213, %v244
    %v258 = vsel %vm232, %v215, %v245
    %v259 = vsel %vm233, %v218, %v246
    %v260 = vld [vmem:[#allocation2] sm:$0xff]
    %v261 = vld [vmem:[#allocation2 + $0x8] sm:$0xff]
    %v262 = vld [vmem:[#allocation2 + $0x10] sm:$0xff]
    %v263 = vld [vmem:[#allocation2 + $0x18] sm:$0xff]
    %v264 = vld [vmem:[#allocation2 + $0x20] sm:$0xff]
    %v265 = vld [vmem:[#allocation2 + $0x28] sm:$0xff]
    %v266 = vld [vmem:[#allocation2 + $0x30] sm:$0xff]
    %v267 = vld [vmem:[#allocation2 + $0x38] sm:$0xff]
    %v268 = vld [vmem:[#allocation2 + $0x40] sm:$0xff]
    %v269 = vld [vmem:[#allocation2 + $0x48] sm:$0xff]
    %v270 = vld [vmem:[#allocation2 + $0x50] sm:$0xff]
    %v271 = vld [vmem:[#allocation2 + $0x58] sm:$0xff]
    %v272 = vld [vmem:[#allocation2 + $0x60] sm:$0xff]
    %274 = vset.pattern.permute.xlu0 0
    %275 = vperm.xlu0 %274, %v260
    %v276 = vpop.permute.xlu0 %275
    %279 = vset.pattern.permute.xlu0 0
    %280 = vperm.xlu0 %279, %v261
    %v281 = vpop.permute.xlu0 %280
    %284 = vset.pattern.permute.xlu0 0
    %285 = vperm.xlu0 %284, %v262
    %v286 = vpop.permute.xlu0 %285
    %289 = vset.pattern.permute.xlu0 0
    %290 = vperm.xlu0 %289, %v263
    %v291 = vpop.permute.xlu0 %290
    %294 = vset.pattern.permute.xlu0 0
    %295 = vperm.xlu0 %294, %v264
    %v296 = vpop.permute.xlu0 %295
    %299 = vset.pattern.permute.xlu0 0
    %300 = vperm.xlu0 %299, %v265
    %v301 = vpop.permute.xlu0 %300
    %304 = vset.pattern.permute.xlu0 0
    %305 = vperm.xlu0 %304, %v266
    %v306 = vpop.permute.xlu0 %305
    %309 = vset.pattern.permute.xlu0 0
    %310 = vperm.xlu0 %309, %v267
    %v311 = vpop.permute.xlu0 %310
    %314 = vset.pattern.permute.xlu0 0
    %315 = vperm.xlu0 %314, %v268
    %v316 = vpop.permute.xlu0 %315
    %319 = vset.pattern.permute.xlu0 0
    %320 = vperm.xlu0 %319, %v269
    %v321 = vpop.permute.xlu0 %320
    %324 = vset.pattern.permute.xlu0 0
    %325 = vperm.xlu0 %324, %v270
    %v326 = vpop.permute.xlu0 %325
    %329 = vset.pattern.permute.xlu0 0
    %330 = vperm.xlu0 %329, %v271
    %v331 = vpop.permute.xlu0 %330
    %334 = vset.pattern.permute.xlu0 0
    %335 = vperm.xlu0 %334, %v272
    %v336 = vpop.permute.xlu0 %335
    %v338 = vmul.f32 %v247, %v276
    %v339 = vmul.f32 %v248, %v281
    %v340 = vmul.f32 %v249, %v286
    %v341 = vmul.f32 %v250, %v291
    %v342 = vmul.f32 %v251, %v296
    %v343 = vmul.f32 %v252, %v301
    %v344 = vmul.f32 %v253, %v306
    %v345 = vmul.f32 %v254, %v311
    %v346 = vmul.f32 %v255, %v316
    %v347 = vmul.f32 %v256, %v321
    %v348 = vmul.f32 %v257, %v326
    %v349 = vmul.f32 %v258, %v331
    %v350 = vmul.f32 %v259, %v336
    %v351 = vpack.c.bf16 %v339, %v338
    %v352 = vpack.c.bf16 %v341, %v340
    %v353 = vpack.c.bf16 %v343, %v342
    %v354 = vpack.c.bf16 %v345, %v344
    %v355 = vpack.c.bf16 %v347, %v346
    %v356 = vpack.c.bf16 %v349, %v348
    %v357 = vpack.c.bf16 %v350, %v350
    %v358 = vld [vmem:[#allocation7] sm:$0xf]
    %v359 = vld [vmem:[#allocation7 + $0x4] sm:$0xf]
    %v360 = vld [vmem:[#allocation7 + $0x8] sm:$0xf]
    %v361 = vld [vmem:[#allocation7 + $0xc] sm:$0xf]
    %v362 = vld [vmem:[#allocation7 + $0x10] sm:$0xf]
    %v363 = vld [vmem:[#allocation7 + $0x14] sm:$0xf]
    %v364 = vld [vmem:[#allocation7 + $0x18] sm:$0xf]
    %v365 = vld [vmem:[#allocation7 + $0x1c] sm:$0xf]
    %v366 = vld [vmem:[%s0 + $0x34] sm:$0xf]
    %v367 = vld [vmem:[%s0 + $0x38] sm:$0xf]
    %v368 = vld [vmem:[%s0 + $0x3c] sm:$0xf]
    %v369 = vld [vmem:[%s0 + $0x40] sm:$0xf]
    %v370 = vld [vmem:[%s0 + $0x44] sm:$0xf]
    %v371 = vld [vmem:[%s0 + $0x48] sm:$0xf]
    %v372 = vld [vmem:[%s0 + $0x4c] sm:$0xf]
    %v373 = vld [vmem:[%s0 + $0x50] sm:$0xf]
    %v374 = vld [vmem:[%s0 + $0x54] sm:$0xf]
    %v375 = vld [vmem:[%s0 + $0x58] sm:$0xf]
    %v376 = vld [vmem:[%s0 + $0x5c] sm:$0xf]
    %v377 = vld [vmem:[%s0 + $0x60] sm:$0xf]
    %v378 = vld [vmem:[%s0 + $0x64] sm:$0xf]
    %v392 = vunpack.c.l.b16 %v366
    %v393 = vunpack.c.l.b16 %v367
    %v394 = vunpack.c.l.b16 %v368
    %v395 = vunpack.c.l.b16 %v369
    %v396 = vunpack.c.l.b16 %v370
    %v397 = vunpack.c.l.b16 %v371
    %v398 = vunpack.c.l.b16 %v372
    %v399 = vunpack.c.l.b16 %v373
    %v400 = vunpack.c.l.b16 %v374
    %v401 = vunpack.c.l.b16 %v375
    %v402 = vunpack.c.l.b16 %v376
    %v403 = vunpack.c.l.b16 %v377
    %v404 = vunpack.c.l.b16 %v378
    %v405 = vpack.c.b16 %v393, %v392
    %v406 = vpack.c.b16 %v395, %v394
    %v407 = vpack.c.b16 %v397, %v396
    %v408 = vpack.c.b16 %v399, %v398
    %v409 = vpack.c.b16 %v401, %v400
    %v410 = vpack.c.b16 %v403, %v402
    %v411 = vpack.c.b16 %v404, %v404
    %v413 = vsel %vm156, %v405, 0
    %v416 = vsel %vm156, %v406, 0
    %v419 = vsel %vm156, %v407, 0
    %v422 = vsel %vm156, %v408, 0
    %v425 = vsel %vm156, %v409, 0
    %v428 = vsel %vm156, %v410, 0
    %v431 = vsel %vm156, %v411, 0
    %433 = vmatpush.bf16.msra.mxu0 0
    %434 = vmatpush.bf16.msra.mxu0 0
    %435 = vmatpush.bf16.msra.mxu0 0
    %436 = vmatpush.bf16.msra.mxu0 0
    %437 = vmatpush.bf16.msra.mxu0 0
    %438 = vmatpush.bf16.msra.mxu0 0
    %439 = vmatpush.bf16.msra.mxu0 0
    %440 = vmatpush.bf16.msra.mxu0 %v154
    %441 = vmatmul.bf16.gmra.mxu0 %v413
    %v442 = vpop.f32.mrf.mxu0
    %v443 = vadd.f32 %v115, %v442
    %v444 = vpop.f32.mrf.mxu0
    %v445 = vadd.f32 %v115, %v444
    %446 = vmatmul.bf16.gmra.mxu0 %v416
    %v447 = vpop.f32.mrf.mxu0
    %v448 = vadd.f32 %v115, %v447
    %v449 = vpop.f32.mrf.mxu0
    %v450 = vadd.f32 %v115, %v449
    %451 = vmatmul.bf16.gmra.mxu0 %v419
    %v452 = vpop.f32.mrf.mxu0
    %v453 = vadd.f32 %v115, %v452
    %v454 = vpop.f32.mrf.mxu0
    %v455 = vadd.f32 %v115, %v454
    %456 = vmatmul.bf16.gmra.mxu0 %v422
    %v457 = vpop.f32.mrf.mxu0
    %v458 = vadd.f32 %v115, %v457
    %v459 = vpop.f32.mrf.mxu0
    %v460 = vadd.f32 %v115, %v459
    %461 = vmatmul.bf16.gmra.mxu0 %v425
    %v462 = vpop.f32.mrf.mxu0
    %v463 = vadd.f32 %v115, %v462
    %v464 = vpop.f32.mrf.mxu0
    %v465 = vadd.f32 %v115, %v464
    %466 = vmatmul.bf16.gmra.mxu0 %v428
    %v467 = vpop.f32.mrf.mxu0
    %v468 = vadd.f32 %v115, %v467
    %v469 = vpop.f32.mrf.mxu0
    %v470 = vadd.f32 %v115, %v469
    %471 = vmatmul.bf16.gmra.mxu0 %v431
    %v472 = vpop.f32.mrf.mxu0
    %v473 = vadd.f32 %v115, %v472
    %v474 = vpop.f32.mrf.mxu0
    %475 = vdwg.mxu0
    %vm476 = vcmp.ge.f32.partialorder %v443, 0.0
    %vm477 = vcmp.ge.f32.partialorder %v445, 0.0
    %vm478 = vcmp.ge.f32.partialorder %v448, 0.0
    %vm479 = vcmp.ge.f32.partialorder %v450, 0.0
    %vm480 = vcmp.ge.f32.partialorder %v453, 0.0
    %vm481 = vcmp.ge.f32.partialorder %v455, 0.0
    %vm482 = vcmp.ge.f32.partialorder %v458, 0.0
    %vm483 = vcmp.ge.f32.partialorder %v460, 0.0
    %vm484 = vcmp.ge.f32.partialorder %v463, 0.0
    %vm485 = vcmp.ge.f32.partialorder %v465, 0.0
    %vm486 = vcmp.ge.f32.partialorder %v468, 0.0
    %vm487 = vcmp.ge.f32.partialorder %v470, 0.0
    %vm488 = vcmp.ge.f32.partialorder %v473, 0.0
    %v489 = vmul.f32 %v443, 0.1
    %v490 = vmul.f32 %v445, 0.1
    %v491 = vmul.f32 %v448, 0.1
    %v492 = vmul.f32 %v450, 0.1
    %v493 = vmul.f32 %v453, 0.1
    %v494 = vmul.f32 %v455, 0.1
    %v495 = vmul.f32 %v458, 0.1
    %v496 = vmul.f32 %v460, 0.1
    %v497 = vmul.f32 %v463, 0.1
    %v498 = vmul.f32 %v465, 0.1
    %v499 = vmul.f32 %v468, 0.1
    %v500 = vmul.f32 %v470, 0.1
    %v501 = vmul.f32 %v473, 0.1
    %v502 = vsel %vm476, %v443, %v489
    %v503 = vsel %vm477, %v445, %v490
    %v504 = vsel %vm478, %v448, %v491
    %v505 = vsel %vm479, %v450, %v492
    %v506 = vsel %vm480, %v453, %v493
    %v507 = vsel %vm481, %v455, %v494
    %v508 = vsel %vm482, %v458, %v495
    %v509 = vsel %vm483, %v460, %v496
    %v510 = vsel %vm484, %v463, %v497
    %v511 = vsel %vm485, %v465, %v498
    %v512 = vsel %vm486, %v468, %v499
    %v513 = vsel %vm487, %v470, %v500
    %v514 = vsel %vm488, %v473, %v501
    %v515 = vld [vmem:[#allocation2 + $0x68] sm:$0xff]
    %v516 = vld [vmem:[#allocation2 + $0x70] sm:$0xff]
    %v517 = vld [vmem:[#allocation2 + $0x78] sm:$0xff]
    %v518 = vld [vmem:[#allocation2 + $0x80] sm:$0xff]
    %v519 = vld [vmem:[#allocation2 + $0x88] sm:$0xff]
    %v520 = vld [vmem:[#allocation2 + $0x90] sm:$0xff]
    %v521 = vld [vmem:[#allocation2 + $0x98] sm:$0xff]
    %v522 = vld [vmem:[#allocation2 + $0xa0] sm:$0xff]
    %v523 = vld [vmem:[#allocation2 + $0xa8] sm:$0xff]
    %v524 = vld [vmem:[#allocation2 + $0xb0] sm:$0xff]
    %v525 = vld [vmem:[#allocation2 + $0xb8] sm:$0xff]
    %v526 = vld [vmem:[#allocation2 + $0xc0] sm:$0xff]
    %v527 = vld [vmem:[#allocation2 + $0xc8] sm:$0xff]
    %529 = vset.pattern.permute.xlu0 0
    %530 = vperm.xlu0 %529, %v515
    %v531 = vpop.permute.xlu0 %530
    %534 = vset.pattern.permute.xlu0 0
    %535 = vperm.xlu0 %534, %v516
    %v536 = vpop.permute.xlu0 %535
    %539 = vset.pattern.permute.xlu0 0
    %540 = vperm.xlu0 %539, %v517
    %v541 = vpop.permute.xlu0 %540
    %544 = vset.pattern.permute.xlu0 0
    %545 = vperm.xlu0 %544, %v518
    %v546 = vpop.permute.xlu0 %545
    %549 = vset.pattern.permute.xlu0 0
    %550 = vperm.xlu0 %549, %v519
    %v551 = vpop.permute.xlu0 %550
    %554 = vset.pattern.permute.xlu0 0
    %555 = vperm.xlu0 %554, %v520
    %v556 = vpop.permute.xlu0 %555
    %559 = vset.pattern.permute.xlu0 0
    %560 = vperm.xlu0 %559, %v521
    %v561 = vpop.permute.xlu0 %560
    %564 = vset.pattern.permute.xlu0 0
    %565 = vperm.xlu0 %564, %v522
    %v566 = vpop.permute.xlu0 %565
    %569 = vset.pattern.permute.xlu0 0
    %570 = vperm.xlu0 %569, %v523
    %v571 = vpop.permute.xlu0 %570
    %574 = vset.pattern.permute.xlu0 0
    %575 = vperm.xlu0 %574, %v524
    %v576 = vpop.permute.xlu0 %575
    %579 = vset.pattern.permute.xlu0 0
    %580 = vperm.xlu0 %579, %v525
    %v581 = vpop.permute.xlu0 %580
    %584 = vset.pattern.permute.xlu0 0
    %585 = vperm.xlu0 %584, %v526
    %v586 = vpop.permute.xlu0 %585
    %589 = vset.pattern.permute.xlu0 0
    %590 = vperm.xlu0 %589, %v527
    %v591 = vpop.permute.xlu0 %590
    %v593 = vmul.f32 %v502, %v531
    %v594 = vmul.f32 %v503, %v536
    %v595 = vmul.f32 %v504, %v541
    %v596 = vmul.f32 %v505, %v546
    %v597 = vmul.f32 %v506, %v551
    %v598 = vmul.f32 %v507, %v556
    %v599 = vmul.f32 %v508, %v561
    %v600 = vmul.f32 %v509, %v566
    %v601 = vmul.f32 %v510, %v571
    %v602 = vmul.f32 %v511, %v576
    %v603 = vmul.f32 %v512, %v581
    %v604 = vmul.f32 %v513, %v586
    %v605 = vmul.f32 %v514, %v591
    %v606 = vpack.c.bf16 %v594, %v593
    %v607 = vpack.c.bf16 %v596, %v595
    %v608 = vpack.c.bf16 %v598, %v597
    %v609 = vpack.c.bf16 %v600, %v599
    %v610 = vpack.c.bf16 %v602, %v601
    %v611 = vpack.c.bf16 %v604, %v603
    %v612 = vpack.c.bf16 %v605, %v605
    %v613 = vld [vmem:[#allocation7 + $0x20] sm:$0xf]
    %v614 = vld [vmem:[#allocation7 + $0x24] sm:$0xf]
    %v615 = vld [vmem:[#allocation7 + $0x28] sm:$0xf]
    %v616 = vld [vmem:[#allocation7 + $0x2c] sm:$0xf]
    %v617 = vld [vmem:[#allocation7 + $0x30] sm:$0xf]
    %v618 = vld [vmem:[#allocation7 + $0x34] sm:$0xf]
    %v619 = vld [vmem:[#allocation7 + $0x38] sm:$0xf]
    %v620 = vld [vmem:[#allocation7 + $0x3c] sm:$0xf]
    %v629 = vunpack.c.l.b16 %v613
    %v630 = vunpack.c.l.b16 %v614
    %v631 = vunpack.c.l.b16 %v615
    %v632 = vunpack.c.l.b16 %v616
    %v633 = vunpack.c.l.b16 %v617
    %v634 = vunpack.c.l.b16 %v618
    %v635 = vunpack.c.l.b16 %v619
    %v636 = vunpack.c.l.b16 %v620
    %v637 = vpack.c.b16 %v630, %v629
    %v638 = vpack.c.b16 %v632, %v631
    %v639 = vpack.c.b16 %v634, %v633
    %v640 = vpack.c.b16 %v636, %v635
    %vm645 = vcmask 523264
    %v647 = vsel %vm645, %v606, 0
    %v650 = vsel %vm645, %v607, 0
    %v653 = vsel %vm645, %v608, 0
    %v656 = vsel %vm645, %v609, 0
    %v659 = vsel %vm645, %v610, 0
    %v662 = vsel %vm645, %v611, 0
    %v665 = vsel %vm645, %v612, 0
    %667 = vmatpush.bf16.msra.mxu0 0
    %668 = vmatpush.bf16.msra.mxu0 0
    %669 = vmatpush.bf16.msra.mxu0 0
    %670 = vmatpush.bf16.msra.mxu0 0
    %671 = vmatpush.bf16.msra.mxu0 %v640
    %672 = vmatpush.bf16.msra.mxu0 %v639
    %673 = vmatpush.bf16.msra.mxu0 %v638
    %674 = vmatpush.bf16.msra.mxu0 %v637
    %675 = vmatmul.bf16.gmra.mxu0 %v647
    %v676 = vpop.f32.mrf.mxu0
    %v677 = vadd.f32 0.0, %v676
    %v678 = vpop.f32.mrf.mxu0
    %v679 = vadd.f32 0.0, %v678
    %680 = vmatmul.bf16.gmra.mxu0 %v650
    %v681 = vpop.f32.mrf.mxu0
    %v682 = vadd.f32 0.0, %v681
    %v683 = vpop.f32.mrf.mxu0
    %v684 = vadd.f32 0.0, %v683
    %685 = vmatmul.bf16.gmra.mxu0 %v653
    %v686 = vpop.f32.mrf.mxu0
    %v687 = vadd.f32 0.0, %v686
    %v688 = vpop.f32.mrf.mxu0
    %v689 = vadd.f32 0.0, %v688
    %690 = vmatmul.bf16.gmra.mxu0 %v656
    %v691 = vpop.f32.mrf.mxu0
    %v692 = vadd.f32 0.0, %v691
    %v693 = vpop.f32.mrf.mxu0
    %v694 = vadd.f32 0.0, %v693
    %695 = vmatmul.bf16.gmra.mxu0 %v659
    %v696 = vpop.f32.mrf.mxu0
    %v697 = vadd.f32 0.0, %v696
    %v698 = vpop.f32.mrf.mxu0
    %v699 = vadd.f32 0.0, %v698
    %700 = vmatmul.bf16.gmra.mxu0 %v662
    %v701 = vpop.f32.mrf.mxu0
    %v702 = vadd.f32 0.0, %v701
    %v703 = vpop.f32.mrf.mxu0
    %v704 = vadd.f32 0.0, %v703
    %705 = vmatmul.bf16.gmra.mxu0 %v665
    %v706 = vpop.f32.mrf.mxu0
    %v707 = vadd.f32 0.0, %v706
    %v708 = vpop.f32.mrf.mxu0
    %709 = vdwg.mxu0
    %v718 = vunpack.c.l.b16 %v358
    %v719 = vunpack.c.l.b16 %v359
    %v720 = vunpack.c.l.b16 %v360
    %v721 = vunpack.c.l.b16 %v361
    %v722 = vunpack.c.l.b16 %v362
    %v723 = vunpack.c.l.b16 %v363
    %v724 = vunpack.c.l.b16 %v364
    %v725 = vunpack.c.l.b16 %v365
    %v726 = vpack.c.b16 %v719, %v718
    %v727 = vpack.c.b16 %v721, %v720
    %v728 = vpack.c.b16 %v723, %v722
    %v729 = vpack.c.b16 %v725, %v724
    %v735 = vsel %vm645, %v351, 0
    %v738 = vsel %vm645, %v352, 0
    %v741 = vsel %vm645, %v353, 0
    %v744 = vsel %vm645, %v354, 0
    %v747 = vsel %vm645, %v355, 0
    %v750 = vsel %vm645, %v356, 0
    %v753 = vsel %vm645, %v357, 0
    %755 = vmatpush.bf16.msra.mxu0 0
    %756 = vmatpush.bf16.msra.mxu0 0
    %757 = vmatpush.bf16.msra.mxu0 0
    %758 = vmatpush.bf16.msra.mxu0 0
    %759 = vmatpush.bf16.msra.mxu0 %v729
    %760 = vmatpush.bf16.msra.mxu0 %v728
    %761 = vmatpush.bf16.msra.mxu0 %v727
    %762 = vmatpush.bf16.msra.mxu0 %v726
    %763 = vmatmul.bf16.gmra.mxu0 %v735
    %v764 = vpop.f32.mrf.mxu0
    %v765 = vadd.f32 %v677, %v764
    %v766 = vpop.f32.mrf.mxu0
    %v767 = vadd.f32 %v679, %v766
    %768 = vmatmul.bf16.gmra.mxu0 %v738
    %v769 = vpop.f32.mrf.mxu0
    %v770 = vadd.f32 %v682, %v769
    %v771 = vpop.f32.mrf.mxu0
    %v772 = vadd.f32 %v684, %v771
    %773 = vmatmul.bf16.gmra.mxu0 %v741
    %v774 = vpop.f32.mrf.mxu0
    %v775 = vadd.f32 %v687, %v774
    %v776 = vpop.f32.mrf.mxu0
    %v777 = vadd.f32 %v689, %v776
    %778 = vmatmul.bf16.gmra.mxu0 %v744
    %v779 = vpop.f32.mrf.mxu0
    %v780 = vadd.f32 %v692, %v779
    %v781 = vpop.f32.mrf.mxu0
    %v782 = vadd.f32 %v694, %v781
    %783 = vmatmul.bf16.gmra.mxu0 %v747
    %v784 = vpop.f32.mrf.mxu0
    %v785 = vadd.f32 %v697, %v784
    %v786 = vpop.f32.mrf.mxu0
    %v787 = vadd.f32 %v699, %v786
    %788 = vmatmul.bf16.gmra.mxu0 %v750
    %v789 = vpop.f32.mrf.mxu0
    %v790 = vadd.f32 %v702, %v789
    %v791 = vpop.f32.mrf.mxu0
    %v792 = vadd.f32 %v704, %v791
    %793 = vmatmul.bf16.gmra.mxu0 %v753
    %v794 = vpop.f32.mrf.mxu0
    %v795 = vadd.f32 %v707, %v794
    %v796 = vpop.f32.mrf.mxu0
    %797 = vdwg.mxu0
    %v798 = vld [vmem:[%s0 + $0x68] sm:$0xf]
    %v799 = vld [vmem:[%s0 + $0x6c] sm:$0xf]
    %v800 = vld [vmem:[%s0 + $0x70] sm:$0xf]
    %v801 = vld [vmem:[%s0 + $0x74] sm:$0xf]
    %v802 = vld [vmem:[%s0 + $0x78] sm:$0xf]
    %v803 = vld [vmem:[%s0 + $0x7c] sm:$0xf]
    %v804 = vld [vmem:[%s0 + $0x80] sm:$0xf]
    %v805 = vld [vmem:[%s0 + $0x84] sm:$0xf]
    %v806 = vld [vmem:[%s0 + $0x88] sm:$0xf]
    %v807 = vld [vmem:[%s0 + $0x8c] sm:$0xf]
    %v808 = vld [vmem:[%s0 + $0x90] sm:$0xf]
    %v809 = vld [vmem:[%s0 + $0x94] sm:$0xf]
    %v810 = vld [vmem:[%s0 + $0x98] sm:$0xf]
    %v824 = vunpack.c.l.b16 %v798
    %v825 = vunpack.c.l.b16 %v799
    %v826 = vunpack.c.l.b16 %v800
    %v827 = vunpack.c.l.b16 %v801
    %v828 = vunpack.c.l.b16 %v802
    %v829 = vunpack.c.l.b16 %v803
    %v830 = vunpack.c.l.b16 %v804
    %v831 = vunpack.c.l.b16 %v805
    %v832 = vunpack.c.l.b16 %v806
    %v833 = vunpack.c.l.b16 %v807
    %v834 = vunpack.c.l.b16 %v808
    %v835 = vunpack.c.l.b16 %v809
    %v836 = vunpack.c.l.b16 %v810
    %v837 = vpack.c.b16 %v825, %v824
    %v838 = vpack.c.b16 %v827, %v826
    %v839 = vpack.c.b16 %v829, %v828
    %v840 = vpack.c.b16 %v831, %v830
    %v841 = vpack.c.b16 %v833, %v832
    %v842 = vpack.c.b16 %v835, %v834
    %v843 = vpack.c.b16 %v836, %v836
    %v845 = vsel %vm156, %v837, 0
    %v848 = vsel %vm156, %v838, 0
    %v851 = vsel %vm156, %v839, 0
    %v854 = vsel %vm156, %v840, 0
    %v857 = vsel %vm156, %v841, 0
    %v860 = vsel %vm156, %v842, 0
    %v863 = vsel %vm156, %v843, 0
    %865 = vmatpush.bf16.msra.mxu0 0
    %866 = vmatpush.bf16.msra.mxu0 0
    %867 = vmatpush.bf16.msra.mxu0 0
    %868 = vmatpush.bf16.msra.mxu0 0
    %869 = vmatpush.bf16.msra.mxu0 0
    %870 = vmatpush.bf16.msra.mxu0 0
    %871 = vmatpush.bf16.msra.mxu0 0
    %872 = vmatpush.bf16.msra.mxu0 %v154
    %873 = vmatmul.bf16.gmra.mxu0 %v845
    %v874 = vpop.f32.mrf.mxu0
    %v875 = vadd.f32 %v115, %v874
    %v876 = vpop.f32.mrf.mxu0
    %v877 = vadd.f32 %v115, %v876
    %878 = vmatmul.bf16.gmra.mxu0 %v848
    %v879 = vpop.f32.mrf.mxu0
    %v880 = vadd.f32 %v115, %v879
    %v881 = vpop.f32.mrf.mxu0
    %v882 = vadd.f32 %v115, %v881
    %883 = vmatmul.bf16.gmra.mxu0 %v851
    %v884 = vpop.f32.mrf.mxu0
    %v885 = vadd.f32 %v115, %v884
    %v886 = vpop.f32.mrf.mxu0
    %v887 = vadd.f32 %v115, %v886
    %888 = vmatmul.bf16.gmra.mxu0 %v854
    %v889 = vpop.f32.mrf.mxu0
    %v890 = vadd.f32 %v115, %v889
    %v891 = vpop.f32.mrf.mxu0
    %v892 = vadd.f32 %v115, %v891
    %893 = vmatmul.bf16.gmra.mxu0 %v857
    %v894 = vpop.f32.mrf.mxu0
    %v895 = vadd.f32 %v115, %v894
    %v896 = vpop.f32.mrf.mxu0
    %v897 = vadd.f32 %v115, %v896
    %898 = vmatmul.bf16.gmra.mxu0 %v860
    %v899 = vpop.f32.mrf.mxu0
    %v900 = vadd.f32 %v115, %v899
    %v901 = vpop.f32.mrf.mxu0
    %v902 = vadd.f32 %v115, %v901
    %903 = vmatmul.bf16.gmra.mxu0 %v863
    %v904 = vpop.f32.mrf.mxu0
    %v905 = vadd.f32 %v115, %v904
    %v906 = vpop.f32.mrf.mxu0
    %907 = vdwg.mxu0
    %vm908 = vcmp.ge.f32.partialorder %v875, 0.0
    %vm909 = vcmp.ge.f32.partialorder %v877, 0.0
    %vm910 = vcmp.ge.f32.partialorder %v880, 0.0
    %vm911 = vcmp.ge.f32.partialorder %v882, 0.0
    %vm912 = vcmp.ge.f32.partialorder %v885, 0.0
    %vm913 = vcmp.ge.f32.partialorder %v887, 0.0
    %vm914 = vcmp.ge.f32.partialorder %v890, 0.0
    %vm915 = vcmp.ge.f32.partialorder %v892, 0.0
    %vm916 = vcmp.ge.f32.partialorder %v895, 0.0
    %vm917 = vcmp.ge.f32.partialorder %v897, 0.0
    %vm918 = vcmp.ge.f32.partialorder %v900, 0.0
    %vm919 = vcmp.ge.f32.partialorder %v902, 0.0
    %vm920 = vcmp.ge.f32.partialorder %v905, 0.0
    %v921 = vmul.f32 %v875, 0.1
    %v922 = vmul.f32 %v877, 0.1
    %v923 = vmul.f32 %v880, 0.1
    %v924 = vmul.f32 %v882, 0.1
    %v925 = vmul.f32 %v885, 0.1
    %v926 = vmul.f32 %v887, 0.1
    %v927 = vmul.f32 %v890, 0.1
    %v928 = vmul.f32 %v892, 0.1
    %v929 = vmul.f32 %v895, 0.1
    %v930 = vmul.f32 %v897, 0.1
    %v931 = vmul.f32 %v900, 0.1
    %v932 = vmul.f32 %v902, 0.1
    %v933 = vmul.f32 %v905, 0.1
    %v934 = vsel %vm908, %v875, %v921
    %v935 = vsel %vm909, %v877, %v922
    %v936 = vsel %vm910, %v880, %v923
    %v937 = vsel %vm911, %v882, %v924
    %v938 = vsel %vm912, %v885, %v925
    %v939 = vsel %vm913, %v887, %v926
    %v940 = vsel %vm914, %v890, %v927
    %v941 = vsel %vm915, %v892, %v928
    %v942 = vsel %vm916, %v895, %v929
    %v943 = vsel %vm917, %v897, %v930
    %v944 = vsel %vm918, %v900, %v931
    %v945 = vsel %vm919, %v902, %v932
    %v946 = vsel %vm920, %v905, %v933
    %v947 = vld [vmem:[#allocation2 + $0xd0] sm:$0xff]
    %v948 = vld [vmem:[#allocation2 + $0xd8] sm:$0xff]
    %v949 = vld [vmem:[#allocation2 + $0xe0] sm:$0xff]
    %v950 = vld [vmem:[#allocation2 + $0xe8] sm:$0xff]
    %v951 = vld [vmem:[#allocation2 + $0xf0] sm:$0xff]
    %v952 = vld [vmem:[#allocation2 + $0xf8] sm:$0xff]
    %v953 = vld [vmem:[#allocation2 + $0x100] sm:$0xff]
    %v954 = vld [vmem:[#allocation2 + $0x108] sm:$0xff]
    %v955 = vld [vmem:[#allocation2 + $0x110] sm:$0xff]
    %v956 = vld [vmem:[#allocation2 + $0x118] sm:$0xff]
    %v957 = vld [vmem:[#allocation2 + $0x120] sm:$0xff]
    %v958 = vld [vmem:[#allocation2 + $0x128] sm:$0xff]
    %v959 = vld [vmem:[#allocation2 + $0x130] sm:$0xff]
    %961 = vset.pattern.permute.xlu0 0
    %962 = vperm.xlu0 %961, %v947
    %v963 = vpop.permute.xlu0 %962
    %966 = vset.pattern.permute.xlu0 0
    %967 = vperm.xlu0 %966, %v948
    %v968 = vpop.permute.xlu0 %967
    %971 = vset.pattern.permute.xlu0 0
    %972 = vperm.xlu0 %971, %v949
    %v973 = vpop.permute.xlu0 %972
    %976 = vset.pattern.permute.xlu0 0
    %977 = vperm.xlu0 %976, %v950
    %v978 = vpop.permute.xlu0 %977
    %981 = vset.pattern.permute.xlu0 0
    %982 = vperm.xlu0 %981, %v951
    %v983 = vpop.permute.xlu0 %982
    %986 = vset.pattern.permute.xlu0 0
    %987 = vperm.xlu0 %986, %v952
    %v988 = vpop.permute.xlu0 %987
    %991 = vset.pattern.permute.xlu0 0
    %992 = vperm.xlu0 %991, %v953
    %v993 = vpop.permute.xlu0 %992
    %996 = vset.pattern.permute.xlu0 0
    %997 = vperm.xlu0 %996, %v954
    %v998 = vpop.permute.xlu0 %997
    %1001 = vset.pattern.permute.xlu0 0
    %1002 = vperm.xlu0 %1001, %v955
    %v1003 = vpop.permute.xlu0 %1002
    %1006 = vset.pattern.permute.xlu0 0
    %1007 = vperm.xlu0 %1006, %v956
    %v1008 = vpop.permute.xlu0 %1007
    %1011 = vset.pattern.permute.xlu0 0
    %1012 = vperm.xlu0 %1011, %v957
    %v1013 = vpop.permute.xlu0 %1012
    %1016 = vset.pattern.permute.xlu0 0
    %1017 = vperm.xlu0 %1016, %v958
    %v1018 = vpop.permute.xlu0 %1017
    %1021 = vset.pattern.permute.xlu0 0
    %1022 = vperm.xlu0 %1021, %v959
    %v1023 = vpop.permute.xlu0 %1022
    %v1025 = vmul.f32 %v934, %v963
    %v1026 = vmul.f32 %v935, %v968
    %v1027 = vmul.f32 %v936, %v973
    %v1028 = vmul.f32 %v937, %v978
    %v1029 = vmul.f32 %v938, %v983
    %v1030 = vmul.f32 %v939, %v988
    %v1031 = vmul.f32 %v940, %v993
    %v1032 = vmul.f32 %v941, %v998
    %v1033 = vmul.f32 %v942, %v1003
    %v1034 = vmul.f32 %v943, %v1008
    %v1035 = vmul.f32 %v944, %v1013
    %v1036 = vmul.f32 %v945, %v1018
    %v1037 = vmul.f32 %v946, %v1023
    %v1038 = vpack.c.bf16 %v1026, %v1025
    %v1039 = vpack.c.bf16 %v1028, %v1027
    %v1040 = vpack.c.bf16 %v1030, %v1029
    %v1041 = vpack.c.bf16 %v1032, %v1031
    %v1042 = vpack.c.bf16 %v1034, %v1033
    %v1043 = vpack.c.bf16 %v1036, %v1035
    %v1044 = vpack.c.bf16 %v1037, %v1037
    %v1045 = vld [vmem:[#allocation7 + $0x40] sm:$0xf]
    %v1046 = vld [vmem:[#allocation7 + $0x44] sm:$0xf]
    %v1047 = vld [vmem:[#allocation7 + $0x48] sm:$0xf]
    %v1048 = vld [vmem:[#allocation7 + $0x4c] sm:$0xf]
    %v1049 = vld [vmem:[#allocation7 + $0x50] sm:$0xf]
    %v1050 = vld [vmem:[#allocation7 + $0x54] sm:$0xf]
    %v1051 = vld [vmem:[#allocation7 + $0x58] sm:$0xf]
    %v1052 = vld [vmem:[#allocation7 + $0x5c] sm:$0xf]
    %v1061 = vunpack.c.l.b16 %v1045
    %v1062 = vunpack.c.l.b16 %v1046
    %v1063 = vunpack.c.l.b16 %v1047
    %v1064 = vunpack.c.l.b16 %v1048
    %v1065 = vunpack.c.l.b16 %v1049
    %v1066 = vunpack.c.l.b16 %v1050
    %v1067 = vunpack.c.l.b16 %v1051
    %v1068 = vunpack.c.l.b16 %v1052
    %v1069 = vpack.c.b16 %v1062, %v1061
    %v1070 = vpack.c.b16 %v1064, %v1063
    %v1071 = vpack.c.b16 %v1066, %v1065
    %v1072 = vpack.c.b16 %v1068, %v1067
    %v1078 = vsel %vm645, %v1038, 0
    %v1081 = vsel %vm645, %v1039, 0
    %v1084 = vsel %vm645, %v1040, 0
    %v1087 = vsel %vm645, %v1041, 0
    %v1090 = vsel %vm645, %v1042, 0
    %v1093 = vsel %vm645, %v1043, 0
    %v1096 = vsel %vm645, %v1044, 0
    %1098 = vmatpush.bf16.msra.mxu0 0
    %1099 = vmatpush.bf16.msra.mxu0 0
    %1100 = vmatpush.bf16.msra.mxu0 0
    %1101 = vmatpush.bf16.msra.mxu0 0
    %1102 = vmatpush.bf16.msra.mxu0 %v1072
    %1103 = vmatpush.bf16.msra.mxu0 %v1071
    %1104 = vmatpush.bf16.msra.mxu0 %v1070
    %1105 = vmatpush.bf16.msra.mxu0 %v1069
    %1106 = vmatmul.bf16.gmra.mxu0 %v1078
    %v1107 = vpop.f32.mrf.mxu0
    %v1108 = vadd.f32 0.0, %v1107
    %v1109 = vpop.f32.mrf.mxu0
    %v1110 = vadd.f32 0.0, %v1109
    %1111 = vmatmul.bf16.gmra.mxu0 %v1081
    %v1112 = vpop.f32.mrf.mxu0
    %v1113 = vadd.f32 0.0, %v1112
    %v1114 = vpop.f32.mrf.mxu0
    %v1115 = vadd.f32 0.0, %v1114
    %1116 = vmatmul.bf16.gmra.mxu0 %v1084
    %v1117 = vpop.f32.mrf.mxu0
    %v1118 = vadd.f32 0.0, %v1117
    %v1119 = vpop.f32.mrf.mxu0
    %v1120 = vadd.f32 0.0, %v1119
    %1121 = vmatmul.bf16.gmra.mxu0 %v1087
    %v1122 = vpop.f32.mrf.mxu0
    %v1123 = vadd.f32 0.0, %v1122
    %v1124 = vpop.f32.mrf.mxu0
    %v1125 = vadd.f32 0.0, %v1124
    %1126 = vmatmul.bf16.gmra.mxu0 %v1090
    %v1127 = vpop.f32.mrf.mxu0
    %v1128 = vadd.f32 0.0, %v1127
    %v1129 = vpop.f32.mrf.mxu0
    %v1130 = vadd.f32 0.0, %v1129
    %1131 = vmatmul.bf16.gmra.mxu0 %v1093
    %v1132 = vpop.f32.mrf.mxu0
    %v1133 = vadd.f32 0.0, %v1132
    %v1134 = vpop.f32.mrf.mxu0
    %v1135 = vadd.f32 0.0, %v1134
    %1136 = vmatmul.bf16.gmra.mxu0 %v1096
    %v1137 = vpop.f32.mrf.mxu0
    %v1138 = vadd.f32 0.0, %v1137
    %v1139 = vpop.f32.mrf.mxu0
    %1140 = vdwg.mxu0
    %v1141 = vadd.f32 %v765, %v1108
    %v1142 = vadd.f32 %v767, %v1110
    %v1143 = vadd.f32 %v770, %v1113
    %v1144 = vadd.f32 %v772, %v1115
    %v1145 = vadd.f32 %v775, %v1118
    %v1146 = vadd.f32 %v777, %v1120
    %v1147 = vadd.f32 %v780, %v1123
    %v1148 = vadd.f32 %v782, %v1125
    %v1149 = vadd.f32 %v785, %v1128
    %v1150 = vadd.f32 %v787, %v1130
    %v1151 = vadd.f32 %v790, %v1133
    %v1152 = vadd.f32 %v792, %v1135
    %v1153 = vadd.f32 %v795, %v1138
    %v1154 = vld [vmem:[%s0 + $0x9c] sm:$0xf]
    %v1155 = vld [vmem:[%s0 + $0xa0] sm:$0xf]
    %v1156 = vld [vmem:[%s0 + $0xa4] sm:$0xf]
    %v1157 = vld [vmem:[%s0 + $0xa8] sm:$0xf]
    %v1158 = vld [vmem:[%s0 + $0xac] sm:$0xf]
    %v1159 = vld [vmem:[%s0 + $0xb0] sm:$0xf]
    %v1160 = vld [vmem:[%s0 + $0xb4] sm:$0xf]
    %v1161 = vld [vmem:[%s0 + $0xb8] sm:$0xf]
    %v1162 = vld [vmem:[%s0 + $0xbc] sm:$0xf]
    %v1163 = vld [vmem:[%s0 + $0xc0] sm:$0xf]
    %v1164 = vld [vmem:[%s0 + $0xc4] sm:$0xf]
    %v1165 = vld [vmem:[%s0 + $0xc8] sm:$0xf]
    %v1166 = vld [vmem:[%s0 + $0xcc] sm:$0xf]
    %v1180 = vunpack.c.l.b16 %v1154
    %v1181 = vunpack.c.l.b16 %v1155
    %v1182 = vunpack.c.l.b16 %v1156
    %v1183 = vunpack.c.l.b16 %v1157
    %v1184 = vunpack.c.l.b16 %v1158
    %v1185 = vunpack.c.l.b16 %v1159
    %v1186 = vunpack.c.l.b16 %v1160
    %v1187 = vunpack.c.l.b16 %v1161
    %v1188 = vunpack.c.l.b16 %v1162
    %v1189 = vunpack.c.l.b16 %v1163
    %v1190 = vunpack.c.l.b16 %v1164
    %v1191 = vunpack.c.l.b16 %v1165
    %v1192 = vunpack.c.l.b16 %v1166
    %v1193 = vpack.c.b16 %v1181, %v1180
    %v1194 = vpack.c.b16 %v1183, %v1182
    %v1195 = vpack.c.b16 %v1185, %v1184
    %v1196 = vpack.c.b16 %v1187, %v1186
    %v1197 = vpack.c.b16 %v1189, %v1188
    %v1198 = vpack.c.b16 %v1191, %v1190
    %v1199 = vpack.c.b16 %v1192, %v1192
    %v1201 = vsel %vm156, %v1193, 0
    %v1204 = vsel %vm156, %v1194, 0
    %v1207 = vsel %vm156, %v1195, 0
    %v1210 = vsel %vm156, %v1196, 0
    %v1213 = vsel %vm156, %v1197, 0
    %v1216 = vsel %vm156, %v1198, 0
    %v1219 = vsel %vm156, %v1199, 0
    %1221 = vmatpush.bf16.msra.mxu0 0
    %1222 = vmatpush.bf16.msra.mxu0 0
    %1223 = vmatpush.bf16.msra.mxu0 0
    %1224 = vmatpush.bf16.msra.mxu0 0
    %1225 = vmatpush.bf16.msra.mxu0 0
    %1226 = vmatpush.bf16.msra.mxu0 0
    %1227 = vmatpush.bf16.msra.mxu0 0
    %1228 = vmatpush.bf16.msra.mxu0 %v154
    %1229 = vmatmul.bf16.gmra.mxu0 %v1201
    %v1230 = vpop.f32.mrf.mxu0
    %v1231 = vadd.f32 %v115, %v1230
    %v1232 = vpop.f32.mrf.mxu0
    %v1233 = vadd.f32 %v115, %v1232
    %1234 = vmatmul.bf16.gmra.mxu0 %v1204
    %v1235 = vpop.f32.mrf.mxu0
    %v1236 = vadd.f32 %v115, %v1235
    %v1237 = vpop.f32.mrf.mxu0
    %v1238 = vadd.f32 %v115, %v1237
    %1239 = vmatmul.bf16.gmra.mxu0 %v1207
    %v1240 = vpop.f32.mrf.mxu0
    %v1241 = vadd.f32 %v115, %v1240
    %v1242 = vpop.f32.mrf.mxu0
    %v1243 = vadd.f32 %v115, %v1242
    %1244 = vmatmul.bf16.gmra.mxu0 %v1210
    %v1245 = vpop.f32.mrf.mxu0
    %v1246 = vadd.f32 %v115, %v1245
    %v1247 = vpop.f32.mrf.mxu0
    %v1248 = vadd.f32 %v115, %v1247
    %1249 = vmatmul.bf16.gmra.mxu0 %v1213
    %v1250 = vpop.f32.mrf.mxu0
    %v1251 = vadd.f32 %v115, %v1250
    %v1252 = vpop.f32.mrf.mxu0
    %v1253 = vadd.f32 %v115, %v1252
    %1254 = vmatmul.bf16.gmra.mxu0 %v1216
    %v1255 = vpop.f32.mrf.mxu0
    %v1256 = vadd.f32 %v115, %v1255
    %v1257 = vpop.f32.mrf.mxu0
    %v1258 = vadd.f32 %v115, %v1257
    %1259 = vmatmul.bf16.gmra.mxu0 %v1219
    %v1260 = vpop.f32.mrf.mxu0
    %v1261 = vadd.f32 %v115, %v1260
    %v1262 = vpop.f32.mrf.mxu0
    %1263 = vdwg.mxu0
    %vm1264 = vcmp.ge.f32.partialorder %v1231, 0.0
    %vm1265 = vcmp.ge.f32.partialorder %v1233, 0.0
    %vm1266 = vcmp.ge.f32.partialorder %v1236, 0.0
    %vm1267 = vcmp.ge.f32.partialorder %v1238, 0.0
    %vm1268 = vcmp.ge.f32.partialorder %v1241, 0.0
    %vm1269 = vcmp.ge.f32.partialorder %v1243, 0.0
    %vm1270 = vcmp.ge.f32.partialorder %v1246, 0.0
    %vm1271 = vcmp.ge.f32.partialorder %v1248, 0.0
    %vm1272 = vcmp.ge.f32.partialorder %v1251, 0.0
    %vm1273 = vcmp.ge.f32.partialorder %v1253, 0.0
    %vm1274 = vcmp.ge.f32.partialorder %v1256, 0.0
    %vm1275 = vcmp.ge.f32.partialorder %v1258, 0.0
    %vm1276 = vcmp.ge.f32.partialorder %v1261, 0.0
    %v1277 = vmul.f32 %v1231, 0.1
    %v1278 = vmul.f32 %v1233, 0.1
    %v1279 = vmul.f32 %v1236, 0.1
    %v1280 = vmul.f32 %v1238, 0.1
    %v1281 = vmul.f32 %v1241, 0.1
    %v1282 = vmul.f32 %v1243, 0.1
    %v1283 = vmul.f32 %v1246, 0.1
    %v1284 = vmul.f32 %v1248, 0.1
    %v1285 = vmul.f32 %v1251, 0.1
    %v1286 = vmul.f32 %v1253, 0.1
    %v1287 = vmul.f32 %v1256, 0.1
    %v1288 = vmul.f32 %v1258, 0.1
    %v1289 = vmul.f32 %v1261, 0.1
    %v1290 = vsel %vm1264, %v1231, %v1277
    %v1291 = vsel %vm1265, %v1233, %v1278
    %v1292 = vsel %vm1266, %v1236, %v1279
    %v1293 = vsel %vm1267, %v1238, %v1280
    %v1294 = vsel %vm1268, %v1241, %v1281
    %v1295 = vsel %vm1269, %v1243, %v1282
    %v1296 = vsel %vm1270, %v1246, %v1283
    %v1297 = vsel %vm1271, %v1248, %v1284
    %v1298 = vsel %vm1272, %v1251, %v1285
    %v1299 = vsel %vm1273, %v1253, %v1286
    %v1300 = vsel %vm1274, %v1256, %v1287
    %v1301 = vsel %vm1275, %v1258, %v1288
    %v1302 = vsel %vm1276, %v1261, %v1289
    %v1303 = vld [vmem:[#allocation2 + $0x138] sm:$0xff]
    %v1304 = vld [vmem:[#allocation2 + $0x140] sm:$0xff]
    %v1305 = vld [vmem:[#allocation2 + $0x148] sm:$0xff]
    %v1306 = vld [vmem:[#allocation2 + $0x150] sm:$0xff]
    %v1307 = vld [vmem:[#allocation2 + $0x158] sm:$0xff]
    %v1308 = vld [vmem:[#allocation2 + $0x160] sm:$0xff]
    %v1309 = vld [vmem:[#allocation2 + $0x168] sm:$0xff]
    %v1310 = vld [vmem:[#allocation2 + $0x170] sm:$0xff]
    %v1311 = vld [vmem:[#allocation2 + $0x178] sm:$0xff]
    %v1312 = vld [vmem:[#allocation2 + $0x180] sm:$0xff]
    %v1313 = vld [vmem:[#allocation2 + $0x188] sm:$0xff]
    %v1314 = vld [vmem:[#allocation2 + $0x190] sm:$0xff]
    %v1315 = vld [vmem:[#allocation2 + $0x198] sm:$0xff]
    %1317 = vset.pattern.permute.xlu0 0
    %1318 = vperm.xlu0 %1317, %v1303
    %v1319 = vpop.permute.xlu0 %1318
    %1322 = vset.pattern.permute.xlu0 0
    %1323 = vperm.xlu0 %1322, %v1304
    %v1324 = vpop.permute.xlu0 %1323
    %1327 = vset.pattern.permute.xlu0 0
    %1328 = vperm.xlu0 %1327, %v1305
    %v1329 = vpop.permute.xlu0 %1328
    %1332 = vset.pattern.permute.xlu0 0
    %1333 = vperm.xlu0 %1332, %v1306
    %v1334 = vpop.permute.xlu0 %1333
    %1337 = vset.pattern.permute.xlu0 0
    %1338 = vperm.xlu0 %1337, %v1307
    %v1339 = vpop.permute.xlu0 %1338
    %1342 = vset.pattern.permute.xlu0 0
    %1343 = vperm.xlu0 %1342, %v1308
    %v1344 = vpop.permute.xlu0 %1343
    %1347 = vset.pattern.permute.xlu0 0
    %1348 = vperm.xlu0 %1347, %v1309
    %v1349 = vpop.permute.xlu0 %1348
    %1352 = vset.pattern.permute.xlu0 0
    %1353 = vperm.xlu0 %1352, %v1310
    %v1354 = vpop.permute.xlu0 %1353
    %1357 = vset.pattern.permute.xlu0 0
    %1358 = vperm.xlu0 %1357, %v1311
    %v1359 = vpop.permute.xlu0 %1358
    %1362 = vset.pattern.permute.xlu0 0
    %1363 = vperm.xlu0 %1362, %v1312
    %v1364 = vpop.permute.xlu0 %1363
    %1367 = vset.pattern.permute.xlu0 0
    %1368 = vperm.xlu0 %1367, %v1313
    %v1369 = vpop.permute.xlu0 %1368
    %1372 = vset.pattern.permute.xlu0 0
    %1373 = vperm.xlu0 %1372, %v1314
    %v1374 = vpop.permute.xlu0 %1373
    %1377 = vset.pattern.permute.xlu0 0
    %1378 = vperm.xlu0 %1377, %v1315
    %v1379 = vpop.permute.xlu0 %1378
    %v1381 = vmul.f32 %v1290, %v1319
    %v1382 = vmul.f32 %v1291, %v1324
    %v1383 = vmul.f32 %v1292, %v1329
    %v1384 = vmul.f32 %v1293, %v1334
    %v1385 = vmul.f32 %v1294, %v1339
    %v1386 = vmul.f32 %v1295, %v1344
    %v1387 = vmul.f32 %v1296, %v1349
    %v1388 = vmul.f32 %v1297, %v1354
    %v1389 = vmul.f32 %v1298, %v1359
    %v1390 = vmul.f32 %v1299, %v1364
    %v1391 = vmul.f32 %v1300, %v1369
    %v1392 = vmul.f32 %v1301, %v1374
    %v1393 = vmul.f32 %v1302, %v1379
    %v1394 = vpack.c.bf16 %v1382, %v1381
    %v1395 = vpack.c.bf16 %v1384, %v1383
    %v1396 = vpack.c.bf16 %v1386, %v1385
    %v1397 = vpack.c.bf16 %v1388, %v1387
    %v1398 = vpack.c.bf16 %v1390, %v1389
    %v1399 = vpack.c.bf16 %v1392, %v1391
    %v1400 = vpack.c.bf16 %v1393, %v1393
    %v1401 = vld [vmem:[#allocation7 + $0x60] sm:$0xf]
    %v1402 = vld [vmem:[#allocation7 + $0x64] sm:$0xf]
    %v1403 = vld [vmem:[#allocation7 + $0x68] sm:$0xf]
    %v1404 = vld [vmem:[#allocation7 + $0x6c] sm:$0xf]
    %v1405 = vld [vmem:[#allocation7 + $0x70] sm:$0xf]
    %v1406 = vld [vmem:[#allocation7 + $0x74] sm:$0xf]
    %v1407 = vld [vmem:[#allocation7 + $0x78] sm:$0xf]
    %v1408 = vld [vmem:[#allocation7 + $0x7c] sm:$0xf]
    %v1417 = vunpack.c.l.b16 %v1401
    %v1418 = vunpack.c.l.b16 %v1402
    %v1419 = vunpack.c.l.b16 %v1403
    %v1420 = vunpack.c.l.b16 %v1404
    %v1421 = vunpack.c.l.b16 %v1405
    %v1422 = vunpack.c.l.b16 %v1406
    %v1423 = vunpack.c.l.b16 %v1407
    %v1424 = vunpack.c.l.b16 %v1408
    %v1425 = vpack.c.b16 %v1418, %v1417
    %v1426 = vpack.c.b16 %v1420, %v1419
    %v1427 = vpack.c.b16 %v1422, %v1421
    %v1428 = vpack.c.b16 %v1424, %v1423
    %v1434 = vsel %vm645, %v1394, 0
    %v1437 = vsel %vm645, %v1395, 0
    %v1440 = vsel %vm645, %v1396, 0
    %v1443 = vsel %vm645, %v1397, 0
    %v1446 = vsel %vm645, %v1398, 0
    %v1449 = vsel %vm645, %v1399, 0
    %v1452 = vsel %vm645, %v1400, 0
    %1454 = vmatpush.bf16.msra.mxu0 0
    %1455 = vmatpush.bf16.msra.mxu0 0
    %1456 = vmatpush.bf16.msra.mxu0 0
    %1457 = vmatpush.bf16.msra.mxu0 0
    %1458 = vmatpush.bf16.msra.mxu0 %v1428
    %1459 = vmatpush.bf16.msra.mxu0 %v1427
    %1460 = vmatpush.bf16.msra.mxu0 %v1426
    %1461 = vmatpush.bf16.msra.mxu0 %v1425
    %1462 = vmatmul.bf16.gmra.mxu0 %v1434
    %v1463 = vpop.f32.mrf.mxu0
    %v1464 = vadd.f32 0.0, %v1463
    %v1465 = vpop.f32.mrf.mxu0
    %v1466 = vadd.f32 0.0, %v1465
    %1467 = vmatmul.bf16.gmra.mxu0 %v1437
    %v1468 = vpop.f32.mrf.mxu0
    %v1469 = vadd.f32 0.0, %v1468
    %v1470 = vpop.f32.mrf.mxu0
    %v1471 = vadd.f32 0.0, %v1470
    %1472 = vmatmul.bf16.gmra.mxu0 %v1440
    %v1473 = vpop.f32.mrf.mxu0
    %v1474 = vadd.f32 0.0, %v1473
    %v1475 = vpop.f32.mrf.mxu0
    %v1476 = vadd.f32 0.0, %v1475
    %1477 = vmatmul.bf16.gmra.mxu0 %v1443
    %v1478 = vpop.f32.mrf.mxu0
    %v1479 = vadd.f32 0.0, %v1478
    %v1480 = vpop.f32.mrf.mxu0
    %v1481 = vadd.f32 0.0, %v1480
    %1482 = vmatmul.bf16.gmra.mxu0 %v1446
    %v1483 = vpop.f32.mrf.mxu0
    %v1484 = vadd.f32 0.0, %v1483
    %v1485 = vpop.f32.mrf.mxu0
    %v1486 = vadd.f32 0.0, %v1485
    %1487 = vmatmul.bf16.gmra.mxu0 %v1449
    %v1488 = vpop.f32.mrf.mxu0
    %v1489 = vadd.f32 0.0, %v1488
    %v1490 = vpop.f32.mrf.mxu0
    %v1491 = vadd.f32 0.0, %v1490
    %1492 = vmatmul.bf16.gmra.mxu0 %v1452
    %v1493 = vpop.f32.mrf.mxu0
    %v1494 = vadd.f32 0.0, %v1493
    %v1495 = vpop.f32.mrf.mxu0
    %1496 = vdwg.mxu0
    %v1497 = vadd.f32 %v1141, %v1464
    %v1498 = vadd.f32 %v1142, %v1466
    %v1499 = vadd.f32 %v1143, %v1469
    %v1500 = vadd.f32 %v1144, %v1471
    %v1501 = vadd.f32 %v1145, %v1474
    %v1502 = vadd.f32 %v1146, %v1476
    %v1503 = vadd.f32 %v1147, %v1479
    %v1504 = vadd.f32 %v1148, %v1481
    %v1505 = vadd.f32 %v1149, %v1484
    %v1506 = vadd.f32 %v1150, %v1486
    %v1507 = vadd.f32 %v1151, %v1489
    %v1508 = vadd.f32 %v1152, %v1491
    %v1509 = vadd.f32 %v1153, %v1494
    %v1510 = vld [vmem:[%s0 + $0xd0] sm:$0xf]
    %v1511 = vld [vmem:[%s0 + $0xd4] sm:$0xf]
    %v1512 = vld [vmem:[%s0 + $0xd8] sm:$0xf]
    %v1513 = vld [vmem:[%s0 + $0xdc] sm:$0xf]
    %v1514 = vld [vmem:[%s0 + $0xe0] sm:$0xf]
    %v1515 = vld [vmem:[%s0 + $0xe4] sm:$0xf]
    %v1516 = vld [vmem:[%s0 + $0xe8] sm:$0xf]
    %v1517 = vld [vmem:[%s0 + $0xec] sm:$0xf]
    %v1518 = vld [vmem:[%s0 + $0xf0] sm:$0xf]
    %v1519 = vld [vmem:[%s0 + $0xf4] sm:$0xf]
    %v1520 = vld [vmem:[%s0 + $0xf8] sm:$0xf]
    %v1521 = vld [vmem:[%s0 + $0xfc] sm:$0xf]
    %v1522 = vld [vmem:[%s0 + $0x100] sm:$0xf]
    %v1536 = vunpack.c.l.b16 %v1510
    %v1537 = vunpack.c.l.b16 %v1511
    %v1538 = vunpack.c.l.b16 %v1512
    %v1539 = vunpack.c.l.b16 %v1513
    %v1540 = vunpack.c.l.b16 %v1514
    %v1541 = vunpack.c.l.b16 %v1515
    %v1542 = vunpack.c.l.b16 %v1516
    %v1543 = vunpack.c.l.b16 %v1517
    %v1544 = vunpack.c.l.b16 %v1518
    %v1545 = vunpack.c.l.b16 %v1519
    %v1546 = vunpack.c.l.b16 %v1520
    %v1547 = vunpack.c.l.b16 %v1521
    %v1548 = vunpack.c.l.b16 %v1522
    %v1549 = vpack.c.b16 %v1537, %v1536
    %v1550 = vpack.c.b16 %v1539, %v1538
    %v1551 = vpack.c.b16 %v1541, %v1540
    %v1552 = vpack.c.b16 %v1543, %v1542
    %v1553 = vpack.c.b16 %v1545, %v1544
    %v1554 = vpack.c.b16 %v1547, %v1546
    %v1555 = vpack.c.b16 %v1548, %v1548
    %v1557 = vsel %vm156, %v1549, 0
    %v1560 = vsel %vm156, %v1550, 0
    %v1563 = vsel %vm156, %v1551, 0
    %v1566 = vsel %vm156, %v1552, 0
    %v1569 = vsel %vm156, %v1553, 0
    %v1572 = vsel %vm156, %v1554, 0
    %v1575 = vsel %vm156, %v1555, 0
    %1577 = vmatpush.bf16.msra.mxu0 0
    %1578 = vmatpush.bf16.msra.mxu0 0
    %1579 = vmatpush.bf16.msra.mxu0 0
    %1580 = vmatpush.bf16.msra.mxu0 0
    %1581 = vmatpush.bf16.msra.mxu0 0
    %1582 = vmatpush.bf16.msra.mxu0 0
    %1583 = vmatpush.bf16.msra.mxu0 0
    %1584 = vmatpush.bf16.msra.mxu0 %v154
    %1585 = vmatmul.bf16.gmra.mxu0 %v1557
    %v1586 = vpop.f32.mrf.mxu0
    %v1587 = vadd.f32 %v115, %v1586
    %v1588 = vpop.f32.mrf.mxu0
    %v1589 = vadd.f32 %v115, %v1588
    %1590 = vmatmul.bf16.gmra.mxu0 %v1560
    %v1591 = vpop.f32.mrf.mxu0
    %v1592 = vadd.f32 %v115, %v1591
    %v1593 = vpop.f32.mrf.mxu0
    %v1594 = vadd.f32 %v115, %v1593
    %1595 = vmatmul.bf16.gmra.mxu0 %v1563
    %v1596 = vpop.f32.mrf.mxu0
    %v1597 = vadd.f32 %v115, %v1596
    %v1598 = vpop.f32.mrf.mxu0
    %v1599 = vadd.f32 %v115, %v1598
    %1600 = vmatmul.bf16.gmra.mxu0 %v1566
    %v1601 = vpop.f32.mrf.mxu0
    %v1602 = vadd.f32 %v115, %v1601
    %v1603 = vpop.f32.mrf.mxu0
    %v1604 = vadd.f32 %v115, %v1603
    %1605 = vmatmul.bf16.gmra.mxu0 %v1569
    %v1606 = vpop.f32.mrf.mxu0
    %v1607 = vadd.f32 %v115, %v1606
    %v1608 = vpop.f32.mrf.mxu0
    %v1609 = vadd.f32 %v115, %v1608
    %1610 = vmatmul.bf16.gmra.mxu0 %v1572
    %v1611 = vpop.f32.mrf.mxu0
    %v1612 = vadd.f32 %v115, %v1611
    %v1613 = vpop.f32.mrf.mxu0
    %v1614 = vadd.f32 %v115, %v1613
    %1615 = vmatmul.bf16.gmra.mxu0 %v1575
    %v1616 = vpop.f32.mrf.mxu0
    %v1617 = vadd.f32 %v115, %v1616
    %v1618 = vpop.f32.mrf.mxu0
    %1619 = vdwg.mxu0
    %vm1620 = vcmp.ge.f32.partialorder %v1587, 0.0
    %vm1621 = vcmp.ge.f32.partialorder %v1589, 0.0
    %vm1622 = vcmp.ge.f32.partialorder %v1592, 0.0
    %vm1623 = vcmp.ge.f32.partialorder %v1594, 0.0
    %vm1624 = vcmp.ge.f32.partialorder %v1597, 0.0
    %vm1625 = vcmp.ge.f32.partialorder %v1599, 0.0
    %vm1626 = vcmp.ge.f32.partialorder %v1602, 0.0
    %vm1627 = vcmp.ge.f32.partialorder %v1604, 0.0
    %vm1628 = vcmp.ge.f32.partialorder %v1607, 0.0
    %vm1629 = vcmp.ge.f32.partialorder %v1609, 0.0
    %vm1630 = vcmp.ge.f32.partialorder %v1612, 0.0
    %vm1631 = vcmp.ge.f32.partialorder %v1614, 0.0
    %vm1632 = vcmp.ge.f32.partialorder %v1617, 0.0
    %v1633 = vmul.f32 %v1587, 0.1
    %v1634 = vmul.f32 %v1589, 0.1
    %v1635 = vmul.f32 %v1592, 0.1
    %v1636 = vmul.f32 %v1594, 0.1
    %v1637 = vmul.f32 %v1597, 0.1
    %v1638 = vmul.f32 %v1599, 0.1
    %v1639 = vmul.f32 %v1602, 0.1
    %v1640 = vmul.f32 %v1604, 0.1
    %v1641 = vmul.f32 %v1607, 0.1
    %v1642 = vmul.f32 %v1609, 0.1
    %v1643 = vmul.f32 %v1612, 0.1
    %v1644 = vmul.f32 %v1614, 0.1
    %v1645 = vmul.f32 %v1617, 0.1
    %v1646 = vsel %vm1620, %v1587, %v1633
    %v1647 = vsel %vm1621, %v1589, %v1634
    %v1648 = vsel %vm1622, %v1592, %v1635
    %v1649 = vsel %vm1623, %v1594, %v1636
    %v1650 = vsel %vm1624, %v1597, %v1637
    %v1651 = vsel %vm1625, %v1599, %v1638
    %v1652 = vsel %vm1626, %v1602, %v1639
    %v1653 = vsel %vm1627, %v1604, %v1640
    %v1654 = vsel %vm1628, %v1607, %v1641
    %v1655 = vsel %vm1629, %v1609, %v1642
    %v1656 = vsel %vm1630, %v1612, %v1643
    %v1657 = vsel %vm1631, %v1614, %v1644
    %v1658 = vsel %vm1632, %v1617, %v1645
    %v1659 = vld [vmem:[#allocation2 + $0x1a0] sm:$0xff]
    %v1660 = vld [vmem:[#allocation2 + $0x1a8] sm:$0xff]
    %v1661 = vld [vmem:[#allocation2 + $0x1b0] sm:$0xff]
    %v1662 = vld [vmem:[#allocation2 + $0x1b8] sm:$0xff]
    %v1663 = vld [vmem:[#allocation2 + $0x1c0] sm:$0xff]
    %v1664 = vld [vmem:[#allocation2 + $0x1c8] sm:$0xff]
    %v1665 = vld [vmem:[#allocation2 + $0x1d0] sm:$0xff]
    %v1666 = vld [vmem:[#allocation2 + $0x1d8] sm:$0xff]
    %v1667 = vld [vmem:[#allocation2 + $0x1e0] sm:$0xff]
    %v1668 = vld [vmem:[#allocation2 + $0x1e8] sm:$0xff]
    %v1669 = vld [vmem:[#allocation2 + $0x1f0] sm:$0xff]
    %v1670 = vld [vmem:[#allocation2 + $0x1f8] sm:$0xff]
    %v1671 = vld [vmem:[#allocation2 + $0x200] sm:$0xff]
    %1673 = vset.pattern.permute.xlu0 0
    %1674 = vperm.xlu0 %1673, %v1659
    %v1675 = vpop.permute.xlu0 %1674
    %1678 = vset.pattern.permute.xlu0 0
    %1679 = vperm.xlu0 %1678, %v1660
    %v1680 = vpop.permute.xlu0 %1679
    %1683 = vset.pattern.permute.xlu0 0
    %1684 = vperm.xlu0 %1683, %v1661
    %v1685 = vpop.permute.xlu0 %1684
    %1688 = vset.pattern.permute.xlu0 0
    %1689 = vperm.xlu0 %1688, %v1662
    %v1690 = vpop.permute.xlu0 %1689
    %1693 = vset.pattern.permute.xlu0 0
    %1694 = vperm.xlu0 %1693, %v1663
    %v1695 = vpop.permute.xlu0 %1694
    %1698 = vset.pattern.permute.xlu0 0
    %1699 = vperm.xlu0 %1698, %v1664
    %v1700 = vpop.permute.xlu0 %1699
    %1703 = vset.pattern.permute.xlu0 0
    %1704 = vperm.xlu0 %1703, %v1665
    %v1705 = vpop.permute.xlu0 %1704
    %1708 = vset.pattern.permute.xlu0 0
    %1709 = vperm.xlu0 %1708, %v1666
    %v1710 = vpop.permute.xlu0 %1709
    %1713 = vset.pattern.permute.xlu0 0
    %1714 = vperm.xlu0 %1713, %v1667
    %v1715 = vpop.permute.xlu0 %1714
    %1718 = vset.pattern.permute.xlu0 0
    %1719 = vperm.xlu0 %1718, %v1668
    %v1720 = vpop.permute.xlu0 %1719
    %1723 = vset.pattern.permute.xlu0 0
    %1724 = vperm.xlu0 %1723, %v1669
    %v1725 = vpop.permute.xlu0 %1724
    %1728 = vset.pattern.permute.xlu0 0
    %1729 = vperm.xlu0 %1728, %v1670
    %v1730 = vpop.permute.xlu0 %1729
    %1733 = vset.pattern.permute.xlu0 0
    %1734 = vperm.xlu0 %1733, %v1671
    %v1735 = vpop.permute.xlu0 %1734
    %v1737 = vmul.f32 %v1646, %v1675
    %v1738 = vmul.f32 %v1647, %v1680
    %v1739 = vmul.f32 %v1648, %v1685
    %v1740 = vmul.f32 %v1649, %v1690
    %v1741 = vmul.f32 %v1650, %v1695
    %v1742 = vmul.f32 %v1651, %v1700
    %v1743 = vmul.f32 %v1652, %v1705
    %v1744 = vmul.f32 %v1653, %v1710
    %v1745 = vmul.f32 %v1654, %v1715
    %v1746 = vmul.f32 %v1655, %v1720
    %v1747 = vmul.f32 %v1656, %v1725
    %v1748 = vmul.f32 %v1657, %v1730
    %v1749 = vmul.f32 %v1658, %v1735
    %v1750 = vpack.c.bf16 %v1738, %v1737
    %v1751 = vpack.c.bf16 %v1740, %v1739
    %v1752 = vpack.c.bf16 %v1742, %v1741
    %v1753 = vpack.c.bf16 %v1744, %v1743
    %v1754 = vpack.c.bf16 %v1746, %v1745
    %v1755 = vpack.c.bf16 %v1748, %v1747
    %v1756 = vpack.c.bf16 %v1749, %v1749
    %v1757 = vld [vmem:[#allocation7 + $0x80] sm:$0xf]
    %v1758 = vld [vmem:[#allocation7 + $0x84] sm:$0xf]
    %v1759 = vld [vmem:[#allocation7 + $0x88] sm:$0xf]
    %v1760 = vld [vmem:[#allocation7 + $0x8c] sm:$0xf]
    %v1761 = vld [vmem:[#allocation7 + $0x90] sm:$0xf]
    %v1762 = vld [vmem:[#allocation7 + $0x94] sm:$0xf]
    %v1763 = vld [vmem:[#allocation7 + $0x98] sm:$0xf]
    %v1764 = vld [vmem:[#allocation7 + $0x9c] sm:$0xf]
    %v1773 = vunpack.c.l.b16 %v1757
    %v1774 = vunpack.c.l.b16 %v1758
    %v1775 = vunpack.c.l.b16 %v1759
    %v1776 = vunpack.c.l.b16 %v1760
    %v1777 = vunpack.c.l.b16 %v1761
    %v1778 = vunpack.c.l.b16 %v1762
    %v1779 = vunpack.c.l.b16 %v1763
    %v1780 = vunpack.c.l.b16 %v1764
    %v1781 = vpack.c.b16 %v1774, %v1773
    %v1782 = vpack.c.b16 %v1776, %v1775
    %v1783 = vpack.c.b16 %v1778, %v1777
    %v1784 = vpack.c.b16 %v1780, %v1779
    %v1790 = vsel %vm645, %v1750, 0
    %v1793 = vsel %vm645, %v1751, 0
    %v1796 = vsel %vm645, %v1752, 0
    %v1799 = vsel %vm645, %v1753, 0
    %v1802 = vsel %vm645, %v1754, 0
    %v1805 = vsel %vm645, %v1755, 0
    %v1808 = vsel %vm645, %v1756, 0
    %1810 = vmatpush.bf16.msra.mxu0 0
    %1811 = vmatpush.bf16.msra.mxu0 0
    %1812 = vmatpush.bf16.msra.mxu0 0
    %1813 = vmatpush.bf16.msra.mxu0 0
    %1814 = vmatpush.bf16.msra.mxu0 %v1784
    %1815 = vmatpush.bf16.msra.mxu0 %v1783
    %1816 = vmatpush.bf16.msra.mxu0 %v1782
    %1817 = vmatpush.bf16.msra.mxu0 %v1781
    %1818 = vmatmul.bf16.gmra.mxu0 %v1790
    %v1819 = vpop.f32.mrf.mxu0
    %v1820 = vadd.f32 0.0, %v1819
    %v1821 = vpop.f32.mrf.mxu0
    %v1822 = vadd.f32 0.0, %v1821
    %1823 = vmatmul.bf16.gmra.mxu0 %v1793
    %v1824 = vpop.f32.mrf.mxu0
    %v1825 = vadd.f32 0.0, %v1824
    %v1826 = vpop.f32.mrf.mxu0
    %v1827 = vadd.f32 0.0, %v1826
    %1828 = vmatmul.bf16.gmra.mxu0 %v1796
    %v1829 = vpop.f32.mrf.mxu0
    %v1830 = vadd.f32 0.0, %v1829
    %v1831 = vpop.f32.mrf.mxu0
    %v1832 = vadd.f32 0.0, %v1831
    %1833 = vmatmul.bf16.gmra.mxu0 %v1799
    %v1834 = vpop.f32.mrf.mxu0
    %v1835 = vadd.f32 0.0, %v1834
    %v1836 = vpop.f32.mrf.mxu0
    %v1837 = vadd.f32 0.0, %v1836
    %1838 = vmatmul.bf16.gmra.mxu0 %v1802
    %v1839 = vpop.f32.mrf.mxu0
    %v1840 = vadd.f32 0.0, %v1839
    %v1841 = vpop.f32.mrf.mxu0
    %v1842 = vadd.f32 0.0, %v1841
    %1843 = vmatmul.bf16.gmra.mxu0 %v1805
    %v1844 = vpop.f32.mrf.mxu0
    %v1845 = vadd.f32 0.0, %v1844
    %v1846 = vpop.f32.mrf.mxu0
    %v1847 = vadd.f32 0.0, %v1846
    %1848 = vmatmul.bf16.gmra.mxu0 %v1808
    %v1849 = vpop.f32.mrf.mxu0
    %v1850 = vadd.f32 0.0, %v1849
    %v1851 = vpop.f32.mrf.mxu0
    %1852 = vdwg.mxu0
    %v1853 = vadd.f32 %v1497, %v1820
    %v1854 = vadd.f32 %v1498, %v1822
    %v1855 = vadd.f32 %v1499, %v1825
    %v1856 = vadd.f32 %v1500, %v1827
    %v1857 = vadd.f32 %v1501, %v1830
    %v1858 = vadd.f32 %v1502, %v1832
    %v1859 = vadd.f32 %v1503, %v1835
    %v1860 = vadd.f32 %v1504, %v1837
    %v1861 = vadd.f32 %v1505, %v1840
    %v1862 = vadd.f32 %v1506, %v1842
    %v1863 = vadd.f32 %v1507, %v1845
    %v1864 = vadd.f32 %v1508, %v1847
    %v1865 = vadd.f32 %v1509, %v1850
    %v1866 = vld [vmem:[%s0 + $0x104] sm:$0xf]
    %v1867 = vld [vmem:[%s0 + $0x108] sm:$0xf]
    %v1868 = vld [vmem:[%s0 + $0x10c] sm:$0xf]
    %v1869 = vld [vmem:[%s0 + $0x110] sm:$0xf]
    %v1870 = vld [vmem:[%s0 + $0x114] sm:$0xf]
    %v1871 = vld [vmem:[%s0 + $0x118] sm:$0xf]
    %v1872 = vld [vmem:[%s0 + $0x11c] sm:$0xf]
    %v1873 = vld [vmem:[%s0 + $0x120] sm:$0xf]
    %v1874 = vld [vmem:[%s0 + $0x124] sm:$0xf]
    %v1875 = vld [vmem:[%s0 + $0x128] sm:$0xf]
    %v1876 = vld [vmem:[%s0 + $0x12c] sm:$0xf]
    %v1877 = vld [vmem:[%s0 + $0x130] sm:$0xf]
    %v1878 = vld [vmem:[%s0 + $0x134] sm:$0xf]
    %v1892 = vunpack.c.l.b16 %v1866
    %v1893 = vunpack.c.l.b16 %v1867
    %v1894 = vunpack.c.l.b16 %v1868
    %v1895 = vunpack.c.l.b16 %v1869
    %v1896 = vunpack.c.l.b16 %v1870
    %v1897 = vunpack.c.l.b16 %v1871
    %v1898 = vunpack.c.l.b16 %v1872
    %v1899 = vunpack.c.l.b16 %v1873
    %v1900 = vunpack.c.l.b16 %v1874
    %v1901 = vunpack.c.l.b16 %v1875
    %v1902 = vunpack.c.l.b16 %v1876
    %v1903 = vunpack.c.l.b16 %v1877
    %v1904 = vunpack.c.l.b16 %v1878
    %v1905 = vpack.c.b16 %v1893, %v1892
    %v1906 = vpack.c.b16 %v1895, %v1894
    %v1907 = vpack.c.b16 %v1897, %v1896
    %v1908 = vpack.c.b16 %v1899, %v1898
    %v1909 = vpack.c.b16 %v1901, %v1900
    %v1910 = vpack.c.b16 %v1903, %v1902
    %v1911 = vpack.c.b16 %v1904, %v1904
    %v1913 = vsel %vm156, %v1905, 0
    %v1916 = vsel %vm156, %v1906, 0
    %v1919 = vsel %vm156, %v1907, 0
    %v1922 = vsel %vm156, %v1908, 0
    %v1925 = vsel %vm156, %v1909, 0
    %v1928 = vsel %vm156, %v1910, 0
    %v1931 = vsel %vm156, %v1911, 0
    %1933 = vmatpush.bf16.msra.mxu0 0
    %1934 = vmatpush.bf16.msra.mxu0 0
    %1935 = vmatpush.bf16.msra.mxu0 0
    %1936 = vmatpush.bf16.msra.mxu0 0
    %1937 = vmatpush.bf16.msra.mxu0 0
    %1938 = vmatpush.bf16.msra.mxu0 0
    %1939 = vmatpush.bf16.msra.mxu0 0
    %1940 = vmatpush.bf16.msra.mxu0 %v154
    %1941 = vmatmul.bf16.gmra.mxu0 %v1913
    %v1942 = vpop.f32.mrf.mxu0
    %v1943 = vadd.f32 %v115, %v1942
    %v1944 = vpop.f32.mrf.mxu0
    %v1945 = vadd.f32 %v115, %v1944
    %1946 = vmatmul.bf16.gmra.mxu0 %v1916
    %v1947 = vpop.f32.mrf.mxu0
    %v1948 = vadd.f32 %v115, %v1947
    %v1949 = vpop.f32.mrf.mxu0
    %v1950 = vadd.f32 %v115, %v1949
    %1951 = vmatmul.bf16.gmra.mxu0 %v1919
    %v1952 = vpop.f32.mrf.mxu0
    %v1953 = vadd.f32 %v115, %v1952
    %v1954 = vpop.f32.mrf.mxu0
    %v1955 = vadd.f32 %v115, %v1954
    %1956 = vmatmul.bf16.gmra.mxu0 %v1922
    %v1957 = vpop.f32.mrf.mxu0
    %v1958 = vadd.f32 %v115, %v1957
    %v1959 = vpop.f32.mrf.mxu0
    %v1960 = vadd.f32 %v115, %v1959
    %1961 = vmatmul.bf16.gmra.mxu0 %v1925
    %v1962 = vpop.f32.mrf.mxu0
    %v1963 = vadd.f32 %v115, %v1962
    %v1964 = vpop.f32.mrf.mxu0
    %v1965 = vadd.f32 %v115, %v1964
    %1966 = vmatmul.bf16.gmra.mxu0 %v1928
    %v1967 = vpop.f32.mrf.mxu0
    %v1968 = vadd.f32 %v115, %v1967
    %v1969 = vpop.f32.mrf.mxu0
    %v1970 = vadd.f32 %v115, %v1969
    %1971 = vmatmul.bf16.gmra.mxu0 %v1931
    %v1972 = vpop.f32.mrf.mxu0
    %v1973 = vadd.f32 %v115, %v1972
    %v1974 = vpop.f32.mrf.mxu0
    %1975 = vdwg.mxu0
    %vm1976 = vcmp.ge.f32.partialorder %v1943, 0.0
    %vm1977 = vcmp.ge.f32.partialorder %v1945, 0.0
    %vm1978 = vcmp.ge.f32.partialorder %v1948, 0.0
    %vm1979 = vcmp.ge.f32.partialorder %v1950, 0.0
    %vm1980 = vcmp.ge.f32.partialorder %v1953, 0.0
    %vm1981 = vcmp.ge.f32.partialorder %v1955, 0.0
    %vm1982 = vcmp.ge.f32.partialorder %v1958, 0.0
    %vm1983 = vcmp.ge.f32.partialorder %v1960, 0.0
    %vm1984 = vcmp.ge.f32.partialorder %v1963, 0.0
    %vm1985 = vcmp.ge.f32.partialorder %v1965, 0.0
    %vm1986 = vcmp.ge.f32.partialorder %v1968, 0.0
    %vm1987 = vcmp.ge.f32.partialorder %v1970, 0.0
    %vm1988 = vcmp.ge.f32.partialorder %v1973, 0.0
    %v1989 = vmul.f32 %v1943, 0.1
    %v1990 = vmul.f32 %v1945, 0.1
    %v1991 = vmul.f32 %v1948, 0.1
    %v1992 = vmul.f32 %v1950, 0.1
    %v1993 = vmul.f32 %v1953, 0.1
    %v1994 = vmul.f32 %v1955, 0.1
    %v1995 = vmul.f32 %v1958, 0.1
    %v1996 = vmul.f32 %v1960, 0.1
    %v1997 = vmul.f32 %v1963, 0.1
    %v1998 = vmul.f32 %v1965, 0.1
    %v1999 = vmul.f32 %v1968, 0.1
    %v2000 = vmul.f32 %v1970, 0.1
    %v2001 = vmul.f32 %v1973, 0.1
    %v2002 = vsel %vm1976, %v1943, %v1989
    %v2003 = vsel %vm1977, %v1945, %v1990
    %v2004 = vsel %vm1978, %v1948, %v1991
    %v2005 = vsel %vm1979, %v1950, %v1992
    %v2006 = vsel %vm1980, %v1953, %v1993
    %v2007 = vsel %vm1981, %v1955, %v1994
    %v2008 = vsel %vm1982, %v1958, %v1995
    %v2009 = vsel %vm1983, %v1960, %v1996
    %v2010 = vsel %vm1984, %v1963, %v1997
    %v2011 = vsel %vm1985, %v1965, %v1998
    %v2012 = vsel %vm1986, %v1968, %v1999
    %v2013 = vsel %vm1987, %v1970, %v2000
    %v2014 = vsel %vm1988, %v1973, %v2001
    %v2015 = vld [vmem:[#allocation2 + $0x208] sm:$0xff]
    %v2016 = vld [vmem:[#allocation2 + $0x210] sm:$0xff]
    %v2017 = vld [vmem:[#allocation2 + $0x218] sm:$0xff]
    %v2018 = vld [vmem:[#allocation2 + $0x220] sm:$0xff]
    %v2019 = vld [vmem:[#allocation2 + $0x228] sm:$0xff]
    %v2020 = vld [vmem:[#allocation2 + $0x230] sm:$0xff]
    %v2021 = vld [vmem:[#allocation2 + $0x238] sm:$0xff]
    %v2022 = vld [vmem:[#allocation2 + $0x240] sm:$0xff]
    %v2023 = vld [vmem:[#allocation2 + $0x248] sm:$0xff]
    %v2024 = vld [vmem:[#allocation2 + $0x250] sm:$0xff]
    %v2025 = vld [vmem:[#allocation2 + $0x258] sm:$0xff]
    %v2026 = vld [vmem:[#allocation2 + $0x260] sm:$0xff]
    %v2027 = vld [vmem:[#allocation2 + $0x268] sm:$0xff]
    %2029 = vset.pattern.permute.xlu0 0
    %2030 = vperm.xlu0 %2029, %v2015
    %v2031 = vpop.permute.xlu0 %2030
    %2034 = vset.pattern.permute.xlu0 0
    %2035 = vperm.xlu0 %2034, %v2016
    %v2036 = vpop.permute.xlu0 %2035
    %2039 = vset.pattern.permute.xlu0 0
    %2040 = vperm.xlu0 %2039, %v2017
    %v2041 = vpop.permute.xlu0 %2040
    %2044 = vset.pattern.permute.xlu0 0
    %2045 = vperm.xlu0 %2044, %v2018
    %v2046 = vpop.permute.xlu0 %2045
    %2049 = vset.pattern.permute.xlu0 0
    %2050 = vperm.xlu0 %2049, %v2019
    %v2051 = vpop.permute.xlu0 %2050
    %2054 = vset.pattern.permute.xlu0 0
    %2055 = vperm.xlu0 %2054, %v2020
    %v2056 = vpop.permute.xlu0 %2055
    %2059 = vset.pattern.permute.xlu0 0
    %2060 = vperm.xlu0 %2059, %v2021
    %v2061 = vpop.permute.xlu0 %2060
    %2064 = vset.pattern.permute.xlu0 0
    %2065 = vperm.xlu0 %2064, %v2022
    %v2066 = vpop.permute.xlu0 %2065
    %2069 = vset.pattern.permute.xlu0 0
    %2070 = vperm.xlu0 %2069, %v2023
    %v2071 = vpop.permute.xlu0 %2070
    %2074 = vset.pattern.permute.xlu0 0
    %2075 = vperm.xlu0 %2074, %v2024
    %v2076 = vpop.permute.xlu0 %2075
    %2079 = vset.pattern.permute.xlu0 0
    %2080 = vperm.xlu0 %2079, %v2025
    %v2081 = vpop.permute.xlu0 %2080
    %2084 = vset.pattern.permute.xlu0 0
    %2085 = vperm.xlu0 %2084, %v2026
    %v2086 = vpop.permute.xlu0 %2085
    %2089 = vset.pattern.permute.xlu0 0
    %2090 = vperm.xlu0 %2089, %v2027
    %v2091 = vpop.permute.xlu0 %2090
    %v2093 = vmul.f32 %v2002, %v2031
    %v2094 = vmul.f32 %v2003, %v2036
    %v2095 = vmul.f32 %v2004, %v2041
    %v2096 = vmul.f32 %v2005, %v2046
    %v2097 = vmul.f32 %v2006, %v2051
    %v2098 = vmul.f32 %v2007, %v2056
    %v2099 = vmul.f32 %v2008, %v2061
    %v2100 = vmul.f32 %v2009, %v2066
    %v2101 = vmul.f32 %v2010, %v2071
    %v2102 = vmul.f32 %v2011, %v2076
    %v2103 = vmul.f32 %v2012, %v2081
    %v2104 = vmul.f32 %v2013, %v2086
    %v2105 = vmul.f32 %v2014, %v2091
    %v2106 = vpack.c.bf16 %v2094, %v2093
    %v2107 = vpack.c.bf16 %v2096, %v2095
    %v2108 = vpack.c.bf16 %v2098, %v2097
    %v2109 = vpack.c.bf16 %v2100, %v2099
    %v2110 = vpack.c.bf16 %v2102, %v2101
    %v2111 = vpack.c.bf16 %v2104, %v2103
    %v2112 = vpack.c.bf16 %v2105, %v2105
    %v2113 = vld [vmem:[#allocation7 + $0xa0] sm:$0xf]
    %v2114 = vld [vmem:[#allocation7 + $0xa4] sm:$0xf]
    %v2115 = vld [vmem:[#allocation7 + $0xa8] sm:$0xf]
    %v2116 = vld [vmem:[#allocation7 + $0xac] sm:$0xf]
    %v2117 = vld [vmem:[#allocation7 + $0xb0] sm:$0xf]
    %v2118 = vld [vmem:[#allocation7 + $0xb4] sm:$0xf]
    %v2119 = vld [vmem:[#allocation7 + $0xb8] sm:$0xf]
    %v2120 = vld [vmem:[#allocation7 + $0xbc] sm:$0xf]
    %v2129 = vunpack.c.l.b16 %v2113
    %v2130 = vunpack.c.l.b16 %v2114
    %v2131 = vunpack.c.l.b16 %v2115
    %v2132 = vunpack.c.l.b16 %v2116
    %v2133 = vunpack.c.l.b16 %v2117
    %v2134 = vunpack.c.l.b16 %v2118
    %v2135 = vunpack.c.l.b16 %v2119
    %v2136 = vunpack.c.l.b16 %v2120
    %v2137 = vpack.c.b16 %v2130, %v2129
    %v2138 = vpack.c.b16 %v2132, %v2131
    %v2139 = vpack.c.b16 %v2134, %v2133
    %v2140 = vpack.c.b16 %v2136, %v2135
    %v2146 = vsel %vm645, %v2106, 0
    %v2149 = vsel %vm645, %v2107, 0
    %v2152 = vsel %vm645, %v2108, 0
    %v2155 = vsel %vm645, %v2109, 0
    %v2158 = vsel %vm645, %v2110, 0
    %v2161 = vsel %vm645, %v2111, 0
    %v2164 = vsel %vm645, %v2112, 0
    %2166 = vmatpush.bf16.msra.mxu0 0
    %2167 = vmatpush.bf16.msra.mxu0 0
    %2168 = vmatpush.bf16.msra.mxu0 0
    %2169 = vmatpush.bf16.msra.mxu0 0
    %2170 = vmatpush.bf16.msra.mxu0 %v2140
    %2171 = vmatpush.bf16.msra.mxu0 %v2139
    %2172 = vmatpush.bf16.msra.mxu0 %v2138
    %2173 = vmatpush.bf16.msra.mxu0 %v2137
    %2174 = vmatmul.bf16.gmra.mxu0 %v2146
    %v2175 = vpop.f32.mrf.mxu0
    %v2176 = vadd.f32 0.0, %v2175
    %v2177 = vpop.f32.mrf.mxu0
    %v2178 = vadd.f32 0.0, %v2177
    %2179 = vmatmul.bf16.gmra.mxu0 %v2149
    %v2180 = vpop.f32.mrf.mxu0
    %v2181 = vadd.f32 0.0, %v2180
    %v2182 = vpop.f32.mrf.mxu0
    %v2183 = vadd.f32 0.0, %v2182
    %2184 = vmatmul.bf16.gmra.mxu0 %v2152
    %v2185 = vpop.f32.mrf.mxu0
    %v2186 = vadd.f32 0.0, %v2185
    %v2187 = vpop.f32.mrf.mxu0
    %v2188 = vadd.f32 0.0, %v2187
    %2189 = vmatmul.bf16.gmra.mxu0 %v2155
    %v2190 = vpop.f32.mrf.mxu0
    %v2191 = vadd.f32 0.0, %v2190
    %v2192 = vpop.f32.mrf.mxu0
    %v2193 = vadd.f32 0.0, %v2192
    %2194 = vmatmul.bf16.gmra.mxu0 %v2158
    %v2195 = vpop.f32.mrf.mxu0
    %v2196 = vadd.f32 0.0, %v2195
    %v2197 = vpop.f32.mrf.mxu0
    %v2198 = vadd.f32 0.0, %v2197
    %2199 = vmatmul.bf16.gmra.mxu0 %v2161
    %v2200 = vpop.f32.mrf.mxu0
    %v2201 = vadd.f32 0.0, %v2200
    %v2202 = vpop.f32.mrf.mxu0
    %v2203 = vadd.f32 0.0, %v2202
    %2204 = vmatmul.bf16.gmra.mxu0 %v2164
    %v2205 = vpop.f32.mrf.mxu0
    %v2206 = vadd.f32 0.0, %v2205
    %v2207 = vpop.f32.mrf.mxu0
    %2208 = vdwg.mxu0
    %v2209 = vadd.f32 %v1853, %v2176
    %v2210 = vadd.f32 %v1854, %v2178
    %v2211 = vadd.f32 %v1855, %v2181
    %v2212 = vadd.f32 %v1856, %v2183
    %v2213 = vadd.f32 %v1857, %v2186
    %v2214 = vadd.f32 %v1858, %v2188
    %v2215 = vadd.f32 %v1859, %v2191
    %v2216 = vadd.f32 %v1860, %v2193
    %v2217 = vadd.f32 %v1861, %v2196
    %v2218 = vadd.f32 %v1862, %v2198
    %v2219 = vadd.f32 %v1863, %v2201
    %v2220 = vadd.f32 %v1864, %v2203
    %v2221 = vadd.f32 %v1865, %v2206
    %v2222 = vld [vmem:[%s0 + $0x138] sm:$0xf]
    %v2223 = vld [vmem:[%s0 + $0x13c] sm:$0xf]
    %v2224 = vld [vmem:[%s0 + $0x140] sm:$0xf]
    %v2225 = vld [vmem:[%s0 + $0x144] sm:$0xf]
    %v2226 = vld [vmem:[%s0 + $0x148] sm:$0xf]
    %v2227 = vld [vmem:[%s0 + $0x14c] sm:$0xf]
    %v2228 = vld [vmem:[%s0 + $0x150] sm:$0xf]
    %v2229 = vld [vmem:[%s0 + $0x154] sm:$0xf]
    %v2230 = vld [vmem:[%s0 + $0x158] sm:$0xf]
    %v2231 = vld [vmem:[%s0 + $0x15c] sm:$0xf]
    %v2232 = vld [vmem:[%s0 + $0x160] sm:$0xf]
    %v2233 = vld [vmem:[%s0 + $0x164] sm:$0xf]
    %v2234 = vld [vmem:[%s0 + $0x168] sm:$0xf]
    %v2248 = vunpack.c.l.b16 %v2222
    %v2249 = vunpack.c.l.b16 %v2223
    %v2250 = vunpack.c.l.b16 %v2224
    %v2251 = vunpack.c.l.b16 %v2225
    %v2252 = vunpack.c.l.b16 %v2226
    %v2253 = vunpack.c.l.b16 %v2227
    %v2254 = vunpack.c.l.b16 %v2228
    %v2255 = vunpack.c.l.b16 %v2229
    %v2256 = vunpack.c.l.b16 %v2230
    %v2257 = vunpack.c.l.b16 %v2231
    %v2258 = vunpack.c.l.b16 %v2232
    %v2259 = vunpack.c.l.b16 %v2233
    %v2260 = vunpack.c.l.b16 %v2234
    %v2261 = vpack.c.b16 %v2249, %v2248
    %v2262 = vpack.c.b16 %v2251, %v2250
    %v2263 = vpack.c.b16 %v2253, %v2252
    %v2264 = vpack.c.b16 %v2255, %v2254
    %v2265 = vpack.c.b16 %v2257, %v2256
    %v2266 = vpack.c.b16 %v2259, %v2258
    %v2267 = vpack.c.b16 %v2260, %v2260
    %v2269 = vsel %vm156, %v2261, 0
    %v2272 = vsel %vm156, %v2262, 0
    %v2275 = vsel %vm156, %v2263, 0
    %v2278 = vsel %vm156, %v2264, 0
    %v2281 = vsel %vm156, %v2265, 0
    %v2284 = vsel %vm156, %v2266, 0
    %v2287 = vsel %vm156, %v2267, 0
    %2289 = vmatpush.bf16.msra.mxu0 0
    %2290 = vmatpush.bf16.msra.mxu0 0
    %2291 = vmatpush.bf16.msra.mxu0 0
    %2292 = vmatpush.bf16.msra.mxu0 0
    %2293 = vmatpush.bf16.msra.mxu0 0
    %2294 = vmatpush.bf16.msra.mxu0 0
    %2295 = vmatpush.bf16.msra.mxu0 0
    %2296 = vmatpush.bf16.msra.mxu0 %v154
    %2297 = vmatmul.bf16.gmra.mxu0 %v2269
    %v2298 = vpop.f32.mrf.mxu0
    %v2299 = vadd.f32 %v115, %v2298
    %v2300 = vpop.f32.mrf.mxu0
    %v2301 = vadd.f32 %v115, %v2300
    %2302 = vmatmul.bf16.gmra.mxu0 %v2272
    %v2303 = vpop.f32.mrf.mxu0
    %v2304 = vadd.f32 %v115, %v2303
    %v2305 = vpop.f32.mrf.mxu0
    %v2306 = vadd.f32 %v115, %v2305
    %2307 = vmatmul.bf16.gmra.mxu0 %v2275
    %v2308 = vpop.f32.mrf.mxu0
    %v2309 = vadd.f32 %v115, %v2308
    %v2310 = vpop.f32.mrf.mxu0
    %v2311 = vadd.f32 %v115, %v2310
    %2312 = vmatmul.bf16.gmra.mxu0 %v2278
    %v2313 = vpop.f32.mrf.mxu0
    %v2314 = vadd.f32 %v115, %v2313
    %v2315 = vpop.f32.mrf.mxu0
    %v2316 = vadd.f32 %v115, %v2315
    %2317 = vmatmul.bf16.gmra.mxu0 %v2281
    %v2318 = vpop.f32.mrf.mxu0
    %v2319 = vadd.f32 %v115, %v2318
    %v2320 = vpop.f32.mrf.mxu0
    %v2321 = vadd.f32 %v115, %v2320
    %2322 = vmatmul.bf16.gmra.mxu0 %v2284
    %v2323 = vpop.f32.mrf.mxu0
    %v2324 = vadd.f32 %v115, %v2323
    %v2325 = vpop.f32.mrf.mxu0
    %v2326 = vadd.f32 %v115, %v2325
    %2327 = vmatmul.bf16.gmra.mxu0 %v2287
    %v2328 = vpop.f32.mrf.mxu0
    %v2329 = vadd.f32 %v115, %v2328
    %v2330 = vpop.f32.mrf.mxu0
    %2331 = vdwg.mxu0
    %vm2332 = vcmp.ge.f32.partialorder %v2299, 0.0
    %vm2333 = vcmp.ge.f32.partialorder %v2301, 0.0
    %vm2334 = vcmp.ge.f32.partialorder %v2304, 0.0
    %vm2335 = vcmp.ge.f32.partialorder %v2306, 0.0
    %vm2336 = vcmp.ge.f32.partialorder %v2309, 0.0
    %vm2337 = vcmp.ge.f32.partialorder %v2311, 0.0
    %vm2338 = vcmp.ge.f32.partialorder %v2314, 0.0
    %vm2339 = vcmp.ge.f32.partialorder %v2316, 0.0
    %vm2340 = vcmp.ge.f32.partialorder %v2319, 0.0
    %vm2341 = vcmp.ge.f32.partialorder %v2321, 0.0
    %vm2342 = vcmp.ge.f32.partialorder %v2324, 0.0
    %vm2343 = vcmp.ge.f32.partialorder %v2326, 0.0
    %vm2344 = vcmp.ge.f32.partialorder %v2329, 0.0
    %v2345 = vmul.f32 %v2299, 0.1
    %v2346 = vmul.f32 %v2301, 0.1
    %v2347 = vmul.f32 %v2304, 0.1
    %v2348 = vmul.f32 %v2306, 0.1
    %v2349 = vmul.f32 %v2309, 0.1
    %v2350 = vmul.f32 %v2311, 0.1
    %v2351 = vmul.f32 %v2314, 0.1
    %v2352 = vmul.f32 %v2316, 0.1
    %v2353 = vmul.f32 %v2319, 0.1
    %v2354 = vmul.f32 %v2321, 0.1
    %v2355 = vmul.f32 %v2324, 0.1
    %v2356 = vmul.f32 %v2326, 0.1
    %v2357 = vmul.f32 %v2329, 0.1
    %v2358 = vsel %vm2332, %v2299, %v2345
    %v2359 = vsel %vm2333, %v2301, %v2346
    %v2360 = vsel %vm2334, %v2304, %v2347
    %v2361 = vsel %vm2335, %v2306, %v2348
    %v2362 = vsel %vm2336, %v2309, %v2349
    %v2363 = vsel %vm2337, %v2311, %v2350
    %v2364 = vsel %vm2338, %v2314, %v2351
    %v2365 = vsel %vm2339, %v2316, %v2352
    %v2366 = vsel %vm2340, %v2319, %v2353
    %v2367 = vsel %vm2341, %v2321, %v2354
    %v2368 = vsel %vm2342, %v2324, %v2355
    %v2369 = vsel %vm2343, %v2326, %v2356
    %v2370 = vsel %vm2344, %v2329, %v2357
    %v2371 = vld [vmem:[#allocation2 + $0x270] sm:$0xff]
    %v2372 = vld [vmem:[#allocation2 + $0x278] sm:$0xff]
    %v2373 = vld [vmem:[#allocation2 + $0x280] sm:$0xff]
    %v2374 = vld [vmem:[#allocation2 + $0x288] sm:$0xff]
    %v2375 = vld [vmem:[#allocation2 + $0x290] sm:$0xff]
    %v2376 = vld [vmem:[#allocation2 + $0x298] sm:$0xff]
    %v2377 = vld [vmem:[#allocation2 + $0x2a0] sm:$0xff]
    %v2378 = vld [vmem:[#allocation2 + $0x2a8] sm:$0xff]
    %v2379 = vld [vmem:[#allocation2 + $0x2b0] sm:$0xff]
    %v2380 = vld [vmem:[#allocation2 + $0x2b8] sm:$0xff]
    %v2381 = vld [vmem:[#allocation2 + $0x2c0] sm:$0xff]
    %v2382 = vld [vmem:[#allocation2 + $0x2c8] sm:$0xff]
    %v2383 = vld [vmem:[#allocation2 + $0x2d0] sm:$0xff]
    %2385 = vset.pattern.permute.xlu0 0
    %2386 = vperm.xlu0 %2385, %v2371
    %v2387 = vpop.permute.xlu0 %2386
    %2390 = vset.pattern.permute.xlu0 0
    %2391 = vperm.xlu0 %2390, %v2372
    %v2392 = vpop.permute.xlu0 %2391
    %2395 = vset.pattern.permute.xlu0 0
    %2396 = vperm.xlu0 %2395, %v2373
    %v2397 = vpop.permute.xlu0 %2396
    %2400 = vset.pattern.permute.xlu0 0
    %2401 = vperm.xlu0 %2400, %v2374
    %v2402 = vpop.permute.xlu0 %2401
    %2405 = vset.pattern.permute.xlu0 0
    %2406 = vperm.xlu0 %2405, %v2375
    %v2407 = vpop.permute.xlu0 %2406
    %2410 = vset.pattern.permute.xlu0 0
    %2411 = vperm.xlu0 %2410, %v2376
    %v2412 = vpop.permute.xlu0 %2411
    %2415 = vset.pattern.permute.xlu0 0
    %2416 = vperm.xlu0 %2415, %v2377
    %v2417 = vpop.permute.xlu0 %2416
    %2420 = vset.pattern.permute.xlu0 0
    %2421 = vperm.xlu0 %2420, %v2378
    %v2422 = vpop.permute.xlu0 %2421
    %2425 = vset.pattern.permute.xlu0 0
    %2426 = vperm.xlu0 %2425, %v2379
    %v2427 = vpop.permute.xlu0 %2426
    %2430 = vset.pattern.permute.xlu0 0
    %2431 = vperm.xlu0 %2430, %v2380
    %v2432 = vpop.permute.xlu0 %2431
    %2435 = vset.pattern.permute.xlu0 0
    %2436 = vperm.xlu0 %2435, %v2381
    %v2437 = vpop.permute.xlu0 %2436
    %2440 = vset.pattern.permute.xlu0 0
    %2441 = vperm.xlu0 %2440, %v2382
    %v2442 = vpop.permute.xlu0 %2441
    %2445 = vset.pattern.permute.xlu0 0
    %2446 = vperm.xlu0 %2445, %v2383
    %v2447 = vpop.permute.xlu0 %2446
    %v2449 = vmul.f32 %v2358, %v2387
    %v2450 = vmul.f32 %v2359, %v2392
    %v2451 = vmul.f32 %v2360, %v2397
    %v2452 = vmul.f32 %v2361, %v2402
    %v2453 = vmul.f32 %v2362, %v2407
    %v2454 = vmul.f32 %v2363, %v2412
    %v2455 = vmul.f32 %v2364, %v2417
    %v2456 = vmul.f32 %v2365, %v2422
    %v2457 = vmul.f32 %v2366, %v2427
    %v2458 = vmul.f32 %v2367, %v2432
    %v2459 = vmul.f32 %v2368, %v2437
    %v2460 = vmul.f32 %v2369, %v2442
    %v2461 = vmul.f32 %v2370, %v2447
    %v2462 = vpack.c.bf16 %v2450, %v2449
    %v2463 = vpack.c.bf16 %v2452, %v2451
    %v2464 = vpack.c.bf16 %v2454, %v2453
    %v2465 = vpack.c.bf16 %v2456, %v2455
    %v2466 = vpack.c.bf16 %v2458, %v2457
    %v2467 = vpack.c.bf16 %v2460, %v2459
    %v2468 = vpack.c.bf16 %v2461, %v2461
    %v2469 = vld [vmem:[#allocation7 + $0xc0] sm:$0xf]
    %v2470 = vld [vmem:[#allocation7 + $0xc4] sm:$0xf]
    %v2471 = vld [vmem:[#allocation7 + $0xc8] sm:$0xf]
    %v2472 = vld [vmem:[#allocation7 + $0xcc] sm:$0xf]
    %v2473 = vld [vmem:[#allocation7 + $0xd0] sm:$0xf]
    %v2474 = vld [vmem:[#allocation7 + $0xd4] sm:$0xf]
    %v2475 = vld [vmem:[#allocation7 + $0xd8] sm:$0xf]
    %v2476 = vld [vmem:[#allocation7 + $0xdc] sm:$0xf]
    %v2485 = vunpack.c.l.b16 %v2469
    %v2486 = vunpack.c.l.b16 %v2470
    %v2487 = vunpack.c.l.b16 %v2471
    %v2488 = vunpack.c.l.b16 %v2472
    %v2489 = vunpack.c.l.b16 %v2473
    %v2490 = vunpack.c.l.b16 %v2474
    %v2491 = vunpack.c.l.b16 %v2475
    %v2492 = vunpack.c.l.b16 %v2476
    %v2493 = vpack.c.b16 %v2486, %v2485
    %v2494 = vpack.c.b16 %v2488, %v2487
    %v2495 = vpack.c.b16 %v2490, %v2489
    %v2496 = vpack.c.b16 %v2492, %v2491
    %v2502 = vsel %vm645, %v2462, 0
    %v2505 = vsel %vm645, %v2463, 0
    %v2508 = vsel %vm645, %v2464, 0
    %v2511 = vsel %vm645, %v2465, 0
    %v2514 = vsel %vm645, %v2466, 0
    %v2517 = vsel %vm645, %v2467, 0
    %v2520 = vsel %vm645, %v2468, 0
    %2522 = vmatpush.bf16.msra.mxu0 0
    %2523 = vmatpush.bf16.msra.mxu0 0
    %2524 = vmatpush.bf16.msra.mxu0 0
    %2525 = vmatpush.bf16.msra.mxu0 0
    %2526 = vmatpush.bf16.msra.mxu0 %v2496
    %2527 = vmatpush.bf16.msra.mxu0 %v2495
    %2528 = vmatpush.bf16.msra.mxu0 %v2494
    %2529 = vmatpush.bf16.msra.mxu0 %v2493
    %2530 = vmatmul.bf16.gmra.mxu0 %v2502
    %v2531 = vpop.f32.mrf.mxu0
    %v2532 = vadd.f32 0.0, %v2531
    %v2533 = vpop.f32.mrf.mxu0
    %v2534 = vadd.f32 0.0, %v2533
    %2535 = vmatmul.bf16.gmra.mxu0 %v2505
    %v2536 = vpop.f32.mrf.mxu0
    %v2537 = vadd.f32 0.0, %v2536
    %v2538 = vpop.f32.mrf.mxu0
    %v2539 = vadd.f32 0.0, %v2538
    %2540 = vmatmul.bf16.gmra.mxu0 %v2508
    %v2541 = vpop.f32.mrf.mxu0
    %v2542 = vadd.f32 0.0, %v2541
    %v2543 = vpop.f32.mrf.mxu0
    %v2544 = vadd.f32 0.0, %v2543
    %2545 = vmatmul.bf16.gmra.mxu0 %v2511
    %v2546 = vpop.f32.mrf.mxu0
    %v2547 = vadd.f32 0.0, %v2546
    %v2548 = vpop.f32.mrf.mxu0
    %v2549 = vadd.f32 0.0, %v2548
    %2550 = vmatmul.bf16.gmra.mxu0 %v2514
    %v2551 = vpop.f32.mrf.mxu0
    %v2552 = vadd.f32 0.0, %v2551
    %v2553 = vpop.f32.mrf.mxu0
    %v2554 = vadd.f32 0.0, %v2553
    %2555 = vmatmul.bf16.gmra.mxu0 %v2517
    %v2556 = vpop.f32.mrf.mxu0
    %v2557 = vadd.f32 0.0, %v2556
    %v2558 = vpop.f32.mrf.mxu0
    %v2559 = vadd.f32 0.0, %v2558
    %2560 = vmatmul.bf16.gmra.mxu0 %v2520
    %v2561 = vpop.f32.mrf.mxu0
    %v2562 = vadd.f32 0.0, %v2561
    %v2563 = vpop.f32.mrf.mxu0
    %2564 = vdwg.mxu0
    %v2565 = vadd.f32 %v2209, %v2532
    %v2566 = vadd.f32 %v2210, %v2534
    %v2567 = vadd.f32 %v2211, %v2537
    %v2568 = vadd.f32 %v2212, %v2539
    %v2569 = vadd.f32 %v2213, %v2542
    %v2570 = vadd.f32 %v2214, %v2544
    %v2571 = vadd.f32 %v2215, %v2547
    %v2572 = vadd.f32 %v2216, %v2549
    %v2573 = vadd.f32 %v2217, %v2552
    %v2574 = vadd.f32 %v2218, %v2554
    %v2575 = vadd.f32 %v2219, %v2557
    %v2576 = vadd.f32 %v2220, %v2559
    %v2577 = vadd.f32 %v2221, %v2562
    %v2578 = vld [vmem:[%s0 + $0x16c] sm:$0xf]
    %v2579 = vld [vmem:[%s0 + $0x170] sm:$0xf]
    %v2580 = vld [vmem:[%s0 + $0x174] sm:$0xf]
    %v2581 = vld [vmem:[%s0 + $0x178] sm:$0xf]
    %v2582 = vld [vmem:[%s0 + $0x17c] sm:$0xf]
    %v2583 = vld [vmem:[%s0 + $0x180] sm:$0xf]
    %v2584 = vld [vmem:[%s0 + $0x184] sm:$0xf]
    %v2585 = vld [vmem:[%s0 + $0x188] sm:$0xf]
    %v2586 = vld [vmem:[%s0 + $0x18c] sm:$0xf]
    %v2587 = vld [vmem:[%s0 + $0x190] sm:$0xf]
    %v2588 = vld [vmem:[%s0 + $0x194] sm:$0xf]
    %v2589 = vld [vmem:[%s0 + $0x198] sm:$0xf]
    %v2590 = vld [vmem:[%s0 + $0x19c] sm:$0xf]
    %v2604 = vunpack.c.l.b16 %v2578
    %v2605 = vunpack.c.l.b16 %v2579
    %v2606 = vunpack.c.l.b16 %v2580
    %v2607 = vunpack.c.l.b16 %v2581
    %v2608 = vunpack.c.l.b16 %v2582
    %v2609 = vunpack.c.l.b16 %v2583
    %v2610 = vunpack.c.l.b16 %v2584
    %v2611 = vunpack.c.l.b16 %v2585
    %v2612 = vunpack.c.l.b16 %v2586
    %v2613 = vunpack.c.l.b16 %v2587
    %v2614 = vunpack.c.l.b16 %v2588
    %v2615 = vunpack.c.l.b16 %v2589
    %v2616 = vunpack.c.l.b16 %v2590
    %v2617 = vpack.c.b16 %v2605, %v2604
    %v2618 = vpack.c.b16 %v2607, %v2606
    %v2619 = vpack.c.b16 %v2609, %v2608
    %v2620 = vpack.c.b16 %v2611, %v2610
    %v2621 = vpack.c.b16 %v2613, %v2612
    %v2622 = vpack.c.b16 %v2615, %v2614
    %v2623 = vpack.c.b16 %v2616, %v2616
    %v2625 = vsel %vm156, %v2617, 0
    %v2628 = vsel %vm156, %v2618, 0
    %v2631 = vsel %vm156, %v2619, 0
    %v2634 = vsel %vm156, %v2620, 0
    %v2637 = vsel %vm156, %v2621, 0
    %v2640 = vsel %vm156, %v2622, 0
    %v2643 = vsel %vm156, %v2623, 0
    %2645 = vmatpush.bf16.msra.mxu0 0
    %2646 = vmatpush.bf16.msra.mxu0 0
    %2647 = vmatpush.bf16.msra.mxu0 0
    %2648 = vmatpush.bf16.msra.mxu0 0
    %2649 = vmatpush.bf16.msra.mxu0 0
    %2650 = vmatpush.bf16.msra.mxu0 0
    %2651 = vmatpush.bf16.msra.mxu0 0
    %2652 = vmatpush.bf16.msra.mxu0 %v154
    %2653 = vmatmul.bf16.gmra.mxu0 %v2625
    %v2654 = vpop.f32.mrf.mxu0
    %v2655 = vadd.f32 %v115, %v2654
    %v2656 = vpop.f32.mrf.mxu0
    %v2657 = vadd.f32 %v115, %v2656
    %2658 = vmatmul.bf16.gmra.mxu0 %v2628
    %v2659 = vpop.f32.mrf.mxu0
    %v2660 = vadd.f32 %v115, %v2659
    %v2661 = vpop.f32.mrf.mxu0
    %v2662 = vadd.f32 %v115, %v2661
    %2663 = vmatmul.bf16.gmra.mxu0 %v2631
    %v2664 = vpop.f32.mrf.mxu0
    %v2665 = vadd.f32 %v115, %v2664
    %v2666 = vpop.f32.mrf.mxu0
    %v2667 = vadd.f32 %v115, %v2666
    %2668 = vmatmul.bf16.gmra.mxu0 %v2634
    %v2669 = vpop.f32.mrf.mxu0
    %v2670 = vadd.f32 %v115, %v2669
    %v2671 = vpop.f32.mrf.mxu0
    %v2672 = vadd.f32 %v115, %v2671
    %2673 = vmatmul.bf16.gmra.mxu0 %v2637
    %v2674 = vpop.f32.mrf.mxu0
    %v2675 = vadd.f32 %v115, %v2674
    %v2676 = vpop.f32.mrf.mxu0
    %v2677 = vadd.f32 %v115, %v2676
    %2678 = vmatmul.bf16.gmra.mxu0 %v2640
    %v2679 = vpop.f32.mrf.mxu0
    %v2680 = vadd.f32 %v115, %v2679
    %v2681 = vpop.f32.mrf.mxu0
    %v2682 = vadd.f32 %v115, %v2681
    %2683 = vmatmul.bf16.gmra.mxu0 %v2643
    %v2684 = vpop.f32.mrf.mxu0
    %v2685 = vadd.f32 %v115, %v2684
    %v2686 = vpop.f32.mrf.mxu0
    %2687 = vdwg.mxu0
    %vm2688 = vcmp.ge.f32.partialorder %v2655, 0.0
    %vm2689 = vcmp.ge.f32.partialorder %v2657, 0.0
    %vm2690 = vcmp.ge.f32.partialorder %v2660, 0.0
    %vm2691 = vcmp.ge.f32.partialorder %v2662, 0.0
    %vm2692 = vcmp.ge.f32.partialorder %v2665, 0.0
    %vm2693 = vcmp.ge.f32.partialorder %v2667, 0.0
    %vm2694 = vcmp.ge.f32.partialorder %v2670, 0.0
    %vm2695 = vcmp.ge.f32.partialorder %v2672, 0.0
    %vm2696 = vcmp.ge.f32.partialorder %v2675, 0.0
    %vm2697 = vcmp.ge.f32.partialorder %v2677, 0.0
    %vm2698 = vcmp.ge.f32.partialorder %v2680, 0.0
    %vm2699 = vcmp.ge.f32.partialorder %v2682, 0.0
    %vm2700 = vcmp.ge.f32.partialorder %v2685, 0.0
    %v2701 = vmul.f32 %v2655, 0.1
    %v2702 = vmul.f32 %v2657, 0.1
    %v2703 = vmul.f32 %v2660, 0.1
    %v2704 = vmul.f32 %v2662, 0.1
    %v2705 = vmul.f32 %v2665, 0.1
    %v2706 = vmul.f32 %v2667, 0.1
    %v2707 = vmul.f32 %v2670, 0.1
    %v2708 = vmul.f32 %v2672, 0.1
    %v2709 = vmul.f32 %v2675, 0.1
    %v2710 = vmul.f32 %v2677, 0.1
    %v2711 = vmul.f32 %v2680, 0.1
    %v2712 = vmul.f32 %v2682, 0.1
    %v2713 = vmul.f32 %v2685, 0.1
    %v2714 = vsel %vm2688, %v2655, %v2701
    %v2715 = vsel %vm2689, %v2657, %v2702
    %v2716 = vsel %vm2690, %v2660, %v2703
    %v2717 = vsel %vm2691, %v2662, %v2704
    %v2718 = vsel %vm2692, %v2665, %v2705
    %v2719 = vsel %vm2693, %v2667, %v2706
    %v2720 = vsel %vm2694, %v2670, %v2707
    %v2721 = vsel %vm2695, %v2672, %v2708
    %v2722 = vsel %vm2696, %v2675, %v2709
    %v2723 = vsel %vm2697, %v2677, %v2710
    %v2724 = vsel %vm2698, %v2680, %v2711
    %v2725 = vsel %vm2699, %v2682, %v2712
    %v2726 = vsel %vm2700, %v2685, %v2713
    %v2727 = vld [vmem:[#allocation2 + $0x2d8] sm:$0xff]
    %v2728 = vld [vmem:[#allocation2 + $0x2e0] sm:$0xff]
    %v2729 = vld [vmem:[#allocation2 + $0x2e8] sm:$0xff]
    %v2730 = vld [vmem:[#allocation2 + $0x2f0] sm:$0xff]
    %v2731 = vld [vmem:[#allocation2 + $0x2f8] sm:$0xff]
    %v2732 = vld [vmem:[#allocation2 + $0x300] sm:$0xff]
    %v2733 = vld [vmem:[#allocation2 + $0x308] sm:$0xff]
    %v2734 = vld [vmem:[#allocation2 + $0x310] sm:$0xff]
    %v2735 = vld [vmem:[#allocation2 + $0x318] sm:$0xff]
    %v2736 = vld [vmem:[#allocation2 + $0x320] sm:$0xff]
    %v2737 = vld [vmem:[#allocation2 + $0x328] sm:$0xff]
    %v2738 = vld [vmem:[#allocation2 + $0x330] sm:$0xff]
    %v2739 = vld [vmem:[#allocation2 + $0x338] sm:$0xff]
    %2741 = vset.pattern.permute.xlu0 0
    %2742 = vperm.xlu0 %2741, %v2727
    %v2743 = vpop.permute.xlu0 %2742
    %2746 = vset.pattern.permute.xlu0 0
    %2747 = vperm.xlu0 %2746, %v2728
    %v2748 = vpop.permute.xlu0 %2747
    %2751 = vset.pattern.permute.xlu0 0
    %2752 = vperm.xlu0 %2751, %v2729
    %v2753 = vpop.permute.xlu0 %2752
    %2756 = vset.pattern.permute.xlu0 0
    %2757 = vperm.xlu0 %2756, %v2730
    %v2758 = vpop.permute.xlu0 %2757
    %2761 = vset.pattern.permute.xlu0 0
    %2762 = vperm.xlu0 %2761, %v2731
    %v2763 = vpop.permute.xlu0 %2762
    %2766 = vset.pattern.permute.xlu0 0
    %2767 = vperm.xlu0 %2766, %v2732
    %v2768 = vpop.permute.xlu0 %2767
    %2771 = vset.pattern.permute.xlu0 0
    %2772 = vperm.xlu0 %2771, %v2733
    %v2773 = vpop.permute.xlu0 %2772
    %2776 = vset.pattern.permute.xlu0 0
    %2777 = vperm.xlu0 %2776, %v2734
    %v2778 = vpop.permute.xlu0 %2777
    %2781 = vset.pattern.permute.xlu0 0
    %2782 = vperm.xlu0 %2781, %v2735
    %v2783 = vpop.permute.xlu0 %2782
    %2786 = vset.pattern.permute.xlu0 0
    %2787 = vperm.xlu0 %2786, %v2736
    %v2788 = vpop.permute.xlu0 %2787
    %2791 = vset.pattern.permute.xlu0 0
    %2792 = vperm.xlu0 %2791, %v2737
    %v2793 = vpop.permute.xlu0 %2792
    %2796 = vset.pattern.permute.xlu0 0
    %2797 = vperm.xlu0 %2796, %v2738
    %v2798 = vpop.permute.xlu0 %2797
    %2801 = vset.pattern.permute.xlu0 0
    %2802 = vperm.xlu0 %2801, %v2739
    %v2803 = vpop.permute.xlu0 %2802
    %v2805 = vmul.f32 %v2714, %v2743
    %v2806 = vmul.f32 %v2715, %v2748
    %v2807 = vmul.f32 %v2716, %v2753
    %v2808 = vmul.f32 %v2717, %v2758
    %v2809 = vmul.f32 %v2718, %v2763
    %v2810 = vmul.f32 %v2719, %v2768
    %v2811 = vmul.f32 %v2720, %v2773
    %v2812 = vmul.f32 %v2721, %v2778
    %v2813 = vmul.f32 %v2722, %v2783
    %v2814 = vmul.f32 %v2723, %v2788
    %v2815 = vmul.f32 %v2724, %v2793
    %v2816 = vmul.f32 %v2725, %v2798
    %v2817 = vmul.f32 %v2726, %v2803
    %v2818 = vpack.c.bf16 %v2806, %v2805
    %v2819 = vpack.c.bf16 %v2808, %v2807
    %v2820 = vpack.c.bf16 %v2810, %v2809
    %v2821 = vpack.c.bf16 %v2812, %v2811
    %v2822 = vpack.c.bf16 %v2814, %v2813
    %v2823 = vpack.c.bf16 %v2816, %v2815
    %v2824 = vpack.c.bf16 %v2817, %v2817
    %v2825 = vld [vmem:[#allocation7 + $0xe0] sm:$0xf]
    %v2826 = vld [vmem:[#allocation7 + $0xe4] sm:$0xf]
    %v2827 = vld [vmem:[#allocation7 + $0xe8] sm:$0xf]
    %v2828 = vld [vmem:[#allocation7 + $0xec] sm:$0xf]
    %v2829 = vld [vmem:[#allocation7 + $0xf0] sm:$0xf]
    %v2830 = vld [vmem:[#allocation7 + $0xf4] sm:$0xf]
    %v2831 = vld [vmem:[#allocation7 + $0xf8] sm:$0xf]
    %v2832 = vld [vmem:[#allocation7 + $0xfc] sm:$0xf]
    %v2841 = vunpack.c.l.b16 %v2825
    %v2842 = vunpack.c.l.b16 %v2826
    %v2843 = vunpack.c.l.b16 %v2827
    %v2844 = vunpack.c.l.b16 %v2828
    %v2845 = vunpack.c.l.b16 %v2829
    %v2846 = vunpack.c.l.b16 %v2830
    %v2847 = vunpack.c.l.b16 %v2831
    %v2848 = vunpack.c.l.b16 %v2832
    %v2849 = vpack.c.b16 %v2842, %v2841
    %v2850 = vpack.c.b16 %v2844, %v2843
    %v2851 = vpack.c.b16 %v2846, %v2845
    %v2852 = vpack.c.b16 %v2848, %v2847
    %v2858 = vsel %vm645, %v2818, 0
    %v2861 = vsel %vm645, %v2819, 0
    %v2864 = vsel %vm645, %v2820, 0
    %v2867 = vsel %vm645, %v2821, 0
    %v2870 = vsel %vm645, %v2822, 0
    %v2873 = vsel %vm645, %v2823, 0
    %v2876 = vsel %vm645, %v2824, 0
    %2878 = vmatpush.bf16.msra.mxu0 0
    %2879 = vmatpush.bf16.msra.mxu0 0
    %2880 = vmatpush.bf16.msra.mxu0 0
    %2881 = vmatpush.bf16.msra.mxu0 0
    %2882 = vmatpush.bf16.msra.mxu0 %v2852
    %2883 = vmatpush.bf16.msra.mxu0 %v2851
    %2884 = vmatpush.bf16.msra.mxu0 %v2850
    %2885 = vmatpush.bf16.msra.mxu0 %v2849
    %2886 = vmatmul.bf16.gmra.mxu0 %v2858
    %v2887 = vpop.f32.mrf.mxu0
    %v2888 = vadd.f32 0.0, %v2887
    %v2889 = vpop.f32.mrf.mxu0
    %v2890 = vadd.f32 0.0, %v2889
    %2891 = vmatmul.bf16.gmra.mxu0 %v2861
    %v2892 = vpop.f32.mrf.mxu0
    %v2893 = vadd.f32 0.0, %v2892
    %v2894 = vpop.f32.mrf.mxu0
    %v2895 = vadd.f32 0.0, %v2894
    %2896 = vmatmul.bf16.gmra.mxu0 %v2864
    %v2897 = vpop.f32.mrf.mxu0
    %v2898 = vadd.f32 0.0, %v2897
    %v2899 = vpop.f32.mrf.mxu0
    %v2900 = vadd.f32 0.0, %v2899
    %2901 = vmatmul.bf16.gmra.mxu0 %v2867
    %v2902 = vpop.f32.mrf.mxu0
    %v2903 = vadd.f32 0.0, %v2902
    %v2904 = vpop.f32.mrf.mxu0
    %v2905 = vadd.f32 0.0, %v2904
    %2906 = vmatmul.bf16.gmra.mxu0 %v2870
    %v2907 = vpop.f32.mrf.mxu0
    %v2908 = vadd.f32 0.0, %v2907
    %v2909 = vpop.f32.mrf.mxu0
    %v2910 = vadd.f32 0.0, %v2909
    %2911 = vmatmul.bf16.gmra.mxu0 %v2873
    %v2912 = vpop.f32.mrf.mxu0
    %v2913 = vadd.f32 0.0, %v2912
    %v2914 = vpop.f32.mrf.mxu0
    %v2915 = vadd.f32 0.0, %v2914
    %2916 = vmatmul.bf16.gmra.mxu0 %v2876
    %v2917 = vpop.f32.mrf.mxu0
    %v2918 = vadd.f32 0.0, %v2917
    %v2919 = vpop.f32.mrf.mxu0
    %2920 = vdwg.mxu0
    %v2921 = vadd.f32 %v2565, %v2888
    %v2922 = vadd.f32 %v2566, %v2890
    %v2923 = vadd.f32 %v2567, %v2893
    %v2924 = vadd.f32 %v2568, %v2895
    %v2925 = vadd.f32 %v2569, %v2898
    %v2926 = vadd.f32 %v2570, %v2900
    %v2927 = vadd.f32 %v2571, %v2903
    %v2928 = vadd.f32 %v2572, %v2905
    %v2929 = vadd.f32 %v2573, %v2908
    %v2930 = vadd.f32 %v2574, %v2910
    %v2931 = vadd.f32 %v2575, %v2913
    %v2932 = vadd.f32 %v2576, %v2915
    %v2933 = vadd.f32 %v2577, %v2918
    %v2934 = vld [vmem:[%s0 + $0x1a0] sm:$0xf]
    %v2935 = vld [vmem:[%s0 + $0x1a4] sm:$0xf]
    %v2936 = vld [vmem:[%s0 + $0x1a8] sm:$0xf]
    %v2937 = vld [vmem:[%s0 + $0x1ac] sm:$0xf]
    %v2938 = vld [vmem:[%s0 + $0x1b0] sm:$0xf]
    %v2939 = vld [vmem:[%s0 + $0x1b4] sm:$0xf]
    %v2940 = vld [vmem:[%s0 + $0x1b8] sm:$0xf]
    %v2941 = vld [vmem:[%s0 + $0x1bc] sm:$0xf]
    %v2942 = vld [vmem:[%s0 + $0x1c0] sm:$0xf]
    %v2943 = vld [vmem:[%s0 + $0x1c4] sm:$0xf]
    %v2944 = vld [vmem:[%s0 + $0x1c8] sm:$0xf]
    %v2945 = vld [vmem:[%s0 + $0x1cc] sm:$0xf]
    %v2946 = vld [vmem:[%s0 + $0x1d0] sm:$0xf]
    %v2960 = vunpack.c.l.b16 %v2934
    %v2961 = vunpack.c.l.b16 %v2935
    %v2962 = vunpack.c.l.b16 %v2936
    %v2963 = vunpack.c.l.b16 %v2937
    %v2964 = vunpack.c.l.b16 %v2938
    %v2965 = vunpack.c.l.b16 %v2939
    %v2966 = vunpack.c.l.b16 %v2940
    %v2967 = vunpack.c.l.b16 %v2941
    %v2968 = vunpack.c.l.b16 %v2942
    %v2969 = vunpack.c.l.b16 %v2943
    %v2970 = vunpack.c.l.b16 %v2944
    %v2971 = vunpack.c.l.b16 %v2945
    %v2972 = vunpack.c.l.b16 %v2946
    %v2973 = vpack.c.b16 %v2961, %v2960
    %v2974 = vpack.c.b16 %v2963, %v2962
    %v2975 = vpack.c.b16 %v2965, %v2964
    %v2976 = vpack.c.b16 %v2967, %v2966
    %v2977 = vpack.c.b16 %v2969, %v2968
    %v2978 = vpack.c.b16 %v2971, %v2970
    %v2979 = vpack.c.b16 %v2972, %v2972
    %v2981 = vsel %vm156, %v2973, 0
    %v2984 = vsel %vm156, %v2974, 0
    %v2987 = vsel %vm156, %v2975, 0
    %v2990 = vsel %vm156, %v2976, 0
    %v2993 = vsel %vm156, %v2977, 0
    %v2996 = vsel %vm156, %v2978, 0
    %v2999 = vsel %vm156, %v2979, 0
    %3001 = vmatpush.bf16.msra.mxu0 0
    %3002 = vmatpush.bf16.msra.mxu0 0
    %3003 = vmatpush.bf16.msra.mxu0 0
    %3004 = vmatpush.bf16.msra.mxu0 0
    %3005 = vmatpush.bf16.msra.mxu0 0
    %3006 = vmatpush.bf16.msra.mxu0 0
    %3007 = vmatpush.bf16.msra.mxu0 0
    %3008 = vmatpush.bf16.msra.mxu0 %v154
    %3009 = vmatmul.bf16.gmra.mxu0 %v2981
    %v3010 = vpop.f32.mrf.mxu0
    %v3011 = vadd.f32 %v115, %v3010
    %v3012 = vpop.f32.mrf.mxu0
    %v3013 = vadd.f32 %v115, %v3012
    %3014 = vmatmul.bf16.gmra.mxu0 %v2984
    %v3015 = vpop.f32.mrf.mxu0
    %v3016 = vadd.f32 %v115, %v3015
    %v3017 = vpop.f32.mrf.mxu0
    %v3018 = vadd.f32 %v115, %v3017
    %3019 = vmatmul.bf16.gmra.mxu0 %v2987
    %v3020 = vpop.f32.mrf.mxu0
    %v3021 = vadd.f32 %v115, %v3020
    %v3022 = vpop.f32.mrf.mxu0
    %v3023 = vadd.f32 %v115, %v3022
    %3024 = vmatmul.bf16.gmra.mxu0 %v2990
    %v3025 = vpop.f32.mrf.mxu0
    %v3026 = vadd.f32 %v115, %v3025
    %v3027 = vpop.f32.mrf.mxu0
    %v3028 = vadd.f32 %v115, %v3027
    %3029 = vmatmul.bf16.gmra.mxu0 %v2993
    %v3030 = vpop.f32.mrf.mxu0
    %v3031 = vadd.f32 %v115, %v3030
    %v3032 = vpop.f32.mrf.mxu0
    %v3033 = vadd.f32 %v115, %v3032
    %3034 = vmatmul.bf16.gmra.mxu0 %v2996
    %v3035 = vpop.f32.mrf.mxu0
    %v3036 = vadd.f32 %v115, %v3035
    %v3037 = vpop.f32.mrf.mxu0
    %v3038 = vadd.f32 %v115, %v3037
    %3039 = vmatmul.bf16.gmra.mxu0 %v2999
    %v3040 = vpop.f32.mrf.mxu0
    %v3041 = vadd.f32 %v115, %v3040
    %v3042 = vpop.f32.mrf.mxu0
    %3043 = vdwg.mxu0
    %vm3044 = vcmp.ge.f32.partialorder %v3011, 0.0
    %vm3045 = vcmp.ge.f32.partialorder %v3013, 0.0
    %vm3046 = vcmp.ge.f32.partialorder %v3016, 0.0
    %vm3047 = vcmp.ge.f32.partialorder %v3018, 0.0
    %vm3048 = vcmp.ge.f32.partialorder %v3021, 0.0
    %vm3049 = vcmp.ge.f32.partialorder %v3023, 0.0
    %vm3050 = vcmp.ge.f32.partialorder %v3026, 0.0
    %vm3051 = vcmp.ge.f32.partialorder %v3028, 0.0
    %vm3052 = vcmp.ge.f32.partialorder %v3031, 0.0
    %vm3053 = vcmp.ge.f32.partialorder %v3033, 0.0
    %vm3054 = vcmp.ge.f32.partialorder %v3036, 0.0
    %vm3055 = vcmp.ge.f32.partialorder %v3038, 0.0
    %vm3056 = vcmp.ge.f32.partialorder %v3041, 0.0
    %v3057 = vmul.f32 %v3011, 0.1
    %v3058 = vmul.f32 %v3013, 0.1
    %v3059 = vmul.f32 %v3016, 0.1
    %v3060 = vmul.f32 %v3018, 0.1
    %v3061 = vmul.f32 %v3021, 0.1
    %v3062 = vmul.f32 %v3023, 0.1
    %v3063 = vmul.f32 %v3026, 0.1
    %v3064 = vmul.f32 %v3028, 0.1
    %v3065 = vmul.f32 %v3031, 0.1
    %v3066 = vmul.f32 %v3033, 0.1
    %v3067 = vmul.f32 %v3036, 0.1
    %v3068 = vmul.f32 %v3038, 0.1
    %v3069 = vmul.f32 %v3041, 0.1
    %v3070 = vsel %vm3044, %v3011, %v3057
    %v3071 = vsel %vm3045, %v3013, %v3058
    %v3072 = vsel %vm3046, %v3016, %v3059
    %v3073 = vsel %vm3047, %v3018, %v3060
    %v3074 = vsel %vm3048, %v3021, %v3061
    %v3075 = vsel %vm3049, %v3023, %v3062
    %v3076 = vsel %vm3050, %v3026, %v3063
    %v3077 = vsel %vm3051, %v3028, %v3064
    %v3078 = vsel %vm3052, %v3031, %v3065
    %v3079 = vsel %vm3053, %v3033, %v3066
    %v3080 = vsel %vm3054, %v3036, %v3067
    %v3081 = vsel %vm3055, %v3038, %v3068
    %v3082 = vsel %vm3056, %v3041, %v3069
    %v3083 = vld [vmem:[#allocation2 + $0x340] sm:$0xff]
    %v3084 = vld [vmem:[#allocation2 + $0x348] sm:$0xff]
    %v3085 = vld [vmem:[#allocation2 + $0x350] sm:$0xff]
    %v3086 = vld [vmem:[#allocation2 + $0x358] sm:$0xff]
    %v3087 = vld [vmem:[#allocation2 + $0x360] sm:$0xff]
    %v3088 = vld [vmem:[#allocation2 + $0x368] sm:$0xff]
    %v3089 = vld [vmem:[#allocation2 + $0x370] sm:$0xff]
    %v3090 = vld [vmem:[#allocation2 + $0x378] sm:$0xff]
    %v3091 = vld [vmem:[#allocation2 + $0x380] sm:$0xff]
    %v3092 = vld [vmem:[#allocation2 + $0x388] sm:$0xff]
    %v3093 = vld [vmem:[#allocation2 + $0x390] sm:$0xff]
    %v3094 = vld [vmem:[#allocation2 + $0x398] sm:$0xff]
    %v3095 = vld [vmem:[#allocation2 + $0x3a0] sm:$0xff]
    %3097 = vset.pattern.permute.xlu0 0
    %3098 = vperm.xlu0 %3097, %v3083
    %v3099 = vpop.permute.xlu0 %3098
    %3102 = vset.pattern.permute.xlu0 0
    %3103 = vperm.xlu0 %3102, %v3084
    %v3104 = vpop.permute.xlu0 %3103
    %3107 = vset.pattern.permute.xlu0 0
    %3108 = vperm.xlu0 %3107, %v3085
    %v3109 = vpop.permute.xlu0 %3108
    %3112 = vset.pattern.permute.xlu0 0
    %3113 = vperm.xlu0 %3112, %v3086
    %v3114 = vpop.permute.xlu0 %3113
    %3117 = vset.pattern.permute.xlu0 0
    %3118 = vperm.xlu0 %3117, %v3087
    %v3119 = vpop.permute.xlu0 %3118
    %3122 = vset.pattern.permute.xlu0 0
    %3123 = vperm.xlu0 %3122, %v3088
    %v3124 = vpop.permute.xlu0 %3123
    %3127 = vset.pattern.permute.xlu0 0
    %3128 = vperm.xlu0 %3127, %v3089
    %v3129 = vpop.permute.xlu0 %3128
    %3132 = vset.pattern.permute.xlu0 0
    %3133 = vperm.xlu0 %3132, %v3090
    %v3134 = vpop.permute.xlu0 %3133
    %3137 = vset.pattern.permute.xlu0 0
    %3138 = vperm.xlu0 %3137, %v3091
    %v3139 = vpop.permute.xlu0 %3138
    %3142 = vset.pattern.permute.xlu0 0
    %3143 = vperm.xlu0 %3142, %v3092
    %v3144 = vpop.permute.xlu0 %3143
    %3147 = vset.pattern.permute.xlu0 0
    %3148 = vperm.xlu0 %3147, %v3093
    %v3149 = vpop.permute.xlu0 %3148
    %3152 = vset.pattern.permute.xlu0 0
    %3153 = vperm.xlu0 %3152, %v3094
    %v3154 = vpop.permute.xlu0 %3153
    %3157 = vset.pattern.permute.xlu0 0
    %3158 = vperm.xlu0 %3157, %v3095
    %v3159 = vpop.permute.xlu0 %3158
    %v3161 = vmul.f32 %v3070, %v3099
    %v3162 = vmul.f32 %v3071, %v3104
    %v3163 = vmul.f32 %v3072, %v3109
    %v3164 = vmul.f32 %v3073, %v3114
    %v3165 = vmul.f32 %v3074, %v3119
    %v3166 = vmul.f32 %v3075, %v3124
    %v3167 = vmul.f32 %v3076, %v3129
    %v3168 = vmul.f32 %v3077, %v3134
    %v3169 = vmul.f32 %v3078, %v3139
    %v3170 = vmul.f32 %v3079, %v3144
    %v3171 = vmul.f32 %v3080, %v3149
    %v3172 = vmul.f32 %v3081, %v3154
    %v3173 = vmul.f32 %v3082, %v3159
    %v3174 = vpack.c.bf16 %v3162, %v3161
    %v3175 = vpack.c.bf16 %v3164, %v3163
    %v3176 = vpack.c.bf16 %v3166, %v3165
    %v3177 = vpack.c.bf16 %v3168, %v3167
    %v3178 = vpack.c.bf16 %v3170, %v3169
    %v3179 = vpack.c.bf16 %v3172, %v3171
    %v3180 = vpack.c.bf16 %v3173, %v3173
    %v3181 = vld [vmem:[#allocation7 + $0x100] sm:$0xf]
    %v3182 = vld [vmem:[#allocation7 + $0x104] sm:$0xf]
    %v3183 = vld [vmem:[#allocation7 + $0x108] sm:$0xf]
    %v3184 = vld [vmem:[#allocation7 + $0x10c] sm:$0xf]
    %v3185 = vld [vmem:[#allocation7 + $0x110] sm:$0xf]
    %v3186 = vld [vmem:[#allocation7 + $0x114] sm:$0xf]
    %v3187 = vld [vmem:[#allocation7 + $0x118] sm:$0xf]
    %v3188 = vld [vmem:[#allocation7 + $0x11c] sm:$0xf]
    %v3197 = vunpack.c.l.b16 %v3181
    %v3198 = vunpack.c.l.b16 %v3182
    %v3199 = vunpack.c.l.b16 %v3183
    %v3200 = vunpack.c.l.b16 %v3184
    %v3201 = vunpack.c.l.b16 %v3185
    %v3202 = vunpack.c.l.b16 %v3186
    %v3203 = vunpack.c.l.b16 %v3187
    %v3204 = vunpack.c.l.b16 %v3188
    %v3205 = vpack.c.b16 %v3198, %v3197
    %v3206 = vpack.c.b16 %v3200, %v3199
    %v3207 = vpack.c.b16 %v3202, %v3201
    %v3208 = vpack.c.b16 %v3204, %v3203
    %v3214 = vsel %vm645, %v3174, 0
    %v3217 = vsel %vm645, %v3175, 0
    %v3220 = vsel %vm645, %v3176, 0
    %v3223 = vsel %vm645, %v3177, 0
    %v3226 = vsel %vm645, %v3178, 0
    %v3229 = vsel %vm645, %v3179, 0
    %v3232 = vsel %vm645, %v3180, 0
    %3234 = vmatpush.bf16.msra.mxu0 0
    %3235 = vmatpush.bf16.msra.mxu0 0
    %3236 = vmatpush.bf16.msra.mxu0 0
    %3237 = vmatpush.bf16.msra.mxu0 0
    %3238 = vmatpush.bf16.msra.mxu0 %v3208
    %3239 = vmatpush.bf16.msra.mxu0 %v3207
    %3240 = vmatpush.bf16.msra.mxu0 %v3206
    %3241 = vmatpush.bf16.msra.mxu0 %v3205
    %3242 = vmatmul.bf16.gmra.mxu0 %v3214
    %v3243 = vpop.f32.mrf.mxu0
    %v3244 = vadd.f32 0.0, %v3243
    %v3245 = vpop.f32.mrf.mxu0
    %v3246 = vadd.f32 0.0, %v3245
    %3247 = vmatmul.bf16.gmra.mxu0 %v3217
    %v3248 = vpop.f32.mrf.mxu0
    %v3249 = vadd.f32 0.0, %v3248
    %v3250 = vpop.f32.mrf.mxu0
    %v3251 = vadd.f32 0.0, %v3250
    %3252 = vmatmul.bf16.gmra.mxu0 %v3220
    %v3253 = vpop.f32.mrf.mxu0
    %v3254 = vadd.f32 0.0, %v3253
    %v3255 = vpop.f32.mrf.mxu0
    %v3256 = vadd.f32 0.0, %v3255
    %3257 = vmatmul.bf16.gmra.mxu0 %v3223
    %v3258 = vpop.f32.mrf.mxu0
    %v3259 = vadd.f32 0.0, %v3258
    %v3260 = vpop.f32.mrf.mxu0
    %v3261 = vadd.f32 0.0, %v3260
    %3262 = vmatmul.bf16.gmra.mxu0 %v3226
    %v3263 = vpop.f32.mrf.mxu0
    %v3264 = vadd.f32 0.0, %v3263
    %v3265 = vpop.f32.mrf.mxu0
    %v3266 = vadd.f32 0.0, %v3265
    %3267 = vmatmul.bf16.gmra.mxu0 %v3229
    %v3268 = vpop.f32.mrf.mxu0
    %v3269 = vadd.f32 0.0, %v3268
    %v3270 = vpop.f32.mrf.mxu0
    %v3271 = vadd.f32 0.0, %v3270
    %3272 = vmatmul.bf16.gmra.mxu0 %v3232
    %v3273 = vpop.f32.mrf.mxu0
    %v3274 = vadd.f32 0.0, %v3273
    %v3275 = vpop.f32.mrf.mxu0
    %3276 = vdwg.mxu0
    %v3277 = vadd.f32 %v2921, %v3244
    %v3278 = vadd.f32 %v2922, %v3246
    %v3279 = vadd.f32 %v2923, %v3249
    %v3280 = vadd.f32 %v2924, %v3251
    %v3281 = vadd.f32 %v2925, %v3254
    %v3282 = vadd.f32 %v2926, %v3256
    %v3283 = vadd.f32 %v2927, %v3259
    %v3284 = vadd.f32 %v2928, %v3261
    %v3285 = vadd.f32 %v2929, %v3264
    %v3286 = vadd.f32 %v2930, %v3266
    %v3287 = vadd.f32 %v2931, %v3269
    %v3288 = vadd.f32 %v2932, %v3271
    %v3289 = vadd.f32 %v2933, %v3274
    %v3290 = vld [vmem:[#allocation9] sm:$0x1]
    %v3292 = vperm.slane %v3290, 0
    %v3294 = vadd.f32 %v3277, %v3292
    %v3295 = vadd.f32 %v3278, %v3292
    %v3296 = vadd.f32 %v3279, %v3292
    %v3297 = vadd.f32 %v3280, %v3292
    %v3298 = vadd.f32 %v3281, %v3292
    %v3299 = vadd.f32 %v3282, %v3292
    %v3300 = vadd.f32 %v3283, %v3292
    %v3301 = vadd.f32 %v3284, %v3292
    %v3302 = vadd.f32 %v3285, %v3292
    %v3303 = vadd.f32 %v3286, %v3292
    %v3304 = vadd.f32 %v3287, %v3292
    %v3305 = vadd.f32 %v3288, %v3292
    %v3306 = vadd.f32 %v3289, %v3292
    %vm3307 = vcmp.ge.f32.partialorder %v3294, 0.0
    %vm3308 = vcmp.ge.f32.partialorder %v3295, 0.0
    %vm3309 = vcmp.ge.f32.partialorder %v3296, 0.0
    %vm3310 = vcmp.ge.f32.partialorder %v3297, 0.0
    %vm3311 = vcmp.ge.f32.partialorder %v3298, 0.0
    %vm3312 = vcmp.ge.f32.partialorder %v3299, 0.0
    %vm3313 = vcmp.ge.f32.partialorder %v3300, 0.0
    %vm3314 = vcmp.ge.f32.partialorder %v3301, 0.0
    %vm3315 = vcmp.ge.f32.partialorder %v3302, 0.0
    %vm3316 = vcmp.ge.f32.partialorder %v3303, 0.0
    %vm3317 = vcmp.ge.f32.partialorder %v3304, 0.0
    %vm3318 = vcmp.ge.f32.partialorder %v3305, 0.0
    %vm3319 = vcmp.ge.f32.partialorder %v3306, 0.0
    %v3320 = vmul.f32 %v3294, 0.1
    %v3321 = vmul.f32 %v3295, 0.1
    %v3322 = vmul.f32 %v3296, 0.1
    %v3323 = vmul.f32 %v3297, 0.1
    %v3324 = vmul.f32 %v3298, 0.1
    %v3325 = vmul.f32 %v3299, 0.1
    %v3326 = vmul.f32 %v3300, 0.1
    %v3327 = vmul.f32 %v3301, 0.1
    %v3328 = vmul.f32 %v3302, 0.1
    %v3329 = vmul.f32 %v3303, 0.1
    %v3330 = vmul.f32 %v3304, 0.1
    %v3331 = vmul.f32 %v3305, 0.1
    %v3332 = vmul.f32 %v3306, 0.1
    %v3333 = vsel %vm3307, %v3294, %v3320
    %v3334 = vsel %vm3308, %v3295, %v3321
    %v3335 = vsel %vm3309, %v3296, %v3322
    %v3336 = vsel %vm3310, %v3297, %v3323
    %v3337 = vsel %vm3311, %v3298, %v3324
    %v3338 = vsel %vm3312, %v3299, %v3325
    %v3339 = vsel %vm3313, %v3300, %v3326
    %v3340 = vsel %vm3314, %v3301, %v3327
    %v3341 = vsel %vm3315, %v3302, %v3328
    %v3342 = vsel %vm3316, %v3303, %v3329
    %v3343 = vsel %vm3317, %v3304, %v3330
    %v3344 = vsel %vm3318, %v3305, %v3331
    %v3345 = vsel %vm3319, %v3306, %v3332
    %v3346 = vpack.c.bf16 %v3333, %v3333
    %v3347 = vpack.c.bf16 %v3334, %v3334
    %v3348 = vpack.c.bf16 %v3335, %v3335
    %v3349 = vpack.c.bf16 %v3336, %v3336
    %v3350 = vpack.c.bf16 %v3337, %v3337
    %v3351 = vpack.c.bf16 %v3338, %v3338
    %v3352 = vpack.c.bf16 %v3339, %v3339
    %v3353 = vpack.c.bf16 %v3340, %v3340
    %v3354 = vpack.c.bf16 %v3341, %v3341
    %v3355 = vpack.c.bf16 %v3342, %v3342
    %v3356 = vpack.c.bf16 %v3343, %v3343
    %v3357 = vpack.c.bf16 %v3344, %v3344
    %v3358 = vpack.c.bf16 %v3345, %v3345
    %3359 = vst [vmem:[%s6] sm:$0xf] %v3346
    %3360 = vst [vmem:[%s6 + $0x4] sm:$0xf] %v3347
    %3361 = vst [vmem:[%s6 + $0x8] sm:$0xf] %v3348
    %3362 = vst [vmem:[%s6 + $0xc] sm:$0xf] %v3349
    %3363 = vst [vmem:[%s6 + $0x10] sm:$0xf] %v3350
    %3364 = vst [vmem:[%s6 + $0x14] sm:$0xf] %v3351
    %3365 = vst [vmem:[%s6 + $0x18] sm:$0xf] %v3352
    %3366 = vst [vmem:[%s6 + $0x1c] sm:$0xf] %v3353
    %3367 = vst [vmem:[%s6 + $0x20] sm:$0xf] %v3354
    %3368 = vst [vmem:[%s6 + $0x24] sm:$0xf] %v3355
    %3369 = vst [vmem:[%s6 + $0x28] sm:$0xf] %v3356
    %3370 = vst [vmem:[%s6 + $0x2c] sm:$0xf] %v3357
    %3371 = vst [vmem:[%s6 + $0x30] sm:$0x1] %v3358
    // Predicated region
    $region46: #{discriminator_forward.2} parent=1 // pred_check
      _
    $region47: #{discriminator_forward.2} parent=1 // pred_check_branch
      %3373 = sbr.rel (0) target = $region49
    $region48: #{discriminator_forward.2} parent=1 // pred_region
      _
    $region49: #{discriminator_forward.2} parent=1 // pred_fallthru
      _
    // Predicated region
    $region50: #{discriminator_forward.2} parent=1 // pred_check
      _
    $region51: #{discriminator_forward.2} parent=1 // pred_check_branch
      %3375 = sbr.rel (0) target = $region53
    $region52: #{discriminator_forward.2} parent=1 // pred_region
      _
    $region53: #{discriminator_forward.2} parent=1 // pred_fallthru
      _
    %3376 = vsyncpa [#allocation3], 1
    %3377 = vsyncpa [#allocation5], 1
    %3378 = vsyncpa [#allocation8], 1

// kernel: discriminator_forward.3
$region0: #{discriminator_forward.3}
  #allocation0 [shape = 'u32[]', space=smem, size = 0x4, offset = 0x4, fixed_abs, tag = 'smem constant byte address 0x4 - core index']
  #allocation1 [shape = 'u32[72,128]{1,0:T(1,128)}', space=vmem, size = 0x9000, scoped, tag = 'internal scratch']
  #allocation2 [shape = 'f32[1,1]{1,0:T(1,128)S(1)}', space=vmem, size = 0x200, scoped, tag = 'scoped memory for discriminator_forward.3']
  %s0 = inlined_call_operand.vmem [shape: bf16[2,6272], index: 0, kind: input, shape index: {}]
  %s1 = inlined_call_operand.hbm [shape: bf16[6272,1024], index: 1, kind: input, shape index: {}]
  %s2 = inlined_call_operand.hbm [shape: f32[1,1024], index: 2, kind: input, shape index: {}]
  %s3 = inlined_call_operand.hbm [shape: f32[1,1024], index: 3, kind: input, shape index: {}]
  %s4 = inlined_call_operand.hbm [shape: f32[1,1024], index: 4, kind: input, shape index: {}]
  %s5 = inlined_call_operand.<no memory space> [shape: f32[1,1], index: 5, kind: input, shape index: {}]
  %s6 = inlined_call_operand.hbm [shape: f32[2,1024], index: 6, kind: output, shape index: {0}]
  %s7 = inlined_call_operand.vmem [shape: f32[1,2,1], index: 7, kind: output, shape index: {1}]
  %8 = xla_tuple %s6, %s7
  %s9 = sld [smem:[#allocation0]]
  $region89: #{discriminator_forward.3} parent=0
    _
  %s11 = ssub.s32 1, %s9
  %s12 = scalar_select 0, %s11, %s9
  %v13 = vstv %s5
  %14 = vst [vmem:[#allocation2] sm:$0x1] %v13
  $region1: #{discriminator_forward.3} parent=0
    #allocation3 [shape = 'u8[3670016]{0}', space=vmem, size = 0x380000, scoped, tag = 'input window, operand 1']
    #allocation4 [shape = 's32[2]{0}', space=sflag, size = 0x8, scoped, tag = 'scoped memory for discriminator_forward.3']
    #allocation5 [shape = 's32[2]{0}', space=sflag, size = 0x8, scoped, tag = 'scoped memory for discriminator_forward.3']
    #allocation6 [shape = 'u8[4096]{0}', space=vmem, size = 0x1000, scoped, tag = 'input window, operand 2, single buffered']
    #allocation7 [shape = 's32[1]{0}', space=sflag, size = 0x4, scoped, tag = 'scoped memory for discriminator_forward.3']
    #allocation8 [shape = 'u8[4096]{0}', space=vmem, size = 0x1000, scoped, tag = 'input window, operand 3, single buffered']
    #allocation9 [shape = 'u8[4096]{0}', space=vmem, size = 0x1000, scoped, tag = 'input window, operand 4, single buffered']
    #allocation10 [shape = 's32[1]{0}', space=sflag, size = 0x4, scoped, tag = 'scoped memory for discriminator_forward.3']
    #allocation11 [shape = 'u8[8192]{0}', space=vmem, size = 0x2000, scoped, tag = 'output window, operand 0, single buffered']
    %15 = vsyncpa [#allocation4], 0
    %s16 = scalar_lea.sflag [#allocation4], 1
    %17 = vsyncpa %s16, 0
    %18 = vsyncpa [#allocation7], 0
    %19 = vsyncpa [#allocation10], 0
    %20 = vsyncpa [#allocation5], 0
    loop: start=0, step=1, limit=9
    $region2: #{discriminator_forward.3} parent=1 // loop_pre_header
      _
    $region3: #{discriminator_forward.3} parent=1 // loop_header
      %s22 = sphi 0, %s26
      %p23 = scmp.ge.s32.totalorder %s22, 9
      %s29 = sphi 0, %s41
      %s30 = sphi 0, %s37
      %s31 = sphi 0, %s29
      %s32 = sphi 0, %s30
      %s33 = sphi 0, %s31
      %s34 = sphi 0, %s32
      %s44 = sphi 0, %s46
      %s47 = sphi 0, %s44
      %s48 = sphi 0, %s47
      %s64 = sphi 0, %s48
      %s72 = sphi 0, %s74
      %s75 = sphi 0, %s72
      %s76 = sphi 0, %s75
      %s92 = sphi 0, %s76
      %s98 = sphi 0, %s100
      %s101 = sphi 0, %s98
      %s102 = sphi 0, %s101
      %s118 = sphi 0, %s102
      %s124 = sphi 0, %s126
      %s127 = sphi 0, %s124
      %s128 = sphi 0, %s127
      %s144 = sphi 0, %s128
      %s150 = sphi 0, %s152
      %s153 = sphi 0, %s150
      %s154 = sphi 0, %s153
      %s170 = sphi 0, %s154
      %s174 = sphi 0, %s174
      %s176 = sphi 0, %s174
      %s177 = sphi 0, %s176
      %s191 = sphi 0, %s177
      %s197 = sphi 0, %s199
      %s200 = sphi 0, %s197
      %s201 = sphi 0, %s200
      %s217 = sphi 0, %s201
      %s223 = sphi 0, %s225
      %s226 = sphi 0, %s223
      %s227 = sphi 0, %s226
      %s243 = sphi 0, %s227
    $region4: #{discriminator_forward.3} parent=1 // loop_header_branch
      %25 = sbr.rel (%p23) target = $region8
    $region5: #{discriminator_forward.3} parent=1 // loop_body
      %s27 = ssub.s32 %s22, 1
      %s28 = ssub.s32 %s22, 2
      %s35 = sadd.s32 1, %s30
      %p36 = scmp.ge.s32.totalorder %s35, 7
      %s37 = scalar_select %p36, 0, %s35
      %s38 = sadd.s32 1, %s29
      %s39 = scalar_select %p36, %s38, %s29
      %p40 = scmp.ge.s32.totalorder %s39, 1
      %s41 = scalar_select %p40, 0, %s39
      %s42 = ssub.s32 %s30, %s37
      %p43 = scmp.eq.s32.totalorder %s42, 0
      %s45 = sadd.s32 %s44, 1
      %s46 = scalar_select %p43, %s44, %s45
      %p49 = pneg %p43
      %p50 = scmp.eq.s32.totalorder %s22, 6
      %p51 = por %p49, %p50
      %p52 = scmp.ne.s32.totalorder %s44, %s47
      %p53 = scmp.eq.s32.totalorder %s22, 0
      %p54 = por %p52, %p53
      %p55 = scmp.ne.s32.totalorder %s44, %s47
      %p56 = scmp.eq.s32.totalorder %s27, 6
      %p57 = por %p55, %p56
      %p58 = scmp.ne.s32.totalorder %s47, %s48
      %p59 = scmp.eq.s32.totalorder %s27, 0
      %p60 = por %p58, %p59
      %p61 = scmp.ne.s32.totalorder %s47, %s48
      %p62 = scmp.eq.s32.totalorder %s28, 6
      %p63 = por %p61, %p62
      %p65 = scmp.ne.s32.totalorder %s48, %s64
      %p66 = scmp.eq.s32.totalorder %s28, 0
      %p67 = por %p65, %p66
      %s68 = ssub.s32 %s30, %s37
      %s69 = ssub.s32 %s29, %s41
      %s70 = sor.u32 %s68, %s69
      %p71 = scmp.eq.s32.totalorder %s70, 0
      %s73 = sadd.s32 %s72, 1
      %s74 = scalar_select %p71, %s72, %s73
      %p77 = pneg %p71
      %p78 = scmp.eq.s32.totalorder %s22, 6
      %p79 = por %p77, %p78
      %p80 = scmp.ne.s32.totalorder %s72, %s75
      %p81 = scmp.eq.s32.totalorder %s22, 0
      %p82 = por %p80, %p81
      %p83 = scmp.ne.s32.totalorder %s72, %s75
      %p84 = scmp.eq.s32.totalorder %s27, 6
      %p85 = por %p83, %p84
      %p86 = scmp.ne.s32.totalorder %s75, %s76
      %p87 = scmp.eq.s32.totalorder %s27, 0
      %p88 = por %p86, %p87
      %p89 = scmp.ne.s32.totalorder %s75, %s76
      %p90 = scmp.eq.s32.totalorder %s28, 6
      %p91 = por %p89, %p90
      %p93 = scmp.ne.s32.totalorder %s76, %s92
      %p94 = scmp.eq.s32.totalorder %s28, 0
      %p95 = por %p93, %p94
      %s96 = ssub.s32 %s29, %s41
      %p97 = scmp.eq.s32.totalorder %s96, 0
      %s99 = sadd.s32 %s98, 1
      %s100 = scalar_select %p97, %s98, %s99
      %p103 = pneg %p97
      %p104 = scmp.eq.s32.totalorder %s22, 6
      %p105 = por %p103, %p104
      %p106 = scmp.ne.s32.totalorder %s98, %s101
      %p107 = scmp.eq.s32.totalorder %s22, 0
      %p108 = por %p106, %p107
      %p109 = scmp.ne.s32.totalorder %s98, %s101
      %p110 = scmp.eq.s32.totalorder %s27, 6
      %p111 = por %p109, %p110
      %p112 = scmp.ne.s32.totalorder %s101, %s102
      %p113 = scmp.eq.s32.totalorder %s27, 0
      %p114 = por %p112, %p113
      %p115 = scmp.ne.s32.totalorder %s101, %s102
      %p116 = scmp.eq.s32.totalorder %s28, 6
      %p117 = por %p115, %p116
      %p119 = scmp.ne.s32.totalorder %s102, %s118
      %p120 = scmp.eq.s32.totalorder %s28, 0
      %p121 = por %p119, %p120
      %s122 = ssub.s32 %s29, %s41
      %p123 = scmp.eq.s32.totalorder %s122, 0
      %s125 = sadd.s32 %s124, 1
      %s126 = scalar_select %p123, %s124, %s125
      %p129 = pneg %p123
      %p130 = scmp.eq.s32.totalorder %s22, 6
      %p131 = por %p129, %p130
      %p132 = scmp.ne.s32.totalorder %s124, %s127
      %p133 = scmp.eq.s32.totalorder %s22, 0
      %p134 = por %p132, %p133
      %p135 = scmp.ne.s32.totalorder %s124, %s127
      %p136 = scmp.eq.s32.totalorder %s27, 6
      %p137 = por %p135, %p136
      %p138 = scmp.ne.s32.totalorder %s127, %s128
      %p139 = scmp.eq.s32.totalorder %s27, 0
      %p140 = por %p138, %p139
      %p141 = scmp.ne.s32.totalorder %s127, %s128
      %p142 = scmp.eq.s32.totalorder %s28, 6
      %p143 = por %p141, %p142
      %p145 = scmp.ne.s32.totalorder %s128, %s144
      %p146 = scmp.eq.s32.totalorder %s28, 0
      %p147 = por %p145, %p146
      %s148 = ssub.s32 %s29, %s41
      %p149 = scmp.eq.s32.totalorder %s148, 0
      %s151 = sadd.s32 %s150, 1
      %s152 = scalar_select %p149, %s150, %s151
      %p155 = pneg %p149
      %p156 = scmp.eq.s32.totalorder %s22, 6
      %p157 = por %p155, %p156
      %p158 = scmp.ne.s32.totalorder %s150, %s153
      %p159 = scmp.eq.s32.totalorder %s22, 0
      %p160 = por %p158, %p159
      %p161 = scmp.ne.s32.totalorder %s150, %s153
      %p162 = scmp.eq.s32.totalorder %s27, 6
      %p163 = por %p161, %p162
      %p164 = scmp.ne.s32.totalorder %s153, %s154
      %p165 = scmp.eq.s32.totalorder %s27, 0
      %p166 = por %p164, %p165
      %p167 = scmp.ne.s32.totalorder %s153, %s154
      %p168 = scmp.eq.s32.totalorder %s28, 6
      %p169 = por %p167, %p168
      %p171 = scmp.ne.s32.totalorder %s154, %s170
      %p172 = scmp.eq.s32.totalorder %s28, 0
      %p173 = por %p171, %p172
      %s175 = sadd.s32 %s174, 1
      %p178 = scmp.eq.s32.totalorder %s22, 6
      %p179 = scmp.ne.s32.totalorder %s174, %s176
      %p180 = scmp.eq.s32.totalorder %s22, 0
      %p181 = por %p179, %p180
      %p182 = scmp.ne.s32.totalorder %s174, %s176
      %p183 = scmp.eq.s32.totalorder %s27, 6
      %p184 = por %p182, %p183
      %p185 = scmp.ne.s32.totalorder %s176, %s177
      %p186 = scmp.eq.s32.totalorder %s27, 0
      %p187 = por %p185, %p186
      %p188 = scmp.ne.s32.totalorder %s176, %s177
      %p189 = scmp.eq.s32.totalorder %s28, 6
      %p190 = por %p188, %p189
      %p192 = scmp.ne.s32.totalorder %s177, %s191
      %p193 = scmp.eq.s32.totalorder %s28, 0
      %p194 = por %p192, %p193
      %s195 = ssub.s32 %s29, %s41
      %p196 = scmp.eq.s32.totalorder %s195, 0
      %s198 = sadd.s32 %s197, 1
      %s199 = scalar_select %p196, %s197, %s198
      %p202 = pneg %p196
      %p203 = scmp.eq.s32.totalorder %s22, 6
      %p204 = por %p202, %p203
      %p205 = scmp.ne.s32.totalorder %s197, %s200
      %p206 = scmp.eq.s32.totalorder %s22, 0
      %p207 = por %p205, %p206
      %p208 = scmp.ne.s32.totalorder %s197, %s200
      %p209 = scmp.eq.s32.totalorder %s27, 6
      %p210 = por %p208, %p209
      %p211 = scmp.ne.s32.totalorder %s200, %s201
      %p212 = scmp.eq.s32.totalorder %s27, 0
      %p213 = por %p211, %p212
      %p214 = scmp.ne.s32.totalorder %s200, %s201
      %p215 = scmp.eq.s32.totalorder %s28, 6
      %p216 = por %p214, %p215
      %p218 = scmp.ne.s32.totalorder %s201, %s217
      %p219 = scmp.eq.s32.totalorder %s28, 0
      %p220 = por %p218, %p219
      %s221 = ssub.s32 %s29, %s41
      %p222 = scmp.eq.s32.totalorder %s221, 0
      %s224 = sadd.s32 %s223, 1
      %s225 = scalar_select %p222, %s223, %s224
      %p228 = pneg %p222
      %p229 = scmp.eq.s32.totalorder %s22, 6
      %p230 = por %p228, %p229
      %p231 = scmp.ne.s32.totalorder %s223, %s226
      %p232 = scmp.eq.s32.totalorder %s22, 0
      %p233 = por %p231, %p232
      %p234 = scmp.ne.s32.totalorder %s223, %s226
      %p235 = scmp.eq.s32.totalorder %s27, 6
      %p236 = por %p234, %p235
      %p237 = scmp.ne.s32.totalorder %s226, %s227
      %p238 = scmp.eq.s32.totalorder %s27, 0
      %p239 = por %p237, %p238
      %p240 = scmp.ne.s32.totalorder %s226, %s227
      %p241 = scmp.eq.s32.totalorder %s28, 6
      %p242 = por %p240, %p241
      %p244 = scmp.ne.s32.totalorder %s227, %s243
      %p245 = scmp.eq.s32.totalorder %s28, 0
      %p246 = por %p244, %p245
      %p247 = scmp.le.s32.totalorder 1, %s22
      %p248 = scmp.lt.s32.totalorder %s22, 8
      %p249 = pnand %p247, %p248
      %p250 = pneg %p249
      // Predicated region
      $region9: #{discriminator_forward.3} parent=5 // pred_check
        _
      $region10: #{discriminator_forward.3} parent=5 // pred_check_branch
        %252 = sbr.rel (%p249) target = $region12
      $region11: #{discriminator_forward.3} parent=5 // pred_region
        %s253 = ssub.s32 %s22, 1
        // Predicated region
        $region13: #{discriminator_forward.3} parent=11 // pred_check
          %p254 = pneg %p114
        $region14: #{discriminator_forward.3} parent=11 // pred_check_branch
          %256 = sbr.rel (%p254) target = $region16
        $region15: #{discriminator_forward.3} parent=11 // pred_region
          %s257 = smul.u32 8, %s31
          %259 = vsyncadd [#allocation7], 0
          %s260 = scalar_lea.hbm %s2, %s257
          %s262 = sshll.u32 %s260, 4
          %s263 = int_to_ptr.hbm [resolvable:$true] %s262
          %s264 = sshll.u32 [#allocation6], 4
          %s265 = int_to_ptr.vmem [resolvable:$true] %s264
          %267 = dma.hbm_to_vmem [thread:$0]  %s263, 128, %s265, [#allocation7]
        $region16: #{discriminator_forward.3} parent=11 // pred_fallthru
          _
        // Predicated region
        $region17: #{discriminator_forward.3} parent=11 // pred_check
          %p268 = pneg %p140
        $region18: #{discriminator_forward.3} parent=11 // pred_check_branch
          %270 = sbr.rel (%p268) target = $region20
        $region19: #{discriminator_forward.3} parent=11 // pred_region
          %s271 = smul.u32 8, %s31
          %273 = vsyncadd [#allocation7], 0
          %s274 = scalar_lea.hbm %s3, %s271
          %s276 = sshll.u32 %s274, 4
          %s277 = int_to_ptr.hbm [resolvable:$true] %s276
          %s278 = sshll.u32 [#allocation8], 4
          %s279 = int_to_ptr.vmem [resolvable:$true] %s278
          %281 = dma.hbm_to_vmem [thread:$0]  %s277, 128, %s279, [#allocation7]
        $region20: #{discriminator_forward.3} parent=11 // pred_fallthru
          _
        // Predicated region
        $region21: #{discriminator_forward.3} parent=11 // pred_check
          %p282 = pneg %p166
        $region22: #{discriminator_forward.3} parent=11 // pred_check_branch
          %284 = sbr.rel (%p282) target = $region24
        $region23: #{discriminator_forward.3} parent=11 // pred_region
          %s285 = smul.u32 8, %s31
          %287 = vsyncadd [#allocation10], 0
          %s288 = scalar_lea.hbm %s4, %s285
          %s290 = sshll.u32 %s288, 4
          %s291 = int_to_ptr.hbm [resolvable:$true] %s290
          %s292 = sshll.u32 [#allocation9], 4
          %s293 = int_to_ptr.vmem [resolvable:$true] %s292
          %295 = dma.hbm_to_vmem [thread:$0]  %s291, 128, %s293, [#allocation10]
        $region24: #{discriminator_forward.3} parent=11 // pred_fallthru
          _
        // Predicated region
        $region25: #{discriminator_forward.3} parent=11 // pred_check
          %p296 = pneg %p187
        $region26: #{discriminator_forward.3} parent=11 // pred_check_branch
          %298 = sbr.rel (%p296) target = $region28
        $region27: #{discriminator_forward.3} parent=11 // pred_region
          _
        $region28: #{discriminator_forward.3} parent=11 // pred_fallthru
          _
      $region12: #{discriminator_forward.3} parent=5 // pred_fallthru
        _
      %p299 = scmp.lt.s32.totalorder %s22, 7
      // Predicated region
      $region29: #{discriminator_forward.3} parent=5 // pred_check
        %p300 = pneg %p299
      $region30: #{discriminator_forward.3} parent=5 // pred_check_branch
        %302 = sbr.rel (%p300) target = $region32
      $region31: #{discriminator_forward.3} parent=5 // pred_region
        // Predicated region
        $region33: #{discriminator_forward.3} parent=31 // pred_check
          %p303 = pneg %p54
        $region34: #{discriminator_forward.3} parent=31 // pred_check_branch
          %305 = sbr.rel (%p303) target = $region36
        $region35: #{discriminator_forward.3} parent=31 // pred_region
          %s306 = smul.u32 7, %s30
          %p307 = scmp.lt.s32.totalorder %s306, 48
          %s308 = scalar_select %p307, %s306, 48
          %s309 = scalar_lea.vmem %s0, %s308
          %s310 = smul.u32 7, %s30
        $region36: #{discriminator_forward.3} parent=31 // pred_fallthru
          _
        // Predicated region
        $region37: #{discriminator_forward.3} parent=31 // pred_check
          %p311 = pneg %p82
        $region38: #{discriminator_forward.3} parent=31 // pred_check_branch
          %313 = sbr.rel (%p311) target = $region40
        $region39: #{discriminator_forward.3} parent=31 // pred_region
          %s314 = sand.u32 %s72, 1
          %s315 = scalar_lea.sflag [#allocation4], %s314
          %s316 = sand.u32 %s72, 1
          %s317 = smul.addr %s316, 3584
          %s318 = scalar_lea.vmem [#allocation3], %s317
          %s319 = smul.u32 112, %s30
          %s320 = smul.u32 8, %s29
          %322 = vsyncadd %s315, 0
          %s323 = smul.addr %s319, 8
          %s324 = sadd.s32 %s320, %s323
          %s325 = smul.addr %s324, 4
          %s326 = scalar_lea.hbm %s1, %s325
          %s327 = sshll.u32 %s326, 4
          %s328 = int_to_ptr.hbm [resolvable:$true] %s327
          %s329 = sshll.u32 %s318, 4
          %s330 = int_to_ptr.vmem [resolvable:$true] %s329
          %335 = dma.hbm_to_vmem [thread:$0]  %s328, 57344, %s330, %s315, 512, 512, 32
        $region40: #{discriminator_forward.3} parent=31 // pred_fallthru
          _
      $region32: #{discriminator_forward.3} parent=5 // pred_fallthru
        _
      %p336 = scmp.le.s32.totalorder 1, %s22
      %p337 = scmp.lt.s32.totalorder %s22, 8
      %p338 = pnand %p336, %p337
      %p339 = pneg %p338
      // Predicated region
      $region41: #{discriminator_forward.3} parent=5 // pred_check
        _
      $region42: #{discriminator_forward.3} parent=5 // pred_check_branch
        %341 = sbr.rel (%p338) target = $region44
      $region43: #{discriminator_forward.3} parent=5 // pred_region
        %s342 = ssub.s32 %s22, 1
        %s343 = sand.u32 %s75, 1
        %s344 = scalar_lea.sflag [#allocation4], %s343
        %s345 = sand.u32 %s75, 1
        %s346 = smul.addr %s345, 3584
        %s347 = scalar_lea.vmem [#allocation3], %s346
        // Predicated region
        $region45: #{discriminator_forward.3} parent=43 // pred_check
          %p348 = pneg %p88
        $region46: #{discriminator_forward.3} parent=43 // pred_check_branch
          %350 = sbr.rel (%p348) target = $region48
        $region47: #{discriminator_forward.3} parent=43 // pred_region
          %352 = dma.done %s344, 57344
        $region48: #{discriminator_forward.3} parent=43 // pred_fallthru
          _
        // Predicated region
        $region49: #{discriminator_forward.3} parent=43 // pred_check
          %p353 = pneg %p114
        $region50: #{discriminator_forward.3} parent=43 // pred_check_branch
          %355 = sbr.rel (%p353) target = $region52
        $region51: #{discriminator_forward.3} parent=43 // pred_region
          %357 = dma.done [#allocation7], 128
        $region52: #{discriminator_forward.3} parent=43 // pred_fallthru
          _
        // Predicated region
        $region53: #{discriminator_forward.3} parent=43 // pred_check
          %p358 = pneg %p140
        $region54: #{discriminator_forward.3} parent=43 // pred_check_branch
          %360 = sbr.rel (%p358) target = $region56
        $region55: #{discriminator_forward.3} parent=43 // pred_region
          %362 = dma.done [#allocation7], 128
        $region56: #{discriminator_forward.3} parent=43 // pred_fallthru
          _
        // Predicated region
        $region57: #{discriminator_forward.3} parent=43 // pred_check
          %p363 = pneg %p166
        $region58: #{discriminator_forward.3} parent=43 // pred_check_branch
          %365 = sbr.rel (%p363) target = $region60
        $region59: #{discriminator_forward.3} parent=43 // pred_region
          %367 = dma.done [#allocation10], 128
        $region60: #{discriminator_forward.3} parent=43 // pred_fallthru
          _
        %s368 = smul.u32 7, %s32
        %p369 = scmp.lt.s32.totalorder %s368, 48
        %s370 = scalar_select %p369, %s368, 48
        %s371 = scalar_lea.vmem %s0, %s370
        %p372 = pneg %p60
        %p373 = pneg %p57
        %s374 = sand.u32 %s75, 1
        %s375 = scalar_lea.sflag [#allocation4], %s374
        %s376 = sand.u32 %s75, 1
        %s377 = smul.addr %s376, 3584
        %s378 = scalar_lea.vmem [#allocation3], %s377
        %p379 = pneg %p88
        %p380 = pneg %p85
        %p381 = pneg %p114
        %p382 = pneg %p111
        %p383 = pneg %p140
        %p384 = pneg %p137
        %p385 = pneg %p166
        %p386 = pneg %p163
        %p387 = pneg %p187
        %p388 = pneg %p184
        %p389 = pneg %p213
        %p390 = pneg %p210
        %p391 = pneg %p239
        %p392 = pneg %p236
        %p393 = scmp.lt.s32.totalorder %s31, 0
        %s394 = scalar_select %p393, %s31, 0
        %s395 = smul.addr %s394, 2
        %s396 = scalar_lea.vmem %s7, %s395
        %s397 = smul.u32 7, %s32
        %p398 = scmp.lt.s32.totalorder %s397, 48
        %s399 = scalar_select %p398, %s397, 48
        %s400 = scalar_lea.vmem %s0, %s399
        %s401 = smul.u32 7, %s32
        %s402 = smul.u32 112, %s32
        %s403 = smul.u32 8, %s31
        %s404 = smul.u32 8, %s31
        %s405 = smul.u32 8, %s31
        %s406 = smul.u32 8, %s31
        %s407 = smul.u32 8, %s31
        %p408 = scmp.lt.s32.totalorder %s31, 0
        %s409 = scalar_select %p408, %s31, 0
        %s410 = smul.addr %s409, 2
        %s411 = scalar_lea.vmem %s7, %s410
        %p412 = scmp.eq.s32.totalorder %s32, 0
        // Predicated region
        $region61: #{discriminator_forward.3} parent=43 // pred_check
          %p413 = pneg %p412
        $region62: #{discriminator_forward.3} parent=43 // pred_check_branch
          %415 = sbr.rel (%p413) target = $region64
        $region63: #{discriminator_forward.3} parent=43 // pred_region
          %416 = vst [vmem:[#allocation11] sm:$0xff] 0.0
          %417 = vst [vmem:[#allocation11 + $0x8] sm:$0xff] 0.0
        $region64: #{discriminator_forward.3} parent=43 // pred_fallthru
          _
        %v418 = vld [vmem:[#allocation11] sm:$0xff]
        %v419 = vld [vmem:[#allocation11 + $0x8] sm:$0xff]
        %v420 = vld [vmem:[%s400] sm:$0x7f]
        %v421 = vld [vmem:[%s347] sm:$0xff]
        %v422 = vld [vmem:[%s347 + $0x8] sm:$0xff]
        %v423 = vld [vmem:[%s347 + $0x10] sm:$0xff]
        %v424 = vld [vmem:[%s347 + $0x18] sm:$0xff]
        %v425 = vld [vmem:[%s347 + $0x20] sm:$0xff]
        %v426 = vld [vmem:[%s347 + $0x28] sm:$0xff]
        %v427 = vld [vmem:[%s347 + $0x30] sm:$0xff]
        %v428 = vld [vmem:[%s347 + $0x38] sm:$0xff]
        %v429 = vld [vmem:[%s347 + $0x40] sm:$0xff]
        %v430 = vld [vmem:[%s347 + $0x48] sm:$0xff]
        %v431 = vld [vmem:[%s347 + $0x50] sm:$0xff]
        %v432 = vld [vmem:[%s347 + $0x58] sm:$0xff]
        %v433 = vld [vmem:[%s347 + $0x60] sm:$0xff]
        %v434 = vld [vmem:[%s347 + $0x68] sm:$0xff]
        %v435 = vld [vmem:[%s347 + $0x70] sm:$0xff]
        %v436 = vld [vmem:[%s347 + $0x78] sm:$0xff]
        %v437 = vld [vmem:[%s347 + $0x80] sm:$0xff]
        %v438 = vld [vmem:[%s347 + $0x88] sm:$0xff]
        %v439 = vld [vmem:[%s347 + $0x90] sm:$0xff]
        %v440 = vld [vmem:[%s347 + $0x98] sm:$0xff]
        %v441 = vld [vmem:[%s347 + $0xa0] sm:$0xff]
        %v442 = vld [vmem:[%s347 + $0xa8] sm:$0xff]
        %v443 = vld [vmem:[%s347 + $0xb0] sm:$0xff]
        %v444 = vld [vmem:[%s347 + $0xb8] sm:$0xff]
        %v445 = vld [vmem:[%s347 + $0xc0] sm:$0xff]
        %v446 = vld [vmem:[%s347 + $0xc8] sm:$0xff]
        %v447 = vld [vmem:[%s347 + $0xd0] sm:$0xff]
        %v448 = vld [vmem:[%s347 + $0xd8] sm:$0xff]
        %v449 = vld [vmem:[%s347 + $0xe0] sm:$0xff]
        %v450 = vld [vmem:[%s347 + $0xe8] sm:$0xff]
        %v451 = vld [vmem:[%s347 + $0xf0] sm:$0xff]
        %v452 = vld [vmem:[%s347 + $0xf8] sm:$0xff]
        %v453 = vld [vmem:[%s347 + $0x100] sm:$0xff]
        %v454 = vld [vmem:[%s347 + $0x108] sm:$0xff]
        %v455 = vld [vmem:[%s347 + $0x110] sm:$0xff]
        %v456 = vld [vmem:[%s347 + $0x118] sm:$0xff]
        %v457 = vld [vmem:[%s347 + $0x120] sm:$0xff]
        %v458 = vld [vmem:[%s347 + $0x128] sm:$0xff]
        %v459 = vld [vmem:[%s347 + $0x130] sm:$0xff]
        %v460 = vld [vmem:[%s347 + $0x138] sm:$0xff]
        %v461 = vld [vmem:[%s347 + $0x140] sm:$0xff]
        %v462 = vld [vmem:[%s347 + $0x148] sm:$0xff]
        %v463 = vld [vmem:[%s347 + $0x150] sm:$0xff]
        %v464 = vld [vmem:[%s347 + $0x158] sm:$0xff]
        %v465 = vld [vmem:[%s347 + $0x160] sm:$0xff]
        %v466 = vld [vmem:[%s347 + $0x168] sm:$0xff]
        %v467 = vld [vmem:[%s347 + $0x170] sm:$0xff]
        %v468 = vld [vmem:[%s347 + $0x178] sm:$0xff]
        %v469 = vld [vmem:[%s347 + $0x180] sm:$0xff]
        %v470 = vld [vmem:[%s347 + $0x188] sm:$0xff]
        %v471 = vld [vmem:[%s347 + $0x190] sm:$0xff]
        %v472 = vld [vmem:[%s347 + $0x198] sm:$0xff]
        %v473 = vld [vmem:[%s347 + $0x1a0] sm:$0xff]
        %v474 = vld [vmem:[%s347 + $0x1a8] sm:$0xff]
        %v475 = vld [vmem:[%s347 + $0x1b0] sm:$0xff]
        %v476 = vld [vmem:[%s347 + $0x1b8] sm:$0xff]
        %v477 = vld [vmem:[%s347 + $0x1c0] sm:$0xff]
        %v478 = vld [vmem:[%s347 + $0x1c8] sm:$0xff]
        %v479 = vld [vmem:[%s347 + $0x1d0] sm:$0xff]
        %v480 = vld [vmem:[%s347 + $0x1d8] sm:$0xff]
        %v481 = vld [vmem:[%s347 + $0x1e0] sm:$0xff]
        %v482 = vld [vmem:[%s347 + $0x1e8] sm:$0xff]
        %v483 = vld [vmem:[%s347 + $0x1f0] sm:$0xff]
        %v484 = vld [vmem:[%s347 + $0x1f8] sm:$0xff]
        %v485 = vld [vmem:[%s347 + $0x200] sm:$0xff]
        %v486 = vld [vmem:[%s347 + $0x208] sm:$0xff]
        %v487 = vld [vmem:[%s347 + $0x210] sm:$0xff]
        %v488 = vld [vmem:[%s347 + $0x218] sm:$0xff]
        %v489 = vld [vmem:[%s347 + $0x220] sm:$0xff]
        %v490 = vld [vmem:[%s347 + $0x228] sm:$0xff]
        %v491 = vld [vmem:[%s347 + $0x230] sm:$0xff]
        %v492 = vld [vmem:[%s347 + $0x238] sm:$0xff]
        %v493 = vld [vmem:[%s347 + $0x240] sm:$0xff]
        %v494 = vld [vmem:[%s347 + $0x248] sm:$0xff]
        %v495 = vld [vmem:[%s347 + $0x250] sm:$0xff]
        %v496 = vld [vmem:[%s347 + $0x258] sm:$0xff]
        %v497 = vld [vmem:[%s347 + $0x260] sm:$0xff]
        %v498 = vld [vmem:[%s347 + $0x268] sm:$0xff]
        %v499 = vld [vmem:[%s347 + $0x270] sm:$0xff]
        %v500 = vld [vmem:[%s347 + $0x278] sm:$0xff]
        %v501 = vld [vmem:[%s347 + $0x280] sm:$0xff]
        %v502 = vld [vmem:[%s347 + $0x288] sm:$0xff]
        %v503 = vld [vmem:[%s347 + $0x290] sm:$0xff]
        %v504 = vld [vmem:[%s347 + $0x298] sm:$0xff]
        %v505 = vld [vmem:[%s347 + $0x2a0] sm:$0xff]
        %v506 = vld [vmem:[%s347 + $0x2a8] sm:$0xff]
        %v507 = vld [vmem:[%s347 + $0x2b0] sm:$0xff]
        %v508 = vld [vmem:[%s347 + $0x2b8] sm:$0xff]
        %v509 = vld [vmem:[%s347 + $0x2c0] sm:$0xff]
        %v510 = vld [vmem:[%s347 + $0x2c8] sm:$0xff]
        %v511 = vld [vmem:[%s347 + $0x2d0] sm:$0xff]
        %v512 = vld [vmem:[%s347 + $0x2d8] sm:$0xff]
        %v513 = vld [vmem:[%s347 + $0x2e0] sm:$0xff]
        %v514 = vld [vmem:[%s347 + $0x2e8] sm:$0xff]
        %v515 = vld [vmem:[%s347 + $0x2f0] sm:$0xff]
        %v516 = vld [vmem:[%s347 + $0x2f8] sm:$0xff]
        %v517 = vld [vmem:[%s347 + $0x300] sm:$0xff]
        %v518 = vld [vmem:[%s347 + $0x308] sm:$0xff]
        %v519 = vld [vmem:[%s347 + $0x310] sm:$0xff]
        %v520 = vld [vmem:[%s347 + $0x318] sm:$0xff]
        %v521 = vld [vmem:[%s347 + $0x320] sm:$0xff]
        %v522 = vld [vmem:[%s347 + $0x328] sm:$0xff]
        %v523 = vld [vmem:[%s347 + $0x330] sm:$0xff]
        %v524 = vld [vmem:[%s347 + $0x338] sm:$0xff]
        %v525 = vld [vmem:[%s347 + $0x340] sm:$0xff]
        %v526 = vld [vmem:[%s347 + $0x348] sm:$0xff]
        %v527 = vld [vmem:[%s347 + $0x350] sm:$0xff]
        %v528 = vld [vmem:[%s347 + $0x358] sm:$0xff]
        %v529 = vld [vmem:[%s347 + $0x360] sm:$0xff]
        %v530 = vld [vmem:[%s347 + $0x368] sm:$0xff]
        %v531 = vld [vmem:[%s347 + $0x370] sm:$0xff]
        %v532 = vld [vmem:[%s347 + $0x378] sm:$0xff]
        %v533 = vld [vmem:[%s347 + $0x380] sm:$0xff]
        %v534 = vld [vmem:[%s347 + $0x388] sm:$0xff]
        %v535 = vld [vmem:[%s347 + $0x390] sm:$0xff]
        %v536 = vld [vmem:[%s347 + $0x398] sm:$0xff]
        %v537 = vld [vmem:[%s347 + $0x3a0] sm:$0xff]
        %v538 = vld [vmem:[%s347 + $0x3a8] sm:$0xff]
        %v539 = vld [vmem:[%s347 + $0x3b0] sm:$0xff]
        %v540 = vld [vmem:[%s347 + $0x3b8] sm:$0xff]
        %v541 = vld [vmem:[%s347 + $0x3c0] sm:$0xff]
        %v542 = vld [vmem:[%s347 + $0x3c8] sm:$0xff]
        %v543 = vld [vmem:[%s347 + $0x3d0] sm:$0xff]
        %v544 = vld [vmem:[%s347 + $0x3d8] sm:$0xff]
        %v545 = vld [vmem:[%s347 + $0x3e0] sm:$0xff]
        %v546 = vld [vmem:[%s347 + $0x3e8] sm:$0xff]
        %v547 = vld [vmem:[%s347 + $0x3f0] sm:$0xff]
        %v548 = vld [vmem:[%s347 + $0x3f8] sm:$0xff]
        %v549 = vld [vmem:[%s347 + $0x400] sm:$0xff]
        %v550 = vld [vmem:[%s347 + $0x408] sm:$0xff]
        %v551 = vld [vmem:[%s347 + $0x410] sm:$0xff]
        %v552 = vld [vmem:[%s347 + $0x418] sm:$0xff]
        %v553 = vld [vmem:[%s347 + $0x420] sm:$0xff]
        %v554 = vld [vmem:[%s347 + $0x428] sm:$0xff]
        %v555 = vld [vmem:[%s347 + $0x430] sm:$0xff]
        %v556 = vld [vmem:[%s347 + $0x438] sm:$0xff]
        %v557 = vld [vmem:[%s347 + $0x440] sm:$0xff]
        %v558 = vld [vmem:[%s347 + $0x448] sm:$0xff]
        %v559 = vld [vmem:[%s347 + $0x450] sm:$0xff]
        %v560 = vld [vmem:[%s347 + $0x458] sm:$0xff]
        %v561 = vld [vmem:[%s347 + $0x460] sm:$0xff]
        %v562 = vld [vmem:[%s347 + $0x468] sm:$0xff]
        %v563 = vld [vmem:[%s347 + $0x470] sm:$0xff]
        %v564 = vld [vmem:[%s347 + $0x478] sm:$0xff]
        %v565 = vld [vmem:[%s347 + $0x480] sm:$0xff]
        %v566 = vld [vmem:[%s347 + $0x488] sm:$0xff]
        %v567 = vld [vmem:[%s347 + $0x490] sm:$0xff]
        %v568 = vld [vmem:[%s347 + $0x498] sm:$0xff]
        %v569 = vld [vmem:[%s347 + $0x4a0] sm:$0xff]
        %v570 = vld [vmem:[%s347 + $0x4a8] sm:$0xff]
        %v571 = vld [vmem:[%s347 + $0x4b0] sm:$0xff]
        %v572 = vld [vmem:[%s347 + $0x4b8] sm:$0xff]
        %v573 = vld [vmem:[%s347 + $0x4c0] sm:$0xff]
        %v574 = vld [vmem:[%s347 + $0x4c8] sm:$0xff]
        %v575 = vld [vmem:[%s347 + $0x4d0] sm:$0xff]
        %v576 = vld [vmem:[%s347 + $0x4d8] sm:$0xff]
        %v577 = vld [vmem:[%s347 + $0x4e0] sm:$0xff]
        %v578 = vld [vmem:[%s347 + $0x4e8] sm:$0xff]
        %v579 = vld [vmem:[%s347 + $0x4f0] sm:$0xff]
        %v580 = vld [vmem:[%s347 + $0x4f8] sm:$0xff]
        %v581 = vld [vmem:[%s347 + $0x500] sm:$0xff]
        %v582 = vld [vmem:[%s347 + $0x508] sm:$0xff]
        %v583 = vld [vmem:[%s347 + $0x510] sm:$0xff]
        %v584 = vld [vmem:[%s347 + $0x518] sm:$0xff]
        %v585 = vld [vmem:[%s347 + $0x520] sm:$0xff]
        %v586 = vld [vmem:[%s347 + $0x528] sm:$0xff]
        %v587 = vld [vmem:[%s347 + $0x530] sm:$0xff]
        %v588 = vld [vmem:[%s347 + $0x538] sm:$0xff]
        %v589 = vld [vmem:[%s347 + $0x540] sm:$0xff]
        %v590 = vld [vmem:[%s347 + $0x548] sm:$0xff]
        %v591 = vld [vmem:[%s347 + $0x550] sm:$0xff]
        %v592 = vld [vmem:[%s347 + $0x558] sm:$0xff]
        %v593 = vld [vmem:[%s347 + $0x560] sm:$0xff]
        %v594 = vld [vmem:[%s347 + $0x568] sm:$0xff]
        %v595 = vld [vmem:[%s347 + $0x570] sm:$0xff]
        %v596 = vld [vmem:[%s347 + $0x578] sm:$0xff]
        %v597 = vld [vmem:[%s347 + $0x580] sm:$0xff]
        %v598 = vld [vmem:[%s347 + $0x588] sm:$0xff]
        %v599 = vld [vmem:[%s347 + $0x590] sm:$0xff]
        %v600 = vld [vmem:[%s347 + $0x598] sm:$0xff]
        %v601 = vld [vmem:[%s347 + $0x5a0] sm:$0xff]
        %v602 = vld [vmem:[%s347 + $0x5a8] sm:$0xff]
        %v603 = vld [vmem:[%s347 + $0x5b0] sm:$0xff]
        %v604 = vld [vmem:[%s347 + $0x5b8] sm:$0xff]
        %v605 = vld [vmem:[%s347 + $0x5c0] sm:$0xff]
        %v606 = vld [vmem:[%s347 + $0x5c8] sm:$0xff]
        %v607 = vld [vmem:[%s347 + $0x5d0] sm:$0xff]
        %v608 = vld [vmem:[%s347 + $0x5d8] sm:$0xff]
        %v609 = vld [vmem:[%s347 + $0x5e0] sm:$0xff]
        %v610 = vld [vmem:[%s347 + $0x5e8] sm:$0xff]
        %v611 = vld [vmem:[%s347 + $0x5f0] sm:$0xff]
        %v612 = vld [vmem:[%s347 + $0x5f8] sm:$0xff]
        %v613 = vld [vmem:[%s347 + $0x600] sm:$0xff]
        %v614 = vld [vmem:[%s347 + $0x608] sm:$0xff]
        %v615 = vld [vmem:[%s347 + $0x610] sm:$0xff]
        %v616 = vld [vmem:[%s347 + $0x618] sm:$0xff]
        %v617 = vld [vmem:[%s347 + $0x620] sm:$0xff]
        %v618 = vld [vmem:[%s347 + $0x628] sm:$0xff]
        %v619 = vld [vmem:[%s347 + $0x630] sm:$0xff]
        %v620 = vld [vmem:[%s347 + $0x638] sm:$0xff]
        %v621 = vld [vmem:[%s347 + $0x640] sm:$0xff]
        %v622 = vld [vmem:[%s347 + $0x648] sm:$0xff]
        %v623 = vld [vmem:[%s347 + $0x650] sm:$0xff]
        %v624 = vld [vmem:[%s347 + $0x658] sm:$0xff]
        %v625 = vld [vmem:[%s347 + $0x660] sm:$0xff]
        %v626 = vld [vmem:[%s347 + $0x668] sm:$0xff]
        %v627 = vld [vmem:[%s347 + $0x670] sm:$0xff]
        %v628 = vld [vmem:[%s347 + $0x678] sm:$0xff]
        %v629 = vld [vmem:[%s347 + $0x680] sm:$0xff]
        %v630 = vld [vmem:[%s347 + $0x688] sm:$0xff]
        %v631 = vld [vmem:[%s347 + $0x690] sm:$0xff]
        %v632 = vld [vmem:[%s347 + $0x698] sm:$0xff]
        %v633 = vld [vmem:[%s347 + $0x6a0] sm:$0xff]
        %v634 = vld [vmem:[%s347 + $0x6a8] sm:$0xff]
        %v635 = vld [vmem:[%s347 + $0x6b0] sm:$0xff]
        %v636 = vld [vmem:[%s347 + $0x6b8] sm:$0xff]
        %v637 = vld [vmem:[%s347 + $0x6c0] sm:$0xff]
        %v638 = vld [vmem:[%s347 + $0x6c8] sm:$0xff]
        %v639 = vld [vmem:[%s347 + $0x6d0] sm:$0xff]
        %v640 = vld [vmem:[%s347 + $0x6d8] sm:$0xff]
        %v641 = vld [vmem:[%s347 + $0x6e0] sm:$0xff]
        %v642 = vld [vmem:[%s347 + $0x6e8] sm:$0xff]
        %v643 = vld [vmem:[%s347 + $0x6f0] sm:$0xff]
        %v644 = vld [vmem:[%s347 + $0x6f8] sm:$0xff]
        %v645 = vld [vmem:[%s347 + $0x700] sm:$0xff]
        %v646 = vld [vmem:[%s347 + $0x708] sm:$0xff]
        %v647 = vld [vmem:[%s347 + $0x710] sm:$0xff]
        %v648 = vld [vmem:[%s347 + $0x718] sm:$0xff]
        %v649 = vld [vmem:[%s347 + $0x720] sm:$0xff]
        %v650 = vld [vmem:[%s347 + $0x728] sm:$0xff]
        %v651 = vld [vmem:[%s347 + $0x730] sm:$0xff]
        %v652 = vld [vmem:[%s347 + $0x738] sm:$0xff]
        %v653 = vld [vmem:[%s347 + $0x740] sm:$0xff]
        %v654 = vld [vmem:[%s347 + $0x748] sm:$0xff]
        %v655 = vld [vmem:[%s347 + $0x750] sm:$0xff]
        %v656 = vld [vmem:[%s347 + $0x758] sm:$0xff]
        %v657 = vld [vmem:[%s347 + $0x760] sm:$0xff]
        %v658 = vld [vmem:[%s347 + $0x768] sm:$0xff]
        %v659 = vld [vmem:[%s347 + $0x770] sm:$0xff]
        %v660 = vld [vmem:[%s347 + $0x778] sm:$0xff]
        %v661 = vld [vmem:[%s347 + $0x780] sm:$0xff]
        %v662 = vld [vmem:[%s347 + $0x788] sm:$0xff]
        %v663 = vld [vmem:[%s347 + $0x790] sm:$0xff]
        %v664 = vld [vmem:[%s347 + $0x798] sm:$0xff]
        %v665 = vld [vmem:[%s347 + $0x7a0] sm:$0xff]
        %v666 = vld [vmem:[%s347 + $0x7a8] sm:$0xff]
        %v667 = vld [vmem:[%s347 + $0x7b0] sm:$0xff]
        %v668 = vld [vmem:[%s347 + $0x7b8] sm:$0xff]
        %v669 = vld [vmem:[%s347 + $0x7c0] sm:$0xff]
        %v670 = vld [vmem:[%s347 + $0x7c8] sm:$0xff]
        %v671 = vld [vmem:[%s347 + $0x7d0] sm:$0xff]
        %v672 = vld [vmem:[%s347 + $0x7d8] sm:$0xff]
        %v673 = vld [vmem:[%s347 + $0x7e0] sm:$0xff]
        %v674 = vld [vmem:[%s347 + $0x7e8] sm:$0xff]
        %v675 = vld [vmem:[%s347 + $0x7f0] sm:$0xff]
        %v676 = vld [vmem:[%s347 + $0x7f8] sm:$0xff]
        %v677 = vld [vmem:[%s347 + $0x800] sm:$0xff]
        %v678 = vld [vmem:[%s347 + $0x808] sm:$0xff]
        %v679 = vld [vmem:[%s347 + $0x810] sm:$0xff]
        %v680 = vld [vmem:[%s347 + $0x818] sm:$0xff]
        %v681 = vld [vmem:[%s347 + $0x820] sm:$0xff]
        %v682 = vld [vmem:[%s347 + $0x828] sm:$0xff]
        %v683 = vld [vmem:[%s347 + $0x830] sm:$0xff]
        %v684 = vld [vmem:[%s347 + $0x838] sm:$0xff]
        %v685 = vld [vmem:[%s347 + $0x840] sm:$0xff]
        %v686 = vld [vmem:[%s347 + $0x848] sm:$0xff]
        %v687 = vld [vmem:[%s347 + $0x850] sm:$0xff]
        %v688 = vld [vmem:[%s347 + $0x858] sm:$0xff]
        %v689 = vld [vmem:[%s347 + $0x860] sm:$0xff]
        %v690 = vld [vmem:[%s347 + $0x868] sm:$0xff]
        %v691 = vld [vmem:[%s347 + $0x870] sm:$0xff]
        %v692 = vld [vmem:[%s347 + $0x878] sm:$0xff]
        %v693 = vld [vmem:[%s347 + $0x880] sm:$0xff]
        %v694 = vld [vmem:[%s347 + $0x888] sm:$0xff]
        %v695 = vld [vmem:[%s347 + $0x890] sm:$0xff]
        %v696 = vld [vmem:[%s347 + $0x898] sm:$0xff]
        %v697 = vld [vmem:[%s347 + $0x8a0] sm:$0xff]
        %v698 = vld [vmem:[%s347 + $0x8a8] sm:$0xff]
        %v699 = vld [vmem:[%s347 + $0x8b0] sm:$0xff]
        %v700 = vld [vmem:[%s347 + $0x8b8] sm:$0xff]
        %v701 = vld [vmem:[%s347 + $0x8c0] sm:$0xff]
        %v702 = vld [vmem:[%s347 + $0x8c8] sm:$0xff]
        %v703 = vld [vmem:[%s347 + $0x8d0] sm:$0xff]
        %v704 = vld [vmem:[%s347 + $0x8d8] sm:$0xff]
        %v705 = vld [vmem:[%s347 + $0x8e0] sm:$0xff]
        %v706 = vld [vmem:[%s347 + $0x8e8] sm:$0xff]
        %v707 = vld [vmem:[%s347 + $0x8f0] sm:$0xff]
        %v708 = vld [vmem:[%s347 + $0x8f8] sm:$0xff]
        %v709 = vld [vmem:[%s347 + $0x900] sm:$0xff]
        %v710 = vld [vmem:[%s347 + $0x908] sm:$0xff]
        %v711 = vld [vmem:[%s347 + $0x910] sm:$0xff]
        %v712 = vld [vmem:[%s347 + $0x918] sm:$0xff]
        %v713 = vld [vmem:[%s347 + $0x920] sm:$0xff]
        %v714 = vld [vmem:[%s347 + $0x928] sm:$0xff]
        %v715 = vld [vmem:[%s347 + $0x930] sm:$0xff]
        %v716 = vld [vmem:[%s347 + $0x938] sm:$0xff]
        %v717 = vld [vmem:[%s347 + $0x940] sm:$0xff]
        %v718 = vld [vmem:[%s347 + $0x948] sm:$0xff]
        %v719 = vld [vmem:[%s347 + $0x950] sm:$0xff]
        %v720 = vld [vmem:[%s347 + $0x958] sm:$0xff]
        %v721 = vld [vmem:[%s347 + $0x960] sm:$0xff]
        %v722 = vld [vmem:[%s347 + $0x968] sm:$0xff]
        %v723 = vld [vmem:[%s347 + $0x970] sm:$0xff]
        %v724 = vld [vmem:[%s347 + $0x978] sm:$0xff]
        %v725 = vld [vmem:[%s347 + $0x980] sm:$0xff]
        %v726 = vld [vmem:[%s347 + $0x988] sm:$0xff]
        %v727 = vld [vmem:[%s347 + $0x990] sm:$0xff]
        %v728 = vld [vmem:[%s347 + $0x998] sm:$0xff]
        %v729 = vld [vmem:[%s347 + $0x9a0] sm:$0xff]
        %v730 = vld [vmem:[%s347 + $0x9a8] sm:$0xff]
        %v731 = vld [vmem:[%s347 + $0x9b0] sm:$0xff]
        %v732 = vld [vmem:[%s347 + $0x9b8] sm:$0xff]
        %v733 = vld [vmem:[%s347 + $0x9c0] sm:$0xff]
        %v734 = vld [vmem:[%s347 + $0x9c8] sm:$0xff]
        %v735 = vld [vmem:[%s347 + $0x9d0] sm:$0xff]
        %v736 = vld [vmem:[%s347 + $0x9d8] sm:$0xff]
        %v737 = vld [vmem:[%s347 + $0x9e0] sm:$0xff]
        %v738 = vld [vmem:[%s347 + $0x9e8] sm:$0xff]
        %v739 = vld [vmem:[%s347 + $0x9f0] sm:$0xff]
        %v740 = vld [vmem:[%s347 + $0x9f8] sm:$0xff]
        %v741 = vld [vmem:[%s347 + $0xa00] sm:$0xff]
        %v742 = vld [vmem:[%s347 + $0xa08] sm:$0xff]
        %v743 = vld [vmem:[%s347 + $0xa10] sm:$0xff]
        %v744 = vld [vmem:[%s347 + $0xa18] sm:$0xff]
        %v745 = vld [vmem:[%s347 + $0xa20] sm:$0xff]
        %v746 = vld [vmem:[%s347 + $0xa28] sm:$0xff]
        %v747 = vld [vmem:[%s347 + $0xa30] sm:$0xff]
        %v748 = vld [vmem:[%s347 + $0xa38] sm:$0xff]
        %v749 = vld [vmem:[%s347 + $0xa40] sm:$0xff]
        %v750 = vld [vmem:[%s347 + $0xa48] sm:$0xff]
        %v751 = vld [vmem:[%s347 + $0xa50] sm:$0xff]
        %v752 = vld [vmem:[%s347 + $0xa58] sm:$0xff]
        %v753 = vld [vmem:[%s347 + $0xa60] sm:$0xff]
        %v754 = vld [vmem:[%s347 + $0xa68] sm:$0xff]
        %v755 = vld [vmem:[%s347 + $0xa70] sm:$0xff]
        %v756 = vld [vmem:[%s347 + $0xa78] sm:$0xff]
        %v757 = vld [vmem:[%s347 + $0xa80] sm:$0xff]
        %v758 = vld [vmem:[%s347 + $0xa88] sm:$0xff]
        %v759 = vld [vmem:[%s347 + $0xa90] sm:$0xff]
        %v760 = vld [vmem:[%s347 + $0xa98] sm:$0xff]
        %v761 = vld [vmem:[%s347 + $0xaa0] sm:$0xff]
        %v762 = vld [vmem:[%s347 + $0xaa8] sm:$0xff]
        %v763 = vld [vmem:[%s347 + $0xab0] sm:$0xff]
        %v764 = vld [vmem:[%s347 + $0xab8] sm:$0xff]
        %v765 = vld [vmem:[%s347 + $0xac0] sm:$0xff]
        %v766 = vld [vmem:[%s347 + $0xac8] sm:$0xff]
        %v767 = vld [vmem:[%s347 + $0xad0] sm:$0xff]
        %v768 = vld [vmem:[%s347 + $0xad8] sm:$0xff]
        %v769 = vld [vmem:[%s347 + $0xae0] sm:$0xff]
        %v770 = vld [vmem:[%s347 + $0xae8] sm:$0xff]
        %v771 = vld [vmem:[%s347 + $0xaf0] sm:$0xff]
        %v772 = vld [vmem:[%s347 + $0xaf8] sm:$0xff]
        %v773 = vld [vmem:[%s347 + $0xb00] sm:$0xff]
        %v774 = vld [vmem:[%s347 + $0xb08] sm:$0xff]
        %v775 = vld [vmem:[%s347 + $0xb10] sm:$0xff]
        %v776 = vld [vmem:[%s347 + $0xb18] sm:$0xff]
        %v777 = vld [vmem:[%s347 + $0xb20] sm:$0xff]
        %v778 = vld [vmem:[%s347 + $0xb28] sm:$0xff]
        %v779 = vld [vmem:[%s347 + $0xb30] sm:$0xff]
        %v780 = vld [vmem:[%s347 + $0xb38] sm:$0xff]
        %v781 = vld [vmem:[%s347 + $0xb40] sm:$0xff]
        %v782 = vld [vmem:[%s347 + $0xb48] sm:$0xff]
        %v783 = vld [vmem:[%s347 + $0xb50] sm:$0xff]
        %v784 = vld [vmem:[%s347 + $0xb58] sm:$0xff]
        %v785 = vld [vmem:[%s347 + $0xb60] sm:$0xff]
        %v786 = vld [vmem:[%s347 + $0xb68] sm:$0xff]
        %v787 = vld [vmem:[%s347 + $0xb70] sm:$0xff]
        %v788 = vld [vmem:[%s347 + $0xb78] sm:$0xff]
        %v789 = vld [vmem:[%s347 + $0xb80] sm:$0xff]
        %v790 = vld [vmem:[%s347 + $0xb88] sm:$0xff]
        %v791 = vld [vmem:[%s347 + $0xb90] sm:$0xff]
        %v792 = vld [vmem:[%s347 + $0xb98] sm:$0xff]
        %v793 = vld [vmem:[%s347 + $0xba0] sm:$0xff]
        %v794 = vld [vmem:[%s347 + $0xba8] sm:$0xff]
        %v795 = vld [vmem:[%s347 + $0xbb0] sm:$0xff]
        %v796 = vld [vmem:[%s347 + $0xbb8] sm:$0xff]
        %v797 = vld [vmem:[%s347 + $0xbc0] sm:$0xff]
        %v798 = vld [vmem:[%s347 + $0xbc8] sm:$0xff]
        %v799 = vld [vmem:[%s347 + $0xbd0] sm:$0xff]
        %v800 = vld [vmem:[%s347 + $0xbd8] sm:$0xff]
        %v801 = vld [vmem:[%s347 + $0xbe0] sm:$0xff]
        %v802 = vld [vmem:[%s347 + $0xbe8] sm:$0xff]
        %v803 = vld [vmem:[%s347 + $0xbf0] sm:$0xff]
        %v804 = vld [vmem:[%s347 + $0xbf8] sm:$0xff]
        %v805 = vld [vmem:[%s347 + $0xc00] sm:$0xff]
        %v806 = vld [vmem:[%s347 + $0xc08] sm:$0xff]
        %v807 = vld [vmem:[%s347 + $0xc10] sm:$0xff]
        %v808 = vld [vmem:[%s347 + $0xc18] sm:$0xff]
        %v809 = vld [vmem:[%s347 + $0xc20] sm:$0xff]
        %v810 = vld [vmem:[%s347 + $0xc28] sm:$0xff]
        %v811 = vld [vmem:[%s347 + $0xc30] sm:$0xff]
        %v812 = vld [vmem:[%s347 + $0xc38] sm:$0xff]
        %v813 = vld [vmem:[%s347 + $0xc40] sm:$0xff]
        %v814 = vld [vmem:[%s347 + $0xc48] sm:$0xff]
        %v815 = vld [vmem:[%s347 + $0xc50] sm:$0xff]
        %v816 = vld [vmem:[%s347 + $0xc58] sm:$0xff]
        %v817 = vld [vmem:[%s347 + $0xc60] sm:$0xff]
        %v818 = vld [vmem:[%s347 + $0xc68] sm:$0xff]
        %v819 = vld [vmem:[%s347 + $0xc70] sm:$0xff]
        %v820 = vld [vmem:[%s347 + $0xc78] sm:$0xff]
        %v821 = vld [vmem:[%s347 + $0xc80] sm:$0xff]
        %v822 = vld [vmem:[%s347 + $0xc88] sm:$0xff]
        %v823 = vld [vmem:[%s347 + $0xc90] sm:$0xff]
        %v824 = vld [vmem:[%s347 + $0xc98] sm:$0xff]
        %v825 = vld [vmem:[%s347 + $0xca0] sm:$0xff]
        %v826 = vld [vmem:[%s347 + $0xca8] sm:$0xff]
        %v827 = vld [vmem:[%s347 + $0xcb0] sm:$0xff]
        %v828 = vld [vmem:[%s347 + $0xcb8] sm:$0xff]
        %v829 = vld [vmem:[%s347 + $0xcc0] sm:$0xff]
        %v830 = vld [vmem:[%s347 + $0xcc8] sm:$0xff]
        %v831 = vld [vmem:[%s347 + $0xcd0] sm:$0xff]
        %v832 = vld [vmem:[%s347 + $0xcd8] sm:$0xff]
        %v833 = vld [vmem:[%s347 + $0xce0] sm:$0xff]
        %v834 = vld [vmem:[%s347 + $0xce8] sm:$0xff]
        %v835 = vld [vmem:[%s347 + $0xcf0] sm:$0xff]
        %v836 = vld [vmem:[%s347 + $0xcf8] sm:$0xff]
        %v837 = vld [vmem:[%s347 + $0xd00] sm:$0xff]
        %v838 = vld [vmem:[%s347 + $0xd08] sm:$0xff]
        %v839 = vld [vmem:[%s347 + $0xd10] sm:$0xff]
        %v840 = vld [vmem:[%s347 + $0xd18] sm:$0xff]
        %v841 = vld [vmem:[%s347 + $0xd20] sm:$0xff]
        %v842 = vld [vmem:[%s347 + $0xd28] sm:$0xff]
        %v843 = vld [vmem:[%s347 + $0xd30] sm:$0xff]
        %v844 = vld [vmem:[%s347 + $0xd38] sm:$0xff]
        %v845 = vld [vmem:[%s347 + $0xd40] sm:$0xff]
        %v846 = vld [vmem:[%s347 + $0xd48] sm:$0xff]
        %v847 = vld [vmem:[%s347 + $0xd50] sm:$0xff]
        %v848 = vld [vmem:[%s347 + $0xd58] sm:$0xff]
        %v849 = vld [vmem:[%s347 + $0xd60] sm:$0xff]
        %v850 = vld [vmem:[%s347 + $0xd68] sm:$0xff]
        %v851 = vld [vmem:[%s347 + $0xd70] sm:$0xff]
        %v852 = vld [vmem:[%s347 + $0xd78] sm:$0xff]
        %v853 = vld [vmem:[%s347 + $0xd80] sm:$0xff]
        %v854 = vld [vmem:[%s347 + $0xd88] sm:$0xff]
        %v855 = vld [vmem:[%s347 + $0xd90] sm:$0xff]
        %v856 = vld [vmem:[%s347 + $0xd98] sm:$0xff]
        %v857 = vld [vmem:[%s347 + $0xda0] sm:$0xff]
        %v858 = vld [vmem:[%s347 + $0xda8] sm:$0xff]
        %v859 = vld [vmem:[%s347 + $0xdb0] sm:$0xff]
        %v860 = vld [vmem:[%s347 + $0xdb8] sm:$0xff]
        %v861 = vld [vmem:[%s347 + $0xdc0] sm:$0xff]
        %v862 = vld [vmem:[%s347 + $0xdc8] sm:$0xff]
        %v863 = vld [vmem:[%s347 + $0xdd0] sm:$0xff]
        %v864 = vld [vmem:[%s347 + $0xdd8] sm:$0xff]
        %v865 = vld [vmem:[%s347 + $0xde0] sm:$0xff]
        %v866 = vld [vmem:[%s347 + $0xde8] sm:$0xff]
        %v867 = vld [vmem:[%s347 + $0xdf0] sm:$0xff]
        %v868 = vld [vmem:[%s347 + $0xdf8] sm:$0xff]
        %870 = vst [vmem:[#allocation1] ss:$9 sm:$0xff] %v420
        %v871 = vld [vmem:[#allocation1] sm:$0xff]
        %v872 = vld [vmem:[#allocation1 + $0x9] sm:$0xff]
        %v873 = vld [vmem:[#allocation1 + $0x12] sm:$0xff]
        %v874 = vld [vmem:[#allocation1 + $0x1b] sm:$0xff]
        %v875 = vld [vmem:[#allocation1 + $0x24] sm:$0xff]
        %v876 = vld [vmem:[#allocation1 + $0x2d] sm:$0xff]
        %v877 = vld [vmem:[#allocation1 + $0x36] sm:$0xff]
        %v1333 = vunpack.c.l.b16 %v421
        %v1334 = vunpack.c.h.b16 %v421
        %v1335 = vunpack.c.l.b16 %v422
        %v1336 = vunpack.c.h.b16 %v422
        %v1337 = vunpack.c.l.b16 %v423
        %v1338 = vunpack.c.h.b16 %v423
        %v1339 = vunpack.c.l.b16 %v424
        %v1340 = vunpack.c.h.b16 %v424
        %v1341 = vunpack.c.l.b16 %v425
        %v1342 = vunpack.c.h.b16 %v425
        %v1343 = vunpack.c.l.b16 %v426
        %v1344 = vunpack.c.h.b16 %v426
        %v1345 = vunpack.c.l.b16 %v427
        %v1346 = vunpack.c.h.b16 %v427
        %v1347 = vunpack.c.l.b16 %v428
        %v1348 = vunpack.c.h.b16 %v428
        %v1349 = vunpack.c.l.b16 %v429
        %v1350 = vunpack.c.h.b16 %v429
        %v1351 = vunpack.c.l.b16 %v430
        %v1352 = vunpack.c.h.b16 %v430
        %v1353 = vunpack.c.l.b16 %v431
        %v1354 = vunpack.c.h.b16 %v431
        %v1355 = vunpack.c.l.b16 %v432
        %v1356 = vunpack.c.h.b16 %v432
        %v1357 = vunpack.c.l.b16 %v433
        %v1358 = vunpack.c.h.b16 %v433
        %v1359 = vunpack.c.l.b16 %v434
        %v1360 = vunpack.c.h.b16 %v434
        %v1361 = vunpack.c.l.b16 %v435
        %v1362 = vunpack.c.h.b16 %v435
        %v1363 = vunpack.c.l.b16 %v436
        %v1364 = vunpack.c.h.b16 %v436
        %v1365 = vunpack.c.l.b16 %v437
        %v1366 = vunpack.c.h.b16 %v437
        %v1367 = vunpack.c.l.b16 %v438
        %v1368 = vunpack.c.h.b16 %v438
        %v1369 = vunpack.c.l.b16 %v439
        %v1370 = vunpack.c.h.b16 %v439
        %v1371 = vunpack.c.l.b16 %v440
        %v1372 = vunpack.c.h.b16 %v440
        %v1373 = vunpack.c.l.b16 %v441
        %v1374 = vunpack.c.h.b16 %v441
        %v1375 = vunpack.c.l.b16 %v442
        %v1376 = vunpack.c.h.b16 %v442
        %v1377 = vunpack.c.l.b16 %v443
        %v1378 = vunpack.c.h.b16 %v443
        %v1379 = vunpack.c.l.b16 %v444
        %v1380 = vunpack.c.h.b16 %v444
        %v1381 = vunpack.c.l.b16 %v445
        %v1382 = vunpack.c.h.b16 %v445
        %v1383 = vunpack.c.l.b16 %v446
        %v1384 = vunpack.c.h.b16 %v446
        %v1385 = vunpack.c.l.b16 %v447
        %v1386 = vunpack.c.h.b16 %v447
        %v1387 = vunpack.c.l.b16 %v448
        %v1388 = vunpack.c.h.b16 %v448
        %v1389 = vunpack.c.l.b16 %v449
        %v1390 = vunpack.c.h.b16 %v449
        %v1391 = vunpack.c.l.b16 %v450
        %v1392 = vunpack.c.h.b16 %v450
        %v1393 = vunpack.c.l.b16 %v451
        %v1394 = vunpack.c.h.b16 %v451
        %v1395 = vunpack.c.l.b16 %v452
        %v1396 = vunpack.c.h.b16 %v452
        %v1397 = vunpack.c.l.b16 %v453
        %v1398 = vunpack.c.h.b16 %v453
        %v1399 = vunpack.c.l.b16 %v454
        %v1400 = vunpack.c.h.b16 %v454
        %v1401 = vunpack.c.l.b16 %v455
        %v1402 = vunpack.c.h.b16 %v455
        %v1403 = vunpack.c.l.b16 %v456
        %v1404 = vunpack.c.h.b16 %v456
        %v1405 = vunpack.c.l.b16 %v457
        %v1406 = vunpack.c.h.b16 %v457
        %v1407 = vunpack.c.l.b16 %v458
        %v1408 = vunpack.c.h.b16 %v458
        %v1409 = vunpack.c.l.b16 %v459
        %v1410 = vunpack.c.h.b16 %v459
        %v1411 = vunpack.c.l.b16 %v460
        %v1412 = vunpack.c.h.b16 %v460
        %v1413 = vunpack.c.l.b16 %v461
        %v1414 = vunpack.c.h.b16 %v461
        %v1415 = vunpack.c.l.b16 %v462
        %v1416 = vunpack.c.h.b16 %v462
        %v1417 = vunpack.c.l.b16 %v463
        %v1418 = vunpack.c.h.b16 %v463
        %v1419 = vunpack.c.l.b16 %v464
        %v1420 = vunpack.c.h.b16 %v464
        %v1421 = vunpack.c.l.b16 %v465
        %v1422 = vunpack.c.h.b16 %v465
        %v1423 = vunpack.c.l.b16 %v466
        %v1424 = vunpack.c.h.b16 %v466
        %v1425 = vunpack.c.l.b16 %v467
        %v1426 = vunpack.c.h.b16 %v467
        %v1427 = vunpack.c.l.b16 %v468
        %v1428 = vunpack.c.h.b16 %v468
        %v1429 = vunpack.c.l.b16 %v469
        %v1430 = vunpack.c.h.b16 %v469
        %v1431 = vunpack.c.l.b16 %v470
        %v1432 = vunpack.c.h.b16 %v470
        %v1433 = vunpack.c.l.b16 %v471
        %v1434 = vunpack.c.h.b16 %v471
        %v1435 = vunpack.c.l.b16 %v472
        %v1436 = vunpack.c.h.b16 %v472
        %v1437 = vunpack.c.l.b16 %v473
        %v1438 = vunpack.c.h.b16 %v473
        %v1439 = vunpack.c.l.b16 %v474
        %v1440 = vunpack.c.h.b16 %v474
        %v1441 = vunpack.c.l.b16 %v475
        %v1442 = vunpack.c.h.b16 %v475
        %v1443 = vunpack.c.l.b16 %v476
        %v1444 = vunpack.c.h.b16 %v476
        %v1445 = vunpack.c.l.b16 %v477
        %v1446 = vunpack.c.h.b16 %v477
        %v1447 = vunpack.c.l.b16 %v478
        %v1448 = vunpack.c.h.b16 %v478
        %v1449 = vunpack.c.l.b16 %v479
        %v1450 = vunpack.c.h.b16 %v479
        %v1451 = vunpack.c.l.b16 %v480
        %v1452 = vunpack.c.h.b16 %v480
        %v1453 = vunpack.c.l.b16 %v481
        %v1454 = vunpack.c.h.b16 %v481
        %v1455 = vunpack.c.l.b16 %v482
        %v1456 = vunpack.c.h.b16 %v482
        %v1457 = vunpack.c.l.b16 %v483
        %v1458 = vunpack.c.h.b16 %v483
        %v1459 = vunpack.c.l.b16 %v484
        %v1460 = vunpack.c.h.b16 %v484
        %v1461 = vunpack.c.l.b16 %v485
        %v1462 = vunpack.c.h.b16 %v485
        %v1463 = vunpack.c.l.b16 %v486
        %v1464 = vunpack.c.h.b16 %v486
        %v1465 = vunpack.c.l.b16 %v487
        %v1466 = vunpack.c.h.b16 %v487
        %v1467 = vunpack.c.l.b16 %v488
        %v1468 = vunpack.c.h.b16 %v488
        %v1469 = vunpack.c.l.b16 %v489
        %v1470 = vunpack.c.h.b16 %v489
        %v1471 = vunpack.c.l.b16 %v490
        %v1472 = vunpack.c.h.b16 %v490
        %v1473 = vunpack.c.l.b16 %v491
        %v1474 = vunpack.c.h.b16 %v491
        %v1475 = vunpack.c.l.b16 %v492
        %v1476 = vunpack.c.h.b16 %v492
        %v1477 = vunpack.c.l.b16 %v493
        %v1478 = vunpack.c.h.b16 %v493
        %v1479 = vunpack.c.l.b16 %v494
        %v1480 = vunpack.c.h.b16 %v494
        %v1481 = vunpack.c.l.b16 %v495
        %v1482 = vunpack.c.h.b16 %v495
        %v1483 = vunpack.c.l.b16 %v496
        %v1484 = vunpack.c.h.b16 %v496
        %v1485 = vunpack.c.l.b16 %v497
        %v1486 = vunpack.c.h.b16 %v497
        %v1487 = vunpack.c.l.b16 %v498
        %v1488 = vunpack.c.h.b16 %v498
        %v1489 = vunpack.c.l.b16 %v499
        %v1490 = vunpack.c.h.b16 %v499
        %v1491 = vunpack.c.l.b16 %v500
        %v1492 = vunpack.c.h.b16 %v500
        %v1493 = vunpack.c.l.b16 %v501
        %v1494 = vunpack.c.h.b16 %v501
        %v1495 = vunpack.c.l.b16 %v502
        %v1496 = vunpack.c.h.b16 %v502
        %v1497 = vunpack.c.l.b16 %v503
        %v1498 = vunpack.c.h.b16 %v503
        %v1499 = vunpack.c.l.b16 %v504
        %v1500 = vunpack.c.h.b16 %v504
        %v1501 = vunpack.c.l.b16 %v505
        %v1502 = vunpack.c.h.b16 %v505
        %v1503 = vunpack.c.l.b16 %v506
        %v1504 = vunpack.c.h.b16 %v506
        %v1505 = vunpack.c.l.b16 %v507
        %v1506 = vunpack.c.h.b16 %v507
        %v1507 = vunpack.c.l.b16 %v508
        %v1508 = vunpack.c.h.b16 %v508
        %v1509 = vunpack.c.l.b16 %v509
        %v1510 = vunpack.c.h.b16 %v509
        %v1511 = vunpack.c.l.b16 %v510
        %v1512 = vunpack.c.h.b16 %v510
        %v1513 = vunpack.c.l.b16 %v511
        %v1514 = vunpack.c.h.b16 %v511
        %v1515 = vunpack.c.l.b16 %v512
        %v1516 = vunpack.c.h.b16 %v512
        %v1517 = vunpack.c.l.b16 %v513
        %v1518 = vunpack.c.h.b16 %v513
        %v1519 = vunpack.c.l.b16 %v514
        %v1520 = vunpack.c.h.b16 %v514
        %v1521 = vunpack.c.l.b16 %v515
        %v1522 = vunpack.c.h.b16 %v515
        %v1523 = vunpack.c.l.b16 %v516
        %v1524 = vunpack.c.h.b16 %v516
        %v1525 = vunpack.c.l.b16 %v517
        %v1526 = vunpack.c.h.b16 %v517
        %v1527 = vunpack.c.l.b16 %v518
        %v1528 = vunpack.c.h.b16 %v518
        %v1529 = vunpack.c.l.b16 %v519
        %v1530 = vunpack.c.h.b16 %v519
        %v1531 = vunpack.c.l.b16 %v520
        %v1532 = vunpack.c.h.b16 %v520
        %v1533 = vunpack.c.l.b16 %v521
        %v1534 = vunpack.c.h.b16 %v521
        %v1535 = vunpack.c.l.b16 %v522
        %v1536 = vunpack.c.h.b16 %v522
        %v1537 = vunpack.c.l.b16 %v523
        %v1538 = vunpack.c.h.b16 %v523
        %v1539 = vunpack.c.l.b16 %v524
        %v1540 = vunpack.c.h.b16 %v524
        %v1541 = vunpack.c.l.b16 %v525
        %v1542 = vunpack.c.h.b16 %v525
        %v1543 = vunpack.c.l.b16 %v526
        %v1544 = vunpack.c.h.b16 %v526
        %v1545 = vunpack.c.l.b16 %v527
        %v1546 = vunpack.c.h.b16 %v527
        %v1547 = vunpack.c.l.b16 %v528
        %v1548 = vunpack.c.h.b16 %v528
        %v1549 = vunpack.c.l.b16 %v529
        %v1550 = vunpack.c.h.b16 %v529
        %v1551 = vunpack.c.l.b16 %v530
        %v1552 = vunpack.c.h.b16 %v530
        %v1553 = vunpack.c.l.b16 %v531
        %v1554 = vunpack.c.h.b16 %v531
        %v1555 = vunpack.c.l.b16 %v532
        %v1556 = vunpack.c.h.b16 %v532
        %v1557 = vunpack.c.l.b16 %v533
        %v1558 = vunpack.c.h.b16 %v533
        %v1559 = vunpack.c.l.b16 %v534
        %v1560 = vunpack.c.h.b16 %v534
        %v1561 = vunpack.c.l.b16 %v535
        %v1562 = vunpack.c.h.b16 %v535
        %v1563 = vunpack.c.l.b16 %v536
        %v1564 = vunpack.c.h.b16 %v536
        %v1565 = vunpack.c.l.b16 %v537
        %v1566 = vunpack.c.h.b16 %v537
        %v1567 = vunpack.c.l.b16 %v538
        %v1568 = vunpack.c.h.b16 %v538
        %v1569 = vunpack.c.l.b16 %v539
        %v1570 = vunpack.c.h.b16 %v539
        %v1571 = vunpack.c.l.b16 %v540
        %v1572 = vunpack.c.h.b16 %v540
        %v1573 = vunpack.c.l.b16 %v541
        %v1574 = vunpack.c.h.b16 %v541
        %v1575 = vunpack.c.l.b16 %v542
        %v1576 = vunpack.c.h.b16 %v542
        %v1577 = vunpack.c.l.b16 %v543
        %v1578 = vunpack.c.h.b16 %v543
        %v1579 = vunpack.c.l.b16 %v544
        %v1580 = vunpack.c.h.b16 %v544
        %v1581 = vunpack.c.l.b16 %v545
        %v1582 = vunpack.c.h.b16 %v545
        %v1583 = vunpack.c.l.b16 %v546
        %v1584 = vunpack.c.h.b16 %v546
        %v1585 = vunpack.c.l.b16 %v547
        %v1586 = vunpack.c.h.b16 %v547
        %v1587 = vunpack.c.l.b16 %v548
        %v1588 = vunpack.c.h.b16 %v548
        %v1589 = vunpack.c.l.b16 %v549
        %v1590 = vunpack.c.h.b16 %v549
        %v1591 = vunpack.c.l.b16 %v550
        %v1592 = vunpack.c.h.b16 %v550
        %v1593 = vunpack.c.l.b16 %v551
        %v1594 = vunpack.c.h.b16 %v551
        %v1595 = vunpack.c.l.b16 %v552
        %v1596 = vunpack.c.h.b16 %v552
        %v1597 = vunpack.c.l.b16 %v553
        %v1598 = vunpack.c.h.b16 %v553
        %v1599 = vunpack.c.l.b16 %v554
        %v1600 = vunpack.c.h.b16 %v554
        %v1601 = vunpack.c.l.b16 %v555
        %v1602 = vunpack.c.h.b16 %v555
        %v1603 = vunpack.c.l.b16 %v556
        %v1604 = vunpack.c.h.b16 %v556
        %v1605 = vunpack.c.l.b16 %v557
        %v1606 = vunpack.c.h.b16 %v557
        %v1607 = vunpack.c.l.b16 %v558
        %v1608 = vunpack.c.h.b16 %v558
        %v1609 = vunpack.c.l.b16 %v559
        %v1610 = vunpack.c.h.b16 %v559
        %v1611 = vunpack.c.l.b16 %v560
        %v1612 = vunpack.c.h.b16 %v560
        %v1613 = vunpack.c.l.b16 %v561
        %v1614 = vunpack.c.h.b16 %v561
        %v1615 = vunpack.c.l.b16 %v562
        %v1616 = vunpack.c.h.b16 %v562
        %v1617 = vunpack.c.l.b16 %v563
        %v1618 = vunpack.c.h.b16 %v563
        %v1619 = vunpack.c.l.b16 %v564
        %v1620 = vunpack.c.h.b16 %v564
        %v1621 = vunpack.c.l.b16 %v565
        %v1622 = vunpack.c.h.b16 %v565
        %v1623 = vunpack.c.l.b16 %v566
        %v1624 = vunpack.c.h.b16 %v566
        %v1625 = vunpack.c.l.b16 %v567
        %v1626 = vunpack.c.h.b16 %v567
        %v1627 = vunpack.c.l.b16 %v568
        %v1628 = vunpack.c.h.b16 %v568
        %v1629 = vunpack.c.l.b16 %v569
        %v1630 = vunpack.c.h.b16 %v569
        %v1631 = vunpack.c.l.b16 %v570
        %v1632 = vunpack.c.h.b16 %v570
        %v1633 = vunpack.c.l.b16 %v571
        %v1634 = vunpack.c.h.b16 %v571
        %v1635 = vunpack.c.l.b16 %v572
        %v1636 = vunpack.c.h.b16 %v572
        %v1637 = vunpack.c.l.b16 %v573
        %v1638 = vunpack.c.h.b16 %v573
        %v1639 = vunpack.c.l.b16 %v574
        %v1640 = vunpack.c.h.b16 %v574
        %v1641 = vunpack.c.l.b16 %v575
        %v1642 = vunpack.c.h.b16 %v575
        %v1643 = vunpack.c.l.b16 %v576
        %v1644 = vunpack.c.h.b16 %v576
        %v1645 = vunpack.c.l.b16 %v577
        %v1646 = vunpack.c.h.b16 %v577
        %v1647 = vunpack.c.l.b16 %v578
        %v1648 = vunpack.c.h.b16 %v578
        %v1649 = vunpack.c.l.b16 %v579
        %v1650 = vunpack.c.h.b16 %v579
        %v1651 = vunpack.c.l.b16 %v580
        %v1652 = vunpack.c.h.b16 %v580
        %v1653 = vunpack.c.l.b16 %v581
        %v1654 = vunpack.c.h.b16 %v581
        %v1655 = vunpack.c.l.b16 %v582
        %v1656 = vunpack.c.h.b16 %v582
        %v1657 = vunpack.c.l.b16 %v583
        %v1658 = vunpack.c.h.b16 %v583
        %v1659 = vunpack.c.l.b16 %v584
        %v1660 = vunpack.c.h.b16 %v584
        %v1661 = vunpack.c.l.b16 %v585
        %v1662 = vunpack.c.h.b16 %v585
        %v1663 = vunpack.c.l.b16 %v586
        %v1664 = vunpack.c.h.b16 %v586
        %v1665 = vunpack.c.l.b16 %v587
        %v1666 = vunpack.c.h.b16 %v587
        %v1667 = vunpack.c.l.b16 %v588
        %v1668 = vunpack.c.h.b16 %v588
        %v1669 = vunpack.c.l.b16 %v589
        %v1670 = vunpack.c.h.b16 %v589
        %v1671 = vunpack.c.l.b16 %v590
        %v1672 = vunpack.c.h.b16 %v590
        %v1673 = vunpack.c.l.b16 %v591
        %v1674 = vunpack.c.h.b16 %v591
        %v1675 = vunpack.c.l.b16 %v592
        %v1676 = vunpack.c.h.b16 %v592
        %v1677 = vunpack.c.l.b16 %v593
        %v1678 = vunpack.c.h.b16 %v593
        %v1679 = vunpack.c.l.b16 %v594
        %v1680 = vunpack.c.h.b16 %v594
        %v1681 = vunpack.c.l.b16 %v595
        %v1682 = vunpack.c.h.b16 %v595
        %v1683 = vunpack.c.l.b16 %v596
        %v1684 = vunpack.c.h.b16 %v596
        %v1685 = vunpack.c.l.b16 %v597
        %v1686 = vunpack.c.h.b16 %v597
        %v1687 = vunpack.c.l.b16 %v598
        %v1688 = vunpack.c.h.b16 %v598
        %v1689 = vunpack.c.l.b16 %v599
        %v1690 = vunpack.c.h.b16 %v599
        %v1691 = vunpack.c.l.b16 %v600
        %v1692 = vunpack.c.h.b16 %v600
        %v1693 = vunpack.c.l.b16 %v601
        %v1694 = vunpack.c.h.b16 %v601
        %v1695 = vunpack.c.l.b16 %v602
        %v1696 = vunpack.c.h.b16 %v602
        %v1697 = vunpack.c.l.b16 %v603
        %v1698 = vunpack.c.h.b16 %v603
        %v1699 = vunpack.c.l.b16 %v604
        %v1700 = vunpack.c.h.b16 %v604
        %v1701 = vunpack.c.l.b16 %v605
        %v1702 = vunpack.c.h.b16 %v605
        %v1703 = vunpack.c.l.b16 %v606
        %v1704 = vunpack.c.h.b16 %v606
        %v1705 = vunpack.c.l.b16 %v607
        %v1706 = vunpack.c.h.b16 %v607
        %v1707 = vunpack.c.l.b16 %v608
        %v1708 = vunpack.c.h.b16 %v608
        %v1709 = vunpack.c.l.b16 %v609
        %v1710 = vunpack.c.h.b16 %v609
        %v1711 = vunpack.c.l.b16 %v610
        %v1712 = vunpack.c.h.b16 %v610
        %v1713 = vunpack.c.l.b16 %v611
        %v1714 = vunpack.c.h.b16 %v611
        %v1715 = vunpack.c.l.b16 %v612
        %v1716 = vunpack.c.h.b16 %v612
        %v1717 = vunpack.c.l.b16 %v613
        %v1718 = vunpack.c.h.b16 %v613
        %v1719 = vunpack.c.l.b16 %v614
        %v1720 = vunpack.c.h.b16 %v614
        %v1721 = vunpack.c.l.b16 %v615
        %v1722 = vunpack.c.h.b16 %v615
        %v1723 = vunpack.c.l.b16 %v616
        %v1724 = vunpack.c.h.b16 %v616
        %v1725 = vunpack.c.l.b16 %v617
        %v1726 = vunpack.c.h.b16 %v617
        %v1727 = vunpack.c.l.b16 %v618
        %v1728 = vunpack.c.h.b16 %v618
        %v1729 = vunpack.c.l.b16 %v619
        %v1730 = vunpack.c.h.b16 %v619
        %v1731 = vunpack.c.l.b16 %v620
        %v1732 = vunpack.c.h.b16 %v620
        %v1733 = vunpack.c.l.b16 %v621
        %v1734 = vunpack.c.h.b16 %v621
        %v1735 = vunpack.c.l.b16 %v622
        %v1736 = vunpack.c.h.b16 %v622
        %v1737 = vunpack.c.l.b16 %v623
        %v1738 = vunpack.c.h.b16 %v623
        %v1739 = vunpack.c.l.b16 %v624
        %v1740 = vunpack.c.h.b16 %v624
        %v1741 = vunpack.c.l.b16 %v625
        %v1742 = vunpack.c.h.b16 %v625
        %v1743 = vunpack.c.l.b16 %v626
        %v1744 = vunpack.c.h.b16 %v626
        %v1745 = vunpack.c.l.b16 %v627
        %v1746 = vunpack.c.h.b16 %v627
        %v1747 = vunpack.c.l.b16 %v628
        %v1748 = vunpack.c.h.b16 %v628
        %v1749 = vunpack.c.l.b16 %v629
        %v1750 = vunpack.c.h.b16 %v629
        %v1751 = vunpack.c.l.b16 %v630
        %v1752 = vunpack.c.h.b16 %v630
        %v1753 = vunpack.c.l.b16 %v631
        %v1754 = vunpack.c.h.b16 %v631
        %v1755 = vunpack.c.l.b16 %v632
        %v1756 = vunpack.c.h.b16 %v632
        %v1757 = vunpack.c.l.b16 %v633
        %v1758 = vunpack.c.h.b16 %v633
        %v1759 = vunpack.c.l.b16 %v634
        %v1760 = vunpack.c.h.b16 %v634
        %v1761 = vunpack.c.l.b16 %v635
        %v1762 = vunpack.c.h.b16 %v635
        %v1763 = vunpack.c.l.b16 %v636
        %v1764 = vunpack.c.h.b16 %v636
        %v1765 = vunpack.c.l.b16 %v637
        %v1766 = vunpack.c.h.b16 %v637
        %v1767 = vunpack.c.l.b16 %v638
        %v1768 = vunpack.c.h.b16 %v638
        %v1769 = vunpack.c.l.b16 %v639
        %v1770 = vunpack.c.h.b16 %v639
        %v1771 = vunpack.c.l.b16 %v640
        %v1772 = vunpack.c.h.b16 %v640
        %v1773 = vunpack.c.l.b16 %v641
        %v1774 = vunpack.c.h.b16 %v641
        %v1775 = vunpack.c.l.b16 %v642
        %v1776 = vunpack.c.h.b16 %v642
        %v1777 = vunpack.c.l.b16 %v643
        %v1778 = vunpack.c.h.b16 %v643
        %v1779 = vunpack.c.l.b16 %v644
        %v1780 = vunpack.c.h.b16 %v644
        %v1781 = vunpack.c.l.b16 %v645
        %v1782 = vunpack.c.h.b16 %v645
        %v1783 = vunpack.c.l.b16 %v646
        %v1784 = vunpack.c.h.b16 %v646
        %v1785 = vunpack.c.l.b16 %v647
        %v1786 = vunpack.c.h.b16 %v647
        %v1787 = vunpack.c.l.b16 %v648
        %v1788 = vunpack.c.h.b16 %v648
        %v1789 = vunpack.c.l.b16 %v649
        %v1790 = vunpack.c.h.b16 %v649
        %v1791 = vunpack.c.l.b16 %v650
        %v1792 = vunpack.c.h.b16 %v650
        %v1793 = vunpack.c.l.b16 %v651
        %v1794 = vunpack.c.h.b16 %v651
        %v1795 = vunpack.c.l.b16 %v652
        %v1796 = vunpack.c.h.b16 %v652
        %v1797 = vunpack.c.l.b16 %v653
        %v1798 = vunpack.c.h.b16 %v653
        %v1799 = vunpack.c.l.b16 %v654
        %v1800 = vunpack.c.h.b16 %v654
        %v1801 = vunpack.c.l.b16 %v655
        %v1802 = vunpack.c.h.b16 %v655
        %v1803 = vunpack.c.l.b16 %v656
        %v1804 = vunpack.c.h.b16 %v656
        %v1805 = vunpack.c.l.b16 %v657
        %v1806 = vunpack.c.h.b16 %v657
        %v1807 = vunpack.c.l.b16 %v658
        %v1808 = vunpack.c.h.b16 %v658
        %v1809 = vunpack.c.l.b16 %v659
        %v1810 = vunpack.c.h.b16 %v659
        %v1811 = vunpack.c.l.b16 %v660
        %v1812 = vunpack.c.h.b16 %v660
        %v1813 = vunpack.c.l.b16 %v661
        %v1814 = vunpack.c.h.b16 %v661
        %v1815 = vunpack.c.l.b16 %v662
        %v1816 = vunpack.c.h.b16 %v662
        %v1817 = vunpack.c.l.b16 %v663
        %v1818 = vunpack.c.h.b16 %v663
        %v1819 = vunpack.c.l.b16 %v664
        %v1820 = vunpack.c.h.b16 %v664
        %v1821 = vunpack.c.l.b16 %v665
        %v1822 = vunpack.c.h.b16 %v665
        %v1823 = vunpack.c.l.b16 %v666
        %v1824 = vunpack.c.h.b16 %v666
        %v1825 = vunpack.c.l.b16 %v667
        %v1826 = vunpack.c.h.b16 %v667
        %v1827 = vunpack.c.l.b16 %v668
        %v1828 = vunpack.c.h.b16 %v668
        %v1829 = vunpack.c.l.b16 %v669
        %v1830 = vunpack.c.h.b16 %v669
        %v1831 = vunpack.c.l.b16 %v670
        %v1832 = vunpack.c.h.b16 %v670
        %v1833 = vunpack.c.l.b16 %v671
        %v1834 = vunpack.c.h.b16 %v671
        %v1835 = vunpack.c.l.b16 %v672
        %v1836 = vunpack.c.h.b16 %v672
        %v1837 = vunpack.c.l.b16 %v673
        %v1838 = vunpack.c.h.b16 %v673
        %v1839 = vunpack.c.l.b16 %v674
        %v1840 = vunpack.c.h.b16 %v674
        %v1841 = vunpack.c.l.b16 %v675
        %v1842 = vunpack.c.h.b16 %v675
        %v1843 = vunpack.c.l.b16 %v676
        %v1844 = vunpack.c.h.b16 %v676
        %v1845 = vunpack.c.l.b16 %v677
        %v1846 = vunpack.c.h.b16 %v677
        %v1847 = vunpack.c.l.b16 %v678
        %v1848 = vunpack.c.h.b16 %v678
        %v1849 = vunpack.c.l.b16 %v679
        %v1850 = vunpack.c.h.b16 %v679
        %v1851 = vunpack.c.l.b16 %v680
        %v1852 = vunpack.c.h.b16 %v680
        %v1853 = vunpack.c.l.b16 %v681
        %v1854 = vunpack.c.h.b16 %v681
        %v1855 = vunpack.c.l.b16 %v682
        %v1856 = vunpack.c.h.b16 %v682
        %v1857 = vunpack.c.l.b16 %v683
        %v1858 = vunpack.c.h.b16 %v683
        %v1859 = vunpack.c.l.b16 %v684
        %v1860 = vunpack.c.h.b16 %v684
        %v1861 = vunpack.c.l.b16 %v685
        %v1862 = vunpack.c.h.b16 %v685
        %v1863 = vunpack.c.l.b16 %v686
        %v1864 = vunpack.c.h.b16 %v686
        %v1865 = vunpack.c.l.b16 %v687
        %v1866 = vunpack.c.h.b16 %v687
        %v1867 = vunpack.c.l.b16 %v688
        %v1868 = vunpack.c.h.b16 %v688
        %v1869 = vunpack.c.l.b16 %v689
        %v1870 = vunpack.c.h.b16 %v689
        %v1871 = vunpack.c.l.b16 %v690
        %v1872 = vunpack.c.h.b16 %v690
        %v1873 = vunpack.c.l.b16 %v691
        %v1874 = vunpack.c.h.b16 %v691
        %v1875 = vunpack.c.l.b16 %v692
        %v1876 = vunpack.c.h.b16 %v692
        %v1877 = vunpack.c.l.b16 %v693
        %v1878 = vunpack.c.h.b16 %v693
        %v1879 = vunpack.c.l.b16 %v694
        %v1880 = vunpack.c.h.b16 %v694
        %v1881 = vunpack.c.l.b16 %v695
        %v1882 = vunpack.c.h.b16 %v695
        %v1883 = vunpack.c.l.b16 %v696
        %v1884 = vunpack.c.h.b16 %v696
        %v1885 = vunpack.c.l.b16 %v697
        %v1886 = vunpack.c.h.b16 %v697
        %v1887 = vunpack.c.l.b16 %v698
        %v1888 = vunpack.c.h.b16 %v698
        %v1889 = vunpack.c.l.b16 %v699
        %v1890 = vunpack.c.h.b16 %v699
        %v1891 = vunpack.c.l.b16 %v700
        %v1892 = vunpack.c.h.b16 %v700
        %v1893 = vunpack.c.l.b16 %v701
        %v1894 = vunpack.c.h.b16 %v701
        %v1895 = vunpack.c.l.b16 %v702
        %v1896 = vunpack.c.h.b16 %v702
        %v1897 = vunpack.c.l.b16 %v703
        %v1898 = vunpack.c.h.b16 %v703
        %v1899 = vunpack.c.l.b16 %v704
        %v1900 = vunpack.c.h.b16 %v704
        %v1901 = vunpack.c.l.b16 %v705
        %v1902 = vunpack.c.h.b16 %v705
        %v1903 = vunpack.c.l.b16 %v706
        %v1904 = vunpack.c.h.b16 %v706
        %v1905 = vunpack.c.l.b16 %v707
        %v1906 = vunpack.c.h.b16 %v707
        %v1907 = vunpack.c.l.b16 %v708
        %v1908 = vunpack.c.h.b16 %v708
        %v1909 = vunpack.c.l.b16 %v709
        %v1910 = vunpack.c.h.b16 %v709
        %v1911 = vunpack.c.l.b16 %v710
        %v1912 = vunpack.c.h.b16 %v710
        %v1913 = vunpack.c.l.b16 %v711
        %v1914 = vunpack.c.h.b16 %v711
        %v1915 = vunpack.c.l.b16 %v712
        %v1916 = vunpack.c.h.b16 %v712
        %v1917 = vunpack.c.l.b16 %v713
        %v1918 = vunpack.c.h.b16 %v713
        %v1919 = vunpack.c.l.b16 %v714
        %v1920 = vunpack.c.h.b16 %v714
        %v1921 = vunpack.c.l.b16 %v715
        %v1922 = vunpack.c.h.b16 %v715
        %v1923 = vunpack.c.l.b16 %v716
        %v1924 = vunpack.c.h.b16 %v716
        %v1925 = vunpack.c.l.b16 %v717
        %v1926 = vunpack.c.h.b16 %v717
        %v1927 = vunpack.c.l.b16 %v718
        %v1928 = vunpack.c.h.b16 %v718
        %v1929 = vunpack.c.l.b16 %v719
        %v1930 = vunpack.c.h.b16 %v719
        %v1931 = vunpack.c.l.b16 %v720
        %v1932 = vunpack.c.h.b16 %v720
        %v1933 = vunpack.c.l.b16 %v721
        %v1934 = vunpack.c.h.b16 %v721
        %v1935 = vunpack.c.l.b16 %v722
        %v1936 = vunpack.c.h.b16 %v722
        %v1937 = vunpack.c.l.b16 %v723
        %v1938 = vunpack.c.h.b16 %v723
        %v1939 = vunpack.c.l.b16 %v724
        %v1940 = vunpack.c.h.b16 %v724
        %v1941 = vunpack.c.l.b16 %v725
        %v1942 = vunpack.c.h.b16 %v725
        %v1943 = vunpack.c.l.b16 %v726
        %v1944 = vunpack.c.h.b16 %v726
        %v1945 = vunpack.c.l.b16 %v727
        %v1946 = vunpack.c.h.b16 %v727
        %v1947 = vunpack.c.l.b16 %v728
        %v1948 = vunpack.c.h.b16 %v728
        %v1949 = vunpack.c.l.b16 %v729
        %v1950 = vunpack.c.h.b16 %v729
        %v1951 = vunpack.c.l.b16 %v730
        %v1952 = vunpack.c.h.b16 %v730
        %v1953 = vunpack.c.l.b16 %v731
        %v1954 = vunpack.c.h.b16 %v731
        %v1955 = vunpack.c.l.b16 %v732
        %v1956 = vunpack.c.h.b16 %v732
        %v1957 = vunpack.c.l.b16 %v733
        %v1958 = vunpack.c.h.b16 %v733
        %v1959 = vunpack.c.l.b16 %v734
        %v1960 = vunpack.c.h.b16 %v734
        %v1961 = vunpack.c.l.b16 %v735
        %v1962 = vunpack.c.h.b16 %v735
        %v1963 = vunpack.c.l.b16 %v736
        %v1964 = vunpack.c.h.b16 %v736
        %v1965 = vunpack.c.l.b16 %v737
        %v1966 = vunpack.c.h.b16 %v737
        %v1967 = vunpack.c.l.b16 %v738
        %v1968 = vunpack.c.h.b16 %v738
        %v1969 = vunpack.c.l.b16 %v739
        %v1970 = vunpack.c.h.b16 %v739
        %v1971 = vunpack.c.l.b16 %v740
        %v1972 = vunpack.c.h.b16 %v740
        %v1973 = vunpack.c.l.b16 %v741
        %v1974 = vunpack.c.h.b16 %v741
        %v1975 = vunpack.c.l.b16 %v742
        %v1976 = vunpack.c.h.b16 %v742
        %v1977 = vunpack.c.l.b16 %v743
        %v1978 = vunpack.c.h.b16 %v743
        %v1979 = vunpack.c.l.b16 %v744
        %v1980 = vunpack.c.h.b16 %v744
        %v1981 = vunpack.c.l.b16 %v745
        %v1982 = vunpack.c.h.b16 %v745
        %v1983 = vunpack.c.l.b16 %v746
        %v1984 = vunpack.c.h.b16 %v746
        %v1985 = vunpack.c.l.b16 %v747
        %v1986 = vunpack.c.h.b16 %v747
        %v1987 = vunpack.c.l.b16 %v748
        %v1988 = vunpack.c.h.b16 %v748
        %v1989 = vunpack.c.l.b16 %v749
        %v1990 = vunpack.c.h.b16 %v749
        %v1991 = vunpack.c.l.b16 %v750
        %v1992 = vunpack.c.h.b16 %v750
        %v1993 = vunpack.c.l.b16 %v751
        %v1994 = vunpack.c.h.b16 %v751
        %v1995 = vunpack.c.l.b16 %v752
        %v1996 = vunpack.c.h.b16 %v752
        %v1997 = vunpack.c.l.b16 %v753
        %v1998 = vunpack.c.h.b16 %v753
        %v1999 = vunpack.c.l.b16 %v754
        %v2000 = vunpack.c.h.b16 %v754
        %v2001 = vunpack.c.l.b16 %v755
        %v2002 = vunpack.c.h.b16 %v755
        %v2003 = vunpack.c.l.b16 %v756
        %v2004 = vunpack.c.h.b16 %v756
        %v2005 = vunpack.c.l.b16 %v757
        %v2006 = vunpack.c.h.b16 %v757
        %v2007 = vunpack.c.l.b16 %v758
        %v2008 = vunpack.c.h.b16 %v758
        %v2009 = vunpack.c.l.b16 %v759
        %v2010 = vunpack.c.h.b16 %v759
        %v2011 = vunpack.c.l.b16 %v760
        %v2012 = vunpack.c.h.b16 %v760
        %v2013 = vunpack.c.l.b16 %v761
        %v2014 = vunpack.c.h.b16 %v761
        %v2015 = vunpack.c.l.b16 %v762
        %v2016 = vunpack.c.h.b16 %v762
        %v2017 = vunpack.c.l.b16 %v763
        %v2018 = vunpack.c.h.b16 %v763
        %v2019 = vunpack.c.l.b16 %v764
        %v2020 = vunpack.c.h.b16 %v764
        %v2021 = vunpack.c.l.b16 %v765
        %v2022 = vunpack.c.h.b16 %v765
        %v2023 = vunpack.c.l.b16 %v766
        %v2024 = vunpack.c.h.b16 %v766
        %v2025 = vunpack.c.l.b16 %v767
        %v2026 = vunpack.c.h.b16 %v767
        %v2027 = vunpack.c.l.b16 %v768
        %v2028 = vunpack.c.h.b16 %v768
        %v2029 = vunpack.c.l.b16 %v769
        %v2030 = vunpack.c.h.b16 %v769
        %v2031 = vunpack.c.l.b16 %v770
        %v2032 = vunpack.c.h.b16 %v770
        %v2033 = vunpack.c.l.b16 %v771
        %v2034 = vunpack.c.h.b16 %v771
        %v2035 = vunpack.c.l.b16 %v772
        %v2036 = vunpack.c.h.b16 %v772
        %v2037 = vunpack.c.l.b16 %v773
        %v2038 = vunpack.c.h.b16 %v773
        %v2039 = vunpack.c.l.b16 %v774
        %v2040 = vunpack.c.h.b16 %v774
        %v2041 = vunpack.c.l.b16 %v775
        %v2042 = vunpack.c.h.b16 %v775
        %v2043 = vunpack.c.l.b16 %v776
        %v2044 = vunpack.c.h.b16 %v776
        %v2045 = vunpack.c.l.b16 %v777
        %v2046 = vunpack.c.h.b16 %v777
        %v2047 = vunpack.c.l.b16 %v778
        %v2048 = vunpack.c.h.b16 %v778
        %v2049 = vunpack.c.l.b16 %v779
        %v2050 = vunpack.c.h.b16 %v779
        %v2051 = vunpack.c.l.b16 %v780
        %v2052 = vunpack.c.h.b16 %v780
        %v2053 = vunpack.c.l.b16 %v781
        %v2054 = vunpack.c.h.b16 %v781
        %v2055 = vunpack.c.l.b16 %v782
        %v2056 = vunpack.c.h.b16 %v782
        %v2057 = vunpack.c.l.b16 %v783
        %v2058 = vunpack.c.h.b16 %v783
        %v2059 = vunpack.c.l.b16 %v784
        %v2060 = vunpack.c.h.b16 %v784
        %v2061 = vunpack.c.l.b16 %v785
        %v2062 = vunpack.c.h.b16 %v785
        %v2063 = vunpack.c.l.b16 %v786
        %v2064 = vunpack.c.h.b16 %v786
        %v2065 = vunpack.c.l.b16 %v787
        %v2066 = vunpack.c.h.b16 %v787
        %v2067 = vunpack.c.l.b16 %v788
        %v2068 = vunpack.c.h.b16 %v788
        %v2069 = vunpack.c.l.b16 %v789
        %v2070 = vunpack.c.h.b16 %v789
        %v2071 = vunpack.c.l.b16 %v790
        %v2072 = vunpack.c.h.b16 %v790
        %v2073 = vunpack.c.l.b16 %v791
        %v2074 = vunpack.c.h.b16 %v791
        %v2075 = vunpack.c.l.b16 %v792
        %v2076 = vunpack.c.h.b16 %v792
        %v2077 = vunpack.c.l.b16 %v793
        %v2078 = vunpack.c.h.b16 %v793
        %v2079 = vunpack.c.l.b16 %v794
        %v2080 = vunpack.c.h.b16 %v794
        %v2081 = vunpack.c.l.b16 %v795
        %v2082 = vunpack.c.h.b16 %v795
        %v2083 = vunpack.c.l.b16 %v796
        %v2084 = vunpack.c.h.b16 %v796
        %v2085 = vunpack.c.l.b16 %v797
        %v2086 = vunpack.c.h.b16 %v797
        %v2087 = vunpack.c.l.b16 %v798
        %v2088 = vunpack.c.h.b16 %v798
        %v2089 = vunpack.c.l.b16 %v799
        %v2090 = vunpack.c.h.b16 %v799
        %v2091 = vunpack.c.l.b16 %v800
        %v2092 = vunpack.c.h.b16 %v800
        %v2093 = vunpack.c.l.b16 %v801
        %v2094 = vunpack.c.h.b16 %v801
        %v2095 = vunpack.c.l.b16 %v802
        %v2096 = vunpack.c.h.b16 %v802
        %v2097 = vunpack.c.l.b16 %v803
        %v2098 = vunpack.c.h.b16 %v803
        %v2099 = vunpack.c.l.b16 %v804
        %v2100 = vunpack.c.h.b16 %v804
        %v2101 = vunpack.c.l.b16 %v805
        %v2102 = vunpack.c.h.b16 %v805
        %v2103 = vunpack.c.l.b16 %v806
        %v2104 = vunpack.c.h.b16 %v806
        %v2105 = vunpack.c.l.b16 %v807
        %v2106 = vunpack.c.h.b16 %v807
        %v2107 = vunpack.c.l.b16 %v808
        %v2108 = vunpack.c.h.b16 %v808
        %v2109 = vunpack.c.l.b16 %v809
        %v2110 = vunpack.c.h.b16 %v809
        %v2111 = vunpack.c.l.b16 %v810
        %v2112 = vunpack.c.h.b16 %v810
        %v2113 = vunpack.c.l.b16 %v811
        %v2114 = vunpack.c.h.b16 %v811
        %v2115 = vunpack.c.l.b16 %v812
        %v2116 = vunpack.c.h.b16 %v812
        %v2117 = vunpack.c.l.b16 %v813
        %v2118 = vunpack.c.h.b16 %v813
        %v2119 = vunpack.c.l.b16 %v814
        %v2120 = vunpack.c.h.b16 %v814
        %v2121 = vunpack.c.l.b16 %v815
        %v2122 = vunpack.c.h.b16 %v815
        %v2123 = vunpack.c.l.b16 %v816
        %v2124 = vunpack.c.h.b16 %v816
        %v2125 = vunpack.c.l.b16 %v817
        %v2126 = vunpack.c.h.b16 %v817
        %v2127 = vunpack.c.l.b16 %v818
        %v2128 = vunpack.c.h.b16 %v818
        %v2129 = vunpack.c.l.b16 %v819
        %v2130 = vunpack.c.h.b16 %v819
        %v2131 = vunpack.c.l.b16 %v820
        %v2132 = vunpack.c.h.b16 %v820
        %v2133 = vunpack.c.l.b16 %v821
        %v2134 = vunpack.c.h.b16 %v821
        %v2135 = vunpack.c.l.b16 %v822
        %v2136 = vunpack.c.h.b16 %v822
        %v2137 = vunpack.c.l.b16 %v823
        %v2138 = vunpack.c.h.b16 %v823
        %v2139 = vunpack.c.l.b16 %v824
        %v2140 = vunpack.c.h.b16 %v824
        %v2141 = vunpack.c.l.b16 %v825
        %v2142 = vunpack.c.h.b16 %v825
        %v2143 = vunpack.c.l.b16 %v826
        %v2144 = vunpack.c.h.b16 %v826
        %v2145 = vunpack.c.l.b16 %v827
        %v2146 = vunpack.c.h.b16 %v827
        %v2147 = vunpack.c.l.b16 %v828
        %v2148 = vunpack.c.h.b16 %v828
        %v2149 = vunpack.c.l.b16 %v829
        %v2150 = vunpack.c.h.b16 %v829
        %v2151 = vunpack.c.l.b16 %v830
        %v2152 = vunpack.c.h.b16 %v830
        %v2153 = vunpack.c.l.b16 %v831
        %v2154 = vunpack.c.h.b16 %v831
        %v2155 = vunpack.c.l.b16 %v832
        %v2156 = vunpack.c.h.b16 %v832
        %v2157 = vunpack.c.l.b16 %v833
        %v2158 = vunpack.c.h.b16 %v833
        %v2159 = vunpack.c.l.b16 %v834
        %v2160 = vunpack.c.h.b16 %v834
        %v2161 = vunpack.c.l.b16 %v835
        %v2162 = vunpack.c.h.b16 %v835
        %v2163 = vunpack.c.l.b16 %v836
        %v2164 = vunpack.c.h.b16 %v836
        %v2165 = vunpack.c.l.b16 %v837
        %v2166 = vunpack.c.h.b16 %v837
        %v2167 = vunpack.c.l.b16 %v838
        %v2168 = vunpack.c.h.b16 %v838
        %v2169 = vunpack.c.l.b16 %v839
        %v2170 = vunpack.c.h.b16 %v839
        %v2171 = vunpack.c.l.b16 %v840
        %v2172 = vunpack.c.h.b16 %v840
        %v2173 = vunpack.c.l.b16 %v841
        %v2174 = vunpack.c.h.b16 %v841
        %v2175 = vunpack.c.l.b16 %v842
        %v2176 = vunpack.c.h.b16 %v842
        %v2177 = vunpack.c.l.b16 %v843
        %v2178 = vunpack.c.h.b16 %v843
        %v2179 = vunpack.c.l.b16 %v844
        %v2180 = vunpack.c.h.b16 %v844
        %v2181 = vunpack.c.l.b16 %v845
        %v2182 = vunpack.c.h.b16 %v845
        %v2183 = vunpack.c.l.b16 %v846
        %v2184 = vunpack.c.h.b16 %v846
        %v2185 = vunpack.c.l.b16 %v847
        %v2186 = vunpack.c.h.b16 %v847
        %v2187 = vunpack.c.l.b16 %v848
        %v2188 = vunpack.c.h.b16 %v848
        %v2189 = vunpack.c.l.b16 %v849
        %v2190 = vunpack.c.h.b16 %v849
        %v2191 = vunpack.c.l.b16 %v850
        %v2192 = vunpack.c.h.b16 %v850
        %v2193 = vunpack.c.l.b16 %v851
        %v2194 = vunpack.c.h.b16 %v851
        %v2195 = vunpack.c.l.b16 %v852
        %v2196 = vunpack.c.h.b16 %v852
        %v2197 = vunpack.c.l.b16 %v853
        %v2198 = vunpack.c.h.b16 %v853
        %v2199 = vunpack.c.l.b16 %v854
        %v2200 = vunpack.c.h.b16 %v854
        %v2201 = vunpack.c.l.b16 %v855
        %v2202 = vunpack.c.h.b16 %v855
        %v2203 = vunpack.c.l.b16 %v856
        %v2204 = vunpack.c.h.b16 %v856
        %v2205 = vunpack.c.l.b16 %v857
        %v2206 = vunpack.c.h.b16 %v857
        %v2207 = vunpack.c.l.b16 %v858
        %v2208 = vunpack.c.h.b16 %v858
        %v2209 = vunpack.c.l.b16 %v859
        %v2210 = vunpack.c.h.b16 %v859
        %v2211 = vunpack.c.l.b16 %v860
        %v2212 = vunpack.c.h.b16 %v860
        %v2213 = vunpack.c.l.b16 %v861
        %v2214 = vunpack.c.h.b16 %v861
        %v2215 = vunpack.c.l.b16 %v862
        %v2216 = vunpack.c.h.b16 %v862
        %v2217 = vunpack.c.l.b16 %v863
        %v2218 = vunpack.c.h.b16 %v863
        %v2219 = vunpack.c.l.b16 %v864
        %v2220 = vunpack.c.h.b16 %v864
        %v2221 = vunpack.c.l.b16 %v865
        %v2222 = vunpack.c.h.b16 %v865
        %v2223 = vunpack.c.l.b16 %v866
        %v2224 = vunpack.c.h.b16 %v866
        %v2225 = vunpack.c.l.b16 %v867
        %v2226 = vunpack.c.h.b16 %v867
        %v2227 = vunpack.c.l.b16 %v868
        %v2228 = vunpack.c.h.b16 %v868
        %v2229 = vpack.c.b16 %v1341, %v1333
        %v2230 = vpack.c.b16 %v1342, %v1334
        %v2231 = vpack.c.b16 %v1343, %v1335
        %v2232 = vpack.c.b16 %v1344, %v1336
        %v2233 = vpack.c.b16 %v1345, %v1337
        %v2234 = vpack.c.b16 %v1346, %v1338
        %v2235 = vpack.c.b16 %v1347, %v1339
        %v2236 = vpack.c.b16 %v1348, %v1340
        %v2237 = vpack.c.b16 %v1357, %v1349
        %v2238 = vpack.c.b16 %v1358, %v1350
        %v2239 = vpack.c.b16 %v1359, %v1351
        %v2240 = vpack.c.b16 %v1360, %v1352
        %v2241 = vpack.c.b16 %v1361, %v1353
        %v2242 = vpack.c.b16 %v1362, %v1354
        %v2243 = vpack.c.b16 %v1363, %v1355
        %v2244 = vpack.c.b16 %v1364, %v1356
        %v2245 = vpack.c.b16 %v1373, %v1365
        %v2246 = vpack.c.b16 %v1374, %v1366
        %v2247 = vpack.c.b16 %v1375, %v1367
        %v2248 = vpack.c.b16 %v1376, %v1368
        %v2249 = vpack.c.b16 %v1377, %v1369
        %v2250 = vpack.c.b16 %v1378, %v1370
        %v2251 = vpack.c.b16 %v1379, %v1371
        %v2252 = vpack.c.b16 %v1380, %v1372
        %v2253 = vpack.c.b16 %v1389, %v1381
        %v2254 = vpack.c.b16 %v1390, %v1382
        %v2255 = vpack.c.b16 %v1391, %v1383
        %v2256 = vpack.c.b16 %v1392, %v1384
        %v2257 = vpack.c.b16 %v1393, %v1385
        %v2258 = vpack.c.b16 %v1394, %v1386
        %v2259 = vpack.c.b16 %v1395, %v1387
        %v2260 = vpack.c.b16 %v1396, %v1388
        %v2261 = vpack.c.b16 %v1405, %v1397
        %v2262 = vpack.c.b16 %v1406, %v1398
        %v2263 = vpack.c.b16 %v1407, %v1399
        %v2264 = vpack.c.b16 %v1408, %v1400
        %v2265 = vpack.c.b16 %v1409, %v1401
        %v2266 = vpack.c.b16 %v1410, %v1402
        %v2267 = vpack.c.b16 %v1411, %v1403
        %v2268 = vpack.c.b16 %v1412, %v1404
        %v2269 = vpack.c.b16 %v1421, %v1413
        %v2270 = vpack.c.b16 %v1422, %v1414
        %v2271 = vpack.c.b16 %v1423, %v1415
        %v2272 = vpack.c.b16 %v1424, %v1416
        %v2273 = vpack.c.b16 %v1425, %v1417
        %v2274 = vpack.c.b16 %v1426, %v1418
        %v2275 = vpack.c.b16 %v1427, %v1419
        %v2276 = vpack.c.b16 %v1428, %v1420
        %v2277 = vpack.c.b16 %v1437, %v1429
        %v2278 = vpack.c.b16 %v1438, %v1430
        %v2279 = vpack.c.b16 %v1439, %v1431
        %v2280 = vpack.c.b16 %v1440, %v1432
        %v2281 = vpack.c.b16 %v1441, %v1433
        %v2282 = vpack.c.b16 %v1442, %v1434
        %v2283 = vpack.c.b16 %v1443, %v1435
        %v2284 = vpack.c.b16 %v1444, %v1436
        %v2285 = vpack.c.b16 %v1453, %v1445
        %v2286 = vpack.c.b16 %v1454, %v1446
        %v2287 = vpack.c.b16 %v1455, %v1447
        %v2288 = vpack.c.b16 %v1456, %v1448
        %v2289 = vpack.c.b16 %v1457, %v1449
        %v2290 = vpack.c.b16 %v1458, %v1450
        %v2291 = vpack.c.b16 %v1459, %v1451
        %v2292 = vpack.c.b16 %v1460, %v1452
        %v2293 = vpack.c.b16 %v1469, %v1461
        %v2294 = vpack.c.b16 %v1470, %v1462
        %v2295 = vpack.c.b16 %v1471, %v1463
        %v2296 = vpack.c.b16 %v1472, %v1464
        %v2297 = vpack.c.b16 %v1473, %v1465
        %v2298 = vpack.c.b16 %v1474, %v1466
        %v2299 = vpack.c.b16 %v1475, %v1467
        %v2300 = vpack.c.b16 %v1476, %v1468
        %v2301 = vpack.c.b16 %v1485, %v1477
        %v2302 = vpack.c.b16 %v1486, %v1478
        %v2303 = vpack.c.b16 %v1487, %v1479
        %v2304 = vpack.c.b16 %v1488, %v1480
        %v2305 = vpack.c.b16 %v1489, %v1481
        %v2306 = vpack.c.b16 %v1490, %v1482
        %v2307 = vpack.c.b16 %v1491, %v1483
        %v2308 = vpack.c.b16 %v1492, %v1484
        %v2309 = vpack.c.b16 %v1501, %v1493
        %v2310 = vpack.c.b16 %v1502, %v1494
        %v2311 = vpack.c.b16 %v1503, %v1495
        %v2312 = vpack.c.b16 %v1504, %v1496
        %v2313 = vpack.c.b16 %v1505, %v1497
        %v2314 = vpack.c.b16 %v1506, %v1498
        %v2315 = vpack.c.b16 %v1507, %v1499
        %v2316 = vpack.c.b16 %v1508, %v1500
        %v2317 = vpack.c.b16 %v1517, %v1509
        %v2318 = vpack.c.b16 %v1518, %v1510
        %v2319 = vpack.c.b16 %v1519, %v1511
        %v2320 = vpack.c.b16 %v1520, %v1512
        %v2321 = vpack.c.b16 %v1521, %v1513
        %v2322 = vpack.c.b16 %v1522, %v1514
        %v2323 = vpack.c.b16 %v1523, %v1515
        %v2324 = vpack.c.b16 %v1524, %v1516
        %v2325 = vpack.c.b16 %v1533, %v1525
        %v2326 = vpack.c.b16 %v1534, %v1526
        %v2327 = vpack.c.b16 %v1535, %v1527
        %v2328 = vpack.c.b16 %v1536, %v1528
        %v2329 = vpack.c.b16 %v1537, %v1529
        %v2330 = vpack.c.b16 %v1538, %v1530
        %v2331 = vpack.c.b16 %v1539, %v1531
        %v2332 = vpack.c.b16 %v1540, %v1532
        %v2333 = vpack.c.b16 %v1549, %v1541
        %v2334 = vpack.c.b16 %v1550, %v1542
        %v2335 = vpack.c.b16 %v1551, %v1543
        %v2336 = vpack.c.b16 %v1552, %v1544
        %v2337 = vpack.c.b16 %v1553, %v1545
        %v2338 = vpack.c.b16 %v1554, %v1546
        %v2339 = vpack.c.b16 %v1555, %v1547
        %v2340 = vpack.c.b16 %v1556, %v1548
        %v2341 = vpack.c.b16 %v1565, %v1557
        %v2342 = vpack.c.b16 %v1566, %v1558
        %v2343 = vpack.c.b16 %v1567, %v1559
        %v2344 = vpack.c.b16 %v1568, %v1560
        %v2345 = vpack.c.b16 %v1569, %v1561
        %v2346 = vpack.c.b16 %v1570, %v1562
        %v2347 = vpack.c.b16 %v1571, %v1563
        %v2348 = vpack.c.b16 %v1572, %v1564
        %v2349 = vpack.c.b16 %v1581, %v1573
        %v2350 = vpack.c.b16 %v1582, %v1574
        %v2351 = vpack.c.b16 %v1583, %v1575
        %v2352 = vpack.c.b16 %v1584, %v1576
        %v2353 = vpack.c.b16 %v1585, %v1577
        %v2354 = vpack.c.b16 %v1586, %v1578
        %v2355 = vpack.c.b16 %v1587, %v1579
        %v2356 = vpack.c.b16 %v1588, %v1580
        %v2357 = vpack.c.b16 %v1597, %v1589
        %v2358 = vpack.c.b16 %v1598, %v1590
        %v2359 = vpack.c.b16 %v1599, %v1591
        %v2360 = vpack.c.b16 %v1600, %v1592
        %v2361 = vpack.c.b16 %v1601, %v1593
        %v2362 = vpack.c.b16 %v1602, %v1594
        %v2363 = vpack.c.b16 %v1603, %v1595
        %v2364 = vpack.c.b16 %v1604, %v1596
        %v2365 = vpack.c.b16 %v1613, %v1605
        %v2366 = vpack.c.b16 %v1614, %v1606
        %v2367 = vpack.c.b16 %v1615, %v1607
        %v2368 = vpack.c.b16 %v1616, %v1608
        %v2369 = vpack.c.b16 %v1617, %v1609
        %v2370 = vpack.c.b16 %v1618, %v1610
        %v2371 = vpack.c.b16 %v1619, %v1611
        %v2372 = vpack.c.b16 %v1620, %v1612
        %v2373 = vpack.c.b16 %v1629, %v1621
        %v2374 = vpack.c.b16 %v1630, %v1622
        %v2375 = vpack.c.b16 %v1631, %v1623
        %v2376 = vpack.c.b16 %v1632, %v1624
        %v2377 = vpack.c.b16 %v1633, %v1625
        %v2378 = vpack.c.b16 %v1634, %v1626
        %v2379 = vpack.c.b16 %v1635, %v1627
        %v2380 = vpack.c.b16 %v1636, %v1628
        %v2381 = vpack.c.b16 %v1645, %v1637
        %v2382 = vpack.c.b16 %v1646, %v1638
        %v2383 = vpack.c.b16 %v1647, %v1639
        %v2384 = vpack.c.b16 %v1648, %v1640
        %v2385 = vpack.c.b16 %v1649, %v1641
        %v2386 = vpack.c.b16 %v1650, %v1642
        %v2387 = vpack.c.b16 %v1651, %v1643
        %v2388 = vpack.c.b16 %v1652, %v1644
        %v2389 = vpack.c.b16 %v1661, %v1653
        %v2390 = vpack.c.b16 %v1662, %v1654
        %v2391 = vpack.c.b16 %v1663, %v1655
        %v2392 = vpack.c.b16 %v1664, %v1656
        %v2393 = vpack.c.b16 %v1665, %v1657
        %v2394 = vpack.c.b16 %v1666, %v1658
        %v2395 = vpack.c.b16 %v1667, %v1659
        %v2396 = vpack.c.b16 %v1668, %v1660
        %v2397 = vpack.c.b16 %v1677, %v1669
        %v2398 = vpack.c.b16 %v1678, %v1670
        %v2399 = vpack.c.b16 %v1679, %v1671
        %v2400 = vpack.c.b16 %v1680, %v1672
        %v2401 = vpack.c.b16 %v1681, %v1673
        %v2402 = vpack.c.b16 %v1682, %v1674
        %v2403 = vpack.c.b16 %v1683, %v1675
        %v2404 = vpack.c.b16 %v1684, %v1676
        %v2405 = vpack.c.b16 %v1693, %v1685
        %v2406 = vpack.c.b16 %v1694, %v1686
        %v2407 = vpack.c.b16 %v1695, %v1687
        %v2408 = vpack.c.b16 %v1696, %v1688
        %v2409 = vpack.c.b16 %v1697, %v1689
        %v2410 = vpack.c.b16 %v1698, %v1690
        %v2411 = vpack.c.b16 %v1699, %v1691
        %v2412 = vpack.c.b16 %v1700, %v1692
        %v2413 = vpack.c.b16 %v1709, %v1701
        %v2414 = vpack.c.b16 %v1710, %v1702
        %v2415 = vpack.c.b16 %v1711, %v1703
        %v2416 = vpack.c.b16 %v1712, %v1704
        %v2417 = vpack.c.b16 %v1713, %v1705
        %v2418 = vpack.c.b16 %v1714, %v1706
        %v2419 = vpack.c.b16 %v1715, %v1707
        %v2420 = vpack.c.b16 %v1716, %v1708
        %v2421 = vpack.c.b16 %v1725, %v1717
        %v2422 = vpack.c.b16 %v1726, %v1718
        %v2423 = vpack.c.b16 %v1727, %v1719
        %v2424 = vpack.c.b16 %v1728, %v1720
        %v2425 = vpack.c.b16 %v1729, %v1721
        %v2426 = vpack.c.b16 %v1730, %v1722
        %v2427 = vpack.c.b16 %v1731, %v1723
        %v2428 = vpack.c.b16 %v1732, %v1724
        %v2429 = vpack.c.b16 %v1741, %v1733
        %v2430 = vpack.c.b16 %v1742, %v1734
        %v2431 = vpack.c.b16 %v1743, %v1735
        %v2432 = vpack.c.b16 %v1744, %v1736
        %v2433 = vpack.c.b16 %v1745, %v1737
        %v2434 = vpack.c.b16 %v1746, %v1738
        %v2435 = vpack.c.b16 %v1747, %v1739
        %v2436 = vpack.c.b16 %v1748, %v1740
        %v2437 = vpack.c.b16 %v1757, %v1749
        %v2438 = vpack.c.b16 %v1758, %v1750
        %v2439 = vpack.c.b16 %v1759, %v1751
        %v2440 = vpack.c.b16 %v1760, %v1752
        %v2441 = vpack.c.b16 %v1761, %v1753
        %v2442 = vpack.c.b16 %v1762, %v1754
        %v2443 = vpack.c.b16 %v1763, %v1755
        %v2444 = vpack.c.b16 %v1764, %v1756
        %v2445 = vpack.c.b16 %v1773, %v1765
        %v2446 = vpack.c.b16 %v1774, %v1766
        %v2447 = vpack.c.b16 %v1775, %v1767
        %v2448 = vpack.c.b16 %v1776, %v1768
        %v2449 = vpack.c.b16 %v1777, %v1769
        %v2450 = vpack.c.b16 %v1778, %v1770
        %v2451 = vpack.c.b16 %v1779, %v1771
        %v2452 = vpack.c.b16 %v1780, %v1772
        %v2453 = vpack.c.b16 %v1789, %v1781
        %v2454 = vpack.c.b16 %v1790, %v1782
        %v2455 = vpack.c.b16 %v1791, %v1783
        %v2456 = vpack.c.b16 %v1792, %v1784
        %v2457 = vpack.c.b16 %v1793, %v1785
        %v2458 = vpack.c.b16 %v1794, %v1786
        %v2459 = vpack.c.b16 %v1795, %v1787
        %v2460 = vpack.c.b16 %v1796, %v1788
        %v2461 = vpack.c.b16 %v1805, %v1797
        %v2462 = vpack.c.b16 %v1806, %v1798
        %v2463 = vpack.c.b16 %v1807, %v1799
        %v2464 = vpack.c.b16 %v1808, %v1800
        %v2465 = vpack.c.b16 %v1809, %v1801
        %v2466 = vpack.c.b16 %v1810, %v1802
        %v2467 = vpack.c.b16 %v1811, %v1803
        %v2468 = vpack.c.b16 %v1812, %v1804
        %v2469 = vpack.c.b16 %v1821, %v1813
        %v2470 = vpack.c.b16 %v1822, %v1814
        %v2471 = vpack.c.b16 %v1823, %v1815
        %v2472 = vpack.c.b16 %v1824, %v1816
        %v2473 = vpack.c.b16 %v1825, %v1817
        %v2474 = vpack.c.b16 %v1826, %v1818
        %v2475 = vpack.c.b16 %v1827, %v1819
        %v2476 = vpack.c.b16 %v1828, %v1820
        %v2477 = vpack.c.b16 %v1837, %v1829
        %v2478 = vpack.c.b16 %v1838, %v1830
        %v2479 = vpack.c.b16 %v1839, %v1831
        %v2480 = vpack.c.b16 %v1840, %v1832
        %v2481 = vpack.c.b16 %v1841, %v1833
        %v2482 = vpack.c.b16 %v1842, %v1834
        %v2483 = vpack.c.b16 %v1843, %v1835
        %v2484 = vpack.c.b16 %v1844, %v1836
        %v2485 = vpack.c.b16 %v1853, %v1845
        %v2486 = vpack.c.b16 %v1854, %v1846
        %v2487 = vpack.c.b16 %v1855, %v1847
        %v2488 = vpack.c.b16 %v1856, %v1848
        %v2489 = vpack.c.b16 %v1857, %v1849
        %v2490 = vpack.c.b16 %v1858, %v1850
        %v2491 = vpack.c.b16 %v1859, %v1851
        %v2492 = vpack.c.b16 %v1860, %v1852
        %v2493 = vpack.c.b16 %v1869, %v1861
        %v2494 = vpack.c.b16 %v1870, %v1862
        %v2495 = vpack.c.b16 %v1871, %v1863
        %v2496 = vpack.c.b16 %v1872, %v1864
        %v2497 = vpack.c.b16 %v1873, %v1865
        %v2498 = vpack.c.b16 %v1874, %v1866
        %v2499 = vpack.c.b16 %v1875, %v1867
        %v2500 = vpack.c.b16 %v1876, %v1868
        %v2501 = vpack.c.b16 %v1885, %v1877
        %v2502 = vpack.c.b16 %v1886, %v1878
        %v2503 = vpack.c.b16 %v1887, %v1879
        %v2504 = vpack.c.b16 %v1888, %v1880
        %v2505 = vpack.c.b16 %v1889, %v1881
        %v2506 = vpack.c.b16 %v1890, %v1882
        %v2507 = vpack.c.b16 %v1891, %v1883
        %v2508 = vpack.c.b16 %v1892, %v1884
        %v2509 = vpack.c.b16 %v1901, %v1893
        %v2510 = vpack.c.b16 %v1902, %v1894
        %v2511 = vpack.c.b16 %v1903, %v1895
        %v2512 = vpack.c.b16 %v1904, %v1896
        %v2513 = vpack.c.b16 %v1905, %v1897
        %v2514 = vpack.c.b16 %v1906, %v1898
        %v2515 = vpack.c.b16 %v1907, %v1899
        %v2516 = vpack.c.b16 %v1908, %v1900
        %v2517 = vpack.c.b16 %v1917, %v1909
        %v2518 = vpack.c.b16 %v1918, %v1910
        %v2519 = vpack.c.b16 %v1919, %v1911
        %v2520 = vpack.c.b16 %v1920, %v1912
        %v2521 = vpack.c.b16 %v1921, %v1913
        %v2522 = vpack.c.b16 %v1922, %v1914
        %v2523 = vpack.c.b16 %v1923, %v1915
        %v2524 = vpack.c.b16 %v1924, %v1916
        %v2525 = vpack.c.b16 %v1933, %v1925
        %v2526 = vpack.c.b16 %v1934, %v1926
        %v2527 = vpack.c.b16 %v1935, %v1927
        %v2528 = vpack.c.b16 %v1936, %v1928
        %v2529 = vpack.c.b16 %v1937, %v1929
        %v2530 = vpack.c.b16 %v1938, %v1930
        %v2531 = vpack.c.b16 %v1939, %v1931
        %v2532 = vpack.c.b16 %v1940, %v1932
        %v2533 = vpack.c.b16 %v1949, %v1941
        %v2534 = vpack.c.b16 %v1950, %v1942
        %v2535 = vpack.c.b16 %v1951, %v1943
        %v2536 = vpack.c.b16 %v1952, %v1944
        %v2537 = vpack.c.b16 %v1953, %v1945
        %v2538 = vpack.c.b16 %v1954, %v1946
        %v2539 = vpack.c.b16 %v1955, %v1947
        %v2540 = vpack.c.b16 %v1956, %v1948
        %v2541 = vpack.c.b16 %v1965, %v1957
        %v2542 = vpack.c.b16 %v1966, %v1958
        %v2543 = vpack.c.b16 %v1967, %v1959
        %v2544 = vpack.c.b16 %v1968, %v1960
        %v2545 = vpack.c.b16 %v1969, %v1961
        %v2546 = vpack.c.b16 %v1970, %v1962
        %v2547 = vpack.c.b16 %v1971, %v1963
        %v2548 = vpack.c.b16 %v1972, %v1964
        %v2549 = vpack.c.b16 %v1981, %v1973
        %v2550 = vpack.c.b16 %v1982, %v1974
        %v2551 = vpack.c.b16 %v1983, %v1975
        %v2552 = vpack.c.b16 %v1984, %v1976
        %v2553 = vpack.c.b16 %v1985, %v1977
        %v2554 = vpack.c.b16 %v1986, %v1978
        %v2555 = vpack.c.b16 %v1987, %v1979
        %v2556 = vpack.c.b16 %v1988, %v1980
        %v2557 = vpack.c.b16 %v1997, %v1989
        %v2558 = vpack.c.b16 %v1998, %v1990
        %v2559 = vpack.c.b16 %v1999, %v1991
        %v2560 = vpack.c.b16 %v2000, %v1992
        %v2561 = vpack.c.b16 %v2001, %v1993
        %v2562 = vpack.c.b16 %v2002, %v1994
        %v2563 = vpack.c.b16 %v2003, %v1995
        %v2564 = vpack.c.b16 %v2004, %v1996
        %v2565 = vpack.c.b16 %v2013, %v2005
        %v2566 = vpack.c.b16 %v2014, %v2006
        %v2567 = vpack.c.b16 %v2015, %v2007
        %v2568 = vpack.c.b16 %v2016, %v2008
        %v2569 = vpack.c.b16 %v2017, %v2009
        %v2570 = vpack.c.b16 %v2018, %v2010
        %v2571 = vpack.c.b16 %v2019, %v2011
        %v2572 = vpack.c.b16 %v2020, %v2012
        %v2573 = vpack.c.b16 %v2029, %v2021
        %v2574 = vpack.c.b16 %v2030, %v2022
        %v2575 = vpack.c.b16 %v2031, %v2023
        %v2576 = vpack.c.b16 %v2032, %v2024
        %v2577 = vpack.c.b16 %v2033, %v2025
        %v2578 = vpack.c.b16 %v2034, %v2026
        %v2579 = vpack.c.b16 %v2035, %v2027
        %v2580 = vpack.c.b16 %v2036, %v2028
        %v2581 = vpack.c.b16 %v2045, %v2037
        %v2582 = vpack.c.b16 %v2046, %v2038
        %v2583 = vpack.c.b16 %v2047, %v2039
        %v2584 = vpack.c.b16 %v2048, %v2040
        %v2585 = vpack.c.b16 %v2049, %v2041
        %v2586 = vpack.c.b16 %v2050, %v2042
        %v2587 = vpack.c.b16 %v2051, %v2043
        %v2588 = vpack.c.b16 %v2052, %v2044
        %v2589 = vpack.c.b16 %v2061, %v2053
        %v2590 = vpack.c.b16 %v2062, %v2054
        %v2591 = vpack.c.b16 %v2063, %v2055
        %v2592 = vpack.c.b16 %v2064, %v2056
        %v2593 = vpack.c.b16 %v2065, %v2057
        %v2594 = vpack.c.b16 %v2066, %v2058
        %v2595 = vpack.c.b16 %v2067, %v2059
        %v2596 = vpack.c.b16 %v2068, %v2060
        %v2597 = vpack.c.b16 %v2077, %v2069
        %v2598 = vpack.c.b16 %v2078, %v2070
        %v2599 = vpack.c.b16 %v2079, %v2071
        %v2600 = vpack.c.b16 %v2080, %v2072
        %v2601 = vpack.c.b16 %v2081, %v2073
        %v2602 = vpack.c.b16 %v2082, %v2074
        %v2603 = vpack.c.b16 %v2083, %v2075
        %v2604 = vpack.c.b16 %v2084, %v2076
        %v2605 = vpack.c.b16 %v2093, %v2085
        %v2606 = vpack.c.b16 %v2094, %v2086
        %v2607 = vpack.c.b16 %v2095, %v2087
        %v2608 = vpack.c.b16 %v2096, %v2088
        %v2609 = vpack.c.b16 %v2097, %v2089
        %v2610 = vpack.c.b16 %v2098, %v2090
        %v2611 = vpack.c.b16 %v2099, %v2091
        %v2612 = vpack.c.b16 %v2100, %v2092
        %v2613 = vpack.c.b16 %v2109, %v2101
        %v2614 = vpack.c.b16 %v2110, %v2102
        %v2615 = vpack.c.b16 %v2111, %v2103
        %v2616 = vpack.c.b16 %v2112, %v2104
        %v2617 = vpack.c.b16 %v2113, %v2105
        %v2618 = vpack.c.b16 %v2114, %v2106
        %v2619 = vpack.c.b16 %v2115, %v2107
        %v2620 = vpack.c.b16 %v2116, %v2108
        %v2621 = vpack.c.b16 %v2125, %v2117
        %v2622 = vpack.c.b16 %v2126, %v2118
        %v2623 = vpack.c.b16 %v2127, %v2119
        %v2624 = vpack.c.b16 %v2128, %v2120
        %v2625 = vpack.c.b16 %v2129, %v2121
        %v2626 = vpack.c.b16 %v2130, %v2122
        %v2627 = vpack.c.b16 %v2131, %v2123
        %v2628 = vpack.c.b16 %v2132, %v2124
        %v2629 = vpack.c.b16 %v2141, %v2133
        %v2630 = vpack.c.b16 %v2142, %v2134
        %v2631 = vpack.c.b16 %v2143, %v2135
        %v2632 = vpack.c.b16 %v2144, %v2136
        %v2633 = vpack.c.b16 %v2145, %v2137
        %v2634 = vpack.c.b16 %v2146, %v2138
        %v2635 = vpack.c.b16 %v2147, %v2139
        %v2636 = vpack.c.b16 %v2148, %v2140
        %v2637 = vpack.c.b16 %v2157, %v2149
        %v2638 = vpack.c.b16 %v2158, %v2150
        %v2639 = vpack.c.b16 %v2159, %v2151
        %v2640 = vpack.c.b16 %v2160, %v2152
        %v2641 = vpack.c.b16 %v2161, %v2153
        %v2642 = vpack.c.b16 %v2162, %v2154
        %v2643 = vpack.c.b16 %v2163, %v2155
        %v2644 = vpack.c.b16 %v2164, %v2156
        %v2645 = vpack.c.b16 %v2173, %v2165
        %v2646 = vpack.c.b16 %v2174, %v2166
        %v2647 = vpack.c.b16 %v2175, %v2167
        %v2648 = vpack.c.b16 %v2176, %v2168
        %v2649 = vpack.c.b16 %v2177, %v2169
        %v2650 = vpack.c.b16 %v2178, %v2170
        %v2651 = vpack.c.b16 %v2179, %v2171
        %v2652 = vpack.c.b16 %v2180, %v2172
        %v2653 = vpack.c.b16 %v2189, %v2181
        %v2654 = vpack.c.b16 %v2190, %v2182
        %v2655 = vpack.c.b16 %v2191, %v2183
        %v2656 = vpack.c.b16 %v2192, %v2184
        %v2657 = vpack.c.b16 %v2193, %v2185
        %v2658 = vpack.c.b16 %v2194, %v2186
        %v2659 = vpack.c.b16 %v2195, %v2187
        %v2660 = vpack.c.b16 %v2196, %v2188
        %v2661 = vpack.c.b16 %v2205, %v2197
        %v2662 = vpack.c.b16 %v2206, %v2198
        %v2663 = vpack.c.b16 %v2207, %v2199
        %v2664 = vpack.c.b16 %v2208, %v2200
        %v2665 = vpack.c.b16 %v2209, %v2201
        %v2666 = vpack.c.b16 %v2210, %v2202
        %v2667 = vpack.c.b16 %v2211, %v2203
        %v2668 = vpack.c.b16 %v2212, %v2204
        %v2669 = vpack.c.b16 %v2221, %v2213
        %v2670 = vpack.c.b16 %v2222, %v2214
        %v2671 = vpack.c.b16 %v2223, %v2215
        %v2672 = vpack.c.b16 %v2224, %v2216
        %v2673 = vpack.c.b16 %v2225, %v2217
        %v2674 = vpack.c.b16 %v2226, %v2218
        %v2675 = vpack.c.b16 %v2227, %v2219
        %v2676 = vpack.c.b16 %v2228, %v2220
        %3125 = vmatpush.bf16.msra.mxu0 %v2285
        %3126 = vmatpush.bf16.msra.mxu0 %v2277
        %3127 = vmatpush.bf16.msra.mxu0 %v2269
        %3128 = vmatpush.bf16.msra.mxu0 %v2261
        %3129 = vmatpush.bf16.msra.mxu0 %v2253
        %3130 = vmatpush.bf16.msra.mxu0 %v2245
        %3131 = vmatpush.bf16.msra.mxu0 %v2237
        %3132 = vmatpush.bf16.msra.mxu0 %v2229
        %3133 = vmatmul.bf16.gmra.mxu0 %v871
        %v3134 = vpop.f32.mrf.mxu0
        %v3135 = vadd.f32 0.0, %v3134
        %v3136 = vpop.f32.mrf.mxu0
        %3137 = vdwg.mxu0
        %3138 = vmatpush.bf16.msra.mxu0 %v2349
        %3139 = vmatpush.bf16.msra.mxu0 %v2341
        %3140 = vmatpush.bf16.msra.mxu0 %v2333
        %3141 = vmatpush.bf16.msra.mxu0 %v2325
        %3142 = vmatpush.bf16.msra.mxu0 %v2317
        %3143 = vmatpush.bf16.msra.mxu0 %v2309
        %3144 = vmatpush.bf16.msra.mxu0 %v2301
        %3145 = vmatpush.bf16.msra.mxu0 %v2293
        %3146 = vmatmul.bf16.gmra.mxu0 %v872
        %v3147 = vpop.f32.mrf.mxu0
        %v3148 = vadd.f32 %v3135, %v3147
        %v3149 = vpop.f32.mrf.mxu0
        %3150 = vdwg.mxu0
        %3151 = vmatpush.bf16.msra.mxu0 %v2413
        %3152 = vmatpush.bf16.msra.mxu0 %v2405
        %3153 = vmatpush.bf16.msra.mxu0 %v2397
        %3154 = vmatpush.bf16.msra.mxu0 %v2389
        %3155 = vmatpush.bf16.msra.mxu0 %v2381
        %3156 = vmatpush.bf16.msra.mxu0 %v2373
        %3157 = vmatpush.bf16.msra.mxu0 %v2365
        %3158 = vmatpush.bf16.msra.mxu0 %v2357
        %3159 = vmatmul.bf16.gmra.mxu0 %v873
        %v3160 = vpop.f32.mrf.mxu0
        %v3161 = vadd.f32 %v3148, %v3160
        %v3162 = vpop.f32.mrf.mxu0
        %3163 = vdwg.mxu0
        %3164 = vmatpush.bf16.msra.mxu0 %v2477
        %3165 = vmatpush.bf16.msra.mxu0 %v2469
        %3166 = vmatpush.bf16.msra.mxu0 %v2461
        %3167 = vmatpush.bf16.msra.mxu0 %v2453
        %3168 = vmatpush.bf16.msra.mxu0 %v2445
        %3169 = vmatpush.bf16.msra.mxu0 %v2437
        %3170 = vmatpush.bf16.msra.mxu0 %v2429
        %3171 = vmatpush.bf16.msra.mxu0 %v2421
        %3172 = vmatmul.bf16.gmra.mxu0 %v874
        %v3173 = vpop.f32.mrf.mxu0
        %v3174 = vadd.f32 %v3161, %v3173
        %v3175 = vpop.f32.mrf.mxu0
        %3176 = vdwg.mxu0
        %3177 = vmatpush.bf16.msra.mxu0 %v2541
        %3178 = vmatpush.bf16.msra.mxu0 %v2533
        %3179 = vmatpush.bf16.msra.mxu0 %v2525
        %3180 = vmatpush.bf16.msra.mxu0 %v2517
        %3181 = vmatpush.bf16.msra.mxu0 %v2509
        %3182 = vmatpush.bf16.msra.mxu0 %v2501
        %3183 = vmatpush.bf16.msra.mxu0 %v2493
        %3184 = vmatpush.bf16.msra.mxu0 %v2485
        %3185 = vmatmul.bf16.gmra.mxu0 %v875
        %v3186 = vpop.f32.mrf.mxu0
        %v3187 = vadd.f32 %v3174, %v3186
        %v3188 = vpop.f32.mrf.mxu0
        %3189 = vdwg.mxu0
        %3190 = vmatpush.bf16.msra.mxu0 %v2605
        %3191 = vmatpush.bf16.msra.mxu0 %v2597
        %3192 = vmatpush.bf16.msra.mxu0 %v2589
        %3193 = vmatpush.bf16.msra.mxu0 %v2581
        %3194 = vmatpush.bf16.msra.mxu0 %v2573
        %3195 = vmatpush.bf16.msra.mxu0 %v2565
        %3196 = vmatpush.bf16.msra.mxu0 %v2557
        %3197 = vmatpush.bf16.msra.mxu0 %v2549
        %3198 = vmatmul.bf16.gmra.mxu0 %v876
        %v3199 = vpop.f32.mrf.mxu0
        %v3200 = vadd.f32 %v3187, %v3199
        %v3201 = vpop.f32.mrf.mxu0
        %3202 = vdwg.mxu0
        %3203 = vmatpush.bf16.msra.mxu0 %v2669
        %3204 = vmatpush.bf16.msra.mxu0 %v2661
        %3205 = vmatpush.bf16.msra.mxu0 %v2653
        %3206 = vmatpush.bf16.msra.mxu0 %v2645
        %3207 = vmatpush.bf16.msra.mxu0 %v2637
        %3208 = vmatpush.bf16.msra.mxu0 %v2629
        %3209 = vmatpush.bf16.msra.mxu0 %v2621
        %3210 = vmatpush.bf16.msra.mxu0 %v2613
        %3211 = vmatmul.bf16.gmra.mxu0 %v877
        %v3212 = vpop.f32.mrf.mxu0
        %v3213 = vadd.f32 %v3200, %v3212
        %v3214 = vpop.f32.mrf.mxu0
        %3215 = vdwg.mxu0
        %3216 = vmatpush.bf16.msra.mxu0 %v2286
        %3217 = vmatpush.bf16.msra.mxu0 %v2278
        %3218 = vmatpush.bf16.msra.mxu0 %v2270
        %3219 = vmatpush.bf16.msra.mxu0 %v2262
        %3220 = vmatpush.bf16.msra.mxu0 %v2254
        %3221 = vmatpush.bf16.msra.mxu0 %v2246
        %3222 = vmatpush.bf16.msra.mxu0 %v2238
        %3223 = vmatpush.bf16.msra.mxu0 %v2230
        %3224 = vmatmul.bf16.gmra.mxu0 %v871
        %v3225 = vpop.f32.mrf.mxu0
        %v3226 = vadd.f32 0.0, %v3225
        %v3227 = vpop.f32.mrf.mxu0
        %3228 = vdwg.mxu0
        %3229 = vmatpush.bf16.msra.mxu0 %v2350
        %3230 = vmatpush.bf16.msra.mxu0 %v2342
        %3231 = vmatpush.bf16.msra.mxu0 %v2334
        %3232 = vmatpush.bf16.msra.mxu0 %v2326
        %3233 = vmatpush.bf16.msra.mxu0 %v2318
        %3234 = vmatpush.bf16.msra.mxu0 %v2310
        %3235 = vmatpush.bf16.msra.mxu0 %v2302
        %3236 = vmatpush.bf16.msra.mxu0 %v2294
        %3237 = vmatmul.bf16.gmra.mxu0 %v872
        %v3238 = vpop.f32.mrf.mxu0
        %v3239 = vadd.f32 %v3226, %v3238
        %v3240 = vpop.f32.mrf.mxu0
        %3241 = vdwg.mxu0
        %3242 = vmatpush.bf16.msra.mxu0 %v2414
        %3243 = vmatpush.bf16.msra.mxu0 %v2406
        %3244 = vmatpush.bf16.msra.mxu0 %v2398
        %3245 = vmatpush.bf16.msra.mxu0 %v2390
        %3246 = vmatpush.bf16.msra.mxu0 %v2382
        %3247 = vmatpush.bf16.msra.mxu0 %v2374
        %3248 = vmatpush.bf16.msra.mxu0 %v2366
        %3249 = vmatpush.bf16.msra.mxu0 %v2358
        %3250 = vmatmul.bf16.gmra.mxu0 %v873
        %v3251 = vpop.f32.mrf.mxu0
        %v3252 = vadd.f32 %v3239, %v3251
        %v3253 = vpop.f32.mrf.mxu0
        %3254 = vdwg.mxu0
        %3255 = vmatpush.bf16.msra.mxu0 %v2478
        %3256 = vmatpush.bf16.msra.mxu0 %v2470
        %3257 = vmatpush.bf16.msra.mxu0 %v2462
        %3258 = vmatpush.bf16.msra.mxu0 %v2454
        %3259 = vmatpush.bf16.msra.mxu0 %v2446
        %3260 = vmatpush.bf16.msra.mxu0 %v2438
        %3261 = vmatpush.bf16.msra.mxu0 %v2430
        %3262 = vmatpush.bf16.msra.mxu0 %v2422
        %3263 = vmatmul.bf16.gmra.mxu0 %v874
        %v3264 = vpop.f32.mrf.mxu0
        %v3265 = vadd.f32 %v3252, %v3264
        %v3266 = vpop.f32.mrf.mxu0
        %3267 = vdwg.mxu0
        %3268 = vmatpush.bf16.msra.mxu0 %v2542
        %3269 = vmatpush.bf16.msra.mxu0 %v2534
        %3270 = vmatpush.bf16.msra.mxu0 %v2526
        %3271 = vmatpush.bf16.msra.mxu0 %v2518
        %3272 = vmatpush.bf16.msra.mxu0 %v2510
        %3273 = vmatpush.bf16.msra.mxu0 %v2502
        %3274 = vmatpush.bf16.msra.mxu0 %v2494
        %3275 = vmatpush.bf16.msra.mxu0 %v2486
        %3276 = vmatmul.bf16.gmra.mxu0 %v875
        %v3277 = vpop.f32.mrf.mxu0
        %v3278 = vadd.f32 %v3265, %v3277
        %v3279 = vpop.f32.mrf.mxu0
        %3280 = vdwg.mxu0
        %3281 = vmatpush.bf16.msra.mxu0 %v2606
        %3282 = vmatpush.bf16.msra.mxu0 %v2598
        %3283 = vmatpush.bf16.msra.mxu0 %v2590
        %3284 = vmatpush.bf16.msra.mxu0 %v2582
        %3285 = vmatpush.bf16.msra.mxu0 %v2574
        %3286 = vmatpush.bf16.msra.mxu0 %v2566
        %3287 = vmatpush.bf16.msra.mxu0 %v2558
        %3288 = vmatpush.bf16.msra.mxu0 %v2550
        %3289 = vmatmul.bf16.gmra.mxu0 %v876
        %v3290 = vpop.f32.mrf.mxu0
        %v3291 = vadd.f32 %v3278, %v3290
        %v3292 = vpop.f32.mrf.mxu0
        %3293 = vdwg.mxu0
        %3294 = vmatpush.bf16.msra.mxu0 %v2670
        %3295 = vmatpush.bf16.msra.mxu0 %v2662
        %3296 = vmatpush.bf16.msra.mxu0 %v2654
        %3297 = vmatpush.bf16.msra.mxu0 %v2646
        %3298 = vmatpush.bf16.msra.mxu0 %v2638
        %3299 = vmatpush.bf16.msra.mxu0 %v2630
        %3300 = vmatpush.bf16.msra.mxu0 %v2622
        %3301 = vmatpush.bf16.msra.mxu0 %v2614
        %3302 = vmatmul.bf16.gmra.mxu0 %v877
        %v3303 = vpop.f32.mrf.mxu0
        %v3304 = vadd.f32 %v3291, %v3303
        %v3305 = vpop.f32.mrf.mxu0
        %3306 = vdwg.mxu0
        %3307 = vmatpush.bf16.msra.mxu0 %v2287
        %3308 = vmatpush.bf16.msra.mxu0 %v2279
        %3309 = vmatpush.bf16.msra.mxu0 %v2271
        %3310 = vmatpush.bf16.msra.mxu0 %v2263
        %3311 = vmatpush.bf16.msra.mxu0 %v2255
        %3312 = vmatpush.bf16.msra.mxu0 %v2247
        %3313 = vmatpush.bf16.msra.mxu0 %v2239
        %3314 = vmatpush.bf16.msra.mxu0 %v2231
        %3315 = vmatmul.bf16.gmra.mxu0 %v871
        %v3316 = vpop.f32.mrf.mxu0
        %v3317 = vadd.f32 0.0, %v3316
        %v3318 = vpop.f32.mrf.mxu0
        %3319 = vdwg.mxu0
        %3320 = vmatpush.bf16.msra.mxu0 %v2351
        %3321 = vmatpush.bf16.msra.mxu0 %v2343
        %3322 = vmatpush.bf16.msra.mxu0 %v2335
        %3323 = vmatpush.bf16.msra.mxu0 %v2327
        %3324 = vmatpush.bf16.msra.mxu0 %v2319
        %3325 = vmatpush.bf16.msra.mxu0 %v2311
        %3326 = vmatpush.bf16.msra.mxu0 %v2303
        %3327 = vmatpush.bf16.msra.mxu0 %v2295
        %3328 = vmatmul.bf16.gmra.mxu0 %v872
        %v3329 = vpop.f32.mrf.mxu0
        %v3330 = vadd.f32 %v3317, %v3329
        %v3331 = vpop.f32.mrf.mxu0
        %3332 = vdwg.mxu0
        %3333 = vmatpush.bf16.msra.mxu0 %v2415
        %3334 = vmatpush.bf16.msra.mxu0 %v2407
        %3335 = vmatpush.bf16.msra.mxu0 %v2399
        %3336 = vmatpush.bf16.msra.mxu0 %v2391
        %3337 = vmatpush.bf16.msra.mxu0 %v2383
        %3338 = vmatpush.bf16.msra.mxu0 %v2375
        %3339 = vmatpush.bf16.msra.mxu0 %v2367
        %3340 = vmatpush.bf16.msra.mxu0 %v2359
        %3341 = vmatmul.bf16.gmra.mxu0 %v873
        %v3342 = vpop.f32.mrf.mxu0
        %v3343 = vadd.f32 %v3330, %v3342
        %v3344 = vpop.f32.mrf.mxu0
        %3345 = vdwg.mxu0
        %3346 = vmatpush.bf16.msra.mxu0 %v2479
        %3347 = vmatpush.bf16.msra.mxu0 %v2471
        %3348 = vmatpush.bf16.msra.mxu0 %v2463
        %3349 = vmatpush.bf16.msra.mxu0 %v2455
        %3350 = vmatpush.bf16.msra.mxu0 %v2447
        %3351 = vmatpush.bf16.msra.mxu0 %v2439
        %3352 = vmatpush.bf16.msra.mxu0 %v2431
        %3353 = vmatpush.bf16.msra.mxu0 %v2423
        %3354 = vmatmul.bf16.gmra.mxu0 %v874
        %v3355 = vpop.f32.mrf.mxu0
        %v3356 = vadd.f32 %v3343, %v3355
        %v3357 = vpop.f32.mrf.mxu0
        %3358 = vdwg.mxu0
        %3359 = vmatpush.bf16.msra.mxu0 %v2543
        %3360 = vmatpush.bf16.msra.mxu0 %v2535
        %3361 = vmatpush.bf16.msra.mxu0 %v2527
        %3362 = vmatpush.bf16.msra.mxu0 %v2519
        %3363 = vmatpush.bf16.msra.mxu0 %v2511
        %3364 = vmatpush.bf16.msra.mxu0 %v2503
        %3365 = vmatpush.bf16.msra.mxu0 %v2495
        %3366 = vmatpush.bf16.msra.mxu0 %v2487
        %3367 = vmatmul.bf16.gmra.mxu0 %v875
        %v3368 = vpop.f32.mrf.mxu0
        %v3369 = vadd.f32 %v3356, %v3368
        %v3370 = vpop.f32.mrf.mxu0
        %3371 = vdwg.mxu0
        %3372 = vmatpush.bf16.msra.mxu0 %v2607
        %3373 = vmatpush.bf16.msra.mxu0 %v2599
        %3374 = vmatpush.bf16.msra.mxu0 %v2591
        %3375 = vmatpush.bf16.msra.mxu0 %v2583
        %3376 = vmatpush.bf16.msra.mxu0 %v2575
        %3377 = vmatpush.bf16.msra.mxu0 %v2567
        %3378 = vmatpush.bf16.msra.mxu0 %v2559
        %3379 = vmatpush.bf16.msra.mxu0 %v2551
        %3380 = vmatmul.bf16.gmra.mxu0 %v876
        %v3381 = vpop.f32.mrf.mxu0
        %v3382 = vadd.f32 %v3369, %v3381
        %v3383 = vpop.f32.mrf.mxu0
        %3384 = vdwg.mxu0
        %3385 = vmatpush.bf16.msra.mxu0 %v2671
        %3386 = vmatpush.bf16.msra.mxu0 %v2663
        %3387 = vmatpush.bf16.msra.mxu0 %v2655
        %3388 = vmatpush.bf16.msra.mxu0 %v2647
        %3389 = vmatpush.bf16.msra.mxu0 %v2639
        %3390 = vmatpush.bf16.msra.mxu0 %v2631
        %3391 = vmatpush.bf16.msra.mxu0 %v2623
        %3392 = vmatpush.bf16.msra.mxu0 %v2615
        %3393 = vmatmul.bf16.gmra.mxu0 %v877
        %v3394 = vpop.f32.mrf.mxu0
        %v3395 = vadd.f32 %v3382, %v3394
        %v3396 = vpop.f32.mrf.mxu0
        %3397 = vdwg.mxu0
        %3398 = vmatpush.bf16.msra.mxu0 %v2288
        %3399 = vmatpush.bf16.msra.mxu0 %v2280
        %3400 = vmatpush.bf16.msra.mxu0 %v2272
        %3401 = vmatpush.bf16.msra.mxu0 %v2264
        %3402 = vmatpush.bf16.msra.mxu0 %v2256
        %3403 = vmatpush.bf16.msra.mxu0 %v2248
        %3404 = vmatpush.bf16.msra.mxu0 %v2240
        %3405 = vmatpush.bf16.msra.mxu0 %v2232
        %3406 = vmatmul.bf16.gmra.mxu0 %v871
        %v3407 = vpop.f32.mrf.mxu0
        %v3408 = vadd.f32 0.0, %v3407
        %v3409 = vpop.f32.mrf.mxu0
        %3410 = vdwg.mxu0
        %3411 = vmatpush.bf16.msra.mxu0 %v2352
        %3412 = vmatpush.bf16.msra.mxu0 %v2344
        %3413 = vmatpush.bf16.msra.mxu0 %v2336
        %3414 = vmatpush.bf16.msra.mxu0 %v2328
        %3415 = vmatpush.bf16.msra.mxu0 %v2320
        %3416 = vmatpush.bf16.msra.mxu0 %v2312
        %3417 = vmatpush.bf16.msra.mxu0 %v2304
        %3418 = vmatpush.bf16.msra.mxu0 %v2296
        %3419 = vmatmul.bf16.gmra.mxu0 %v872
        %v3420 = vpop.f32.mrf.mxu0
        %v3421 = vadd.f32 %v3408, %v3420
        %v3422 = vpop.f32.mrf.mxu0
        %3423 = vdwg.mxu0
        %3424 = vmatpush.bf16.msra.mxu0 %v2416
        %3425 = vmatpush.bf16.msra.mxu0 %v2408
        %3426 = vmatpush.bf16.msra.mxu0 %v2400
        %3427 = vmatpush.bf16.msra.mxu0 %v2392
        %3428 = vmatpush.bf16.msra.mxu0 %v2384
        %3429 = vmatpush.bf16.msra.mxu0 %v2376
        %3430 = vmatpush.bf16.msra.mxu0 %v2368
        %3431 = vmatpush.bf16.msra.mxu0 %v2360
        %3432 = vmatmul.bf16.gmra.mxu0 %v873
        %v3433 = vpop.f32.mrf.mxu0
        %v3434 = vadd.f32 %v3421, %v3433
        %v3435 = vpop.f32.mrf.mxu0
        %3436 = vdwg.mxu0
        %3437 = vmatpush.bf16.msra.mxu0 %v2480
        %3438 = vmatpush.bf16.msra.mxu0 %v2472
        %3439 = vmatpush.bf16.msra.mxu0 %v2464
        %3440 = vmatpush.bf16.msra.mxu0 %v2456
        %3441 = vmatpush.bf16.msra.mxu0 %v2448
        %3442 = vmatpush.bf16.msra.mxu0 %v2440
        %3443 = vmatpush.bf16.msra.mxu0 %v2432
        %3444 = vmatpush.bf16.msra.mxu0 %v2424
        %3445 = vmatmul.bf16.gmra.mxu0 %v874
        %v3446 = vpop.f32.mrf.mxu0
        %v3447 = vadd.f32 %v3434, %v3446
        %v3448 = vpop.f32.mrf.mxu0
        %3449 = vdwg.mxu0
        %3450 = vmatpush.bf16.msra.mxu0 %v2544
        %3451 = vmatpush.bf16.msra.mxu0 %v2536
        %3452 = vmatpush.bf16.msra.mxu0 %v2528
        %3453 = vmatpush.bf16.msra.mxu0 %v2520
        %3454 = vmatpush.bf16.msra.mxu0 %v2512
        %3455 = vmatpush.bf16.msra.mxu0 %v2504
        %3456 = vmatpush.bf16.msra.mxu0 %v2496
        %3457 = vmatpush.bf16.msra.mxu0 %v2488
        %3458 = vmatmul.bf16.gmra.mxu0 %v875
        %v3459 = vpop.f32.mrf.mxu0
        %v3460 = vadd.f32 %v3447, %v3459
        %v3461 = vpop.f32.mrf.mxu0
        %3462 = vdwg.mxu0
        %3463 = vmatpush.bf16.msra.mxu0 %v2608
        %3464 = vmatpush.bf16.msra.mxu0 %v2600
        %3465 = vmatpush.bf16.msra.mxu0 %v2592
        %3466 = vmatpush.bf16.msra.mxu0 %v2584
        %3467 = vmatpush.bf16.msra.mxu0 %v2576
        %3468 = vmatpush.bf16.msra.mxu0 %v2568
        %3469 = vmatpush.bf16.msra.mxu0 %v2560
        %3470 = vmatpush.bf16.msra.mxu0 %v2552
        %3471 = vmatmul.bf16.gmra.mxu0 %v876
        %v3472 = vpop.f32.mrf.mxu0
        %v3473 = vadd.f32 %v3460, %v3472
        %v3474 = vpop.f32.mrf.mxu0
        %3475 = vdwg.mxu0
        %3476 = vmatpush.bf16.msra.mxu0 %v2672
        %3477 = vmatpush.bf16.msra.mxu0 %v2664
        %3478 = vmatpush.bf16.msra.mxu0 %v2656
        %3479 = vmatpush.bf16.msra.mxu0 %v2648
        %3480 = vmatpush.bf16.msra.mxu0 %v2640
        %3481 = vmatpush.bf16.msra.mxu0 %v2632
        %3482 = vmatpush.bf16.msra.mxu0 %v2624
        %3483 = vmatpush.bf16.msra.mxu0 %v2616
        %3484 = vmatmul.bf16.gmra.mxu0 %v877
        %v3485 = vpop.f32.mrf.mxu0
        %v3486 = vadd.f32 %v3473, %v3485
        %v3487 = vpop.f32.mrf.mxu0
        %3488 = vdwg.mxu0
        %3489 = vmatpush.bf16.msra.mxu0 %v2289
        %3490 = vmatpush.bf16.msra.mxu0 %v2281
        %3491 = vmatpush.bf16.msra.mxu0 %v2273
        %3492 = vmatpush.bf16.msra.mxu0 %v2265
        %3493 = vmatpush.bf16.msra.mxu0 %v2257
        %3494 = vmatpush.bf16.msra.mxu0 %v2249
        %3495 = vmatpush.bf16.msra.mxu0 %v2241
        %3496 = vmatpush.bf16.msra.mxu0 %v2233
        %3497 = vmatmul.bf16.gmra.mxu0 %v871
        %v3498 = vpop.f32.mrf.mxu0
        %v3499 = vadd.f32 0.0, %v3498
        %v3500 = vpop.f32.mrf.mxu0
        %3501 = vdwg.mxu0
        %3502 = vmatpush.bf16.msra.mxu0 %v2353
        %3503 = vmatpush.bf16.msra.mxu0 %v2345
        %3504 = vmatpush.bf16.msra.mxu0 %v2337
        %3505 = vmatpush.bf16.msra.mxu0 %v2329
        %3506 = vmatpush.bf16.msra.mxu0 %v2321
        %3507 = vmatpush.bf16.msra.mxu0 %v2313
        %3508 = vmatpush.bf16.msra.mxu0 %v2305
        %3509 = vmatpush.bf16.msra.mxu0 %v2297
        %3510 = vmatmul.bf16.gmra.mxu0 %v872
        %v3511 = vpop.f32.mrf.mxu0
        %v3512 = vadd.f32 %v3499, %v3511
        %v3513 = vpop.f32.mrf.mxu0
        %3514 = vdwg.mxu0
        %3515 = vmatpush.bf16.msra.mxu0 %v2417
        %3516 = vmatpush.bf16.msra.mxu0 %v2409
        %3517 = vmatpush.bf16.msra.mxu0 %v2401
        %3518 = vmatpush.bf16.msra.mxu0 %v2393
        %3519 = vmatpush.bf16.msra.mxu0 %v2385
        %3520 = vmatpush.bf16.msra.mxu0 %v2377
        %3521 = vmatpush.bf16.msra.mxu0 %v2369
        %3522 = vmatpush.bf16.msra.mxu0 %v2361
        %3523 = vmatmul.bf16.gmra.mxu0 %v873
        %v3524 = vpop.f32.mrf.mxu0
        %v3525 = vadd.f32 %v3512, %v3524
        %v3526 = vpop.f32.mrf.mxu0
        %3527 = vdwg.mxu0
        %3528 = vmatpush.bf16.msra.mxu0 %v2481
        %3529 = vmatpush.bf16.msra.mxu0 %v2473
        %3530 = vmatpush.bf16.msra.mxu0 %v2465
        %3531 = vmatpush.bf16.msra.mxu0 %v2457
        %3532 = vmatpush.bf16.msra.mxu0 %v2449
        %3533 = vmatpush.bf16.msra.mxu0 %v2441
        %3534 = vmatpush.bf16.msra.mxu0 %v2433
        %3535 = vmatpush.bf16.msra.mxu0 %v2425
        %3536 = vmatmul.bf16.gmra.mxu0 %v874
        %v3537 = vpop.f32.mrf.mxu0
        %v3538 = vadd.f32 %v3525, %v3537
        %v3539 = vpop.f32.mrf.mxu0
        %3540 = vdwg.mxu0
        %3541 = vmatpush.bf16.msra.mxu0 %v2545
        %3542 = vmatpush.bf16.msra.mxu0 %v2537
        %3543 = vmatpush.bf16.msra.mxu0 %v2529
        %3544 = vmatpush.bf16.msra.mxu0 %v2521
        %3545 = vmatpush.bf16.msra.mxu0 %v2513
        %3546 = vmatpush.bf16.msra.mxu0 %v2505
        %3547 = vmatpush.bf16.msra.mxu0 %v2497
        %3548 = vmatpush.bf16.msra.mxu0 %v2489
        %3549 = vmatmul.bf16.gmra.mxu0 %v875
        %v3550 = vpop.f32.mrf.mxu0
        %v3551 = vadd.f32 %v3538, %v3550
        %v3552 = vpop.f32.mrf.mxu0
        %3553 = vdwg.mxu0
        %3554 = vmatpush.bf16.msra.mxu0 %v2609
        %3555 = vmatpush.bf16.msra.mxu0 %v2601
        %3556 = vmatpush.bf16.msra.mxu0 %v2593
        %3557 = vmatpush.bf16.msra.mxu0 %v2585
        %3558 = vmatpush.bf16.msra.mxu0 %v2577
        %3559 = vmatpush.bf16.msra.mxu0 %v2569
        %3560 = vmatpush.bf16.msra.mxu0 %v2561
        %3561 = vmatpush.bf16.msra.mxu0 %v2553
        %3562 = vmatmul.bf16.gmra.mxu0 %v876
        %v3563 = vpop.f32.mrf.mxu0
        %v3564 = vadd.f32 %v3551, %v3563
        %v3565 = vpop.f32.mrf.mxu0
        %3566 = vdwg.mxu0
        %3567 = vmatpush.bf16.msra.mxu0 %v2673
        %3568 = vmatpush.bf16.msra.mxu0 %v2665
        %3569 = vmatpush.bf16.msra.mxu0 %v2657
        %3570 = vmatpush.bf16.msra.mxu0 %v2649
        %3571 = vmatpush.bf16.msra.mxu0 %v2641
        %3572 = vmatpush.bf16.msra.mxu0 %v2633
        %3573 = vmatpush.bf16.msra.mxu0 %v2625
        %3574 = vmatpush.bf16.msra.mxu0 %v2617
        %3575 = vmatmul.bf16.gmra.mxu0 %v877
        %v3576 = vpop.f32.mrf.mxu0
        %v3577 = vadd.f32 %v3564, %v3576
        %v3578 = vpop.f32.mrf.mxu0
        %3579 = vdwg.mxu0
        %3580 = vmatpush.bf16.msra.mxu0 %v2290
        %3581 = vmatpush.bf16.msra.mxu0 %v2282
        %3582 = vmatpush.bf16.msra.mxu0 %v2274
        %3583 = vmatpush.bf16.msra.mxu0 %v2266
        %3584 = vmatpush.bf16.msra.mxu0 %v2258
        %3585 = vmatpush.bf16.msra.mxu0 %v2250
        %3586 = vmatpush.bf16.msra.mxu0 %v2242
        %3587 = vmatpush.bf16.msra.mxu0 %v2234
        %3588 = vmatmul.bf16.gmra.mxu0 %v871
        %v3589 = vpop.f32.mrf.mxu0
        %v3590 = vadd.f32 0.0, %v3589
        %v3591 = vpop.f32.mrf.mxu0
        %3592 = vdwg.mxu0
        %3593 = vmatpush.bf16.msra.mxu0 %v2354
        %3594 = vmatpush.bf16.msra.mxu0 %v2346
        %3595 = vmatpush.bf16.msra.mxu0 %v2338
        %3596 = vmatpush.bf16.msra.mxu0 %v2330
        %3597 = vmatpush.bf16.msra.mxu0 %v2322
        %3598 = vmatpush.bf16.msra.mxu0 %v2314
        %3599 = vmatpush.bf16.msra.mxu0 %v2306
        %3600 = vmatpush.bf16.msra.mxu0 %v2298
        %3601 = vmatmul.bf16.gmra.mxu0 %v872
        %v3602 = vpop.f32.mrf.mxu0
        %v3603 = vadd.f32 %v3590, %v3602
        %v3604 = vpop.f32.mrf.mxu0
        %3605 = vdwg.mxu0
        %3606 = vmatpush.bf16.msra.mxu0 %v2418
        %3607 = vmatpush.bf16.msra.mxu0 %v2410
        %3608 = vmatpush.bf16.msra.mxu0 %v2402
        %3609 = vmatpush.bf16.msra.mxu0 %v2394
        %3610 = vmatpush.bf16.msra.mxu0 %v2386
        %3611 = vmatpush.bf16.msra.mxu0 %v2378
        %3612 = vmatpush.bf16.msra.mxu0 %v2370
        %3613 = vmatpush.bf16.msra.mxu0 %v2362
        %3614 = vmatmul.bf16.gmra.mxu0 %v873
        %v3615 = vpop.f32.mrf.mxu0
        %v3616 = vadd.f32 %v3603, %v3615
        %v3617 = vpop.f32.mrf.mxu0
        %3618 = vdwg.mxu0
        %3619 = vmatpush.bf16.msra.mxu0 %v2482
        %3620 = vmatpush.bf16.msra.mxu0 %v2474
        %3621 = vmatpush.bf16.msra.mxu0 %v2466
        %3622 = vmatpush.bf16.msra.mxu0 %v2458
        %3623 = vmatpush.bf16.msra.mxu0 %v2450
        %3624 = vmatpush.bf16.msra.mxu0 %v2442
        %3625 = vmatpush.bf16.msra.mxu0 %v2434
        %3626 = vmatpush.bf16.msra.mxu0 %v2426
        %3627 = vmatmul.bf16.gmra.mxu0 %v874
        %v3628 = vpop.f32.mrf.mxu0
        %v3629 = vadd.f32 %v3616, %v3628
        %v3630 = vpop.f32.mrf.mxu0
        %3631 = vdwg.mxu0
        %3632 = vmatpush.bf16.msra.mxu0 %v2546
        %3633 = vmatpush.bf16.msra.mxu0 %v2538
        %3634 = vmatpush.bf16.msra.mxu0 %v2530
        %3635 = vmatpush.bf16.msra.mxu0 %v2522
        %3636 = vmatpush.bf16.msra.mxu0 %v2514
        %3637 = vmatpush.bf16.msra.mxu0 %v2506
        %3638 = vmatpush.bf16.msra.mxu0 %v2498
        %3639 = vmatpush.bf16.msra.mxu0 %v2490
        %3640 = vmatmul.bf16.gmra.mxu0 %v875
        %v3641 = vpop.f32.mrf.mxu0
        %v3642 = vadd.f32 %v3629, %v3641
        %v3643 = vpop.f32.mrf.mxu0
        %3644 = vdwg.mxu0
        %3645 = vmatpush.bf16.msra.mxu0 %v2610
        %3646 = vmatpush.bf16.msra.mxu0 %v2602
        %3647 = vmatpush.bf16.msra.mxu0 %v2594
        %3648 = vmatpush.bf16.msra.mxu0 %v2586
        %3649 = vmatpush.bf16.msra.mxu0 %v2578
        %3650 = vmatpush.bf16.msra.mxu0 %v2570
        %3651 = vmatpush.bf16.msra.mxu0 %v2562
        %3652 = vmatpush.bf16.msra.mxu0 %v2554
        %3653 = vmatmul.bf16.gmra.mxu0 %v876
        %v3654 = vpop.f32.mrf.mxu0
        %v3655 = vadd.f32 %v3642, %v3654
        %v3656 = vpop.f32.mrf.mxu0
        %3657 = vdwg.mxu0
        %3658 = vmatpush.bf16.msra.mxu0 %v2674
        %3659 = vmatpush.bf16.msra.mxu0 %v2666
        %3660 = vmatpush.bf16.msra.mxu0 %v2658
        %3661 = vmatpush.bf16.msra.mxu0 %v2650
        %3662 = vmatpush.bf16.msra.mxu0 %v2642
        %3663 = vmatpush.bf16.msra.mxu0 %v2634
        %3664 = vmatpush.bf16.msra.mxu0 %v2626
        %3665 = vmatpush.bf16.msra.mxu0 %v2618
        %3666 = vmatmul.bf16.gmra.mxu0 %v877
        %v3667 = vpop.f32.mrf.mxu0
        %v3668 = vadd.f32 %v3655, %v3667
        %v3669 = vpop.f32.mrf.mxu0
        %3670 = vdwg.mxu0
        %3671 = vmatpush.bf16.msra.mxu0 %v2291
        %3672 = vmatpush.bf16.msra.mxu0 %v2283
        %3673 = vmatpush.bf16.msra.mxu0 %v2275
        %3674 = vmatpush.bf16.msra.mxu0 %v2267
        %3675 = vmatpush.bf16.msra.mxu0 %v2259
        %3676 = vmatpush.bf16.msra.mxu0 %v2251
        %3677 = vmatpush.bf16.msra.mxu0 %v2243
        %3678 = vmatpush.bf16.msra.mxu0 %v2235
        %3679 = vmatmul.bf16.gmra.mxu0 %v871
        %v3680 = vpop.f32.mrf.mxu0
        %v3681 = vadd.f32 0.0, %v3680
        %v3682 = vpop.f32.mrf.mxu0
        %3683 = vdwg.mxu0
        %3684 = vmatpush.bf16.msra.mxu0 %v2355
        %3685 = vmatpush.bf16.msra.mxu0 %v2347
        %3686 = vmatpush.bf16.msra.mxu0 %v2339
        %3687 = vmatpush.bf16.msra.mxu0 %v2331
        %3688 = vmatpush.bf16.msra.mxu0 %v2323
        %3689 = vmatpush.bf16.msra.mxu0 %v2315
        %3690 = vmatpush.bf16.msra.mxu0 %v2307
        %3691 = vmatpush.bf16.msra.mxu0 %v2299
        %3692 = vmatmul.bf16.gmra.mxu0 %v872
        %v3693 = vpop.f32.mrf.mxu0
        %v3694 = vadd.f32 %v3681, %v3693
        %v3695 = vpop.f32.mrf.mxu0
        %3696 = vdwg.mxu0
        %3697 = vmatpush.bf16.msra.mxu0 %v2419
        %3698 = vmatpush.bf16.msra.mxu0 %v2411
        %3699 = vmatpush.bf16.msra.mxu0 %v2403
        %3700 = vmatpush.bf16.msra.mxu0 %v2395
        %3701 = vmatpush.bf16.msra.mxu0 %v2387
        %3702 = vmatpush.bf16.msra.mxu0 %v2379
        %3703 = vmatpush.bf16.msra.mxu0 %v2371
        %3704 = vmatpush.bf16.msra.mxu0 %v2363
        %3705 = vmatmul.bf16.gmra.mxu0 %v873
        %v3706 = vpop.f32.mrf.mxu0
        %v3707 = vadd.f32 %v3694, %v3706
        %v3708 = vpop.f32.mrf.mxu0
        %3709 = vdwg.mxu0
        %3710 = vmatpush.bf16.msra.mxu0 %v2483
        %3711 = vmatpush.bf16.msra.mxu0 %v2475
        %3712 = vmatpush.bf16.msra.mxu0 %v2467
        %3713 = vmatpush.bf16.msra.mxu0 %v2459
        %3714 = vmatpush.bf16.msra.mxu0 %v2451
        %3715 = vmatpush.bf16.msra.mxu0 %v2443
        %3716 = vmatpush.bf16.msra.mxu0 %v2435
        %3717 = vmatpush.bf16.msra.mxu0 %v2427
        %3718 = vmatmul.bf16.gmra.mxu0 %v874
        %v3719 = vpop.f32.mrf.mxu0
        %v3720 = vadd.f32 %v3707, %v3719
        %v3721 = vpop.f32.mrf.mxu0
        %3722 = vdwg.mxu0
        %3723 = vmatpush.bf16.msra.mxu0 %v2547
        %3724 = vmatpush.bf16.msra.mxu0 %v2539
        %3725 = vmatpush.bf16.msra.mxu0 %v2531
        %3726 = vmatpush.bf16.msra.mxu0 %v2523
        %3727 = vmatpush.bf16.msra.mxu0 %v2515
        %3728 = vmatpush.bf16.msra.mxu0 %v2507
        %3729 = vmatpush.bf16.msra.mxu0 %v2499
        %3730 = vmatpush.bf16.msra.mxu0 %v2491
        %3731 = vmatmul.bf16.gmra.mxu0 %v875
        %v3732 = vpop.f32.mrf.mxu0
        %v3733 = vadd.f32 %v3720, %v3732
        %v3734 = vpop.f32.mrf.mxu0
        %3735 = vdwg.mxu0
        %3736 = vmatpush.bf16.msra.mxu0 %v2611
        %3737 = vmatpush.bf16.msra.mxu0 %v2603
        %3738 = vmatpush.bf16.msra.mxu0 %v2595
        %3739 = vmatpush.bf16.msra.mxu0 %v2587
        %3740 = vmatpush.bf16.msra.mxu0 %v2579
        %3741 = vmatpush.bf16.msra.mxu0 %v2571
        %3742 = vmatpush.bf16.msra.mxu0 %v2563
        %3743 = vmatpush.bf16.msra.mxu0 %v2555
        %3744 = vmatmul.bf16.gmra.mxu0 %v876
        %v3745 = vpop.f32.mrf.mxu0
        %v3746 = vadd.f32 %v3733, %v3745
        %v3747 = vpop.f32.mrf.mxu0
        %3748 = vdwg.mxu0
        %3749 = vmatpush.bf16.msra.mxu0 %v2675
        %3750 = vmatpush.bf16.msra.mxu0 %v2667
        %3751 = vmatpush.bf16.msra.mxu0 %v2659
        %3752 = vmatpush.bf16.msra.mxu0 %v2651
        %3753 = vmatpush.bf16.msra.mxu0 %v2643
        %3754 = vmatpush.bf16.msra.mxu0 %v2635
        %3755 = vmatpush.bf16.msra.mxu0 %v2627
        %3756 = vmatpush.bf16.msra.mxu0 %v2619
        %3757 = vmatmul.bf16.gmra.mxu0 %v877
        %v3758 = vpop.f32.mrf.mxu0
        %v3759 = vadd.f32 %v3746, %v3758
        %v3760 = vpop.f32.mrf.mxu0
        %3761 = vdwg.mxu0
        %3762 = vmatpush.bf16.msra.mxu0 %v2292
        %3763 = vmatpush.bf16.msra.mxu0 %v2284
        %3764 = vmatpush.bf16.msra.mxu0 %v2276
        %3765 = vmatpush.bf16.msra.mxu0 %v2268
        %3766 = vmatpush.bf16.msra.mxu0 %v2260
        %3767 = vmatpush.bf16.msra.mxu0 %v2252
        %3768 = vmatpush.bf16.msra.mxu0 %v2244
        %3769 = vmatpush.bf16.msra.mxu0 %v2236
        %3770 = vmatmul.bf16.gmra.mxu0 %v871
        %v3771 = vpop.f32.mrf.mxu0
        %v3772 = vadd.f32 0.0, %v3771
        %v3773 = vpop.f32.mrf.mxu0
        %3774 = vdwg.mxu0
        %3775 = vmatpush.bf16.msra.mxu0 %v2356
        %3776 = vmatpush.bf16.msra.mxu0 %v2348
        %3777 = vmatpush.bf16.msra.mxu0 %v2340
        %3778 = vmatpush.bf16.msra.mxu0 %v2332
        %3779 = vmatpush.bf16.msra.mxu0 %v2324
        %3780 = vmatpush.bf16.msra.mxu0 %v2316
        %3781 = vmatpush.bf16.msra.mxu0 %v2308
        %3782 = vmatpush.bf16.msra.mxu0 %v2300
        %3783 = vmatmul.bf16.gmra.mxu0 %v872
        %v3784 = vpop.f32.mrf.mxu0
        %v3785 = vadd.f32 %v3772, %v3784
        %v3786 = vpop.f32.mrf.mxu0
        %3787 = vdwg.mxu0
        %3788 = vmatpush.bf16.msra.mxu0 %v2420
        %3789 = vmatpush.bf16.msra.mxu0 %v2412
        %3790 = vmatpush.bf16.msra.mxu0 %v2404
        %3791 = vmatpush.bf16.msra.mxu0 %v2396
        %3792 = vmatpush.bf16.msra.mxu0 %v2388
        %3793 = vmatpush.bf16.msra.mxu0 %v2380
        %3794 = vmatpush.bf16.msra.mxu0 %v2372
        %3795 = vmatpush.bf16.msra.mxu0 %v2364
        %3796 = vmatmul.bf16.gmra.mxu0 %v873
        %v3797 = vpop.f32.mrf.mxu0
        %v3798 = vadd.f32 %v3785, %v3797
        %v3799 = vpop.f32.mrf.mxu0
        %3800 = vdwg.mxu0
        %3801 = vmatpush.bf16.msra.mxu0 %v2484
        %3802 = vmatpush.bf16.msra.mxu0 %v2476
        %3803 = vmatpush.bf16.msra.mxu0 %v2468
        %3804 = vmatpush.bf16.msra.mxu0 %v2460
        %3805 = vmatpush.bf16.msra.mxu0 %v2452
        %3806 = vmatpush.bf16.msra.mxu0 %v2444
        %3807 = vmatpush.bf16.msra.mxu0 %v2436
        %3808 = vmatpush.bf16.msra.mxu0 %v2428
        %3809 = vmatmul.bf16.gmra.mxu0 %v874
        %v3810 = vpop.f32.mrf.mxu0
        %v3811 = vadd.f32 %v3798, %v3810
        %v3812 = vpop.f32.mrf.mxu0
        %3813 = vdwg.mxu0
        %3814 = vmatpush.bf16.msra.mxu0 %v2548
        %3815 = vmatpush.bf16.msra.mxu0 %v2540
        %3816 = vmatpush.bf16.msra.mxu0 %v2532
        %3817 = vmatpush.bf16.msra.mxu0 %v2524
        %3818 = vmatpush.bf16.msra.mxu0 %v2516
        %3819 = vmatpush.bf16.msra.mxu0 %v2508
        %3820 = vmatpush.bf16.msra.mxu0 %v2500
        %3821 = vmatpush.bf16.msra.mxu0 %v2492
        %3822 = vmatmul.bf16.gmra.mxu0 %v875
        %v3823 = vpop.f32.mrf.mxu0
        %v3824 = vadd.f32 %v3811, %v3823
        %v3825 = vpop.f32.mrf.mxu0
        %3826 = vdwg.mxu0
        %3827 = vmatpush.bf16.msra.mxu0 %v2612
        %3828 = vmatpush.bf16.msra.mxu0 %v2604
        %3829 = vmatpush.bf16.msra.mxu0 %v2596
        %3830 = vmatpush.bf16.msra.mxu0 %v2588
        %3831 = vmatpush.bf16.msra.mxu0 %v2580
        %3832 = vmatpush.bf16.msra.mxu0 %v2572
        %3833 = vmatpush.bf16.msra.mxu0 %v2564
        %3834 = vmatpush.bf16.msra.mxu0 %v2556
        %3835 = vmatmul.bf16.gmra.mxu0 %v876
        %v3836 = vpop.f32.mrf.mxu0
        %v3837 = vadd.f32 %v3824, %v3836
        %v3838 = vpop.f32.mrf.mxu0
        %3839 = vdwg.mxu0
        %3840 = vmatpush.bf16.msra.mxu0 %v2676
        %3841 = vmatpush.bf16.msra.mxu0 %v2668
        %3842 = vmatpush.bf16.msra.mxu0 %v2660
        %3843 = vmatpush.bf16.msra.mxu0 %v2652
        %3844 = vmatpush.bf16.msra.mxu0 %v2644
        %3845 = vmatpush.bf16.msra.mxu0 %v2636
        %3846 = vmatpush.bf16.msra.mxu0 %v2628
        %3847 = vmatpush.bf16.msra.mxu0 %v2620
        %3848 = vmatmul.bf16.gmra.mxu0 %v877
        %v3849 = vpop.f32.mrf.mxu0
        %v3850 = vadd.f32 %v3837, %v3849
        %v3851 = vpop.f32.mrf.mxu0
        %3852 = vdwg.mxu0
        %v3861 = vrot.slane %v3304, 6
        %v3862 = vrot.slane %v3395, 4
        %v3863 = vrot.slane %v3486, 2
        %v3864 = vrot.slane %v3668, 6
        %v3865 = vrot.slane %v3759, 4
        %v3866 = vrot.slane %v3850, 2
        %vm3867 = vcmask 1041408
        %v3868 = vsel %vm3867, %v3213, %v3861
        %vm3869 = vcmask 1045508
        %v3870 = vsel %vm3869, %v3862, %v3863
        %vm3871 = vcmask 1043456
        %v3872 = vsel %vm3871, %v3868, %v3870
        %v3873 = vsel %vm3867, %v3577, %v3864
        %v3874 = vsel %vm3869, %v3865, %v3866
        %v3875 = vsel %vm3871, %v3873, %v3874
        %v3878 = vadd.f32 %v418, %v3872
        %v3879 = vadd.f32 %v419, %v3875
        %3880 = vst [vmem:[#allocation11] sm:$0xff] %v3878
        %3881 = vst [vmem:[#allocation11 + $0x8] sm:$0xff] %v3879
        %p3882 = scmp.eq.s32.totalorder %s32, 6
        // Predicated region
        $region65: #{discriminator_forward.3} parent=43 // pred_check
          %p3883 = pneg %p3882
        $region66: #{discriminator_forward.3} parent=43 // pred_check_branch
          %3885 = sbr.rel (%p3883) target = $region68
        $region67: #{discriminator_forward.3} parent=43 // pred_region
          %v3886 = vld [vmem:[#allocation11] sm:$0xff]
          %v3887 = vld [vmem:[#allocation11 + $0x8] sm:$0xff]
          %v3888 = vld [vmem:[#allocation6] sm:$0xff]
          %v3890 = vperm.slane %v3888, 0
          %v3891 = vperm.slane %v3888, 1
          %v3892 = vperm.slane %v3888, 2
          %v3893 = vperm.slane %v3888, 3
          %v3894 = vperm.slane %v3888, 4
          %v3895 = vperm.slane %v3888, 5
          %v3896 = vperm.slane %v3888, 6
          %v3897 = vperm.slane %v3888, 7
          %v3898 = vrot.slane %v3891, 6
          %v3899 = vrot.slane %v3892, 4
          %v3900 = vrot.slane %v3893, 2
          %v3901 = vrot.slane %v3895, 6
          %v3902 = vrot.slane %v3896, 4
          %v3903 = vrot.slane %v3897, 2
          %v3904 = vsel %vm3867, %v3890, %v3898
          %v3905 = vsel %vm3869, %v3899, %v3900
          %v3906 = vsel %vm3871, %v3904, %v3905
          %v3907 = vsel %vm3867, %v3894, %v3901
          %v3908 = vsel %vm3869, %v3902, %v3903
          %v3909 = vsel %vm3871, %v3907, %v3908
          %v3912 = vmul.f32 %v3886, %v3906
          %v3913 = vmul.f32 %v3887, %v3909
          %v3914 = vld [vmem:[#allocation8] sm:$0xff]
          %v3916 = vperm.slane %v3914, 0
          %v3917 = vperm.slane %v3914, 1
          %v3918 = vperm.slane %v3914, 2
          %v3919 = vperm.slane %v3914, 3
          %v3920 = vperm.slane %v3914, 4
          %v3921 = vperm.slane %v3914, 5
          %v3922 = vperm.slane %v3914, 6
          %v3923 = vperm.slane %v3914, 7
          %v3924 = vrot.slane %v3917, 6
          %v3925 = vrot.slane %v3918, 4
          %v3926 = vrot.slane %v3919, 2
          %v3927 = vrot.slane %v3921, 6
          %v3928 = vrot.slane %v3922, 4
          %v3929 = vrot.slane %v3923, 2
          %v3930 = vsel %vm3867, %v3916, %v3924
          %v3931 = vsel %vm3869, %v3925, %v3926
          %v3932 = vsel %vm3871, %v3930, %v3931
          %v3933 = vsel %vm3867, %v3920, %v3927
          %v3934 = vsel %vm3869, %v3928, %v3929
          %v3935 = vsel %vm3871, %v3933, %v3934
          %v3938 = vadd.f32 %v3912, %v3932
          %v3939 = vadd.f32 %v3913, %v3935
          %vm3940 = vcmp.ge.f32.partialorder %v3938, 0.0
          %vm3941 = vcmp.ge.f32.partialorder %v3939, 0.0
          %v3942 = vmul.f32 %v3938, 0.1
          %v3943 = vmul.f32 %v3939, 0.1
          %v3944 = vsel %vm3940, %v3938, %v3942
          %v3945 = vsel %vm3941, %v3939, %v3943
          %3946 = vst [vmem:[#allocation11] sm:$0xff] %v3944
          %3947 = vst [vmem:[#allocation11 + $0x8] sm:$0xff] %v3945
          %v3948 = vld [vmem:[#allocation9] sm:$0xff]
          %v3950 = vperm.slane %v3948, 0
          %v3951 = vperm.slane %v3948, 1
          %v3952 = vperm.slane %v3948, 2
          %v3953 = vperm.slane %v3948, 3
          %v3954 = vperm.slane %v3948, 4
          %v3955 = vperm.slane %v3948, 5
          %v3956 = vperm.slane %v3948, 6
          %v3957 = vperm.slane %v3948, 7
          %v3958 = vrot.slane %v3951, 6
          %v3959 = vrot.slane %v3952, 4
          %v3960 = vrot.slane %v3953, 2
          %v3961 = vrot.slane %v3955, 6
          %v3962 = vrot.slane %v3956, 4
          %v3963 = vrot.slane %v3957, 2
          %v3964 = vsel %vm3867, %v3950, %v3958
          %v3965 = vsel %vm3869, %v3959, %v3960
          %v3966 = vsel %vm3871, %v3964, %v3965
          %v3967 = vsel %vm3867, %v3954, %v3961
          %v3968 = vsel %vm3869, %v3962, %v3963
          %v3969 = vsel %vm3871, %v3967, %v3968
          %v3972 = vmul.f32 %v3944, %v3966
          %v3973 = vmul.f32 %v3945, %v3969
          %3976 = vst [vmem:[#allocation1] ss:$4 sm:$0xff] %v3972
          %s3977 = scalar_lea.vmem [#allocation1], 32
          %3978 = vst [vmem:[%s3977] ss:$4 sm:$0xff] %v3973
          %v3979 = vld.sshfl [vmem:[#allocation1] sm:$0xff pattern:$0x73625140]
          %v3980 = vld.sshfl [vmem:[#allocation1 + $0x8] sm:$0xff pattern:$0x73625140]
          %v3981 = vld.sshfl [vmem:[#allocation1 + $0x10] sm:$0xff pattern:$0x73625140]
          %v3982 = vld.sshfl [vmem:[#allocation1 + $0x18] sm:$0xff pattern:$0x73625140]
          %v3983 = vld.sshfl [vmem:[#allocation1 + $0x20] sm:$0xff pattern:$0x73625140]
          %v3984 = vld.sshfl [vmem:[#allocation1 + $0x28] sm:$0xff pattern:$0x73625140]
          %v3985 = vld.sshfl [vmem:[#allocation1 + $0x30] sm:$0xff pattern:$0x73625140]
          %v3986 = vld.sshfl [vmem:[#allocation1 + $0x38] sm:$0xff pattern:$0x73625140]
          %v3995 = vsel %vm3867, %v3979, 0.0
          %v3996 = vsel %vm3867, %v3980, 0.0
          %v3997 = vadd.f32 %v3995, %v3996
          %v3998 = vsel %vm3867, %v3981, 0.0
          %v3999 = vadd.f32 %v3997, %v3998
          %v4000 = vsel %vm3867, %v3982, 0.0
          %v4001 = vadd.f32 %v3999, %v4000
          %v4002 = vsel %vm3867, %v3983, 0.0
          %v4003 = vadd.f32 %v4001, %v4002
          %v4004 = vsel %vm3867, %v3984, 0.0
          %v4005 = vadd.f32 %v4003, %v4004
          %v4006 = vsel %vm3867, %v3985, 0.0
          %v4007 = vadd.f32 %v4005, %v4006
          %v4008 = vsel %vm3867, %v3986, 0.0
          %v4009 = vadd.f32 %v4007, %v4008
          %4010 = vadd.xlane.f32.xlu0 %v4009
          %v4011 = vpop.xlane.xlu0 %4010
          %v4012 = vld [vmem:[#allocation2] sm:$0x1]
          %v4014 = vperm.slane %v4012, 0
          %v4016 = vadd.f32 %v4011, %v4014
          %v4017 = vsub.f32 0.0, %v4016
          %v4018 = vmul.f32 %v4017, 1.442695
          %v4019 = vpow.pop %v4018
          %v4020 = vadd.f32 %v4019, 1.0
          %v4021 = vrcp.pop %v4020
          %vm4022 = vcmask 1024
          %4023 = vst.msk [vmem:[%s411] sm:$0x3] %vm4022, %v4021
        $region68: #{discriminator_forward.3} parent=43 // pred_fallthru
          _
        %p4024 = scmp.lt.s32.totalorder %s31, 0
        %s4025 = scalar_select %p4024, %s31, 0
        %s4026 = smul.addr %s4025, 2
        %s4027 = scalar_lea.vmem %s7, %s4026
        // Predicated region
        $region69: #{discriminator_forward.3} parent=43 // pred_check
          %p4028 = pneg %p210
        $region70: #{discriminator_forward.3} parent=43 // pred_check_branch
          %4030 = sbr.rel (%p4028) target = $region72
        $region71: #{discriminator_forward.3} parent=43 // pred_region
          %s4031 = smul.u32 8, %s31
          %4033 = vsyncadd [#allocation5], 0
          %s4034 = smul.addr %s4031, 2
          %s4035 = scalar_lea.hbm %s6, %s4034
          %s4037 = sshll.u32 [#allocation11], 4
          %s4038 = int_to_ptr.vmem [resolvable:$true] %s4037
          %s4039 = sshll.u32 %s4035, 4
          %s4040 = int_to_ptr.hbm [resolvable:$true] %s4039
          %4042 = dma.vmem_to_hbm [thread:$0]  %s4038, 256, %s4040, [#allocation5]
        $region72: #{discriminator_forward.3} parent=43 // pred_fallthru
          _
        // Predicated region
        $region73: #{discriminator_forward.3} parent=43 // pred_check
          %p4043 = pneg %p236
        $region74: #{discriminator_forward.3} parent=43 // pred_check_branch
          %4045 = sbr.rel (%p4043) target = $region76
        $region75: #{discriminator_forward.3} parent=43 // pred_region
          _
        $region76: #{discriminator_forward.3} parent=43 // pred_fallthru
          _
        // Predicated region
        $region77: #{discriminator_forward.3} parent=43 // pred_check
          %p4046 = pneg %p210
        $region78: #{discriminator_forward.3} parent=43 // pred_check_branch
          %4048 = sbr.rel (%p4046) target = $region80
        $region79: #{discriminator_forward.3} parent=43 // pred_region
          %4050 = dma.done [#allocation5], 256
        $region80: #{discriminator_forward.3} parent=43 // pred_fallthru
          _
        // Predicated region
        $region81: #{discriminator_forward.3} parent=43 // pred_check
          %p4051 = pneg %p236
        $region82: #{discriminator_forward.3} parent=43 // pred_check_branch
          %4053 = sbr.rel (%p4051) target = $region84
        $region83: #{discriminator_forward.3} parent=43 // pred_region
          %p4054 = scmp.lt.s32.totalorder %s31, 0
          %s4055 = scalar_select %p4054, %s31, 0
          %s4056 = smul.addr %s4055, 2
          %s4057 = scalar_lea.vmem %s7, %s4056
        $region84: #{discriminator_forward.3} parent=43 // pred_fallthru
          _
      $region44: #{discriminator_forward.3} parent=5 // pred_fallthru
        _
      %p4058 = scmp.le.s32.totalorder 2, %s22
      // Predicated region
      $region85: #{discriminator_forward.3} parent=5 // pred_check
        %p4059 = pneg %p4058
      $region86: #{discriminator_forward.3} parent=5 // pred_check_branch
        %4061 = sbr.rel (%p4059) target = $region88
      $region87: #{discriminator_forward.3} parent=5 // pred_region
        %s4062 = ssub.s32 %s22, 2
      $region88: #{discriminator_forward.3} parent=5 // pred_fallthru
        _
    $region6: #{discriminator_forward.3} parent=1 // loop_footer
      %s26 = sadd.s32 1, %s22
    $region7: #{discriminator_forward.3} parent=1 // loop_footer_branch
      %21 = sbr.rel target = $region3
    $region8: #{discriminator_forward.3} parent=1 // loop_exit
      _
    %4063 = vsyncpa [#allocation4], 1
    %s4064 = scalar_lea.sflag [#allocation4], 1
    %4065 = vsyncpa %s4064, 1
    %4066 = vsyncpa [#allocation7], 1
    %4067 = vsyncpa [#allocation10], 1
    %4068 = vsyncpa [#allocation5], 1
    %s4069 = scalar_lea.sflag [#allocation5], 1
    %4070 = vsyncpa %s4069, 1

</llo_original>
